<compile_context>
chip_gen: v7x
topology: tpu7x:2x2x1
jax: 0.10.0
libtpu: 0.0.40
codegen_flags: <defaults>
</compile_context>

<pallas_src>
import functools

import numpy as np

import jax
import jax.numpy as jnp
from jax import lax
from jax.experimental import pallas as pl
from jax.experimental.pallas import tpu as pltpu


KH = 5       # conv kernel size  (hard-coded in the kernel loops)
STRIDE = 2   # conv stride       (hard-coded in the kernel loops)


def _conv_out(s):
    return (s - KH) // STRIDE + 1


def _round_up(x, m):
    return (x + m - 1) // m * m


# ---------------------------------------------------------------------------
# Fused Pallas kernel: whole BCPolicy forward on VMEM-resident data
# ---------------------------------------------------------------------------
def _bc_fused_kernel(img_ref, speed_ref,
                     t1_ref, b1_ref, t2_ref, b2_ref, t3_ref, b3_ref,
                     w1x_ref, w1s_ref, fb1_ref, w2_ref, fb2_ref,
                     out_ref, act1_ref, act2_ref,
                     *, oh1, oh2, oh3, wc1, wc2, wc3):
    """conv1..3 (+ReLU) + flatten + speed-concat + fc1 (+ReLU) + fc2."""
    bb = img_ref.shape[0]

    def conv_layer(src_ref, dst_ref, t_ref, b_ref, oh, wc_in, wc_out):
        # K-stacked banded conv: one MXU dot per output row; the 5 vertical
        # taps live in the contraction (K) dimension of t_ref.  Bias broadcast
        # is hoisted out of the unrolled loop.  The zero-padded output columns
        # of t_ref / b_ref keep dst's padding lanes exactly zero after ReLU.
        bias = jnp.broadcast_to(b_ref[...], (bb, wc_out))
        for oy in range(oh):
            lhs = src_ref[:, STRIDE * oy * wc_in:(STRIDE * oy + KH) * wc_in]
            acc = jnp.dot(lhs, t_ref[...], preferred_element_type=jnp.float32)
            dst_ref[:, oy * wc_out:(oy + 1) * wc_out] = jnp.maximum(acc + bias, 0.0)

    # conv1 + ReLU -> act1 slab (bb, oh1*wc2)
    conv_layer(img_ref, act1_ref, t1_ref, b1_ref, oh1, wc1, wc2)
    # conv2 + ReLU -> act2 slab (bb, oh2*wc3)
    conv_layer(act1_ref, act2_ref, t2_ref, b2_ref, oh2, wc2, wc3)

    # conv3 + ReLU fused directly into fc1: the NCHW flatten and the speed
    # concat are folded into (row-permuted, split) fc1 weights on the host.
    n3 = t3_ref.shape[1]
    bias3 = jnp.broadcast_to(b3_ref[...], (bb, n3))
    fc1 = speed_ref[...] * w1s_ref[...] + fb1_ref[...]          # (bb, 128)
    for oy in range(oh3):
        lhs = act2_ref[:, STRIDE * oy * wc3:(STRIDE * oy + KH) * wc3]
        row = jnp.maximum(
            jnp.dot(lhs, t3_ref[...], preferred_element_type=jnp.float32) + bias3,
            0.0)                                                 # (bb, n3)
        fc1 = fc1 + jnp.dot(row, w1x_ref[oy], preferred_element_type=jnp.float32)
    h = jnp.maximum(fc1, 0.0)                                    # ReLU
    out_ref[...] = jnp.dot(h, w2_ref[...],
                           preferred_element_type=jnp.float32) + fb2_ref[...]


# ---------------------------------------------------------------------------
# Host-side (numpy) weight preprocessing
# ---------------------------------------------------------------------------
def _stacked_toeplitz(w_hwio, b, w_in, wc_pad_in, n_pad_out):
    """Expand a (5,5,Cin,Cout) stride-2 VALID conv into ONE K-stacked banded
    matrix T of shape (5*wc_pad_in, n_pad) plus a (1, n_pad) bias row, so that
        out_row[oy] = concat(x_row[2*oy : 2*oy+5]) @ T + bias
    for lane-flattened (padded-to-wc_pad_in) input rows.  Columns beyond
    w_out*Cout are zero so the next slab's padding lanes stay exactly zero."""
    w_hwio = np.asarray(w_hwio, np.float32)
    kh, kw, cin, cout = w_hwio.shape
    assert kh == KH and kw == KH, "kernel hard-codes 5x5 / stride-2 convs"
    w_out = (w_in - kw) // STRIDE + 1
    n_out = w_out * cout
    n_pad = n_out if n_pad_out is None else n_pad_out
    assert n_pad >= n_out and w_in * cin <= wc_pad_in
    t = np.zeros((kh, wc_pad_in, n_pad), np.float32)
    for i in range(kh):
        for ox in range(w_out):
            for j in range(kw):
                col = STRIDE * ox + j
                t[i, col * cin:(col + 1) * cin,
                  ox * cout:(ox + 1) * cout] = w_hwio[i, j]
    b_row = np.zeros((1, n_pad), np.float32)
    b_row[0, :n_out] = np.tile(np.asarray(b, np.float32), w_out)
    return t.reshape(kh * wc_pad_in, n_pad), b_row


def build_fused_params(params, c, h, w):
    """Precompute K-stacked Toeplitz conv matrices and permuted/split fc1."""
    c1 = int(params["conv1_w"].shape[-1])
    c2 = int(params["conv2_w"].shape[-1])
    c3 = int(params["conv3_w"].shape[-1])
    h1, w1o = _conv_out(h), _conv_out(w)
    h2, w2o = _conv_out(h1), _conv_out(w1o)
    h3, w3o = _conv_out(h2), _conv_out(w2o)

    wc1 = _round_up(w * c, 128)       # padded lane width of one image row
    wc2 = _round_up(w1o * c1, 128)    # ... of one conv1 output row
    wc3 = _round_up(w2o * c2, 128)    # ... of one conv2 output row

    t1, b1 = _stacked_toeplitz(params["conv1_w"], params["conv1_b"], w, wc1, wc2)
    t2, b2 = _stacked_toeplitz(params["conv2_w"], params["conv2_b"], w1o, wc2, wc3)
    t3, b3 = _stacked_toeplitz(params["conv3_w"], params["conv3_b"], w2o, wc3, None)

    fc1_w = np.asarray(params["fc1_w"], np.float32)              # (n_flat+1, 128)
    n_flat = c3 * h3 * w3o
    assert fc1_w.shape[0] == n_flat + 1
    # Fold PyTorch's NCHW (channel-major) flatten into a row permutation of
    # fc1's image block; split off the speed row (folds the concat into fc1).
    w1x = (fc1_w[:n_flat]
           .reshape(c3, h3, w3o, fc1_w.shape[1])
           .transpose(1, 2, 0, 3)
           .reshape(h3, w3o * c3, fc1_w.shape[1]))                # (h3, w3*c3, 128)
    w1s = fc1_w[n_flat:]                                          # (1, 128)

    dev = lambda x: jnp.asarray(x, jnp.float32)
    return {
        "t1": dev(t1), "b1": dev(b1),
        "t2": dev(t2), "b2": dev(b2),
        "t3": dev(t3), "b3": dev(b3),
        "w1x": dev(w1x), "w1s": dev(w1s),
        "fb1": dev(np.asarray(params["fc1_b"], np.float32)[None, :]),
        "w2": dev(params["fc2_w"]),
        "fb2": dev(np.asarray(params["fc2_b"], np.float32)[None, :]),
        "dims": (c, h, w, h1, h2, h3, wc1, wc2, wc3),
    }


# ---------------------------------------------------------------------------
# Forward wrapper (one pallas_call, batch-chunk grid, everything in VMEM)
# ---------------------------------------------------------------------------
def bc_policy_forward(prep, image_nchw, speed):
    c, h, w, h1, h2, h3, wc1, wc2, wc3 = prep["dims"]
    b = image_nchw.shape[0]
    n_out = prep["w2"].shape[1]

    # Pad the batch to a sublane multiple and chunk it over a "parallel" grid
    # axis (shards across both TensorCores on v7x; amortizes fixed costs).
    bb = min(_round_up(b, 8), 128)
    b_pad = _round_up(b, bb)
    nb = b_pad // bb

    # NCHW -> lane-flattened (B, H*wc1) slab: image row r of batch b occupies
    # lanes [r*wc1, r*wc1 + W*C) in (w, c)-interleaved order; padding is zero.
    # TODO(synk): this small relayout stays as XLA ops in the wrapper; folding
    # it into the kernel would need an in-kernel NCHW channel-interleave.
    img = jnp.transpose(image_nchw.astype(jnp.float32), (0, 2, 3, 1))
    img = img.reshape(b, h, w * c)
    img = jnp.pad(img, ((0, b_pad - b), (0, 0), (0, wc1 - w * c)))
    img = img.reshape(b_pad, h * wc1)
    spd = jnp.pad(speed.astype(jnp.float32), ((0, b_pad - b), (0, 0)))

    kernel = functools.partial(_bc_fused_kernel, oh1=h1, oh2=h2, oh3=h3,
                               wc1=wc1, wc2=wc2, wc3=wc3)

    def resident(arr):
        # Whole (weight) array VMEM-resident; same block every grid step.
        zero = (0,) * arr.ndim
        return pl.BlockSpec(arr.shape, lambda i, zero=zero: zero)

    grid_spec = pltpu.PrefetchScalarGridSpec(
        num_scalar_prefetch=0,
        grid=(nb,),
        in_specs=[
            pl.BlockSpec((bb, h * wc1), lambda i: (i, 0)),     # image slab
            pl.BlockSpec((bb, 1), lambda i: (i, 0)),           # speed
            resident(prep["t1"]), resident(prep["b1"]),
            resident(prep["t2"]), resident(prep["b2"]),
            resident(prep["t3"]), resident(prep["b3"]),
            resident(prep["w1x"]), resident(prep["w1s"]), resident(prep["fb1"]),
            resident(prep["w2"]), resident(prep["fb2"]),
        ],
        out_specs=pl.BlockSpec((bb, n_out), lambda i: (i, 0)),
        scratch_shapes=[
            pltpu.VMEM((bb, h1 * wc2), jnp.float32),   # conv1 activation slab
            pltpu.VMEM((bb, h2 * wc3), jnp.float32),   # conv2 activation slab
        ],
    )

    out = pl.pallas_call(
        kernel,
        out_shape=jax.ShapeDtypeStruct((b_pad, n_out), jnp.float32),
        grid_spec=grid_spec,
        compiler_params=pltpu.CompilerParams(
            dimension_semantics=("parallel",),
            vmem_limit_bytes=64 << 20),
    )(img, spd,
      prep["t1"], prep["b1"], prep["t2"], prep["b2"], prep["t3"], prep["b3"],
      prep["w1x"], prep["w1s"], prep["fb1"], prep["w2"], prep["fb2"])
    return out[:b]


# Pure-JAX reference (lax.conv) used only to validate the Pallas path.
def reference_forward(params, image_nchw, speed):
    x = jnp.transpose(image_nchw, (0, 2, 3, 1))
    for i in (1, 2, 3):
        x = lax.conv_general_dilated(
            x, params[f"conv{i}_w"], (STRIDE, STRIDE), "VALID",
            dimension_numbers=("NHWC", "HWIO", "NHWC"))
        x = jnp.maximum(x + params[f"conv{i}_b"], 0.0)
    b = x.shape[0]
    x = jnp.transpose(x, (0, 3, 1, 2)).reshape(b, -1)            # NCHW flatten
    x = jnp.concatenate([x, speed], axis=1)
    x = jnp.maximum(x @ params["fc1_w"] + params["fc1_b"], 0.0)
    return x @ params["fc2_w"] + params["fc2_b"]


# ---------------------------------------------------------------------------
# Deterministic parameter init (synthetic; shapes from BCPolicy.__init__)
# ---------------------------------------------------------------------------
def init_params(key, n_flat):
    ks = jax.random.split(key, 10)

    def wgt(k, shape, fan_in):
        return jax.random.normal(k, shape, jnp.float32) / jnp.sqrt(jnp.float32(fan_in))

    return {
        # conv weights in (KH, KW, Cin, Cout) layout
        "conv1_w": wgt(ks[0], (5, 5, 3, 16), 5 * 5 * 3),
        "conv1_b": wgt(ks[1], (16,), 5 * 5 * 3),
        "conv2_w": wgt(ks[2], (5, 5, 16, 32), 5 * 5 * 16),
        "conv2_b": wgt(ks[3], (32,), 5 * 5 * 16),
        "conv3_w": wgt(ks[4], (5, 5, 32, 64), 5 * 5 * 32),
        "conv3_b": wgt(ks[5], (64,), 5 * 5 * 32),
        # fc weights in (in, out) layout (equivalent to PyTorch W.T)
        "fc1_w": wgt(ks[6], (n_flat + 1, 128), n_flat + 1),
        "fc1_b": wgt(ks[7], (128,), n_flat + 1),
        "fc2_w": wgt(ks[8], (128, 3), 128),
        "fc2_b": wgt(ks[9], (3,), 128),
    }


if __name__ == "__main__":
    B, C, H, W = 2, 3, 29, 29                      # img_size=(3,29,29) -> n_flat=64
    key = jax.random.PRNGKey(0)
    k_img, k_speed, k_params = jax.random.split(key, 3)

    image = jax.random.normal(k_img, (B, C, H, W), jnp.float32)   # NCHW, like PyTorch
    speed = jax.random.normal(k_speed, (B, 1), jnp.float32)

    # n_flat derived the same way the module does (propagate spatial dims).
    oh = _conv_out(_conv_out(_conv_out(H)))
    ow = _conv_out(_conv_out(_conv_out(W)))
    n_flat = 64 * oh * ow

    params = init_params(k_params, n_flat)
    prep = build_fused_params(params, C, H, W)

    out = bc_policy_forward(prep, image, speed)
    out = jax.block_until_ready(out)

    ref = reference_forward(params, image, speed)
    assert out.shape == (B, 3), out.shape
    assert jnp.allclose(out, ref, rtol=1e-4, atol=1e-4), "Pallas output mismatch vs reference"

    print("KERNEL_OK")
</pallas_src>

<mosaic_0001>
module attributes {stable_mosaic.version = 11 : i64} {
  func.func @_bc_fused_kernel(%arg0: i32, %arg1: memref<8x3712xf32, #tpu.memory_space<vmem>>, %arg2: memref<8x1xf32, #tpu.memory_space<vmem>>, %arg3: memref<640x256xf32, #tpu.memory_space<vmem>>, %arg4: memref<1x256xf32, #tpu.memory_space<vmem>>, %arg5: memref<1280x256xf32, #tpu.memory_space<vmem>>, %arg6: memref<1x256xf32, #tpu.memory_space<vmem>>, %arg7: memref<1280x64xf32, #tpu.memory_space<vmem>>, %arg8: memref<1x64xf32, #tpu.memory_space<vmem>>, %arg9: memref<1x64x128xf32, #tpu.memory_space<vmem>>, %arg10: memref<1x128xf32, #tpu.memory_space<vmem>>, %arg11: memref<1x128xf32, #tpu.memory_space<vmem>>, %arg12: memref<128x3xf32, #tpu.memory_space<vmem>>, %arg13: memref<1x3xf32, #tpu.memory_space<vmem>>, %arg14: memref<8x3xf32, #tpu.memory_space<vmem>>, %arg15: memref<8x3328xf32, #tpu.memory_space<vmem>>, %arg16: memref<8x1280xf32, #tpu.memory_space<vmem>>) attributes {dimension_semantics = [#tpu.dimension_semantics<parallel>], iteration_bounds = array<i64: 1>, scalar_prefetch = 0 : i64, scratch_operands = 2 : i64, tpu.core_type = #tpu.core_type<tc>, window_params = [{transform_indices = @transform_0, window_bounds = array<i64: 8, 3712>}, {transform_indices = @transform_1, window_bounds = array<i64: 8, 1>}, {pipeline_mode = #tpu.pipeline_mode<synchronous>, transform_indices = @transform_2, window_bounds = array<i64: 640, 256>}, {pipeline_mode = #tpu.pipeline_mode<synchronous>, transform_indices = @transform_3, window_bounds = array<i64: 1, 256>}, {pipeline_mode = #tpu.pipeline_mode<synchronous>, transform_indices = @transform_4, window_bounds = array<i64: 1280, 256>}, {pipeline_mode = #tpu.pipeline_mode<synchronous>, transform_indices = @transform_5, window_bounds = array<i64: 1, 256>}, {pipeline_mode = #tpu.pipeline_mode<synchronous>, transform_indices = @transform_6, window_bounds = array<i64: 1280, 64>}, {pipeline_mode = #tpu.pipeline_mode<synchronous>, transform_indices = @transform_7, window_bounds = array<i64: 1, 64>}, {pipeline_mode = #tpu.pipeline_mode<synchronous>, transform_indices = @transform_8, window_bounds = array<i64: 1, 64, 128>}, {pipeline_mode = #tpu.pipeline_mode<synchronous>, transform_indices = @transform_9, window_bounds = array<i64: 1, 128>}, {pipeline_mode = #tpu.pipeline_mode<synchronous>, transform_indices = @transform_10, window_bounds = array<i64: 1, 128>}, {pipeline_mode = #tpu.pipeline_mode<synchronous>, transform_indices = @transform_11, window_bounds = array<i64: 128, 3>}, {pipeline_mode = #tpu.pipeline_mode<synchronous>, transform_indices = @transform_12, window_bounds = array<i64: 1, 3>}, {transform_indices = @transform_13, window_bounds = array<i64: 8, 3>}]} {
    %c0 = arith.constant 0 : index
    %c0_0 = arith.constant 0 : index
    %0 = vector.load %arg4[%c0, %c0_0] : memref<1x256xf32, #tpu.memory_space<vmem>>, vector<1x256xf32>
    %1 = vector.shape_cast %0 : vector<1x256xf32> to vector<1x256xf32>
    %2 = vector.broadcast %1 : vector<1x256xf32> to vector<8x256xf32>
    %c0_1 = arith.constant 0 : index
    %c0_2 = arith.constant 0 : index
    %3 = vector.load %arg1[%c0_1, %c0_2] : memref<8x3712xf32, #tpu.memory_space<vmem>>, vector<8x640xf32>
    %c0_3 = arith.constant 0 : index
    %c0_4 = arith.constant 0 : index
    %4 = vector.load %arg3[%c0_3, %c0_4] : memref<640x256xf32, #tpu.memory_space<vmem>>, vector<640x256xf32>
    %cst = arith.constant dense<0.000000e+00> : vector<8x256xf32>
    %5 = tpu.matmul %3, %4, %cst {dimension_numbers = #tpu.dot_dimension_numbers<[1], [0], [0], [1], [0, 0, 1, 1], [], []>} : vector<8x640xf32>, vector<640x256xf32>, vector<8x256xf32> -> vector<8x256xf32>
    %6 = arith.addf %5, %2 : vector<8x256xf32>
    %cst_5 = arith.constant 0.000000e+00 : f32
    %7 = vector.broadcast %cst_5 : f32 to vector<8x256xf32>
    %8 = arith.maximumf %6, %7 : vector<8x256xf32>
    %c0_6 = arith.constant 0 : index
    %c0_7 = arith.constant 0 : index
    %9 = vector.load %arg15[%c0_6, %c0_7] : memref<8x3328xf32, #tpu.memory_space<vmem>>, vector<8x256xf32>
    tpu.vector_store %arg15[%c0_6, %c0_7], %8 {strides = array<i32>} : memref<8x3328xf32, #tpu.memory_space<vmem>>, vector<8x256xf32>,
    %c0_8 = arith.constant 0 : index
    %c256 = arith.constant 256 : index
    %10 = vector.load %arg1[%c0_8, %c256] : memref<8x3712xf32, #tpu.memory_space<vmem>>, vector<8x640xf32>
    %c0_9 = arith.constant 0 : index
    %c0_10 = arith.constant 0 : index
    %11 = vector.load %arg3[%c0_9, %c0_10] : memref<640x256xf32, #tpu.memory_space<vmem>>, vector<640x256xf32>
    %cst_11 = arith.constant dense<0.000000e+00> : vector<8x256xf32>
    %12 = tpu.matmul %10, %11, %cst_11 {dimension_numbers = #tpu.dot_dimension_numbers<[1], [0], [0], [1], [0, 0, 1, 1], [], []>} : vector<8x640xf32>, vector<640x256xf32>, vector<8x256xf32> -> vector<8x256xf32>
    %13 = arith.addf %12, %2 : vector<8x256xf32>
    %cst_12 = arith.constant 0.000000e+00 : f32
    %14 = vector.broadcast %cst_12 : f32 to vector<8x256xf32>
    %15 = arith.maximumf %13, %14 : vector<8x256xf32>
    %c0_13 = arith.constant 0 : index
    %c256_14 = arith.constant 256 : index
    %16 = vector.load %arg15[%c0_13, %c256_14] : memref<8x3328xf32, #tpu.memory_space<vmem>>, vector<8x256xf32>
    tpu.vector_store %arg15[%c0_13, %c256_14], %15 {strides = array<i32>} : memref<8x3328xf32, #tpu.memory_space<vmem>>, vector<8x256xf32>,
    %c0_15 = arith.constant 0 : index
    %c512 = arith.constant 512 : index
    %17 = vector.load %arg1[%c0_15, %c512] : memref<8x3712xf32, #tpu.memory_space<vmem>>, vector<8x640xf32>
    %c0_16 = arith.constant 0 : index
    %c0_17 = arith.constant 0 : index
    %18 = vector.load %arg3[%c0_16, %c0_17] : memref<640x256xf32, #tpu.memory_space<vmem>>, vector<640x256xf32>
    %cst_18 = arith.constant dense<0.000000e+00> : vector<8x256xf32>
    %19 = tpu.matmul %17, %18, %cst_18 {dimension_numbers = #tpu.dot_dimension_numbers<[1], [0], [0], [1], [0, 0, 1, 1], [], []>} : vector<8x640xf32>, vector<640x256xf32>, vector<8x256xf32> -> vector<8x256xf32>
    %20 = arith.addf %19, %2 : vector<8x256xf32>
    %cst_19 = arith.constant 0.000000e+00 : f32
    %21 = vector.broadcast %cst_19 : f32 to vector<8x256xf32>
    %22 = arith.maximumf %20, %21 : vector<8x256xf32>
    %c0_20 = arith.constant 0 : index
    %c512_21 = arith.constant 512 : index
    %23 = vector.load %arg15[%c0_20, %c512_21] : memref<8x3328xf32, #tpu.memory_space<vmem>>, vector<8x256xf32>
    tpu.vector_store %arg15[%c0_20, %c512_21], %22 {strides = array<i32>} : memref<8x3328xf32, #tpu.memory_space<vmem>>, vector<8x256xf32>,
    %c0_22 = arith.constant 0 : index
    %c768 = arith.constant 768 : index
    %24 = vector.load %arg1[%c0_22, %c768] : memref<8x3712xf32, #tpu.memory_space<vmem>>, vector<8x640xf32>
    %c0_23 = arith.constant 0 : index
    %c0_24 = arith.constant 0 : index
    %25 = vector.load %arg3[%c0_23, %c0_24] : memref<640x256xf32, #tpu.memory_space<vmem>>, vector<640x256xf32>
    %cst_25 = arith.constant dense<0.000000e+00> : vector<8x256xf32>
    %26 = tpu.matmul %24, %25, %cst_25 {dimension_numbers = #tpu.dot_dimension_numbers<[1], [0], [0], [1], [0, 0, 1, 1], [], []>} : vector<8x640xf32>, vector<640x256xf32>, vector<8x256xf32> -> vector<8x256xf32>
    %27 = arith.addf %26, %2 : vector<8x256xf32>
    %cst_26 = arith.constant 0.000000e+00 : f32
    %28 = vector.broadcast %cst_26 : f32 to vector<8x256xf32>
    %29 = arith.maximumf %27, %28 : vector<8x256xf32>
    %c0_27 = arith.constant 0 : index
    %c768_28 = arith.constant 768 : index
    %30 = vector.load %arg15[%c0_27, %c768_28] : memref<8x3328xf32, #tpu.memory_space<vmem>>, vector<8x256xf32>
    tpu.vector_store %arg15[%c0_27, %c768_28], %29 {strides = array<i32>} : memref<8x3328xf32, #tpu.memory_space<vmem>>, vector<8x256xf32>,
    %c0_29 = arith.constant 0 : index
    %c1024 = arith.constant 1024 : index
    %31 = vector.load %arg1[%c0_29, %c1024] : memref<8x3712xf32, #tpu.memory_space<vmem>>, vector<8x640xf32>
    %c0_30 = arith.constant 0 : index
    %c0_31 = arith.constant 0 : index
    %32 = vector.load %arg3[%c0_30, %c0_31] : memref<640x256xf32, #tpu.memory_space<vmem>>, vector<640x256xf32>
    %cst_32 = arith.constant dense<0.000000e+00> : vector<8x256xf32>
    %33 = tpu.matmul %31, %32, %cst_32 {dimension_numbers = #tpu.dot_dimension_numbers<[1], [0], [0], [1], [0, 0, 1, 1], [], []>} : vector<8x640xf32>, vector<640x256xf32>, vector<8x256xf32> -> vector<8x256xf32>
    %34 = arith.addf %33, %2 : vector<8x256xf32>
    %cst_33 = arith.constant 0.000000e+00 : f32
    %35 = vector.broadcast %cst_33 : f32 to vector<8x256xf32>
    %36 = arith.maximumf %34, %35 : vector<8x256xf32>
    %c0_34 = arith.constant 0 : index
    %c1024_35 = arith.constant 1024 : index
    %37 = vector.load %arg15[%c0_34, %c1024_35] : memref<8x3328xf32, #tpu.memory_space<vmem>>, vector<8x256xf32>
    tpu.vector_store %arg15[%c0_34, %c1024_35], %36 {strides = array<i32>} : memref<8x3328xf32, #tpu.memory_space<vmem>>, vector<8x256xf32>,
    %c0_36 = arith.constant 0 : index
    %c1280 = arith.constant 1280 : index
    %38 = vector.load %arg1[%c0_36, %c1280] : memref<8x3712xf32, #tpu.memory_space<vmem>>, vector<8x640xf32>
    %c0_37 = arith.constant 0 : index
    %c0_38 = arith.constant 0 : index
    %39 = vector.load %arg3[%c0_37, %c0_38] : memref<640x256xf32, #tpu.memory_space<vmem>>, vector<640x256xf32>
    %cst_39 = arith.constant dense<0.000000e+00> : vector<8x256xf32>
    %40 = tpu.matmul %38, %39, %cst_39 {dimension_numbers = #tpu.dot_dimension_numbers<[1], [0], [0], [1], [0, 0, 1, 1], [], []>} : vector<8x640xf32>, vector<640x256xf32>, vector<8x256xf32> -> vector<8x256xf32>
    %41 = arith.addf %40, %2 : vector<8x256xf32>
    %cst_40 = arith.constant 0.000000e+00 : f32
    %42 = vector.broadcast %cst_40 : f32 to vector<8x256xf32>
    %43 = arith.maximumf %41, %42 : vector<8x256xf32>
    %c0_41 = arith.constant 0 : index
    %c1280_42 = arith.constant 1280 : index
    %44 = vector.load %arg15[%c0_41, %c1280_42] : memref<8x3328xf32, #tpu.memory_space<vmem>>, vector<8x256xf32>
    tpu.vector_store %arg15[%c0_41, %c1280_42], %43 {strides = array<i32>} : memref<8x3328xf32, #tpu.memory_space<vmem>>, vector<8x256xf32>,
    %c0_43 = arith.constant 0 : index
    %c1536 = arith.constant 1536 : index
    %45 = vector.load %arg1[%c0_43, %c1536] : memref<8x3712xf32, #tpu.memory_space<vmem>>, vector<8x640xf32>
    %c0_44 = arith.constant 0 : index
    %c0_45 = arith.constant 0 : index
    %46 = vector.load %arg3[%c0_44, %c0_45] : memref<640x256xf32, #tpu.memory_space<vmem>>, vector<640x256xf32>
    %cst_46 = arith.constant dense<0.000000e+00> : vector<8x256xf32>
    %47 = tpu.matmul %45, %46, %cst_46 {dimension_numbers = #tpu.dot_dimension_numbers<[1], [0], [0], [1], [0, 0, 1, 1], [], []>} : vector<8x640xf32>, vector<640x256xf32>, vector<8x256xf32> -> vector<8x256xf32>
    %48 = arith.addf %47, %2 : vector<8x256xf32>
    %cst_47 = arith.constant 0.000000e+00 : f32
    %49 = vector.broadcast %cst_47 : f32 to vector<8x256xf32>
    %50 = arith.maximumf %48, %49 : vector<8x256xf32>
    %c0_48 = arith.constant 0 : index
    %c1536_49 = arith.constant 1536 : index
    %51 = vector.load %arg15[%c0_48, %c1536_49] : memref<8x3328xf32, #tpu.memory_space<vmem>>, vector<8x256xf32>
    tpu.vector_store %arg15[%c0_48, %c1536_49], %50 {strides = array<i32>} : memref<8x3328xf32, #tpu.memory_space<vmem>>, vector<8x256xf32>,
    %c0_50 = arith.constant 0 : index
    %c1792 = arith.constant 1792 : index
    %52 = vector.load %arg1[%c0_50, %c1792] : memref<8x3712xf32, #tpu.memory_space<vmem>>, vector<8x640xf32>
    %c0_51 = arith.constant 0 : index
    %c0_52 = arith.constant 0 : index
    %53 = vector.load %arg3[%c0_51, %c0_52] : memref<640x256xf32, #tpu.memory_space<vmem>>, vector<640x256xf32>
    %cst_53 = arith.constant dense<0.000000e+00> : vector<8x256xf32>
    %54 = tpu.matmul %52, %53, %cst_53 {dimension_numbers = #tpu.dot_dimension_numbers<[1], [0], [0], [1], [0, 0, 1, 1], [], []>} : vector<8x640xf32>, vector<640x256xf32>, vector<8x256xf32> -> vector<8x256xf32>
    %55 = arith.addf %54, %2 : vector<8x256xf32>
    %cst_54 = arith.constant 0.000000e+00 : f32
    %56 = vector.broadcast %cst_54 : f32 to vector<8x256xf32>
    %57 = arith.maximumf %55, %56 : vector<8x256xf32>
    %c0_55 = arith.constant 0 : index
    %c1792_56 = arith.constant 1792 : index
    %58 = vector.load %arg15[%c0_55, %c1792_56] : memref<8x3328xf32, #tpu.memory_space<vmem>>, vector<8x256xf32>
    tpu.vector_store %arg15[%c0_55, %c1792_56], %57 {strides = array<i32>} : memref<8x3328xf32, #tpu.memory_space<vmem>>, vector<8x256xf32>,
    %c0_57 = arith.constant 0 : index
    %c2048 = arith.constant 2048 : index
    %59 = vector.load %arg1[%c0_57, %c2048] : memref<8x3712xf32, #tpu.memory_space<vmem>>, vector<8x640xf32>
    %c0_58 = arith.constant 0 : index
    %c0_59 = arith.constant 0 : index
    %60 = vector.load %arg3[%c0_58, %c0_59] : memref<640x256xf32, #tpu.memory_space<vmem>>, vector<640x256xf32>
    %cst_60 = arith.constant dense<0.000000e+00> : vector<8x256xf32>
    %61 = tpu.matmul %59, %60, %cst_60 {dimension_numbers = #tpu.dot_dimension_numbers<[1], [0], [0], [1], [0, 0, 1, 1], [], []>} : vector<8x640xf32>, vector<640x256xf32>, vector<8x256xf32> -> vector<8x256xf32>
    %62 = arith.addf %61, %2 : vector<8x256xf32>
    %cst_61 = arith.constant 0.000000e+00 : f32
    %63 = vector.broadcast %cst_61 : f32 to vector<8x256xf32>
    %64 = arith.maximumf %62, %63 : vector<8x256xf32>
    %c0_62 = arith.constant 0 : index
    %c2048_63 = arith.constant 2048 : index
    %65 = vector.load %arg15[%c0_62, %c2048_63] : memref<8x3328xf32, #tpu.memory_space<vmem>>, vector<8x256xf32>
    tpu.vector_store %arg15[%c0_62, %c2048_63], %64 {strides = array<i32>} : memref<8x3328xf32, #tpu.memory_space<vmem>>, vector<8x256xf32>,
    %c0_64 = arith.constant 0 : index
    %c2304 = arith.constant 2304 : index
    %66 = vector.load %arg1[%c0_64, %c2304] : memref<8x3712xf32, #tpu.memory_space<vmem>>, vector<8x640xf32>
    %c0_65 = arith.constant 0 : index
    %c0_66 = arith.constant 0 : index
    %67 = vector.load %arg3[%c0_65, %c0_66] : memref<640x256xf32, #tpu.memory_space<vmem>>, vector<640x256xf32>
    %cst_67 = arith.constant dense<0.000000e+00> : vector<8x256xf32>
    %68 = tpu.matmul %66, %67, %cst_67 {dimension_numbers = #tpu.dot_dimension_numbers<[1], [0], [0], [1], [0, 0, 1, 1], [], []>} : vector<8x640xf32>, vector<640x256xf32>, vector<8x256xf32> -> vector<8x256xf32>
    %69 = arith.addf %68, %2 : vector<8x256xf32>
    %cst_68 = arith.constant 0.000000e+00 : f32
    %70 = vector.broadcast %cst_68 : f32 to vector<8x256xf32>
    %71 = arith.maximumf %69, %70 : vector<8x256xf32>
    %c0_69 = arith.constant 0 : index
    %c2304_70 = arith.constant 2304 : index
    %72 = vector.load %arg15[%c0_69, %c2304_70] : memref<8x3328xf32, #tpu.memory_space<vmem>>, vector<8x256xf32>
    tpu.vector_store %arg15[%c0_69, %c2304_70], %71 {strides = array<i32>} : memref<8x3328xf32, #tpu.memory_space<vmem>>, vector<8x256xf32>,
    %c0_71 = arith.constant 0 : index
    %c2560 = arith.constant 2560 : index
    %73 = vector.load %arg1[%c0_71, %c2560] : memref<8x3712xf32, #tpu.memory_space<vmem>>, vector<8x640xf32>
    %c0_72 = arith.constant 0 : index
    %c0_73 = arith.constant 0 : index
    %74 = vector.load %arg3[%c0_72, %c0_73] : memref<640x256xf32, #tpu.memory_space<vmem>>, vector<640x256xf32>
    %cst_74 = arith.constant dense<0.000000e+00> : vector<8x256xf32>
    %75 = tpu.matmul %73, %74, %cst_74 {dimension_numbers = #tpu.dot_dimension_numbers<[1], [0], [0], [1], [0, 0, 1, 1], [], []>} : vector<8x640xf32>, vector<640x256xf32>, vector<8x256xf32> -> vector<8x256xf32>
    %76 = arith.addf %75, %2 : vector<8x256xf32>
    %cst_75 = arith.constant 0.000000e+00 : f32
    %77 = vector.broadcast %cst_75 : f32 to vector<8x256xf32>
    %78 = arith.maximumf %76, %77 : vector<8x256xf32>
    %c0_76 = arith.constant 0 : index
    %c2560_77 = arith.constant 2560 : index
    %79 = vector.load %arg15[%c0_76, %c2560_77] : memref<8x3328xf32, #tpu.memory_space<vmem>>, vector<8x256xf32>
    tpu.vector_store %arg15[%c0_76, %c2560_77], %78 {strides = array<i32>} : memref<8x3328xf32, #tpu.memory_space<vmem>>, vector<8x256xf32>,
    %c0_78 = arith.constant 0 : index
    %c2816 = arith.constant 2816 : index
    %80 = vector.load %arg1[%c0_78, %c2816] : memref<8x3712xf32, #tpu.memory_space<vmem>>, vector<8x640xf32>
    %c0_79 = arith.constant 0 : index
    %c0_80 = arith.constant 0 : index
    %81 = vector.load %arg3[%c0_79, %c0_80] : memref<640x256xf32, #tpu.memory_space<vmem>>, vector<640x256xf32>
    %cst_81 = arith.constant dense<0.000000e+00> : vector<8x256xf32>
    %82 = tpu.matmul %80, %81, %cst_81 {dimension_numbers = #tpu.dot_dimension_numbers<[1], [0], [0], [1], [0, 0, 1, 1], [], []>} : vector<8x640xf32>, vector<640x256xf32>, vector<8x256xf32> -> vector<8x256xf32>
    %83 = arith.addf %82, %2 : vector<8x256xf32>
    %cst_82 = arith.constant 0.000000e+00 : f32
    %84 = vector.broadcast %cst_82 : f32 to vector<8x256xf32>
    %85 = arith.maximumf %83, %84 : vector<8x256xf32>
    %c0_83 = arith.constant 0 : index
    %c2816_84 = arith.constant 2816 : index
    %86 = vector.load %arg15[%c0_83, %c2816_84] : memref<8x3328xf32, #tpu.memory_space<vmem>>, vector<8x256xf32>
    tpu.vector_store %arg15[%c0_83, %c2816_84], %85 {strides = array<i32>} : memref<8x3328xf32, #tpu.memory_space<vmem>>, vector<8x256xf32>,
    %c0_85 = arith.constant 0 : index
    %c3072 = arith.constant 3072 : index
    %87 = vector.load %arg1[%c0_85, %c3072] : memref<8x3712xf32, #tpu.memory_space<vmem>>, vector<8x640xf32>
    %c0_86 = arith.constant 0 : index
    %c0_87 = arith.constant 0 : index
    %88 = vector.load %arg3[%c0_86, %c0_87] : memref<640x256xf32, #tpu.memory_space<vmem>>, vector<640x256xf32>
    %cst_88 = arith.constant dense<0.000000e+00> : vector<8x256xf32>
    %89 = tpu.matmul %87, %88, %cst_88 {dimension_numbers = #tpu.dot_dimension_numbers<[1], [0], [0], [1], [0, 0, 1, 1], [], []>} : vector<8x640xf32>, vector<640x256xf32>, vector<8x256xf32> -> vector<8x256xf32>
    %90 = arith.addf %89, %2 : vector<8x256xf32>
    %cst_89 = arith.constant 0.000000e+00 : f32
    %91 = vector.broadcast %cst_89 : f32 to vector<8x256xf32>
    %92 = arith.maximumf %90, %91 : vector<8x256xf32>
    %c0_90 = arith.constant 0 : index
    %c3072_91 = arith.constant 3072 : index
    %93 = vector.load %arg15[%c0_90, %c3072_91] : memref<8x3328xf32, #tpu.memory_space<vmem>>, vector<8x256xf32>
    tpu.vector_store %arg15[%c0_90, %c3072_91], %92 {strides = array<i32>} : memref<8x3328xf32, #tpu.memory_space<vmem>>, vector<8x256xf32>,
    %c0_92 = arith.constant 0 : index
    %c0_93 = arith.constant 0 : index
    %94 = vector.load %arg6[%c0_92, %c0_93] : memref<1x256xf32, #tpu.memory_space<vmem>>, vector<1x256xf32>
    %95 = vector.shape_cast %94 : vector<1x256xf32> to vector<1x256xf32>
    %96 = vector.broadcast %95 : vector<1x256xf32> to vector<8x256xf32>
    %c0_94 = arith.constant 0 : index
    %c0_95 = arith.constant 0 : index
    %97 = vector.load %arg15[%c0_94, %c0_95] : memref<8x3328xf32, #tpu.memory_space<vmem>>, vector<8x1280xf32>
    %c0_96 = arith.constant 0 : index
    %c0_97 = arith.constant 0 : index
    %98 = vector.load %arg5[%c0_96, %c0_97] : memref<1280x256xf32, #tpu.memory_space<vmem>>, vector<1280x256xf32>
    %cst_98 = arith.constant dense<0.000000e+00> : vector<8x256xf32>
    %99 = tpu.matmul %97, %98, %cst_98 {dimension_numbers = #tpu.dot_dimension_numbers<[1], [0], [0], [1], [0, 0, 1, 1], [], []>} : vector<8x1280xf32>, vector<1280x256xf32>, vector<8x256xf32> -> vector<8x256xf32>
    %100 = arith.addf %99, %96 : vector<8x256xf32>
    %cst_99 = arith.constant 0.000000e+00 : f32
    %101 = vector.broadcast %cst_99 : f32 to vector<8x256xf32>
    %102 = arith.maximumf %100, %101 : vector<8x256xf32>
    %c0_100 = arith.constant 0 : index
    %c0_101 = arith.constant 0 : index
    %103 = vector.load %arg16[%c0_100, %c0_101] : memref<8x1280xf32, #tpu.memory_space<vmem>>, vector<8x256xf32>
    tpu.vector_store %arg16[%c0_100, %c0_101], %102 {strides = array<i32>} : memref<8x1280xf32, #tpu.memory_space<vmem>>, vector<8x256xf32>,
    %c0_102 = arith.constant 0 : index
    %c512_103 = arith.constant 512 : index
    %104 = vector.load %arg15[%c0_102, %c512_103] : memref<8x3328xf32, #tpu.memory_space<vmem>>, vector<8x1280xf32>
    %c0_104 = arith.constant 0 : index
    %c0_105 = arith.constant 0 : index
    %105 = vector.load %arg5[%c0_104, %c0_105] : memref<1280x256xf32, #tpu.memory_space<vmem>>, vector<1280x256xf32>
    %cst_106 = arith.constant dense<0.000000e+00> : vector<8x256xf32>
    %106 = tpu.matmul %104, %105, %cst_106 {dimension_numbers = #tpu.dot_dimension_numbers<[1], [0], [0], [1], [0, 0, 1, 1], [], []>} : vector<8x1280xf32>, vector<1280x256xf32>, vector<8x256xf32> -> vector<8x256xf32>
    %107 = arith.addf %106, %96 : vector<8x256xf32>
    %cst_107 = arith.constant 0.000000e+00 : f32
    %108 = vector.broadcast %cst_107 : f32 to vector<8x256xf32>
    %109 = arith.maximumf %107, %108 : vector<8x256xf32>
    %c0_108 = arith.constant 0 : index
    %c256_109 = arith.constant 256 : index
    %110 = vector.load %arg16[%c0_108, %c256_109] : memref<8x1280xf32, #tpu.memory_space<vmem>>, vector<8x256xf32>
    tpu.vector_store %arg16[%c0_108, %c256_109], %109 {strides = array<i32>} : memref<8x1280xf32, #tpu.memory_space<vmem>>, vector<8x256xf32>,
    %c0_110 = arith.constant 0 : index
    %c1024_111 = arith.constant 1024 : index
    %111 = vector.load %arg15[%c0_110, %c1024_111] : memref<8x3328xf32, #tpu.memory_space<vmem>>, vector<8x1280xf32>
    %c0_112 = arith.constant 0 : index
    %c0_113 = arith.constant 0 : index
    %112 = vector.load %arg5[%c0_112, %c0_113] : memref<1280x256xf32, #tpu.memory_space<vmem>>, vector<1280x256xf32>
    %cst_114 = arith.constant dense<0.000000e+00> : vector<8x256xf32>
    %113 = tpu.matmul %111, %112, %cst_114 {dimension_numbers = #tpu.dot_dimension_numbers<[1], [0], [0], [1], [0, 0, 1, 1], [], []>} : vector<8x1280xf32>, vector<1280x256xf32>, vector<8x256xf32> -> vector<8x256xf32>
    %114 = arith.addf %113, %96 : vector<8x256xf32>
    %cst_115 = arith.constant 0.000000e+00 : f32
    %115 = vector.broadcast %cst_115 : f32 to vector<8x256xf32>
    %116 = arith.maximumf %114, %115 : vector<8x256xf32>
    %c0_116 = arith.constant 0 : index
    %c512_117 = arith.constant 512 : index
    %117 = vector.load %arg16[%c0_116, %c512_117] : memref<8x1280xf32, #tpu.memory_space<vmem>>, vector<8x256xf32>
    tpu.vector_store %arg16[%c0_116, %c512_117], %116 {strides = array<i32>} : memref<8x1280xf32, #tpu.memory_space<vmem>>, vector<8x256xf32>,
    %c0_118 = arith.constant 0 : index
    %c1536_119 = arith.constant 1536 : index
    %118 = vector.load %arg15[%c0_118, %c1536_119] : memref<8x3328xf32, #tpu.memory_space<vmem>>, vector<8x1280xf32>
    %c0_120 = arith.constant 0 : index
    %c0_121 = arith.constant 0 : index
    %119 = vector.load %arg5[%c0_120, %c0_121] : memref<1280x256xf32, #tpu.memory_space<vmem>>, vector<1280x256xf32>
    %cst_122 = arith.constant dense<0.000000e+00> : vector<8x256xf32>
    %120 = tpu.matmul %118, %119, %cst_122 {dimension_numbers = #tpu.dot_dimension_numbers<[1], [0], [0], [1], [0, 0, 1, 1], [], []>} : vector<8x1280xf32>, vector<1280x256xf32>, vector<8x256xf32> -> vector<8x256xf32>
    %121 = arith.addf %120, %96 : vector<8x256xf32>
    %cst_123 = arith.constant 0.000000e+00 : f32
    %122 = vector.broadcast %cst_123 : f32 to vector<8x256xf32>
    %123 = arith.maximumf %121, %122 : vector<8x256xf32>
    %c0_124 = arith.constant 0 : index
    %c768_125 = arith.constant 768 : index
    %124 = vector.load %arg16[%c0_124, %c768_125] : memref<8x1280xf32, #tpu.memory_space<vmem>>, vector<8x256xf32>
    tpu.vector_store %arg16[%c0_124, %c768_125], %123 {strides = array<i32>} : memref<8x1280xf32, #tpu.memory_space<vmem>>, vector<8x256xf32>,
    %c0_126 = arith.constant 0 : index
    %c2048_127 = arith.constant 2048 : index
    %125 = vector.load %arg15[%c0_126, %c2048_127] : memref<8x3328xf32, #tpu.memory_space<vmem>>, vector<8x1280xf32>
    %c0_128 = arith.constant 0 : index
    %c0_129 = arith.constant 0 : index
    %126 = vector.load %arg5[%c0_128, %c0_129] : memref<1280x256xf32, #tpu.memory_space<vmem>>, vector<1280x256xf32>
    %cst_130 = arith.constant dense<0.000000e+00> : vector<8x256xf32>
    %127 = tpu.matmul %125, %126, %cst_130 {dimension_numbers = #tpu.dot_dimension_numbers<[1], [0], [0], [1], [0, 0, 1, 1], [], []>} : vector<8x1280xf32>, vector<1280x256xf32>, vector<8x256xf32> -> vector<8x256xf32>
    %128 = arith.addf %127, %96 : vector<8x256xf32>
    %cst_131 = arith.constant 0.000000e+00 : f32
    %129 = vector.broadcast %cst_131 : f32 to vector<8x256xf32>
    %130 = arith.maximumf %128, %129 : vector<8x256xf32>
    %c0_132 = arith.constant 0 : index
    %c1024_133 = arith.constant 1024 : index
    %131 = vector.load %arg16[%c0_132, %c1024_133] : memref<8x1280xf32, #tpu.memory_space<vmem>>, vector<8x256xf32>
    tpu.vector_store %arg16[%c0_132, %c1024_133], %130 {strides = array<i32>} : memref<8x1280xf32, #tpu.memory_space<vmem>>, vector<8x256xf32>,
    %c0_134 = arith.constant 0 : index
    %c0_135 = arith.constant 0 : index
    %132 = vector.load %arg8[%c0_134, %c0_135] : memref<1x64xf32, #tpu.memory_space<vmem>>, vector<1x64xf32>
    %133 = vector.shape_cast %132 : vector<1x64xf32> to vector<1x64xf32>
    %134 = vector.broadcast %133 : vector<1x64xf32> to vector<8x64xf32>
    %c0_136 = arith.constant 0 : index
    %c0_137 = arith.constant 0 : index
    %135 = vector.load %arg2[%c0_136, %c0_137] : memref<8x1xf32, #tpu.memory_space<vmem>>, vector<8x1xf32>
    %c0_138 = arith.constant 0 : index
    %c0_139 = arith.constant 0 : index
    %136 = vector.load %arg10[%c0_138, %c0_139] : memref<1x128xf32, #tpu.memory_space<vmem>>, vector<1x128xf32>
    %137 = vector.broadcast %135 : vector<8x1xf32> to vector<8x128xf32>
    %138 = vector.broadcast %136 : vector<1x128xf32> to vector<8x128xf32>
    %139 = arith.mulf %137, %138 : vector<8x128xf32>
    %c0_140 = arith.constant 0 : index
    %c0_141 = arith.constant 0 : index
    %140 = vector.load %arg11[%c0_140, %c0_141] : memref<1x128xf32, #tpu.memory_space<vmem>>, vector<1x128xf32>
    %141 = vector.broadcast %140 : vector<1x128xf32> to vector<8x128xf32>
    %142 = arith.addf %139, %141 : vector<8x128xf32>
    %c0_142 = arith.constant 0 : index
    %c0_143 = arith.constant 0 : index
    %143 = vector.load %arg16[%c0_142, %c0_143] : memref<8x1280xf32, #tpu.memory_space<vmem>>, vector<8x1280xf32>
    %c0_144 = arith.constant 0 : index
    %c0_145 = arith.constant 0 : index
    %144 = vector.load %arg7[%c0_144, %c0_145] : memref<1280x64xf32, #tpu.memory_space<vmem>>, vector<1280x64xf32>
    %cst_146 = arith.constant dense<0.000000e+00> : vector<8x64xf32>
    %145 = tpu.matmul %143, %144, %cst_146 {dimension_numbers = #tpu.dot_dimension_numbers<[1], [0], [0], [1], [0, 0, 1, 1], [], []>} : vector<8x1280xf32>, vector<1280x64xf32>, vector<8x64xf32> -> vector<8x64xf32>
    %146 = arith.addf %145, %134 : vector<8x64xf32>
    %cst_147 = arith.constant 0.000000e+00 : f32
    %147 = vector.broadcast %cst_147 : f32 to vector<8x64xf32>
    %148 = arith.maximumf %146, %147 : vector<8x64xf32>
    %c0_148 = arith.constant 0 : index
    %c0_149 = arith.constant 0 : index
    %c0_150 = arith.constant 0 : index
    %149 = vector.load %arg9[%c0_148, %c0_149, %c0_150] : memref<1x64x128xf32, #tpu.memory_space<vmem>>, vector<1x64x128xf32>
    %150 = vector.shape_cast %149 : vector<1x64x128xf32> to vector<64x128xf32>
    %cst_151 = arith.constant dense<0.000000e+00> : vector<8x128xf32>
    %151 = tpu.matmul %148, %150, %cst_151 {dimension_numbers = #tpu.dot_dimension_numbers<[1], [0], [0], [1], [0, 0, 1, 1], [], []>} : vector<8x64xf32>, vector<64x128xf32>, vector<8x128xf32> -> vector<8x128xf32>
    %152 = arith.addf %142, %151 : vector<8x128xf32>
    %cst_152 = arith.constant 0.000000e+00 : f32
    %153 = vector.broadcast %cst_152 : f32 to vector<8x128xf32>
    %154 = arith.maximumf %152, %153 : vector<8x128xf32>
    %c0_153 = arith.constant 0 : index
    %c0_154 = arith.constant 0 : index
    %155 = vector.load %arg12[%c0_153, %c0_154] : memref<128x3xf32, #tpu.memory_space<vmem>>, vector<128x3xf32>
    %cst_155 = arith.constant dense<0.000000e+00> : vector<8x3xf32>
    %156 = tpu.matmul %154, %155, %cst_155 {dimension_numbers = #tpu.dot_dimension_numbers<[1], [0], [0], [1], [0, 0, 1, 1], [], []>} : vector<8x128xf32>, vector<128x3xf32>, vector<8x3xf32> -> vector<8x3xf32>
    %c0_156 = arith.constant 0 : index
    %c0_157 = arith.constant 0 : index
    %157 = vector.load %arg13[%c0_156, %c0_157] : memref<1x3xf32, #tpu.memory_space<vmem>>, vector<1x3xf32>
    %158 = vector.broadcast %157 : vector<1x3xf32> to vector<8x3xf32>
    %159 = arith.addf %156, %158 : vector<8x3xf32>
    %c0_158 = arith.constant 0 : index
    %c0_159 = arith.constant 0 : index
    %160 = vector.load %arg14[%c0_158, %c0_159] : memref<8x3xf32, #tpu.memory_space<vmem>>, vector<8x3xf32>
    tpu.vector_store %arg14[%c0_158, %c0_159], %159 {strides = array<i32>} : memref<8x3xf32, #tpu.memory_space<vmem>>, vector<8x3xf32>,
    return
  }
  func.func @transform_0(%arg0: i32) -> (i32, i32) {
    %c0_i32 = arith.constant 0 : i32
    %c0_i32_0 = arith.constant 0 : i32
    return %arg0, %c0_i32 : i32, i32
  }
  func.func @transform_1(%arg0: i32) -> (i32, i32) {
    %c0_i32 = arith.constant 0 : i32
    %c0_i32_0 = arith.constant 0 : i32
    return %arg0, %c0_i32 : i32, i32
  }
  func.func @transform_2(%arg0: i32) -> (i32, i32) {
    %c0_i32 = arith.constant 0 : i32
    %c0_i32_0 = arith.constant 0 : i32
    %c0_i32_1 = arith.constant 0 : i32
    return %c0_i32, %c0_i32_0 : i32, i32
  }
  func.func @transform_3(%arg0: i32) -> (i32, i32) {
    %c0_i32 = arith.constant 0 : i32
    %c0_i32_0 = arith.constant 0 : i32
    %c0_i32_1 = arith.constant 0 : i32
    return %c0_i32, %c0_i32_0 : i32, i32
  }
  func.func @transform_4(%arg0: i32) -> (i32, i32) {
    %c0_i32 = arith.constant 0 : i32
    %c0_i32_0 = arith.constant 0 : i32
    %c0_i32_1 = arith.constant 0 : i32
    return %c0_i32, %c0_i32_0 : i32, i32
  }
  func.func @transform_5(%arg0: i32) -> (i32, i32) {
    %c0_i32 = arith.constant 0 : i32
    %c0_i32_0 = arith.constant 0 : i32
    %c0_i32_1 = arith.constant 0 : i32
    return %c0_i32, %c0_i32_0 : i32, i32
  }
  func.func @transform_6(%arg0: i32) -> (i32, i32) {
    %c0_i32 = arith.constant 0 : i32
    %c0_i32_0 = arith.constant 0 : i32
    %c0_i32_1 = arith.constant 0 : i32
    return %c0_i32, %c0_i32_0 : i32, i32
  }
  func.func @transform_7(%arg0: i32) -> (i32, i32) {
    %c0_i32 = arith.constant 0 : i32
    %c0_i32_0 = arith.constant 0 : i32
    %c0_i32_1 = arith.constant 0 : i32
    return %c0_i32, %c0_i32_0 : i32, i32
  }
  func.func @transform_8(%arg0: i32) -> (i32, i32, i32) {
    %c0_i32 = arith.constant 0 : i32
    %c0_i32_0 = arith.constant 0 : i32
    %c0_i32_1 = arith.constant 0 : i32
    %c0_i32_2 = arith.constant 0 : i32
    return %c0_i32, %c0_i32_0, %c0_i32_1 : i32, i32, i32
  }
  func.func @transform_9(%arg0: i32) -> (i32, i32) {
    %c0_i32 = arith.constant 0 : i32
    %c0_i32_0 = arith.constant 0 : i32
    %c0_i32_1 = arith.constant 0 : i32
    return %c0_i32, %c0_i32_0 : i32, i32
  }
  func.func @transform_10(%arg0: i32) -> (i32, i32) {
    %c0_i32 = arith.constant 0 : i32
    %c0_i32_0 = arith.constant 0 : i32
    %c0_i32_1 = arith.constant 0 : i32
    return %c0_i32, %c0_i32_0 : i32, i32
  }
  func.func @transform_11(%arg0: i32) -> (i32, i32) {
    %c0_i32 = arith.constant 0 : i32
    %c0_i32_0 = arith.constant 0 : i32
    %c0_i32_1 = arith.constant 0 : i32
    return %c0_i32, %c0_i32_0 : i32, i32
  }
  func.func @transform_12(%arg0: i32) -> (i32, i32) {
    %c0_i32 = arith.constant 0 : i32
    %c0_i32_0 = arith.constant 0 : i32
    %c0_i32_1 = arith.constant 0 : i32
    return %c0_i32, %c0_i32_0 : i32, i32
  }
  func.func @transform_13(%arg0: i32) -> (i32, i32) {
    %c0_i32 = arith.constant 0 : i32
    %c0_i32_0 = arith.constant 0 : i32
    return %arg0, %c0_i32 : i32, i32
  }
}

</mosaic_0001>

<llo_original>
// kernel: tpu_custom_call.1
$region0: #{tpu_custom_call.1}
  #allocation0 [shape = 'u32[]', space=smem, size = 0x4, offset = 0x4, fixed_abs, tag = 'smem constant byte address 0x4 - core index']
  #allocation1 [shape = 'u32[144,128]{1,0:T(1,128)}', space=vmem, size = 0x12000, scoped, tag = 'internal scratch']
  #allocation2 [shape = 'f32[8,3328]{1,0:T(8,128)}', space=vmem, size = 0x1a000, scoped, tag = 'scratch operand']
  #allocation3 [shape = 'f32[8,1280]{1,0:T(8,128)}', space=vmem, size = 0xa000, scoped, tag = 'scratch operand']
  %s0 = inlined_call_operand.hbm [shape: f32[8,3712], index: 0, kind: input, shape index: {}]
  %s1 = inlined_call_operand.hbm [shape: f32[8,1], index: 1, kind: input, shape index: {}]
  %s2 = inlined_call_operand.hbm [shape: f32[640,256], index: 2, kind: input, shape index: {}]
  %s3 = inlined_call_operand.hbm [shape: f32[1,256], index: 3, kind: input, shape index: {}]
  %s4 = inlined_call_operand.hbm [shape: f32[1280,256], index: 4, kind: input, shape index: {}]
  %s5 = inlined_call_operand.hbm [shape: f32[1,256], index: 5, kind: input, shape index: {}]
  %s6 = inlined_call_operand.hbm [shape: f32[1280,64], index: 6, kind: input, shape index: {}]
  %s7 = inlined_call_operand.hbm [shape: f32[1,64], index: 7, kind: input, shape index: {}]
  %s8 = inlined_call_operand.hbm [shape: f32[1,64,128], index: 8, kind: input, shape index: {}]
  %s9 = inlined_call_operand.hbm [shape: f32[1,128], index: 9, kind: input, shape index: {}]
  %s10 = inlined_call_operand.hbm [shape: f32[1,128], index: 10, kind: input, shape index: {}]
  %s11 = inlined_call_operand.hbm [shape: f32[128,3], index: 11, kind: input, shape index: {}]
  %s12 = inlined_call_operand.hbm [shape: f32[1,3], index: 12, kind: input, shape index: {}]
  %s13 = inlined_call_operand.hbm [shape: f32[8,3], index: 13, kind: output, shape index: {}]
  %s14 = sld [smem:[#allocation0]]
  $region114: #{tpu_custom_call.1} parent=0
    _
  %s16 = ssub.s32 1, %s14
  %s17 = scalar_select 0, %s16, %s14
  $region1: #{tpu_custom_call.1} parent=0
    #allocation4 [shape = 'u8[118784]{0}', space=vmem, size = 0x1d000, scoped, tag = 'input window, operand 0, single buffered']
    #allocation5 [shape = 's32[1]{0}', space=sflag, size = 0x4, scoped, tag = 'scoped memory for tpu_custom_call.1']
    #allocation6 [shape = 's32[1]{0}', space=sflag, size = 0x4, scoped, tag = 'scoped memory for tpu_custom_call.1']
    #allocation7 [shape = 'u8[4096]{0}', space=vmem, size = 0x1000, scoped, tag = 'input window, operand 1, single buffered']
    #allocation8 [shape = 's32[1]{0}', space=sflag, size = 0x4, scoped, tag = 'scoped memory for tpu_custom_call.1']
    #allocation9 [shape = 'u8[655360]{0}', space=vmem, size = 0xa0000, scoped, tag = 'input window, operand 2, single buffered']
    #allocation10 [shape = 'u8[1024]{0}', space=vmem, size = 0x400, scoped, tag = 'input window, operand 3, single buffered']
    #allocation11 [shape = 's32[1]{0}', space=sflag, size = 0x4, scoped, tag = 'scoped memory for tpu_custom_call.1']
    #allocation12 [shape = 'u8[1310720]{0}', space=vmem, size = 0x140000, scoped, tag = 'input window, operand 4, single buffered']
    #allocation13 [shape = 'u8[1024]{0}', space=vmem, size = 0x400, scoped, tag = 'input window, operand 5, single buffered']
    #allocation14 [shape = 's32[1]{0}', space=sflag, size = 0x4, scoped, tag = 'scoped memory for tpu_custom_call.1']
    #allocation15 [shape = 'u8[655360]{0}', space=vmem, size = 0xa0000, scoped, tag = 'input window, operand 6, single buffered']
    #allocation16 [shape = 'u8[512]{0}', space=vmem, size = 0x400, scoped, tag = 'input window, operand 7, single buffered']
    #allocation17 [shape = 's32[1]{0}', space=sflag, size = 0x4, scoped, tag = 'scoped memory for tpu_custom_call.1']
    #allocation18 [shape = 'u8[32768]{0}', space=vmem, size = 0x8000, scoped, tag = 'input window, operand 8, single buffered']
    #allocation19 [shape = 'u8[512]{0}', space=vmem, size = 0x400, scoped, tag = 'input window, operand 9, single buffered']
    #allocation20 [shape = 's32[1]{0}', space=sflag, size = 0x4, scoped, tag = 'scoped memory for tpu_custom_call.1']
    #allocation21 [shape = 'u8[512]{0}', space=vmem, size = 0x400, scoped, tag = 'input window, operand 10, single buffered']
    #allocation22 [shape = 'u8[65536]{0}', space=vmem, size = 0x10000, scoped, tag = 'input window, operand 11, single buffered']
    #allocation23 [shape = 's32[1]{0}', space=sflag, size = 0x4, scoped, tag = 'scoped memory for tpu_custom_call.1']
    #allocation24 [shape = 'u8[512]{0}', space=vmem, size = 0x400, scoped, tag = 'input window, operand 12, single buffered']
    #allocation25 [shape = 'u8[4096]{0}', space=vmem, size = 0x1000, scoped, tag = 'output window, operand 0, single buffered']
    %18 = vsyncpa [#allocation5], 0
    %19 = vsyncpa [#allocation8], 0
    %20 = vsyncpa [#allocation11], 0
    %21 = vsyncpa [#allocation14], 0
    %22 = vsyncpa [#allocation17], 0
    %23 = vsyncpa [#allocation20], 0
    %24 = vsyncpa [#allocation23], 0
    %25 = vsyncpa [#allocation6], 0
    // Predicated region
    $region2: #{tpu_custom_call.1} parent=1 // pred_check
      _
    $region3: #{tpu_custom_call.1} parent=1 // pred_check_branch
      %27 = sbr.rel (0) target = $region5
    $region4: #{tpu_custom_call.1} parent=1 // pred_region
      %s29 = ssub.s32 3712, 3712
      %30 = vsyncadd [#allocation5], %s29
      %s32 = sshll.u32 [#allocation4], 4
      %s33 = int_to_ptr.vmem [resolvable:$true] %s32
      %35 = dma.hbm_to_vmem [thread:$0]  %s0, 3712, %s33, [#allocation5]
    $region5: #{tpu_custom_call.1} parent=1 // pred_fallthru
      _
    // Predicated region
    $region6: #{tpu_custom_call.1} parent=1 // pred_check
      _
    $region7: #{tpu_custom_call.1} parent=1 // pred_check_branch
      %37 = sbr.rel (0) target = $region9
    $region8: #{tpu_custom_call.1} parent=1 // pred_region
      %s39 = ssub.s32 128, 128
      %40 = vsyncadd [#allocation8], %s39
      %s42 = sshll.u32 [#allocation7], 4
      %s43 = int_to_ptr.vmem [resolvable:$true] %s42
      %45 = dma.hbm_to_vmem [thread:$0]  %s1, 128, %s43, [#allocation8]
    $region9: #{tpu_custom_call.1} parent=1 // pred_fallthru
      _
    // Predicated region
    $region10: #{tpu_custom_call.1} parent=1 // pred_check
      _
    $region11: #{tpu_custom_call.1} parent=1 // pred_check_branch
      %47 = sbr.rel (0) target = $region13
    $region12: #{tpu_custom_call.1} parent=1 // pred_region
      %s49 = ssub.s32 20480, 20480
      %50 = vsyncadd [#allocation8], %s49
      %s51 = sshll.u32 [#allocation9], 4
      %s52 = int_to_ptr.vmem [resolvable:$true] %s51
      %57 = dma.hbm_to_vmem [thread:$0]  %s2, 20480, %s52, [#allocation8], 256, 256, 16
    $region13: #{tpu_custom_call.1} parent=1 // pred_fallthru
      _
    // Predicated region
    $region14: #{tpu_custom_call.1} parent=1 // pred_check
      _
    $region15: #{tpu_custom_call.1} parent=1 // pred_check_branch
      %59 = sbr.rel (0) target = $region17
    $region16: #{tpu_custom_call.1} parent=1 // pred_region
      %s61 = ssub.s32 32, 32
      %62 = vsyncadd [#allocation11], %s61
      %s64 = sshll.u32 [#allocation10], 4
      %s65 = int_to_ptr.vmem [resolvable:$true] %s64
      %67 = dma.hbm_to_vmem [thread:$0]  %s3, 32, %s65, [#allocation11]
    $region17: #{tpu_custom_call.1} parent=1 // pred_fallthru
      _
    // Predicated region
    $region18: #{tpu_custom_call.1} parent=1 // pred_check
      _
    $region19: #{tpu_custom_call.1} parent=1 // pred_check_branch
      %69 = sbr.rel (0) target = $region21
    $region20: #{tpu_custom_call.1} parent=1 // pred_region
      %s71 = ssub.s32 40960, 40960
      %72 = vsyncadd [#allocation11], %s71
      %s73 = sshll.u32 [#allocation12], 4
      %s74 = int_to_ptr.vmem [resolvable:$true] %s73
      %79 = dma.hbm_to_vmem [thread:$0]  %s4, 40960, %s74, [#allocation11], 256, 256, 16
    $region21: #{tpu_custom_call.1} parent=1 // pred_fallthru
      _
    // Predicated region
    $region22: #{tpu_custom_call.1} parent=1 // pred_check
      _
    $region23: #{tpu_custom_call.1} parent=1 // pred_check_branch
      %81 = sbr.rel (0) target = $region25
    $region24: #{tpu_custom_call.1} parent=1 // pred_region
      %s83 = ssub.s32 32, 32
      %84 = vsyncadd [#allocation14], %s83
      %s86 = sshll.u32 [#allocation13], 4
      %s87 = int_to_ptr.vmem [resolvable:$true] %s86
      %89 = dma.hbm_to_vmem [thread:$0]  %s5, 32, %s87, [#allocation14]
    $region25: #{tpu_custom_call.1} parent=1 // pred_fallthru
      _
    // Predicated region
    $region26: #{tpu_custom_call.1} parent=1 // pred_check
      _
    $region27: #{tpu_custom_call.1} parent=1 // pred_check_branch
      %91 = sbr.rel (0) target = $region29
    $region28: #{tpu_custom_call.1} parent=1 // pred_region
      %s93 = ssub.s32 20480, 20480
      %94 = vsyncadd [#allocation14], %s93
      %s95 = sshll.u32 [#allocation15], 4
      %s96 = int_to_ptr.vmem [resolvable:$true] %s95
      %101 = dma.hbm_to_vmem [thread:$0]  %s6, 20480, %s96, [#allocation14], 128, 128, 8
    $region29: #{tpu_custom_call.1} parent=1 // pred_fallthru
      _
    // Predicated region
    $region30: #{tpu_custom_call.1} parent=1 // pred_check
      _
    $region31: #{tpu_custom_call.1} parent=1 // pred_check_branch
      %103 = sbr.rel (0) target = $region33
    $region32: #{tpu_custom_call.1} parent=1 // pred_region
      %s105 = ssub.s32 16, 16
      %106 = vsyncadd [#allocation17], %s105
      %s108 = sshll.u32 [#allocation16], 4
      %s109 = int_to_ptr.vmem [resolvable:$true] %s108
      %111 = dma.hbm_to_vmem [thread:$0]  %s7, 16, %s109, [#allocation17]
    $region33: #{tpu_custom_call.1} parent=1 // pred_fallthru
      _
    // Predicated region
    $region34: #{tpu_custom_call.1} parent=1 // pred_check
      _
    $region35: #{tpu_custom_call.1} parent=1 // pred_check_branch
      %113 = sbr.rel (0) target = $region37
    $region36: #{tpu_custom_call.1} parent=1 // pred_region
      %s115 = ssub.s32 1024, 1024
      %116 = vsyncadd [#allocation17], %s115
      %s117 = sshll.u32 [#allocation18], 4
      %s118 = int_to_ptr.vmem [resolvable:$true] %s117
      %123 = dma.hbm_to_vmem [thread:$0]  %s8, 1024, %s118, [#allocation17], 128, 128, 8
    $region37: #{tpu_custom_call.1} parent=1 // pred_fallthru
      _
    // Predicated region
    $region38: #{tpu_custom_call.1} parent=1 // pred_check
      _
    $region39: #{tpu_custom_call.1} parent=1 // pred_check_branch
      %125 = sbr.rel (0) target = $region41
    $region40: #{tpu_custom_call.1} parent=1 // pred_region
      %s127 = ssub.s32 16, 16
      %128 = vsyncadd [#allocation20], %s127
      %s130 = sshll.u32 [#allocation19], 4
      %s131 = int_to_ptr.vmem [resolvable:$true] %s130
      %133 = dma.hbm_to_vmem [thread:$0]  %s9, 16, %s131, [#allocation20]
    $region41: #{tpu_custom_call.1} parent=1 // pred_fallthru
      _
    // Predicated region
    $region42: #{tpu_custom_call.1} parent=1 // pred_check
      _
    $region43: #{tpu_custom_call.1} parent=1 // pred_check_branch
      %135 = sbr.rel (0) target = $region45
    $region44: #{tpu_custom_call.1} parent=1 // pred_region
      %s137 = ssub.s32 16, 16
      %138 = vsyncadd [#allocation20], %s137
      %s140 = sshll.u32 [#allocation21], 4
      %s141 = int_to_ptr.vmem [resolvable:$true] %s140
      %143 = dma.hbm_to_vmem [thread:$0]  %s10, 16, %s141, [#allocation20]
    $region45: #{tpu_custom_call.1} parent=1 // pred_fallthru
      _
    // Predicated region
    $region46: #{tpu_custom_call.1} parent=1 // pred_check
      _
    $region47: #{tpu_custom_call.1} parent=1 // pred_check_branch
      %145 = sbr.rel (0) target = $region49
    $region48: #{tpu_custom_call.1} parent=1 // pred_region
      %s147 = ssub.s32 2048, 2048
      %148 = vsyncadd [#allocation23], %s147
      %s149 = sshll.u32 [#allocation22], 4
      %s150 = int_to_ptr.vmem [resolvable:$true] %s149
      %155 = dma.hbm_to_vmem [thread:$0]  %s11, 2048, %s150, [#allocation23], 128, 128, 8
    $region49: #{tpu_custom_call.1} parent=1 // pred_fallthru
      _
    // Predicated region
    $region50: #{tpu_custom_call.1} parent=1 // pred_check
      _
    $region51: #{tpu_custom_call.1} parent=1 // pred_check_branch
      %157 = sbr.rel (0) target = $region53
    $region52: #{tpu_custom_call.1} parent=1 // pred_region
      %s159 = ssub.s32 16, 16
      %160 = vsyncadd [#allocation23], %s159
      %s162 = sshll.u32 [#allocation24], 4
      %s163 = int_to_ptr.vmem [resolvable:$true] %s162
      %165 = dma.hbm_to_vmem [thread:$0]  %s12, 16, %s163, [#allocation23]
    $region53: #{tpu_custom_call.1} parent=1 // pred_fallthru
      _
    // Predicated region
    $region54: #{tpu_custom_call.1} parent=1 // pred_check
      _
    $region55: #{tpu_custom_call.1} parent=1 // pred_check_branch
      %167 = sbr.rel (0) target = $region57
    $region56: #{tpu_custom_call.1} parent=1 // pred_region
      %168 = dma.done [#allocation5], 3712
    $region57: #{tpu_custom_call.1} parent=1 // pred_fallthru
      _
    // Predicated region
    $region58: #{tpu_custom_call.1} parent=1 // pred_check
      _
    $region59: #{tpu_custom_call.1} parent=1 // pred_check_branch
      %170 = sbr.rel (0) target = $region61
    $region60: #{tpu_custom_call.1} parent=1 // pred_region
      %171 = dma.done [#allocation8], 128
    $region61: #{tpu_custom_call.1} parent=1 // pred_fallthru
      _
    // Predicated region
    $region62: #{tpu_custom_call.1} parent=1 // pred_check
      _
    $region63: #{tpu_custom_call.1} parent=1 // pred_check_branch
      %173 = sbr.rel (0) target = $region65
    $region64: #{tpu_custom_call.1} parent=1 // pred_region
      %174 = dma.done [#allocation8], 20480
    $region65: #{tpu_custom_call.1} parent=1 // pred_fallthru
      _
    // Predicated region
    $region66: #{tpu_custom_call.1} parent=1 // pred_check
      _
    $region67: #{tpu_custom_call.1} parent=1 // pred_check_branch
      %176 = sbr.rel (0) target = $region69
    $region68: #{tpu_custom_call.1} parent=1 // pred_region
      %177 = dma.done [#allocation11], 32
    $region69: #{tpu_custom_call.1} parent=1 // pred_fallthru
      _
    // Predicated region
    $region70: #{tpu_custom_call.1} parent=1 // pred_check
      _
    $region71: #{tpu_custom_call.1} parent=1 // pred_check_branch
      %179 = sbr.rel (0) target = $region73
    $region72: #{tpu_custom_call.1} parent=1 // pred_region
      %180 = dma.done [#allocation11], 40960
    $region73: #{tpu_custom_call.1} parent=1 // pred_fallthru
      _
    // Predicated region
    $region74: #{tpu_custom_call.1} parent=1 // pred_check
      _
    $region75: #{tpu_custom_call.1} parent=1 // pred_check_branch
      %182 = sbr.rel (0) target = $region77
    $region76: #{tpu_custom_call.1} parent=1 // pred_region
      %183 = dma.done [#allocation14], 32
    $region77: #{tpu_custom_call.1} parent=1 // pred_fallthru
      _
    // Predicated region
    $region78: #{tpu_custom_call.1} parent=1 // pred_check
      _
    $region79: #{tpu_custom_call.1} parent=1 // pred_check_branch
      %185 = sbr.rel (0) target = $region81
    $region80: #{tpu_custom_call.1} parent=1 // pred_region
      %186 = dma.done [#allocation14], 20480
    $region81: #{tpu_custom_call.1} parent=1 // pred_fallthru
      _
    // Predicated region
    $region82: #{tpu_custom_call.1} parent=1 // pred_check
      _
    $region83: #{tpu_custom_call.1} parent=1 // pred_check_branch
      %188 = sbr.rel (0) target = $region85
    $region84: #{tpu_custom_call.1} parent=1 // pred_region
      %189 = dma.done [#allocation17], 16
    $region85: #{tpu_custom_call.1} parent=1 // pred_fallthru
      _
    // Predicated region
    $region86: #{tpu_custom_call.1} parent=1 // pred_check
      _
    $region87: #{tpu_custom_call.1} parent=1 // pred_check_branch
      %191 = sbr.rel (0) target = $region89
    $region88: #{tpu_custom_call.1} parent=1 // pred_region
      %192 = dma.done [#allocation17], 1024
    $region89: #{tpu_custom_call.1} parent=1 // pred_fallthru
      _
    // Predicated region
    $region90: #{tpu_custom_call.1} parent=1 // pred_check
      _
    $region91: #{tpu_custom_call.1} parent=1 // pred_check_branch
      %194 = sbr.rel (0) target = $region93
    $region92: #{tpu_custom_call.1} parent=1 // pred_region
      %195 = dma.done [#allocation20], 16
    $region93: #{tpu_custom_call.1} parent=1 // pred_fallthru
      _
    // Predicated region
    $region94: #{tpu_custom_call.1} parent=1 // pred_check
      _
    $region95: #{tpu_custom_call.1} parent=1 // pred_check_branch
      %197 = sbr.rel (0) target = $region97
    $region96: #{tpu_custom_call.1} parent=1 // pred_region
      %198 = dma.done [#allocation20], 16
    $region97: #{tpu_custom_call.1} parent=1 // pred_fallthru
      _
    // Predicated region
    $region98: #{tpu_custom_call.1} parent=1 // pred_check
      _
    $region99: #{tpu_custom_call.1} parent=1 // pred_check_branch
      %200 = sbr.rel (0) target = $region101
    $region100: #{tpu_custom_call.1} parent=1 // pred_region
      %201 = dma.done [#allocation23], 2048
    $region101: #{tpu_custom_call.1} parent=1 // pred_fallthru
      _
    // Predicated region
    $region102: #{tpu_custom_call.1} parent=1 // pred_check
      _
    $region103: #{tpu_custom_call.1} parent=1 // pred_check_branch
      %203 = sbr.rel (0) target = $region105
    $region104: #{tpu_custom_call.1} parent=1 // pred_region
      %204 = dma.done [#allocation23], 16
    $region105: #{tpu_custom_call.1} parent=1 // pred_fallthru
      _
    %v205 = vld [vmem:[#allocation10] sm:$0x3]
    %v207 = vlaneseq
    %v208 = vshrl.u32 %v207, 7
    %v209 = vsub.s32 0, %v208
    %v210 = vrot.slane %v205, %v209
    %v211 = vlaneseq
    %v212 = vshrl.u32 %v211, 7
    %v213 = vsub.s32 1, %v212
    %v214 = vrot.slane %v205, %v213
    %v217 = vld [vmem:[#allocation4] sm:$0xff]
    %v218 = vld [vmem:[#allocation4 + $0x8] sm:$0xff]
    %v219 = vld [vmem:[#allocation4 + $0x10] sm:$0xff]
    %v220 = vld [vmem:[#allocation4 + $0x18] sm:$0xff]
    %v221 = vld [vmem:[#allocation4 + $0x20] sm:$0xff]
    %v222 = vld [vmem:[#allocation9] sm:$0xff]
    %v223 = vld [vmem:[#allocation9 + $0x8] sm:$0xff]
    %v224 = vld [vmem:[#allocation9 + $0x10] sm:$0xff]
    %v225 = vld [vmem:[#allocation9 + $0x18] sm:$0xff]
    %v226 = vld [vmem:[#allocation9 + $0x20] sm:$0xff]
    %v227 = vld [vmem:[#allocation9 + $0x28] sm:$0xff]
    %v228 = vld [vmem:[#allocation9 + $0x30] sm:$0xff]
    %v229 = vld [vmem:[#allocation9 + $0x38] sm:$0xff]
    %v230 = vld [vmem:[#allocation9 + $0x40] sm:$0xff]
    %v231 = vld [vmem:[#allocation9 + $0x48] sm:$0xff]
    %v232 = vld [vmem:[#allocation9 + $0x50] sm:$0xff]
    %v233 = vld [vmem:[#allocation9 + $0x58] sm:$0xff]
    %v234 = vld [vmem:[#allocation9 + $0x60] sm:$0xff]
    %v235 = vld [vmem:[#allocation9 + $0x68] sm:$0xff]
    %v236 = vld [vmem:[#allocation9 + $0x70] sm:$0xff]
    %v237 = vld [vmem:[#allocation9 + $0x78] sm:$0xff]
    %v238 = vld [vmem:[#allocation9 + $0x80] sm:$0xff]
    %v239 = vld [vmem:[#allocation9 + $0x88] sm:$0xff]
    %v240 = vld [vmem:[#allocation9 + $0x90] sm:$0xff]
    %v241 = vld [vmem:[#allocation9 + $0x98] sm:$0xff]
    %v242 = vld [vmem:[#allocation9 + $0xa0] sm:$0xff]
    %v243 = vld [vmem:[#allocation9 + $0xa8] sm:$0xff]
    %v244 = vld [vmem:[#allocation9 + $0xb0] sm:$0xff]
    %v245 = vld [vmem:[#allocation9 + $0xb8] sm:$0xff]
    %v246 = vld [vmem:[#allocation9 + $0xc0] sm:$0xff]
    %v247 = vld [vmem:[#allocation9 + $0xc8] sm:$0xff]
    %v248 = vld [vmem:[#allocation9 + $0xd0] sm:$0xff]
    %v249 = vld [vmem:[#allocation9 + $0xd8] sm:$0xff]
    %v250 = vld [vmem:[#allocation9 + $0xe0] sm:$0xff]
    %v251 = vld [vmem:[#allocation9 + $0xe8] sm:$0xff]
    %v252 = vld [vmem:[#allocation9 + $0xf0] sm:$0xff]
    %v253 = vld [vmem:[#allocation9 + $0xf8] sm:$0xff]
    %v254 = vld [vmem:[#allocation9 + $0x100] sm:$0xff]
    %v255 = vld [vmem:[#allocation9 + $0x108] sm:$0xff]
    %v256 = vld [vmem:[#allocation9 + $0x110] sm:$0xff]
    %v257 = vld [vmem:[#allocation9 + $0x118] sm:$0xff]
    %v258 = vld [vmem:[#allocation9 + $0x120] sm:$0xff]
    %v259 = vld [vmem:[#allocation9 + $0x128] sm:$0xff]
    %v260 = vld [vmem:[#allocation9 + $0x130] sm:$0xff]
    %v261 = vld [vmem:[#allocation9 + $0x138] sm:$0xff]
    %v262 = vld [vmem:[#allocation9 + $0x140] sm:$0xff]
    %v263 = vld [vmem:[#allocation9 + $0x148] sm:$0xff]
    %v264 = vld [vmem:[#allocation9 + $0x150] sm:$0xff]
    %v265 = vld [vmem:[#allocation9 + $0x158] sm:$0xff]
    %v266 = vld [vmem:[#allocation9 + $0x160] sm:$0xff]
    %v267 = vld [vmem:[#allocation9 + $0x168] sm:$0xff]
    %v268 = vld [vmem:[#allocation9 + $0x170] sm:$0xff]
    %v269 = vld [vmem:[#allocation9 + $0x178] sm:$0xff]
    %v270 = vld [vmem:[#allocation9 + $0x180] sm:$0xff]
    %v271 = vld [vmem:[#allocation9 + $0x188] sm:$0xff]
    %v272 = vld [vmem:[#allocation9 + $0x190] sm:$0xff]
    %v273 = vld [vmem:[#allocation9 + $0x198] sm:$0xff]
    %v274 = vld [vmem:[#allocation9 + $0x1a0] sm:$0xff]
    %v275 = vld [vmem:[#allocation9 + $0x1a8] sm:$0xff]
    %v276 = vld [vmem:[#allocation9 + $0x1b0] sm:$0xff]
    %v277 = vld [vmem:[#allocation9 + $0x1b8] sm:$0xff]
    %v278 = vld [vmem:[#allocation9 + $0x1c0] sm:$0xff]
    %v279 = vld [vmem:[#allocation9 + $0x1c8] sm:$0xff]
    %v280 = vld [vmem:[#allocation9 + $0x1d0] sm:$0xff]
    %v281 = vld [vmem:[#allocation9 + $0x1d8] sm:$0xff]
    %v282 = vld [vmem:[#allocation9 + $0x1e0] sm:$0xff]
    %v283 = vld [vmem:[#allocation9 + $0x1e8] sm:$0xff]
    %v284 = vld [vmem:[#allocation9 + $0x1f0] sm:$0xff]
    %v285 = vld [vmem:[#allocation9 + $0x1f8] sm:$0xff]
    %v286 = vld [vmem:[#allocation9 + $0x200] sm:$0xff]
    %v287 = vld [vmem:[#allocation9 + $0x208] sm:$0xff]
    %v288 = vld [vmem:[#allocation9 + $0x210] sm:$0xff]
    %v289 = vld [vmem:[#allocation9 + $0x218] sm:$0xff]
    %v290 = vld [vmem:[#allocation9 + $0x220] sm:$0xff]
    %v291 = vld [vmem:[#allocation9 + $0x228] sm:$0xff]
    %v292 = vld [vmem:[#allocation9 + $0x230] sm:$0xff]
    %v293 = vld [vmem:[#allocation9 + $0x238] sm:$0xff]
    %v294 = vld [vmem:[#allocation9 + $0x240] sm:$0xff]
    %v295 = vld [vmem:[#allocation9 + $0x248] sm:$0xff]
    %v296 = vld [vmem:[#allocation9 + $0x250] sm:$0xff]
    %v297 = vld [vmem:[#allocation9 + $0x258] sm:$0xff]
    %v298 = vld [vmem:[#allocation9 + $0x260] sm:$0xff]
    %v299 = vld [vmem:[#allocation9 + $0x268] sm:$0xff]
    %v300 = vld [vmem:[#allocation9 + $0x270] sm:$0xff]
    %v301 = vld [vmem:[#allocation9 + $0x278] sm:$0xff]
    %v302 = vld [vmem:[#allocation9 + $0x280] sm:$0xff]
    %v303 = vld [vmem:[#allocation9 + $0x288] sm:$0xff]
    %v304 = vld [vmem:[#allocation9 + $0x290] sm:$0xff]
    %v305 = vld [vmem:[#allocation9 + $0x298] sm:$0xff]
    %v306 = vld [vmem:[#allocation9 + $0x2a0] sm:$0xff]
    %v307 = vld [vmem:[#allocation9 + $0x2a8] sm:$0xff]
    %v308 = vld [vmem:[#allocation9 + $0x2b0] sm:$0xff]
    %v309 = vld [vmem:[#allocation9 + $0x2b8] sm:$0xff]
    %v310 = vld [vmem:[#allocation9 + $0x2c0] sm:$0xff]
    %v311 = vld [vmem:[#allocation9 + $0x2c8] sm:$0xff]
    %v312 = vld [vmem:[#allocation9 + $0x2d0] sm:$0xff]
    %v313 = vld [vmem:[#allocation9 + $0x2d8] sm:$0xff]
    %v314 = vld [vmem:[#allocation9 + $0x2e0] sm:$0xff]
    %v315 = vld [vmem:[#allocation9 + $0x2e8] sm:$0xff]
    %v316 = vld [vmem:[#allocation9 + $0x2f0] sm:$0xff]
    %v317 = vld [vmem:[#allocation9 + $0x2f8] sm:$0xff]
    %v318 = vld [vmem:[#allocation9 + $0x300] sm:$0xff]
    %v319 = vld [vmem:[#allocation9 + $0x308] sm:$0xff]
    %v320 = vld [vmem:[#allocation9 + $0x310] sm:$0xff]
    %v321 = vld [vmem:[#allocation9 + $0x318] sm:$0xff]
    %v322 = vld [vmem:[#allocation9 + $0x320] sm:$0xff]
    %v323 = vld [vmem:[#allocation9 + $0x328] sm:$0xff]
    %v324 = vld [vmem:[#allocation9 + $0x330] sm:$0xff]
    %v325 = vld [vmem:[#allocation9 + $0x338] sm:$0xff]
    %v326 = vld [vmem:[#allocation9 + $0x340] sm:$0xff]
    %v327 = vld [vmem:[#allocation9 + $0x348] sm:$0xff]
    %v328 = vld [vmem:[#allocation9 + $0x350] sm:$0xff]
    %v329 = vld [vmem:[#allocation9 + $0x358] sm:$0xff]
    %v330 = vld [vmem:[#allocation9 + $0x360] sm:$0xff]
    %v331 = vld [vmem:[#allocation9 + $0x368] sm:$0xff]
    %v332 = vld [vmem:[#allocation9 + $0x370] sm:$0xff]
    %v333 = vld [vmem:[#allocation9 + $0x378] sm:$0xff]
    %v334 = vld [vmem:[#allocation9 + $0x380] sm:$0xff]
    %v335 = vld [vmem:[#allocation9 + $0x388] sm:$0xff]
    %v336 = vld [vmem:[#allocation9 + $0x390] sm:$0xff]
    %v337 = vld [vmem:[#allocation9 + $0x398] sm:$0xff]
    %v338 = vld [vmem:[#allocation9 + $0x3a0] sm:$0xff]
    %v339 = vld [vmem:[#allocation9 + $0x3a8] sm:$0xff]
    %v340 = vld [vmem:[#allocation9 + $0x3b0] sm:$0xff]
    %v341 = vld [vmem:[#allocation9 + $0x3b8] sm:$0xff]
    %v342 = vld [vmem:[#allocation9 + $0x3c0] sm:$0xff]
    %v343 = vld [vmem:[#allocation9 + $0x3c8] sm:$0xff]
    %v344 = vld [vmem:[#allocation9 + $0x3d0] sm:$0xff]
    %v345 = vld [vmem:[#allocation9 + $0x3d8] sm:$0xff]
    %v346 = vld [vmem:[#allocation9 + $0x3e0] sm:$0xff]
    %v347 = vld [vmem:[#allocation9 + $0x3e8] sm:$0xff]
    %v348 = vld [vmem:[#allocation9 + $0x3f0] sm:$0xff]
    %v349 = vld [vmem:[#allocation9 + $0x3f8] sm:$0xff]
    %v350 = vld [vmem:[#allocation9 + $0x400] sm:$0xff]
    %v351 = vld [vmem:[#allocation9 + $0x408] sm:$0xff]
    %v352 = vld [vmem:[#allocation9 + $0x410] sm:$0xff]
    %v353 = vld [vmem:[#allocation9 + $0x418] sm:$0xff]
    %v354 = vld [vmem:[#allocation9 + $0x420] sm:$0xff]
    %v355 = vld [vmem:[#allocation9 + $0x428] sm:$0xff]
    %v356 = vld [vmem:[#allocation9 + $0x430] sm:$0xff]
    %v357 = vld [vmem:[#allocation9 + $0x438] sm:$0xff]
    %v358 = vld [vmem:[#allocation9 + $0x440] sm:$0xff]
    %v359 = vld [vmem:[#allocation9 + $0x448] sm:$0xff]
    %v360 = vld [vmem:[#allocation9 + $0x450] sm:$0xff]
    %v361 = vld [vmem:[#allocation9 + $0x458] sm:$0xff]
    %v362 = vld [vmem:[#allocation9 + $0x460] sm:$0xff]
    %v363 = vld [vmem:[#allocation9 + $0x468] sm:$0xff]
    %v364 = vld [vmem:[#allocation9 + $0x470] sm:$0xff]
    %v365 = vld [vmem:[#allocation9 + $0x478] sm:$0xff]
    %v366 = vld [vmem:[#allocation9 + $0x480] sm:$0xff]
    %v367 = vld [vmem:[#allocation9 + $0x488] sm:$0xff]
    %v368 = vld [vmem:[#allocation9 + $0x490] sm:$0xff]
    %v369 = vld [vmem:[#allocation9 + $0x498] sm:$0xff]
    %v370 = vld [vmem:[#allocation9 + $0x4a0] sm:$0xff]
    %v371 = vld [vmem:[#allocation9 + $0x4a8] sm:$0xff]
    %v372 = vld [vmem:[#allocation9 + $0x4b0] sm:$0xff]
    %v373 = vld [vmem:[#allocation9 + $0x4b8] sm:$0xff]
    %v374 = vld [vmem:[#allocation9 + $0x4c0] sm:$0xff]
    %v375 = vld [vmem:[#allocation9 + $0x4c8] sm:$0xff]
    %v376 = vld [vmem:[#allocation9 + $0x4d0] sm:$0xff]
    %v377 = vld [vmem:[#allocation9 + $0x4d8] sm:$0xff]
    %v378 = vld [vmem:[#allocation9 + $0x4e0] sm:$0xff]
    %v379 = vld [vmem:[#allocation9 + $0x4e8] sm:$0xff]
    %v380 = vld [vmem:[#allocation9 + $0x4f0] sm:$0xff]
    %v381 = vld [vmem:[#allocation9 + $0x4f8] sm:$0xff]
    %382 = vmatprep.subr.mxu0 %v223
    %383 = vmatpush1.msra.mxu0 %v222
    %384 = vmatprep.subr.mxu0 %v225
    %385 = vmatpush1.msra.mxu0 %v224
    %386 = vmatprep.subr.mxu0 %v227
    %387 = vmatpush1.msra.mxu0 %v226
    %388 = vmatprep.subr.mxu0 %v229
    %389 = vmatpush1.msra.mxu0 %v228
    %390 = vmatprep.subr.mxu0 %v231
    %391 = vmatpush1.msra.mxu0 %v230
    %392 = vmatprep.subr.mxu0 %v233
    %393 = vmatpush1.msra.mxu0 %v232
    %394 = vmatprep.subr.mxu0 %v235
    %395 = vmatpush1.msra.mxu0 %v234
    %396 = vmatprep.subr.mxu0 %v237
    %397 = vmatpush1.msra.mxu0 %v236
    %398 = vmatprep.subr.mxu0 %v239
    %399 = vmatpush1.msra.mxu0 %v238
    %400 = vmatprep.subr.mxu0 %v241
    %401 = vmatpush1.msra.mxu0 %v240
    %402 = vmatprep.subr.mxu0 %v243
    %403 = vmatpush1.msra.mxu0 %v242
    %404 = vmatprep.subr.mxu0 %v245
    %405 = vmatpush1.msra.mxu0 %v244
    %406 = vmatprep.subr.mxu0 %v247
    %407 = vmatpush1.msra.mxu0 %v246
    %408 = vmatprep.subr.mxu0 %v249
    %409 = vmatpush1.msra.mxu0 %v248
    %410 = vmatprep.subr.mxu0 %v251
    %411 = vmatpush1.msra.mxu0 %v250
    %412 = vmatprep.subr.mxu0 %v253
    %413 = vmatpush1.msra.mxu0 %v252
    %414 = vmatprep.subr.mxu0 %v255
    %415 = vmatpush1.msra.mxu0 %v254
    %416 = vmatprep.subr.mxu0 %v257
    %417 = vmatpush1.msra.mxu0 %v256
    %418 = vmatprep.subr.mxu0 %v259
    %419 = vmatpush1.msra.mxu0 %v258
    %420 = vmatprep.subr.mxu0 %v261
    %421 = vmatpush1.msra.mxu0 %v260
    %422 = vmatprep.subr.mxu0 %v263
    %423 = vmatpush1.msra.mxu0 %v262
    %424 = vmatprep.subr.mxu0 %v265
    %425 = vmatpush1.msra.mxu0 %v264
    %426 = vmatprep.subr.mxu0 %v267
    %427 = vmatpush1.msra.mxu0 %v266
    %428 = vmatprep.subr.mxu0 %v269
    %429 = vmatpush1.msra.mxu0 %v268
    %430 = vmatprep.subr.mxu0 %v271
    %431 = vmatpush1.msra.mxu0 %v270
    %432 = vmatprep.subr.mxu0 %v273
    %433 = vmatpush1.msra.mxu0 %v272
    %434 = vmatprep.subr.mxu0 %v275
    %435 = vmatpush1.msra.mxu0 %v274
    %436 = vmatprep.subr.mxu0 %v277
    %437 = vmatpush1.msra.mxu0 %v276
    %438 = vmatprep.subr.mxu0 %v279
    %439 = vmatpush1.msra.mxu0 %v278
    %440 = vmatprep.subr.mxu0 %v281
    %441 = vmatpush1.msra.mxu0 %v280
    %442 = vmatprep.subr.mxu0 %v283
    %443 = vmatpush1.msra.mxu0 %v282
    %444 = vmatprep.subr.mxu0 %v285
    %445 = vmatpush1.msra.mxu0 %v284
    %446 = vmatprep.mubr.f32.mxu0 %v218
    %447 = vmatmul.mubr.f32.gmra.mrb[0].mxu0 %v217
    %v448 = vpop.f32.mrb[0].mxu0
    %v449 = vadd.f32 %v210, %v448
    %v450 = vpop.f32.mrb[0].mxu0
    %v451 = vadd.f32 %v214, %v450
    %452 = vdwg.mxu0
    %453 = vmatprep.subr.mxu0 %v287
    %454 = vmatpush1.msra.mxu0 %v286
    %455 = vmatprep.subr.mxu0 %v289
    %456 = vmatpush1.msra.mxu0 %v288
    %457 = vmatprep.subr.mxu0 %v291
    %458 = vmatpush1.msra.mxu0 %v290
    %459 = vmatprep.subr.mxu0 %v293
    %460 = vmatpush1.msra.mxu0 %v292
    %461 = vmatprep.subr.mxu0 %v295
    %462 = vmatpush1.msra.mxu0 %v294
    %463 = vmatprep.subr.mxu0 %v297
    %464 = vmatpush1.msra.mxu0 %v296
    %465 = vmatprep.subr.mxu0 %v299
    %466 = vmatpush1.msra.mxu0 %v298
    %467 = vmatprep.subr.mxu0 %v301
    %468 = vmatpush1.msra.mxu0 %v300
    %469 = vmatprep.subr.mxu0 %v303
    %470 = vmatpush1.msra.mxu0 %v302
    %471 = vmatprep.subr.mxu0 %v305
    %472 = vmatpush1.msra.mxu0 %v304
    %473 = vmatprep.subr.mxu0 %v307
    %474 = vmatpush1.msra.mxu0 %v306
    %475 = vmatprep.subr.mxu0 %v309
    %476 = vmatpush1.msra.mxu0 %v308
    %477 = vmatprep.subr.mxu0 %v311
    %478 = vmatpush1.msra.mxu0 %v310
    %479 = vmatprep.subr.mxu0 %v313
    %480 = vmatpush1.msra.mxu0 %v312
    %481 = vmatprep.subr.mxu0 %v315
    %482 = vmatpush1.msra.mxu0 %v314
    %483 = vmatprep.subr.mxu0 %v317
    %484 = vmatpush1.msra.mxu0 %v316
    %485 = vmatprep.subr.mxu0 %v319
    %486 = vmatpush1.msra.mxu0 %v318
    %487 = vmatprep.subr.mxu0 %v321
    %488 = vmatpush1.msra.mxu0 %v320
    %489 = vmatprep.subr.mxu0 %v323
    %490 = vmatpush1.msra.mxu0 %v322
    %491 = vmatprep.subr.mxu0 %v325
    %492 = vmatpush1.msra.mxu0 %v324
    %493 = vmatprep.subr.mxu0 %v327
    %494 = vmatpush1.msra.mxu0 %v326
    %495 = vmatprep.subr.mxu0 %v329
    %496 = vmatpush1.msra.mxu0 %v328
    %497 = vmatprep.subr.mxu0 %v331
    %498 = vmatpush1.msra.mxu0 %v330
    %499 = vmatprep.subr.mxu0 %v333
    %500 = vmatpush1.msra.mxu0 %v332
    %501 = vmatprep.subr.mxu0 %v335
    %502 = vmatpush1.msra.mxu0 %v334
    %503 = vmatprep.subr.mxu0 %v337
    %504 = vmatpush1.msra.mxu0 %v336
    %505 = vmatprep.subr.mxu0 %v339
    %506 = vmatpush1.msra.mxu0 %v338
    %507 = vmatprep.subr.mxu0 %v341
    %508 = vmatpush1.msra.mxu0 %v340
    %509 = vmatprep.subr.mxu0 %v343
    %510 = vmatpush1.msra.mxu0 %v342
    %511 = vmatprep.subr.mxu0 %v345
    %512 = vmatpush1.msra.mxu0 %v344
    %513 = vmatprep.subr.mxu0 %v347
    %514 = vmatpush1.msra.mxu0 %v346
    %515 = vmatprep.subr.mxu0 %v349
    %516 = vmatpush1.msra.mxu0 %v348
    %517 = vmatprep.mubr.f32.mxu0 %v220
    %518 = vmatmul.mubr.f32.gmra.mrb[0].mxu0 %v219
    %v519 = vpop.f32.mrb[0].mxu0
    %v520 = vadd.f32 %v449, %v519
    %v521 = vpop.f32.mrb[0].mxu0
    %v522 = vadd.f32 %v451, %v521
    %523 = vdwg.mxu0
    %524 = vmatprep.subr.mxu0 %v351
    %525 = vmatpush1.msra.mxu0 %v350
    %526 = vmatprep.subr.mxu0 %v353
    %527 = vmatpush1.msra.mxu0 %v352
    %528 = vmatprep.subr.mxu0 %v355
    %529 = vmatpush1.msra.mxu0 %v354
    %530 = vmatprep.subr.mxu0 %v357
    %531 = vmatpush1.msra.mxu0 %v356
    %532 = vmatprep.subr.mxu0 %v359
    %533 = vmatpush1.msra.mxu0 %v358
    %534 = vmatprep.subr.mxu0 %v361
    %535 = vmatpush1.msra.mxu0 %v360
    %536 = vmatprep.subr.mxu0 %v363
    %537 = vmatpush1.msra.mxu0 %v362
    %538 = vmatprep.subr.mxu0 %v365
    %539 = vmatpush1.msra.mxu0 %v364
    %540 = vmatprep.subr.mxu0 %v367
    %541 = vmatpush1.msra.mxu0 %v366
    %542 = vmatprep.subr.mxu0 %v369
    %543 = vmatpush1.msra.mxu0 %v368
    %544 = vmatprep.subr.mxu0 %v371
    %545 = vmatpush1.msra.mxu0 %v370
    %546 = vmatprep.subr.mxu0 %v373
    %547 = vmatpush1.msra.mxu0 %v372
    %548 = vmatprep.subr.mxu0 %v375
    %549 = vmatpush1.msra.mxu0 %v374
    %550 = vmatprep.subr.mxu0 %v377
    %551 = vmatpush1.msra.mxu0 %v376
    %552 = vmatprep.subr.mxu0 %v379
    %553 = vmatpush1.msra.mxu0 %v378
    %554 = vmatprep.subr.mxu0 %v381
    %555 = vmatpush1.msra.mxu0 %v380
    %556 = vmatprep.subr.mxu0 0.0
    %557 = vmatpush1.msra.mxu0 0.0
    %558 = vmatprep.subr.mxu0 0.0
    %559 = vmatpush1.msra.mxu0 0.0
    %560 = vmatprep.subr.mxu0 0.0
    %561 = vmatpush1.msra.mxu0 0.0
    %562 = vmatprep.subr.mxu0 0.0
    %563 = vmatpush1.msra.mxu0 0.0
    %564 = vmatprep.subr.mxu0 0.0
    %565 = vmatpush1.msra.mxu0 0.0
    %566 = vmatprep.subr.mxu0 0.0
    %567 = vmatpush1.msra.mxu0 0.0
    %568 = vmatprep.subr.mxu0 0.0
    %569 = vmatpush1.msra.mxu0 0.0
    %570 = vmatprep.subr.mxu0 0.0
    %571 = vmatpush1.msra.mxu0 0.0
    %572 = vmatprep.subr.mxu0 0.0
    %573 = vmatpush1.msra.mxu0 0.0
    %574 = vmatprep.subr.mxu0 0.0
    %575 = vmatpush1.msra.mxu0 0.0
    %576 = vmatprep.subr.mxu0 0.0
    %577 = vmatpush1.msra.mxu0 0.0
    %578 = vmatprep.subr.mxu0 0.0
    %579 = vmatpush1.msra.mxu0 0.0
    %580 = vmatprep.subr.mxu0 0.0
    %581 = vmatpush1.msra.mxu0 0.0
    %582 = vmatprep.subr.mxu0 0.0
    %583 = vmatpush1.msra.mxu0 0.0
    %584 = vmatprep.subr.mxu0 0.0
    %585 = vmatpush1.msra.mxu0 0.0
    %586 = vmatprep.subr.mxu0 0.0
    %587 = vmatpush1.msra.mxu0 0.0
    %588 = vmatprep.mubr.f32.mxu0 0.0
    %589 = vmatmul.mubr.f32.gmra.mrb[0].mxu0 %v221
    %v590 = vpop.f32.mrb[0].mxu0
    %v591 = vadd.f32 %v520, %v590
    %v592 = vpop.f32.mrb[0].mxu0
    %v593 = vadd.f32 %v522, %v592
    %594 = vdwg.mxu0
    %v595 = vmax.f32 %v591, 0.0
    %v596 = vmax.f32 %v593, 0.0
    %597 = vst [vmem:[#allocation2] sm:$0xff] %v595
    %598 = vst [vmem:[#allocation2 + $0x8] sm:$0xff] %v596
    %v599 = vld [vmem:[#allocation4 + $0x10] sm:$0xff]
    %v600 = vld [vmem:[#allocation4 + $0x18] sm:$0xff]
    %v601 = vld [vmem:[#allocation4 + $0x20] sm:$0xff]
    %v602 = vld [vmem:[#allocation4 + $0x28] sm:$0xff]
    %v603 = vld [vmem:[#allocation4 + $0x30] sm:$0xff]
    %v604 = vld [vmem:[#allocation9] sm:$0xff]
    %v605 = vld [vmem:[#allocation9 + $0x8] sm:$0xff]
    %v606 = vld [vmem:[#allocation9 + $0x10] sm:$0xff]
    %v607 = vld [vmem:[#allocation9 + $0x18] sm:$0xff]
    %v608 = vld [vmem:[#allocation9 + $0x20] sm:$0xff]
    %v609 = vld [vmem:[#allocation9 + $0x28] sm:$0xff]
    %v610 = vld [vmem:[#allocation9 + $0x30] sm:$0xff]
    %v611 = vld [vmem:[#allocation9 + $0x38] sm:$0xff]
    %v612 = vld [vmem:[#allocation9 + $0x40] sm:$0xff]
    %v613 = vld [vmem:[#allocation9 + $0x48] sm:$0xff]
    %v614 = vld [vmem:[#allocation9 + $0x50] sm:$0xff]
    %v615 = vld [vmem:[#allocation9 + $0x58] sm:$0xff]
    %v616 = vld [vmem:[#allocation9 + $0x60] sm:$0xff]
    %v617 = vld [vmem:[#allocation9 + $0x68] sm:$0xff]
    %v618 = vld [vmem:[#allocation9 + $0x70] sm:$0xff]
    %v619 = vld [vmem:[#allocation9 + $0x78] sm:$0xff]
    %v620 = vld [vmem:[#allocation9 + $0x80] sm:$0xff]
    %v621 = vld [vmem:[#allocation9 + $0x88] sm:$0xff]
    %v622 = vld [vmem:[#allocation9 + $0x90] sm:$0xff]
    %v623 = vld [vmem:[#allocation9 + $0x98] sm:$0xff]
    %v624 = vld [vmem:[#allocation9 + $0xa0] sm:$0xff]
    %v625 = vld [vmem:[#allocation9 + $0xa8] sm:$0xff]
    %v626 = vld [vmem:[#allocation9 + $0xb0] sm:$0xff]
    %v627 = vld [vmem:[#allocation9 + $0xb8] sm:$0xff]
    %v628 = vld [vmem:[#allocation9 + $0xc0] sm:$0xff]
    %v629 = vld [vmem:[#allocation9 + $0xc8] sm:$0xff]
    %v630 = vld [vmem:[#allocation9 + $0xd0] sm:$0xff]
    %v631 = vld [vmem:[#allocation9 + $0xd8] sm:$0xff]
    %v632 = vld [vmem:[#allocation9 + $0xe0] sm:$0xff]
    %v633 = vld [vmem:[#allocation9 + $0xe8] sm:$0xff]
    %v634 = vld [vmem:[#allocation9 + $0xf0] sm:$0xff]
    %v635 = vld [vmem:[#allocation9 + $0xf8] sm:$0xff]
    %v636 = vld [vmem:[#allocation9 + $0x100] sm:$0xff]
    %v637 = vld [vmem:[#allocation9 + $0x108] sm:$0xff]
    %v638 = vld [vmem:[#allocation9 + $0x110] sm:$0xff]
    %v639 = vld [vmem:[#allocation9 + $0x118] sm:$0xff]
    %v640 = vld [vmem:[#allocation9 + $0x120] sm:$0xff]
    %v641 = vld [vmem:[#allocation9 + $0x128] sm:$0xff]
    %v642 = vld [vmem:[#allocation9 + $0x130] sm:$0xff]
    %v643 = vld [vmem:[#allocation9 + $0x138] sm:$0xff]
    %v644 = vld [vmem:[#allocation9 + $0x140] sm:$0xff]
    %v645 = vld [vmem:[#allocation9 + $0x148] sm:$0xff]
    %v646 = vld [vmem:[#allocation9 + $0x150] sm:$0xff]
    %v647 = vld [vmem:[#allocation9 + $0x158] sm:$0xff]
    %v648 = vld [vmem:[#allocation9 + $0x160] sm:$0xff]
    %v649 = vld [vmem:[#allocation9 + $0x168] sm:$0xff]
    %v650 = vld [vmem:[#allocation9 + $0x170] sm:$0xff]
    %v651 = vld [vmem:[#allocation9 + $0x178] sm:$0xff]
    %v652 = vld [vmem:[#allocation9 + $0x180] sm:$0xff]
    %v653 = vld [vmem:[#allocation9 + $0x188] sm:$0xff]
    %v654 = vld [vmem:[#allocation9 + $0x190] sm:$0xff]
    %v655 = vld [vmem:[#allocation9 + $0x198] sm:$0xff]
    %v656 = vld [vmem:[#allocation9 + $0x1a0] sm:$0xff]
    %v657 = vld [vmem:[#allocation9 + $0x1a8] sm:$0xff]
    %v658 = vld [vmem:[#allocation9 + $0x1b0] sm:$0xff]
    %v659 = vld [vmem:[#allocation9 + $0x1b8] sm:$0xff]
    %v660 = vld [vmem:[#allocation9 + $0x1c0] sm:$0xff]
    %v661 = vld [vmem:[#allocation9 + $0x1c8] sm:$0xff]
    %v662 = vld [vmem:[#allocation9 + $0x1d0] sm:$0xff]
    %v663 = vld [vmem:[#allocation9 + $0x1d8] sm:$0xff]
    %v664 = vld [vmem:[#allocation9 + $0x1e0] sm:$0xff]
    %v665 = vld [vmem:[#allocation9 + $0x1e8] sm:$0xff]
    %v666 = vld [vmem:[#allocation9 + $0x1f0] sm:$0xff]
    %v667 = vld [vmem:[#allocation9 + $0x1f8] sm:$0xff]
    %v668 = vld [vmem:[#allocation9 + $0x200] sm:$0xff]
    %v669 = vld [vmem:[#allocation9 + $0x208] sm:$0xff]
    %v670 = vld [vmem:[#allocation9 + $0x210] sm:$0xff]
    %v671 = vld [vmem:[#allocation9 + $0x218] sm:$0xff]
    %v672 = vld [vmem:[#allocation9 + $0x220] sm:$0xff]
    %v673 = vld [vmem:[#allocation9 + $0x228] sm:$0xff]
    %v674 = vld [vmem:[#allocation9 + $0x230] sm:$0xff]
    %v675 = vld [vmem:[#allocation9 + $0x238] sm:$0xff]
    %v676 = vld [vmem:[#allocation9 + $0x240] sm:$0xff]
    %v677 = vld [vmem:[#allocation9 + $0x248] sm:$0xff]
    %v678 = vld [vmem:[#allocation9 + $0x250] sm:$0xff]
    %v679 = vld [vmem:[#allocation9 + $0x258] sm:$0xff]
    %v680 = vld [vmem:[#allocation9 + $0x260] sm:$0xff]
    %v681 = vld [vmem:[#allocation9 + $0x268] sm:$0xff]
    %v682 = vld [vmem:[#allocation9 + $0x270] sm:$0xff]
    %v683 = vld [vmem:[#allocation9 + $0x278] sm:$0xff]
    %v684 = vld [vmem:[#allocation9 + $0x280] sm:$0xff]
    %v685 = vld [vmem:[#allocation9 + $0x288] sm:$0xff]
    %v686 = vld [vmem:[#allocation9 + $0x290] sm:$0xff]
    %v687 = vld [vmem:[#allocation9 + $0x298] sm:$0xff]
    %v688 = vld [vmem:[#allocation9 + $0x2a0] sm:$0xff]
    %v689 = vld [vmem:[#allocation9 + $0x2a8] sm:$0xff]
    %v690 = vld [vmem:[#allocation9 + $0x2b0] sm:$0xff]
    %v691 = vld [vmem:[#allocation9 + $0x2b8] sm:$0xff]
    %v692 = vld [vmem:[#allocation9 + $0x2c0] sm:$0xff]
    %v693 = vld [vmem:[#allocation9 + $0x2c8] sm:$0xff]
    %v694 = vld [vmem:[#allocation9 + $0x2d0] sm:$0xff]
    %v695 = vld [vmem:[#allocation9 + $0x2d8] sm:$0xff]
    %v696 = vld [vmem:[#allocation9 + $0x2e0] sm:$0xff]
    %v697 = vld [vmem:[#allocation9 + $0x2e8] sm:$0xff]
    %v698 = vld [vmem:[#allocation9 + $0x2f0] sm:$0xff]
    %v699 = vld [vmem:[#allocation9 + $0x2f8] sm:$0xff]
    %v700 = vld [vmem:[#allocation9 + $0x300] sm:$0xff]
    %v701 = vld [vmem:[#allocation9 + $0x308] sm:$0xff]
    %v702 = vld [vmem:[#allocation9 + $0x310] sm:$0xff]
    %v703 = vld [vmem:[#allocation9 + $0x318] sm:$0xff]
    %v704 = vld [vmem:[#allocation9 + $0x320] sm:$0xff]
    %v705 = vld [vmem:[#allocation9 + $0x328] sm:$0xff]
    %v706 = vld [vmem:[#allocation9 + $0x330] sm:$0xff]
    %v707 = vld [vmem:[#allocation9 + $0x338] sm:$0xff]
    %v708 = vld [vmem:[#allocation9 + $0x340] sm:$0xff]
    %v709 = vld [vmem:[#allocation9 + $0x348] sm:$0xff]
    %v710 = vld [vmem:[#allocation9 + $0x350] sm:$0xff]
    %v711 = vld [vmem:[#allocation9 + $0x358] sm:$0xff]
    %v712 = vld [vmem:[#allocation9 + $0x360] sm:$0xff]
    %v713 = vld [vmem:[#allocation9 + $0x368] sm:$0xff]
    %v714 = vld [vmem:[#allocation9 + $0x370] sm:$0xff]
    %v715 = vld [vmem:[#allocation9 + $0x378] sm:$0xff]
    %v716 = vld [vmem:[#allocation9 + $0x380] sm:$0xff]
    %v717 = vld [vmem:[#allocation9 + $0x388] sm:$0xff]
    %v718 = vld [vmem:[#allocation9 + $0x390] sm:$0xff]
    %v719 = vld [vmem:[#allocation9 + $0x398] sm:$0xff]
    %v720 = vld [vmem:[#allocation9 + $0x3a0] sm:$0xff]
    %v721 = vld [vmem:[#allocation9 + $0x3a8] sm:$0xff]
    %v722 = vld [vmem:[#allocation9 + $0x3b0] sm:$0xff]
    %v723 = vld [vmem:[#allocation9 + $0x3b8] sm:$0xff]
    %v724 = vld [vmem:[#allocation9 + $0x3c0] sm:$0xff]
    %v725 = vld [vmem:[#allocation9 + $0x3c8] sm:$0xff]
    %v726 = vld [vmem:[#allocation9 + $0x3d0] sm:$0xff]
    %v727 = vld [vmem:[#allocation9 + $0x3d8] sm:$0xff]
    %v728 = vld [vmem:[#allocation9 + $0x3e0] sm:$0xff]
    %v729 = vld [vmem:[#allocation9 + $0x3e8] sm:$0xff]
    %v730 = vld [vmem:[#allocation9 + $0x3f0] sm:$0xff]
    %v731 = vld [vmem:[#allocation9 + $0x3f8] sm:$0xff]
    %v732 = vld [vmem:[#allocation9 + $0x400] sm:$0xff]
    %v733 = vld [vmem:[#allocation9 + $0x408] sm:$0xff]
    %v734 = vld [vmem:[#allocation9 + $0x410] sm:$0xff]
    %v735 = vld [vmem:[#allocation9 + $0x418] sm:$0xff]
    %v736 = vld [vmem:[#allocation9 + $0x420] sm:$0xff]
    %v737 = vld [vmem:[#allocation9 + $0x428] sm:$0xff]
    %v738 = vld [vmem:[#allocation9 + $0x430] sm:$0xff]
    %v739 = vld [vmem:[#allocation9 + $0x438] sm:$0xff]
    %v740 = vld [vmem:[#allocation9 + $0x440] sm:$0xff]
    %v741 = vld [vmem:[#allocation9 + $0x448] sm:$0xff]
    %v742 = vld [vmem:[#allocation9 + $0x450] sm:$0xff]
    %v743 = vld [vmem:[#allocation9 + $0x458] sm:$0xff]
    %v744 = vld [vmem:[#allocation9 + $0x460] sm:$0xff]
    %v745 = vld [vmem:[#allocation9 + $0x468] sm:$0xff]
    %v746 = vld [vmem:[#allocation9 + $0x470] sm:$0xff]
    %v747 = vld [vmem:[#allocation9 + $0x478] sm:$0xff]
    %v748 = vld [vmem:[#allocation9 + $0x480] sm:$0xff]
    %v749 = vld [vmem:[#allocation9 + $0x488] sm:$0xff]
    %v750 = vld [vmem:[#allocation9 + $0x490] sm:$0xff]
    %v751 = vld [vmem:[#allocation9 + $0x498] sm:$0xff]
    %v752 = vld [vmem:[#allocation9 + $0x4a0] sm:$0xff]
    %v753 = vld [vmem:[#allocation9 + $0x4a8] sm:$0xff]
    %v754 = vld [vmem:[#allocation9 + $0x4b0] sm:$0xff]
    %v755 = vld [vmem:[#allocation9 + $0x4b8] sm:$0xff]
    %v756 = vld [vmem:[#allocation9 + $0x4c0] sm:$0xff]
    %v757 = vld [vmem:[#allocation9 + $0x4c8] sm:$0xff]
    %v758 = vld [vmem:[#allocation9 + $0x4d0] sm:$0xff]
    %v759 = vld [vmem:[#allocation9 + $0x4d8] sm:$0xff]
    %v760 = vld [vmem:[#allocation9 + $0x4e0] sm:$0xff]
    %v761 = vld [vmem:[#allocation9 + $0x4e8] sm:$0xff]
    %v762 = vld [vmem:[#allocation9 + $0x4f0] sm:$0xff]
    %v763 = vld [vmem:[#allocation9 + $0x4f8] sm:$0xff]
    %764 = vmatprep.subr.mxu0 %v605
    %765 = vmatpush1.msra.mxu0 %v604
    %766 = vmatprep.subr.mxu0 %v607
    %767 = vmatpush1.msra.mxu0 %v606
    %768 = vmatprep.subr.mxu0 %v609
    %769 = vmatpush1.msra.mxu0 %v608
    %770 = vmatprep.subr.mxu0 %v611
    %771 = vmatpush1.msra.mxu0 %v610
    %772 = vmatprep.subr.mxu0 %v613
    %773 = vmatpush1.msra.mxu0 %v612
    %774 = vmatprep.subr.mxu0 %v615
    %775 = vmatpush1.msra.mxu0 %v614
    %776 = vmatprep.subr.mxu0 %v617
    %777 = vmatpush1.msra.mxu0 %v616
    %778 = vmatprep.subr.mxu0 %v619
    %779 = vmatpush1.msra.mxu0 %v618
    %780 = vmatprep.subr.mxu0 %v621
    %781 = vmatpush1.msra.mxu0 %v620
    %782 = vmatprep.subr.mxu0 %v623
    %783 = vmatpush1.msra.mxu0 %v622
    %784 = vmatprep.subr.mxu0 %v625
    %785 = vmatpush1.msra.mxu0 %v624
    %786 = vmatprep.subr.mxu0 %v627
    %787 = vmatpush1.msra.mxu0 %v626
    %788 = vmatprep.subr.mxu0 %v629
    %789 = vmatpush1.msra.mxu0 %v628
    %790 = vmatprep.subr.mxu0 %v631
    %791 = vmatpush1.msra.mxu0 %v630
    %792 = vmatprep.subr.mxu0 %v633
    %793 = vmatpush1.msra.mxu0 %v632
    %794 = vmatprep.subr.mxu0 %v635
    %795 = vmatpush1.msra.mxu0 %v634
    %796 = vmatprep.subr.mxu0 %v637
    %797 = vmatpush1.msra.mxu0 %v636
    %798 = vmatprep.subr.mxu0 %v639
    %799 = vmatpush1.msra.mxu0 %v638
    %800 = vmatprep.subr.mxu0 %v641
    %801 = vmatpush1.msra.mxu0 %v640
    %802 = vmatprep.subr.mxu0 %v643
    %803 = vmatpush1.msra.mxu0 %v642
    %804 = vmatprep.subr.mxu0 %v645
    %805 = vmatpush1.msra.mxu0 %v644
    %806 = vmatprep.subr.mxu0 %v647
    %807 = vmatpush1.msra.mxu0 %v646
    %808 = vmatprep.subr.mxu0 %v649
    %809 = vmatpush1.msra.mxu0 %v648
    %810 = vmatprep.subr.mxu0 %v651
    %811 = vmatpush1.msra.mxu0 %v650
    %812 = vmatprep.subr.mxu0 %v653
    %813 = vmatpush1.msra.mxu0 %v652
    %814 = vmatprep.subr.mxu0 %v655
    %815 = vmatpush1.msra.mxu0 %v654
    %816 = vmatprep.subr.mxu0 %v657
    %817 = vmatpush1.msra.mxu0 %v656
    %818 = vmatprep.subr.mxu0 %v659
    %819 = vmatpush1.msra.mxu0 %v658
    %820 = vmatprep.subr.mxu0 %v661
    %821 = vmatpush1.msra.mxu0 %v660
    %822 = vmatprep.subr.mxu0 %v663
    %823 = vmatpush1.msra.mxu0 %v662
    %824 = vmatprep.subr.mxu0 %v665
    %825 = vmatpush1.msra.mxu0 %v664
    %826 = vmatprep.subr.mxu0 %v667
    %827 = vmatpush1.msra.mxu0 %v666
    %828 = vmatprep.mubr.f32.mxu0 %v600
    %829 = vmatmul.mubr.f32.gmra.mrb[0].mxu0 %v599
    %v830 = vpop.f32.mrb[0].mxu0
    %v831 = vadd.f32 %v210, %v830
    %v832 = vpop.f32.mrb[0].mxu0
    %v833 = vadd.f32 %v214, %v832
    %834 = vdwg.mxu0
    %835 = vmatprep.subr.mxu0 %v669
    %836 = vmatpush1.msra.mxu0 %v668
    %837 = vmatprep.subr.mxu0 %v671
    %838 = vmatpush1.msra.mxu0 %v670
    %839 = vmatprep.subr.mxu0 %v673
    %840 = vmatpush1.msra.mxu0 %v672
    %841 = vmatprep.subr.mxu0 %v675
    %842 = vmatpush1.msra.mxu0 %v674
    %843 = vmatprep.subr.mxu0 %v677
    %844 = vmatpush1.msra.mxu0 %v676
    %845 = vmatprep.subr.mxu0 %v679
    %846 = vmatpush1.msra.mxu0 %v678
    %847 = vmatprep.subr.mxu0 %v681
    %848 = vmatpush1.msra.mxu0 %v680
    %849 = vmatprep.subr.mxu0 %v683
    %850 = vmatpush1.msra.mxu0 %v682
    %851 = vmatprep.subr.mxu0 %v685
    %852 = vmatpush1.msra.mxu0 %v684
    %853 = vmatprep.subr.mxu0 %v687
    %854 = vmatpush1.msra.mxu0 %v686
    %855 = vmatprep.subr.mxu0 %v689
    %856 = vmatpush1.msra.mxu0 %v688
    %857 = vmatprep.subr.mxu0 %v691
    %858 = vmatpush1.msra.mxu0 %v690
    %859 = vmatprep.subr.mxu0 %v693
    %860 = vmatpush1.msra.mxu0 %v692
    %861 = vmatprep.subr.mxu0 %v695
    %862 = vmatpush1.msra.mxu0 %v694
    %863 = vmatprep.subr.mxu0 %v697
    %864 = vmatpush1.msra.mxu0 %v696
    %865 = vmatprep.subr.mxu0 %v699
    %866 = vmatpush1.msra.mxu0 %v698
    %867 = vmatprep.subr.mxu0 %v701
    %868 = vmatpush1.msra.mxu0 %v700
    %869 = vmatprep.subr.mxu0 %v703
    %870 = vmatpush1.msra.mxu0 %v702
    %871 = vmatprep.subr.mxu0 %v705
    %872 = vmatpush1.msra.mxu0 %v704
    %873 = vmatprep.subr.mxu0 %v707
    %874 = vmatpush1.msra.mxu0 %v706
    %875 = vmatprep.subr.mxu0 %v709
    %876 = vmatpush1.msra.mxu0 %v708
    %877 = vmatprep.subr.mxu0 %v711
    %878 = vmatpush1.msra.mxu0 %v710
    %879 = vmatprep.subr.mxu0 %v713
    %880 = vmatpush1.msra.mxu0 %v712
    %881 = vmatprep.subr.mxu0 %v715
    %882 = vmatpush1.msra.mxu0 %v714
    %883 = vmatprep.subr.mxu0 %v717
    %884 = vmatpush1.msra.mxu0 %v716
    %885 = vmatprep.subr.mxu0 %v719
    %886 = vmatpush1.msra.mxu0 %v718
    %887 = vmatprep.subr.mxu0 %v721
    %888 = vmatpush1.msra.mxu0 %v720
    %889 = vmatprep.subr.mxu0 %v723
    %890 = vmatpush1.msra.mxu0 %v722
    %891 = vmatprep.subr.mxu0 %v725
    %892 = vmatpush1.msra.mxu0 %v724
    %893 = vmatprep.subr.mxu0 %v727
    %894 = vmatpush1.msra.mxu0 %v726
    %895 = vmatprep.subr.mxu0 %v729
    %896 = vmatpush1.msra.mxu0 %v728
    %897 = vmatprep.subr.mxu0 %v731
    %898 = vmatpush1.msra.mxu0 %v730
    %899 = vmatprep.mubr.f32.mxu0 %v602
    %900 = vmatmul.mubr.f32.gmra.mrb[0].mxu0 %v601
    %v901 = vpop.f32.mrb[0].mxu0
    %v902 = vadd.f32 %v831, %v901
    %v903 = vpop.f32.mrb[0].mxu0
    %v904 = vadd.f32 %v833, %v903
    %905 = vdwg.mxu0
    %906 = vmatprep.subr.mxu0 %v733
    %907 = vmatpush1.msra.mxu0 %v732
    %908 = vmatprep.subr.mxu0 %v735
    %909 = vmatpush1.msra.mxu0 %v734
    %910 = vmatprep.subr.mxu0 %v737
    %911 = vmatpush1.msra.mxu0 %v736
    %912 = vmatprep.subr.mxu0 %v739
    %913 = vmatpush1.msra.mxu0 %v738
    %914 = vmatprep.subr.mxu0 %v741
    %915 = vmatpush1.msra.mxu0 %v740
    %916 = vmatprep.subr.mxu0 %v743
    %917 = vmatpush1.msra.mxu0 %v742
    %918 = vmatprep.subr.mxu0 %v745
    %919 = vmatpush1.msra.mxu0 %v744
    %920 = vmatprep.subr.mxu0 %v747
    %921 = vmatpush1.msra.mxu0 %v746
    %922 = vmatprep.subr.mxu0 %v749
    %923 = vmatpush1.msra.mxu0 %v748
    %924 = vmatprep.subr.mxu0 %v751
    %925 = vmatpush1.msra.mxu0 %v750
    %926 = vmatprep.subr.mxu0 %v753
    %927 = vmatpush1.msra.mxu0 %v752
    %928 = vmatprep.subr.mxu0 %v755
    %929 = vmatpush1.msra.mxu0 %v754
    %930 = vmatprep.subr.mxu0 %v757
    %931 = vmatpush1.msra.mxu0 %v756
    %932 = vmatprep.subr.mxu0 %v759
    %933 = vmatpush1.msra.mxu0 %v758
    %934 = vmatprep.subr.mxu0 %v761
    %935 = vmatpush1.msra.mxu0 %v760
    %936 = vmatprep.subr.mxu0 %v763
    %937 = vmatpush1.msra.mxu0 %v762
    %938 = vmatprep.subr.mxu0 0.0
    %939 = vmatpush1.msra.mxu0 0.0
    %940 = vmatprep.subr.mxu0 0.0
    %941 = vmatpush1.msra.mxu0 0.0
    %942 = vmatprep.subr.mxu0 0.0
    %943 = vmatpush1.msra.mxu0 0.0
    %944 = vmatprep.subr.mxu0 0.0
    %945 = vmatpush1.msra.mxu0 0.0
    %946 = vmatprep.subr.mxu0 0.0
    %947 = vmatpush1.msra.mxu0 0.0
    %948 = vmatprep.subr.mxu0 0.0
    %949 = vmatpush1.msra.mxu0 0.0
    %950 = vmatprep.subr.mxu0 0.0
    %951 = vmatpush1.msra.mxu0 0.0
    %952 = vmatprep.subr.mxu0 0.0
    %953 = vmatpush1.msra.mxu0 0.0
    %954 = vmatprep.subr.mxu0 0.0
    %955 = vmatpush1.msra.mxu0 0.0
    %956 = vmatprep.subr.mxu0 0.0
    %957 = vmatpush1.msra.mxu0 0.0
    %958 = vmatprep.subr.mxu0 0.0
    %959 = vmatpush1.msra.mxu0 0.0
    %960 = vmatprep.subr.mxu0 0.0
    %961 = vmatpush1.msra.mxu0 0.0
    %962 = vmatprep.subr.mxu0 0.0
    %963 = vmatpush1.msra.mxu0 0.0
    %964 = vmatprep.subr.mxu0 0.0
    %965 = vmatpush1.msra.mxu0 0.0
    %966 = vmatprep.subr.mxu0 0.0
    %967 = vmatpush1.msra.mxu0 0.0
    %968 = vmatprep.subr.mxu0 0.0
    %969 = vmatpush1.msra.mxu0 0.0
    %970 = vmatprep.mubr.f32.mxu0 0.0
    %971 = vmatmul.mubr.f32.gmra.mrb[0].mxu0 %v603
    %v972 = vpop.f32.mrb[0].mxu0
    %v973 = vadd.f32 %v902, %v972
    %v974 = vpop.f32.mrb[0].mxu0
    %v975 = vadd.f32 %v904, %v974
    %976 = vdwg.mxu0
    %v977 = vmax.f32 %v973, 0.0
    %v978 = vmax.f32 %v975, 0.0
    %979 = vst [vmem:[#allocation2 + $0x10] sm:$0xff] %v977
    %980 = vst [vmem:[#allocation2 + $0x18] sm:$0xff] %v978
    %v981 = vld [vmem:[#allocation4 + $0x20] sm:$0xff]
    %v982 = vld [vmem:[#allocation4 + $0x28] sm:$0xff]
    %v983 = vld [vmem:[#allocation4 + $0x30] sm:$0xff]
    %v984 = vld [vmem:[#allocation4 + $0x38] sm:$0xff]
    %v985 = vld [vmem:[#allocation4 + $0x40] sm:$0xff]
    %v986 = vld [vmem:[#allocation9] sm:$0xff]
    %v987 = vld [vmem:[#allocation9 + $0x8] sm:$0xff]
    %v988 = vld [vmem:[#allocation9 + $0x10] sm:$0xff]
    %v989 = vld [vmem:[#allocation9 + $0x18] sm:$0xff]
    %v990 = vld [vmem:[#allocation9 + $0x20] sm:$0xff]
    %v991 = vld [vmem:[#allocation9 + $0x28] sm:$0xff]
    %v992 = vld [vmem:[#allocation9 + $0x30] sm:$0xff]
    %v993 = vld [vmem:[#allocation9 + $0x38] sm:$0xff]
    %v994 = vld [vmem:[#allocation9 + $0x40] sm:$0xff]
    %v995 = vld [vmem:[#allocation9 + $0x48] sm:$0xff]
    %v996 = vld [vmem:[#allocation9 + $0x50] sm:$0xff]
    %v997 = vld [vmem:[#allocation9 + $0x58] sm:$0xff]
    %v998 = vld [vmem:[#allocation9 + $0x60] sm:$0xff]
    %v999 = vld [vmem:[#allocation9 + $0x68] sm:$0xff]
    %v1000 = vld [vmem:[#allocation9 + $0x70] sm:$0xff]
    %v1001 = vld [vmem:[#allocation9 + $0x78] sm:$0xff]
    %v1002 = vld [vmem:[#allocation9 + $0x80] sm:$0xff]
    %v1003 = vld [vmem:[#allocation9 + $0x88] sm:$0xff]
    %v1004 = vld [vmem:[#allocation9 + $0x90] sm:$0xff]
    %v1005 = vld [vmem:[#allocation9 + $0x98] sm:$0xff]
    %v1006 = vld [vmem:[#allocation9 + $0xa0] sm:$0xff]
    %v1007 = vld [vmem:[#allocation9 + $0xa8] sm:$0xff]
    %v1008 = vld [vmem:[#allocation9 + $0xb0] sm:$0xff]
    %v1009 = vld [vmem:[#allocation9 + $0xb8] sm:$0xff]
    %v1010 = vld [vmem:[#allocation9 + $0xc0] sm:$0xff]
    %v1011 = vld [vmem:[#allocation9 + $0xc8] sm:$0xff]
    %v1012 = vld [vmem:[#allocation9 + $0xd0] sm:$0xff]
    %v1013 = vld [vmem:[#allocation9 + $0xd8] sm:$0xff]
    %v1014 = vld [vmem:[#allocation9 + $0xe0] sm:$0xff]
    %v1015 = vld [vmem:[#allocation9 + $0xe8] sm:$0xff]
    %v1016 = vld [vmem:[#allocation9 + $0xf0] sm:$0xff]
    %v1017 = vld [vmem:[#allocation9 + $0xf8] sm:$0xff]
    %v1018 = vld [vmem:[#allocation9 + $0x100] sm:$0xff]
    %v1019 = vld [vmem:[#allocation9 + $0x108] sm:$0xff]
    %v1020 = vld [vmem:[#allocation9 + $0x110] sm:$0xff]
    %v1021 = vld [vmem:[#allocation9 + $0x118] sm:$0xff]
    %v1022 = vld [vmem:[#allocation9 + $0x120] sm:$0xff]
    %v1023 = vld [vmem:[#allocation9 + $0x128] sm:$0xff]
    %v1024 = vld [vmem:[#allocation9 + $0x130] sm:$0xff]
    %v1025 = vld [vmem:[#allocation9 + $0x138] sm:$0xff]
    %v1026 = vld [vmem:[#allocation9 + $0x140] sm:$0xff]
    %v1027 = vld [vmem:[#allocation9 + $0x148] sm:$0xff]
    %v1028 = vld [vmem:[#allocation9 + $0x150] sm:$0xff]
    %v1029 = vld [vmem:[#allocation9 + $0x158] sm:$0xff]
    %v1030 = vld [vmem:[#allocation9 + $0x160] sm:$0xff]
    %v1031 = vld [vmem:[#allocation9 + $0x168] sm:$0xff]
    %v1032 = vld [vmem:[#allocation9 + $0x170] sm:$0xff]
    %v1033 = vld [vmem:[#allocation9 + $0x178] sm:$0xff]
    %v1034 = vld [vmem:[#allocation9 + $0x180] sm:$0xff]
    %v1035 = vld [vmem:[#allocation9 + $0x188] sm:$0xff]
    %v1036 = vld [vmem:[#allocation9 + $0x190] sm:$0xff]
    %v1037 = vld [vmem:[#allocation9 + $0x198] sm:$0xff]
    %v1038 = vld [vmem:[#allocation9 + $0x1a0] sm:$0xff]
    %v1039 = vld [vmem:[#allocation9 + $0x1a8] sm:$0xff]
    %v1040 = vld [vmem:[#allocation9 + $0x1b0] sm:$0xff]
    %v1041 = vld [vmem:[#allocation9 + $0x1b8] sm:$0xff]
    %v1042 = vld [vmem:[#allocation9 + $0x1c0] sm:$0xff]
    %v1043 = vld [vmem:[#allocation9 + $0x1c8] sm:$0xff]
    %v1044 = vld [vmem:[#allocation9 + $0x1d0] sm:$0xff]
    %v1045 = vld [vmem:[#allocation9 + $0x1d8] sm:$0xff]
    %v1046 = vld [vmem:[#allocation9 + $0x1e0] sm:$0xff]
    %v1047 = vld [vmem:[#allocation9 + $0x1e8] sm:$0xff]
    %v1048 = vld [vmem:[#allocation9 + $0x1f0] sm:$0xff]
    %v1049 = vld [vmem:[#allocation9 + $0x1f8] sm:$0xff]
    %v1050 = vld [vmem:[#allocation9 + $0x200] sm:$0xff]
    %v1051 = vld [vmem:[#allocation9 + $0x208] sm:$0xff]
    %v1052 = vld [vmem:[#allocation9 + $0x210] sm:$0xff]
    %v1053 = vld [vmem:[#allocation9 + $0x218] sm:$0xff]
    %v1054 = vld [vmem:[#allocation9 + $0x220] sm:$0xff]
    %v1055 = vld [vmem:[#allocation9 + $0x228] sm:$0xff]
    %v1056 = vld [vmem:[#allocation9 + $0x230] sm:$0xff]
    %v1057 = vld [vmem:[#allocation9 + $0x238] sm:$0xff]
    %v1058 = vld [vmem:[#allocation9 + $0x240] sm:$0xff]
    %v1059 = vld [vmem:[#allocation9 + $0x248] sm:$0xff]
    %v1060 = vld [vmem:[#allocation9 + $0x250] sm:$0xff]
    %v1061 = vld [vmem:[#allocation9 + $0x258] sm:$0xff]
    %v1062 = vld [vmem:[#allocation9 + $0x260] sm:$0xff]
    %v1063 = vld [vmem:[#allocation9 + $0x268] sm:$0xff]
    %v1064 = vld [vmem:[#allocation9 + $0x270] sm:$0xff]
    %v1065 = vld [vmem:[#allocation9 + $0x278] sm:$0xff]
    %v1066 = vld [vmem:[#allocation9 + $0x280] sm:$0xff]
    %v1067 = vld [vmem:[#allocation9 + $0x288] sm:$0xff]
    %v1068 = vld [vmem:[#allocation9 + $0x290] sm:$0xff]
    %v1069 = vld [vmem:[#allocation9 + $0x298] sm:$0xff]
    %v1070 = vld [vmem:[#allocation9 + $0x2a0] sm:$0xff]
    %v1071 = vld [vmem:[#allocation9 + $0x2a8] sm:$0xff]
    %v1072 = vld [vmem:[#allocation9 + $0x2b0] sm:$0xff]
    %v1073 = vld [vmem:[#allocation9 + $0x2b8] sm:$0xff]
    %v1074 = vld [vmem:[#allocation9 + $0x2c0] sm:$0xff]
    %v1075 = vld [vmem:[#allocation9 + $0x2c8] sm:$0xff]
    %v1076 = vld [vmem:[#allocation9 + $0x2d0] sm:$0xff]
    %v1077 = vld [vmem:[#allocation9 + $0x2d8] sm:$0xff]
    %v1078 = vld [vmem:[#allocation9 + $0x2e0] sm:$0xff]
    %v1079 = vld [vmem:[#allocation9 + $0x2e8] sm:$0xff]
    %v1080 = vld [vmem:[#allocation9 + $0x2f0] sm:$0xff]
    %v1081 = vld [vmem:[#allocation9 + $0x2f8] sm:$0xff]
    %v1082 = vld [vmem:[#allocation9 + $0x300] sm:$0xff]
    %v1083 = vld [vmem:[#allocation9 + $0x308] sm:$0xff]
    %v1084 = vld [vmem:[#allocation9 + $0x310] sm:$0xff]
    %v1085 = vld [vmem:[#allocation9 + $0x318] sm:$0xff]
    %v1086 = vld [vmem:[#allocation9 + $0x320] sm:$0xff]
    %v1087 = vld [vmem:[#allocation9 + $0x328] sm:$0xff]
    %v1088 = vld [vmem:[#allocation9 + $0x330] sm:$0xff]
    %v1089 = vld [vmem:[#allocation9 + $0x338] sm:$0xff]
    %v1090 = vld [vmem:[#allocation9 + $0x340] sm:$0xff]
    %v1091 = vld [vmem:[#allocation9 + $0x348] sm:$0xff]
    %v1092 = vld [vmem:[#allocation9 + $0x350] sm:$0xff]
    %v1093 = vld [vmem:[#allocation9 + $0x358] sm:$0xff]
    %v1094 = vld [vmem:[#allocation9 + $0x360] sm:$0xff]
    %v1095 = vld [vmem:[#allocation9 + $0x368] sm:$0xff]
    %v1096 = vld [vmem:[#allocation9 + $0x370] sm:$0xff]
    %v1097 = vld [vmem:[#allocation9 + $0x378] sm:$0xff]
    %v1098 = vld [vmem:[#allocation9 + $0x380] sm:$0xff]
    %v1099 = vld [vmem:[#allocation9 + $0x388] sm:$0xff]
    %v1100 = vld [vmem:[#allocation9 + $0x390] sm:$0xff]
    %v1101 = vld [vmem:[#allocation9 + $0x398] sm:$0xff]
    %v1102 = vld [vmem:[#allocation9 + $0x3a0] sm:$0xff]
    %v1103 = vld [vmem:[#allocation9 + $0x3a8] sm:$0xff]
    %v1104 = vld [vmem:[#allocation9 + $0x3b0] sm:$0xff]
    %v1105 = vld [vmem:[#allocation9 + $0x3b8] sm:$0xff]
    %v1106 = vld [vmem:[#allocation9 + $0x3c0] sm:$0xff]
    %v1107 = vld [vmem:[#allocation9 + $0x3c8] sm:$0xff]
    %v1108 = vld [vmem:[#allocation9 + $0x3d0] sm:$0xff]
    %v1109 = vld [vmem:[#allocation9 + $0x3d8] sm:$0xff]
    %v1110 = vld [vmem:[#allocation9 + $0x3e0] sm:$0xff]
    %v1111 = vld [vmem:[#allocation9 + $0x3e8] sm:$0xff]
    %v1112 = vld [vmem:[#allocation9 + $0x3f0] sm:$0xff]
    %v1113 = vld [vmem:[#allocation9 + $0x3f8] sm:$0xff]
    %v1114 = vld [vmem:[#allocation9 + $0x400] sm:$0xff]
    %v1115 = vld [vmem:[#allocation9 + $0x408] sm:$0xff]
    %v1116 = vld [vmem:[#allocation9 + $0x410] sm:$0xff]
    %v1117 = vld [vmem:[#allocation9 + $0x418] sm:$0xff]
    %v1118 = vld [vmem:[#allocation9 + $0x420] sm:$0xff]
    %v1119 = vld [vmem:[#allocation9 + $0x428] sm:$0xff]
    %v1120 = vld [vmem:[#allocation9 + $0x430] sm:$0xff]
    %v1121 = vld [vmem:[#allocation9 + $0x438] sm:$0xff]
    %v1122 = vld [vmem:[#allocation9 + $0x440] sm:$0xff]
    %v1123 = vld [vmem:[#allocation9 + $0x448] sm:$0xff]
    %v1124 = vld [vmem:[#allocation9 + $0x450] sm:$0xff]
    %v1125 = vld [vmem:[#allocation9 + $0x458] sm:$0xff]
    %v1126 = vld [vmem:[#allocation9 + $0x460] sm:$0xff]
    %v1127 = vld [vmem:[#allocation9 + $0x468] sm:$0xff]
    %v1128 = vld [vmem:[#allocation9 + $0x470] sm:$0xff]
    %v1129 = vld [vmem:[#allocation9 + $0x478] sm:$0xff]
    %v1130 = vld [vmem:[#allocation9 + $0x480] sm:$0xff]
    %v1131 = vld [vmem:[#allocation9 + $0x488] sm:$0xff]
    %v1132 = vld [vmem:[#allocation9 + $0x490] sm:$0xff]
    %v1133 = vld [vmem:[#allocation9 + $0x498] sm:$0xff]
    %v1134 = vld [vmem:[#allocation9 + $0x4a0] sm:$0xff]
    %v1135 = vld [vmem:[#allocation9 + $0x4a8] sm:$0xff]
    %v1136 = vld [vmem:[#allocation9 + $0x4b0] sm:$0xff]
    %v1137 = vld [vmem:[#allocation9 + $0x4b8] sm:$0xff]
    %v1138 = vld [vmem:[#allocation9 + $0x4c0] sm:$0xff]
    %v1139 = vld [vmem:[#allocation9 + $0x4c8] sm:$0xff]
    %v1140 = vld [vmem:[#allocation9 + $0x4d0] sm:$0xff]
    %v1141 = vld [vmem:[#allocation9 + $0x4d8] sm:$0xff]
    %v1142 = vld [vmem:[#allocation9 + $0x4e0] sm:$0xff]
    %v1143 = vld [vmem:[#allocation9 + $0x4e8] sm:$0xff]
    %v1144 = vld [vmem:[#allocation9 + $0x4f0] sm:$0xff]
    %v1145 = vld [vmem:[#allocation9 + $0x4f8] sm:$0xff]
    %1146 = vmatprep.subr.mxu0 %v987
    %1147 = vmatpush1.msra.mxu0 %v986
    %1148 = vmatprep.subr.mxu0 %v989
    %1149 = vmatpush1.msra.mxu0 %v988
    %1150 = vmatprep.subr.mxu0 %v991
    %1151 = vmatpush1.msra.mxu0 %v990
    %1152 = vmatprep.subr.mxu0 %v993
    %1153 = vmatpush1.msra.mxu0 %v992
    %1154 = vmatprep.subr.mxu0 %v995
    %1155 = vmatpush1.msra.mxu0 %v994
    %1156 = vmatprep.subr.mxu0 %v997
    %1157 = vmatpush1.msra.mxu0 %v996
    %1158 = vmatprep.subr.mxu0 %v999
    %1159 = vmatpush1.msra.mxu0 %v998
    %1160 = vmatprep.subr.mxu0 %v1001
    %1161 = vmatpush1.msra.mxu0 %v1000
    %1162 = vmatprep.subr.mxu0 %v1003
    %1163 = vmatpush1.msra.mxu0 %v1002
    %1164 = vmatprep.subr.mxu0 %v1005
    %1165 = vmatpush1.msra.mxu0 %v1004
    %1166 = vmatprep.subr.mxu0 %v1007
    %1167 = vmatpush1.msra.mxu0 %v1006
    %1168 = vmatprep.subr.mxu0 %v1009
    %1169 = vmatpush1.msra.mxu0 %v1008
    %1170 = vmatprep.subr.mxu0 %v1011
    %1171 = vmatpush1.msra.mxu0 %v1010
    %1172 = vmatprep.subr.mxu0 %v1013
    %1173 = vmatpush1.msra.mxu0 %v1012
    %1174 = vmatprep.subr.mxu0 %v1015
    %1175 = vmatpush1.msra.mxu0 %v1014
    %1176 = vmatprep.subr.mxu0 %v1017
    %1177 = vmatpush1.msra.mxu0 %v1016
    %1178 = vmatprep.subr.mxu0 %v1019
    %1179 = vmatpush1.msra.mxu0 %v1018
    %1180 = vmatprep.subr.mxu0 %v1021
    %1181 = vmatpush1.msra.mxu0 %v1020
    %1182 = vmatprep.subr.mxu0 %v1023
    %1183 = vmatpush1.msra.mxu0 %v1022
    %1184 = vmatprep.subr.mxu0 %v1025
    %1185 = vmatpush1.msra.mxu0 %v1024
    %1186 = vmatprep.subr.mxu0 %v1027
    %1187 = vmatpush1.msra.mxu0 %v1026
    %1188 = vmatprep.subr.mxu0 %v1029
    %1189 = vmatpush1.msra.mxu0 %v1028
    %1190 = vmatprep.subr.mxu0 %v1031
    %1191 = vmatpush1.msra.mxu0 %v1030
    %1192 = vmatprep.subr.mxu0 %v1033
    %1193 = vmatpush1.msra.mxu0 %v1032
    %1194 = vmatprep.subr.mxu0 %v1035
    %1195 = vmatpush1.msra.mxu0 %v1034
    %1196 = vmatprep.subr.mxu0 %v1037
    %1197 = vmatpush1.msra.mxu0 %v1036
    %1198 = vmatprep.subr.mxu0 %v1039
    %1199 = vmatpush1.msra.mxu0 %v1038
    %1200 = vmatprep.subr.mxu0 %v1041
    %1201 = vmatpush1.msra.mxu0 %v1040
    %1202 = vmatprep.subr.mxu0 %v1043
    %1203 = vmatpush1.msra.mxu0 %v1042
    %1204 = vmatprep.subr.mxu0 %v1045
    %1205 = vmatpush1.msra.mxu0 %v1044
    %1206 = vmatprep.subr.mxu0 %v1047
    %1207 = vmatpush1.msra.mxu0 %v1046
    %1208 = vmatprep.subr.mxu0 %v1049
    %1209 = vmatpush1.msra.mxu0 %v1048
    %1210 = vmatprep.mubr.f32.mxu0 %v982
    %1211 = vmatmul.mubr.f32.gmra.mrb[0].mxu0 %v981
    %v1212 = vpop.f32.mrb[0].mxu0
    %v1213 = vadd.f32 %v210, %v1212
    %v1214 = vpop.f32.mrb[0].mxu0
    %v1215 = vadd.f32 %v214, %v1214
    %1216 = vdwg.mxu0
    %1217 = vmatprep.subr.mxu0 %v1051
    %1218 = vmatpush1.msra.mxu0 %v1050
    %1219 = vmatprep.subr.mxu0 %v1053
    %1220 = vmatpush1.msra.mxu0 %v1052
    %1221 = vmatprep.subr.mxu0 %v1055
    %1222 = vmatpush1.msra.mxu0 %v1054
    %1223 = vmatprep.subr.mxu0 %v1057
    %1224 = vmatpush1.msra.mxu0 %v1056
    %1225 = vmatprep.subr.mxu0 %v1059
    %1226 = vmatpush1.msra.mxu0 %v1058
    %1227 = vmatprep.subr.mxu0 %v1061
    %1228 = vmatpush1.msra.mxu0 %v1060
    %1229 = vmatprep.subr.mxu0 %v1063
    %1230 = vmatpush1.msra.mxu0 %v1062
    %1231 = vmatprep.subr.mxu0 %v1065
    %1232 = vmatpush1.msra.mxu0 %v1064
    %1233 = vmatprep.subr.mxu0 %v1067
    %1234 = vmatpush1.msra.mxu0 %v1066
    %1235 = vmatprep.subr.mxu0 %v1069
    %1236 = vmatpush1.msra.mxu0 %v1068
    %1237 = vmatprep.subr.mxu0 %v1071
    %1238 = vmatpush1.msra.mxu0 %v1070
    %1239 = vmatprep.subr.mxu0 %v1073
    %1240 = vmatpush1.msra.mxu0 %v1072
    %1241 = vmatprep.subr.mxu0 %v1075
    %1242 = vmatpush1.msra.mxu0 %v1074
    %1243 = vmatprep.subr.mxu0 %v1077
    %1244 = vmatpush1.msra.mxu0 %v1076
    %1245 = vmatprep.subr.mxu0 %v1079
    %1246 = vmatpush1.msra.mxu0 %v1078
    %1247 = vmatprep.subr.mxu0 %v1081
    %1248 = vmatpush1.msra.mxu0 %v1080
    %1249 = vmatprep.subr.mxu0 %v1083
    %1250 = vmatpush1.msra.mxu0 %v1082
    %1251 = vmatprep.subr.mxu0 %v1085
    %1252 = vmatpush1.msra.mxu0 %v1084
    %1253 = vmatprep.subr.mxu0 %v1087
    %1254 = vmatpush1.msra.mxu0 %v1086
    %1255 = vmatprep.subr.mxu0 %v1089
    %1256 = vmatpush1.msra.mxu0 %v1088
    %1257 = vmatprep.subr.mxu0 %v1091
    %1258 = vmatpush1.msra.mxu0 %v1090
    %1259 = vmatprep.subr.mxu0 %v1093
    %1260 = vmatpush1.msra.mxu0 %v1092
    %1261 = vmatprep.subr.mxu0 %v1095
    %1262 = vmatpush1.msra.mxu0 %v1094
    %1263 = vmatprep.subr.mxu0 %v1097
    %1264 = vmatpush1.msra.mxu0 %v1096
    %1265 = vmatprep.subr.mxu0 %v1099
    %1266 = vmatpush1.msra.mxu0 %v1098
    %1267 = vmatprep.subr.mxu0 %v1101
    %1268 = vmatpush1.msra.mxu0 %v1100
    %1269 = vmatprep.subr.mxu0 %v1103
    %1270 = vmatpush1.msra.mxu0 %v1102
    %1271 = vmatprep.subr.mxu0 %v1105
    %1272 = vmatpush1.msra.mxu0 %v1104
    %1273 = vmatprep.subr.mxu0 %v1107
    %1274 = vmatpush1.msra.mxu0 %v1106
    %1275 = vmatprep.subr.mxu0 %v1109
    %1276 = vmatpush1.msra.mxu0 %v1108
    %1277 = vmatprep.subr.mxu0 %v1111
    %1278 = vmatpush1.msra.mxu0 %v1110
    %1279 = vmatprep.subr.mxu0 %v1113
    %1280 = vmatpush1.msra.mxu0 %v1112
    %1281 = vmatprep.mubr.f32.mxu0 %v984
    %1282 = vmatmul.mubr.f32.gmra.mrb[0].mxu0 %v983
    %v1283 = vpop.f32.mrb[0].mxu0
    %v1284 = vadd.f32 %v1213, %v1283
    %v1285 = vpop.f32.mrb[0].mxu0
    %v1286 = vadd.f32 %v1215, %v1285
    %1287 = vdwg.mxu0
    %1288 = vmatprep.subr.mxu0 %v1115
    %1289 = vmatpush1.msra.mxu0 %v1114
    %1290 = vmatprep.subr.mxu0 %v1117
    %1291 = vmatpush1.msra.mxu0 %v1116
    %1292 = vmatprep.subr.mxu0 %v1119
    %1293 = vmatpush1.msra.mxu0 %v1118
    %1294 = vmatprep.subr.mxu0 %v1121
    %1295 = vmatpush1.msra.mxu0 %v1120
    %1296 = vmatprep.subr.mxu0 %v1123
    %1297 = vmatpush1.msra.mxu0 %v1122
    %1298 = vmatprep.subr.mxu0 %v1125
    %1299 = vmatpush1.msra.mxu0 %v1124
    %1300 = vmatprep.subr.mxu0 %v1127
    %1301 = vmatpush1.msra.mxu0 %v1126
    %1302 = vmatprep.subr.mxu0 %v1129
    %1303 = vmatpush1.msra.mxu0 %v1128
    %1304 = vmatprep.subr.mxu0 %v1131
    %1305 = vmatpush1.msra.mxu0 %v1130
    %1306 = vmatprep.subr.mxu0 %v1133
    %1307 = vmatpush1.msra.mxu0 %v1132
    %1308 = vmatprep.subr.mxu0 %v1135
    %1309 = vmatpush1.msra.mxu0 %v1134
    %1310 = vmatprep.subr.mxu0 %v1137
    %1311 = vmatpush1.msra.mxu0 %v1136
    %1312 = vmatprep.subr.mxu0 %v1139
    %1313 = vmatpush1.msra.mxu0 %v1138
    %1314 = vmatprep.subr.mxu0 %v1141
    %1315 = vmatpush1.msra.mxu0 %v1140
    %1316 = vmatprep.subr.mxu0 %v1143
    %1317 = vmatpush1.msra.mxu0 %v1142
    %1318 = vmatprep.subr.mxu0 %v1145
    %1319 = vmatpush1.msra.mxu0 %v1144
    %1320 = vmatprep.subr.mxu0 0.0
    %1321 = vmatpush1.msra.mxu0 0.0
    %1322 = vmatprep.subr.mxu0 0.0
    %1323 = vmatpush1.msra.mxu0 0.0
    %1324 = vmatprep.subr.mxu0 0.0
    %1325 = vmatpush1.msra.mxu0 0.0
    %1326 = vmatprep.subr.mxu0 0.0
    %1327 = vmatpush1.msra.mxu0 0.0
    %1328 = vmatprep.subr.mxu0 0.0
    %1329 = vmatpush1.msra.mxu0 0.0
    %1330 = vmatprep.subr.mxu0 0.0
    %1331 = vmatpush1.msra.mxu0 0.0
    %1332 = vmatprep.subr.mxu0 0.0
    %1333 = vmatpush1.msra.mxu0 0.0
    %1334 = vmatprep.subr.mxu0 0.0
    %1335 = vmatpush1.msra.mxu0 0.0
    %1336 = vmatprep.subr.mxu0 0.0
    %1337 = vmatpush1.msra.mxu0 0.0
    %1338 = vmatprep.subr.mxu0 0.0
    %1339 = vmatpush1.msra.mxu0 0.0
    %1340 = vmatprep.subr.mxu0 0.0
    %1341 = vmatpush1.msra.mxu0 0.0
    %1342 = vmatprep.subr.mxu0 0.0
    %1343 = vmatpush1.msra.mxu0 0.0
    %1344 = vmatprep.subr.mxu0 0.0
    %1345 = vmatpush1.msra.mxu0 0.0
    %1346 = vmatprep.subr.mxu0 0.0
    %1347 = vmatpush1.msra.mxu0 0.0
    %1348 = vmatprep.subr.mxu0 0.0
    %1349 = vmatpush1.msra.mxu0 0.0
    %1350 = vmatprep.subr.mxu0 0.0
    %1351 = vmatpush1.msra.mxu0 0.0
    %1352 = vmatprep.mubr.f32.mxu0 0.0
    %1353 = vmatmul.mubr.f32.gmra.mrb[0].mxu0 %v985
    %v1354 = vpop.f32.mrb[0].mxu0
    %v1355 = vadd.f32 %v1284, %v1354
    %v1356 = vpop.f32.mrb[0].mxu0
    %v1357 = vadd.f32 %v1286, %v1356
    %1358 = vdwg.mxu0
    %v1359 = vmax.f32 %v1355, 0.0
    %v1360 = vmax.f32 %v1357, 0.0
    %1361 = vst [vmem:[#allocation2 + $0x20] sm:$0xff] %v1359
    %1362 = vst [vmem:[#allocation2 + $0x28] sm:$0xff] %v1360
    %v1363 = vld [vmem:[#allocation4 + $0x30] sm:$0xff]
    %v1364 = vld [vmem:[#allocation4 + $0x38] sm:$0xff]
    %v1365 = vld [vmem:[#allocation4 + $0x40] sm:$0xff]
    %v1366 = vld [vmem:[#allocation4 + $0x48] sm:$0xff]
    %v1367 = vld [vmem:[#allocation4 + $0x50] sm:$0xff]
    %v1368 = vld [vmem:[#allocation9] sm:$0xff]
    %v1369 = vld [vmem:[#allocation9 + $0x8] sm:$0xff]
    %v1370 = vld [vmem:[#allocation9 + $0x10] sm:$0xff]
    %v1371 = vld [vmem:[#allocation9 + $0x18] sm:$0xff]
    %v1372 = vld [vmem:[#allocation9 + $0x20] sm:$0xff]
    %v1373 = vld [vmem:[#allocation9 + $0x28] sm:$0xff]
    %v1374 = vld [vmem:[#allocation9 + $0x30] sm:$0xff]
    %v1375 = vld [vmem:[#allocation9 + $0x38] sm:$0xff]
    %v1376 = vld [vmem:[#allocation9 + $0x40] sm:$0xff]
    %v1377 = vld [vmem:[#allocation9 + $0x48] sm:$0xff]
    %v1378 = vld [vmem:[#allocation9 + $0x50] sm:$0xff]
    %v1379 = vld [vmem:[#allocation9 + $0x58] sm:$0xff]
    %v1380 = vld [vmem:[#allocation9 + $0x60] sm:$0xff]
    %v1381 = vld [vmem:[#allocation9 + $0x68] sm:$0xff]
    %v1382 = vld [vmem:[#allocation9 + $0x70] sm:$0xff]
    %v1383 = vld [vmem:[#allocation9 + $0x78] sm:$0xff]
    %v1384 = vld [vmem:[#allocation9 + $0x80] sm:$0xff]
    %v1385 = vld [vmem:[#allocation9 + $0x88] sm:$0xff]
    %v1386 = vld [vmem:[#allocation9 + $0x90] sm:$0xff]
    %v1387 = vld [vmem:[#allocation9 + $0x98] sm:$0xff]
    %v1388 = vld [vmem:[#allocation9 + $0xa0] sm:$0xff]
    %v1389 = vld [vmem:[#allocation9 + $0xa8] sm:$0xff]
    %v1390 = vld [vmem:[#allocation9 + $0xb0] sm:$0xff]
    %v1391 = vld [vmem:[#allocation9 + $0xb8] sm:$0xff]
    %v1392 = vld [vmem:[#allocation9 + $0xc0] sm:$0xff]
    %v1393 = vld [vmem:[#allocation9 + $0xc8] sm:$0xff]
    %v1394 = vld [vmem:[#allocation9 + $0xd0] sm:$0xff]
    %v1395 = vld [vmem:[#allocation9 + $0xd8] sm:$0xff]
    %v1396 = vld [vmem:[#allocation9 + $0xe0] sm:$0xff]
    %v1397 = vld [vmem:[#allocation9 + $0xe8] sm:$0xff]
    %v1398 = vld [vmem:[#allocation9 + $0xf0] sm:$0xff]
    %v1399 = vld [vmem:[#allocation9 + $0xf8] sm:$0xff]
    %v1400 = vld [vmem:[#allocation9 + $0x100] sm:$0xff]
    %v1401 = vld [vmem:[#allocation9 + $0x108] sm:$0xff]
    %v1402 = vld [vmem:[#allocation9 + $0x110] sm:$0xff]
    %v1403 = vld [vmem:[#allocation9 + $0x118] sm:$0xff]
    %v1404 = vld [vmem:[#allocation9 + $0x120] sm:$0xff]
    %v1405 = vld [vmem:[#allocation9 + $0x128] sm:$0xff]
    %v1406 = vld [vmem:[#allocation9 + $0x130] sm:$0xff]
    %v1407 = vld [vmem:[#allocation9 + $0x138] sm:$0xff]
    %v1408 = vld [vmem:[#allocation9 + $0x140] sm:$0xff]
    %v1409 = vld [vmem:[#allocation9 + $0x148] sm:$0xff]
    %v1410 = vld [vmem:[#allocation9 + $0x150] sm:$0xff]
    %v1411 = vld [vmem:[#allocation9 + $0x158] sm:$0xff]
    %v1412 = vld [vmem:[#allocation9 + $0x160] sm:$0xff]
    %v1413 = vld [vmem:[#allocation9 + $0x168] sm:$0xff]
    %v1414 = vld [vmem:[#allocation9 + $0x170] sm:$0xff]
    %v1415 = vld [vmem:[#allocation9 + $0x178] sm:$0xff]
    %v1416 = vld [vmem:[#allocation9 + $0x180] sm:$0xff]
    %v1417 = vld [vmem:[#allocation9 + $0x188] sm:$0xff]
    %v1418 = vld [vmem:[#allocation9 + $0x190] sm:$0xff]
    %v1419 = vld [vmem:[#allocation9 + $0x198] sm:$0xff]
    %v1420 = vld [vmem:[#allocation9 + $0x1a0] sm:$0xff]
    %v1421 = vld [vmem:[#allocation9 + $0x1a8] sm:$0xff]
    %v1422 = vld [vmem:[#allocation9 + $0x1b0] sm:$0xff]
    %v1423 = vld [vmem:[#allocation9 + $0x1b8] sm:$0xff]
    %v1424 = vld [vmem:[#allocation9 + $0x1c0] sm:$0xff]
    %v1425 = vld [vmem:[#allocation9 + $0x1c8] sm:$0xff]
    %v1426 = vld [vmem:[#allocation9 + $0x1d0] sm:$0xff]
    %v1427 = vld [vmem:[#allocation9 + $0x1d8] sm:$0xff]
    %v1428 = vld [vmem:[#allocation9 + $0x1e0] sm:$0xff]
    %v1429 = vld [vmem:[#allocation9 + $0x1e8] sm:$0xff]
    %v1430 = vld [vmem:[#allocation9 + $0x1f0] sm:$0xff]
    %v1431 = vld [vmem:[#allocation9 + $0x1f8] sm:$0xff]
    %v1432 = vld [vmem:[#allocation9 + $0x200] sm:$0xff]
    %v1433 = vld [vmem:[#allocation9 + $0x208] sm:$0xff]
    %v1434 = vld [vmem:[#allocation9 + $0x210] sm:$0xff]
    %v1435 = vld [vmem:[#allocation9 + $0x218] sm:$0xff]
    %v1436 = vld [vmem:[#allocation9 + $0x220] sm:$0xff]
    %v1437 = vld [vmem:[#allocation9 + $0x228] sm:$0xff]
    %v1438 = vld [vmem:[#allocation9 + $0x230] sm:$0xff]
    %v1439 = vld [vmem:[#allocation9 + $0x238] sm:$0xff]
    %v1440 = vld [vmem:[#allocation9 + $0x240] sm:$0xff]
    %v1441 = vld [vmem:[#allocation9 + $0x248] sm:$0xff]
    %v1442 = vld [vmem:[#allocation9 + $0x250] sm:$0xff]
    %v1443 = vld [vmem:[#allocation9 + $0x258] sm:$0xff]
    %v1444 = vld [vmem:[#allocation9 + $0x260] sm:$0xff]
    %v1445 = vld [vmem:[#allocation9 + $0x268] sm:$0xff]
    %v1446 = vld [vmem:[#allocation9 + $0x270] sm:$0xff]
    %v1447 = vld [vmem:[#allocation9 + $0x278] sm:$0xff]
    %v1448 = vld [vmem:[#allocation9 + $0x280] sm:$0xff]
    %v1449 = vld [vmem:[#allocation9 + $0x288] sm:$0xff]
    %v1450 = vld [vmem:[#allocation9 + $0x290] sm:$0xff]
    %v1451 = vld [vmem:[#allocation9 + $0x298] sm:$0xff]
    %v1452 = vld [vmem:[#allocation9 + $0x2a0] sm:$0xff]
    %v1453 = vld [vmem:[#allocation9 + $0x2a8] sm:$0xff]
    %v1454 = vld [vmem:[#allocation9 + $0x2b0] sm:$0xff]
    %v1455 = vld [vmem:[#allocation9 + $0x2b8] sm:$0xff]
    %v1456 = vld [vmem:[#allocation9 + $0x2c0] sm:$0xff]
    %v1457 = vld [vmem:[#allocation9 + $0x2c8] sm:$0xff]
    %v1458 = vld [vmem:[#allocation9 + $0x2d0] sm:$0xff]
    %v1459 = vld [vmem:[#allocation9 + $0x2d8] sm:$0xff]
    %v1460 = vld [vmem:[#allocation9 + $0x2e0] sm:$0xff]
    %v1461 = vld [vmem:[#allocation9 + $0x2e8] sm:$0xff]
    %v1462 = vld [vmem:[#allocation9 + $0x2f0] sm:$0xff]
    %v1463 = vld [vmem:[#allocation9 + $0x2f8] sm:$0xff]
    %v1464 = vld [vmem:[#allocation9 + $0x300] sm:$0xff]
    %v1465 = vld [vmem:[#allocation9 + $0x308] sm:$0xff]
    %v1466 = vld [vmem:[#allocation9 + $0x310] sm:$0xff]
    %v1467 = vld [vmem:[#allocation9 + $0x318] sm:$0xff]
    %v1468 = vld [vmem:[#allocation9 + $0x320] sm:$0xff]
    %v1469 = vld [vmem:[#allocation9 + $0x328] sm:$0xff]
    %v1470 = vld [vmem:[#allocation9 + $0x330] sm:$0xff]
    %v1471 = vld [vmem:[#allocation9 + $0x338] sm:$0xff]
    %v1472 = vld [vmem:[#allocation9 + $0x340] sm:$0xff]
    %v1473 = vld [vmem:[#allocation9 + $0x348] sm:$0xff]
    %v1474 = vld [vmem:[#allocation9 + $0x350] sm:$0xff]
    %v1475 = vld [vmem:[#allocation9 + $0x358] sm:$0xff]
    %v1476 = vld [vmem:[#allocation9 + $0x360] sm:$0xff]
    %v1477 = vld [vmem:[#allocation9 + $0x368] sm:$0xff]
    %v1478 = vld [vmem:[#allocation9 + $0x370] sm:$0xff]
    %v1479 = vld [vmem:[#allocation9 + $0x378] sm:$0xff]
    %v1480 = vld [vmem:[#allocation9 + $0x380] sm:$0xff]
    %v1481 = vld [vmem:[#allocation9 + $0x388] sm:$0xff]
    %v1482 = vld [vmem:[#allocation9 + $0x390] sm:$0xff]
    %v1483 = vld [vmem:[#allocation9 + $0x398] sm:$0xff]
    %v1484 = vld [vmem:[#allocation9 + $0x3a0] sm:$0xff]
    %v1485 = vld [vmem:[#allocation9 + $0x3a8] sm:$0xff]
    %v1486 = vld [vmem:[#allocation9 + $0x3b0] sm:$0xff]
    %v1487 = vld [vmem:[#allocation9 + $0x3b8] sm:$0xff]
    %v1488 = vld [vmem:[#allocation9 + $0x3c0] sm:$0xff]
    %v1489 = vld [vmem:[#allocation9 + $0x3c8] sm:$0xff]
    %v1490 = vld [vmem:[#allocation9 + $0x3d0] sm:$0xff]
    %v1491 = vld [vmem:[#allocation9 + $0x3d8] sm:$0xff]
    %v1492 = vld [vmem:[#allocation9 + $0x3e0] sm:$0xff]
    %v1493 = vld [vmem:[#allocation9 + $0x3e8] sm:$0xff]
    %v1494 = vld [vmem:[#allocation9 + $0x3f0] sm:$0xff]
    %v1495 = vld [vmem:[#allocation9 + $0x3f8] sm:$0xff]
    %v1496 = vld [vmem:[#allocation9 + $0x400] sm:$0xff]
    %v1497 = vld [vmem:[#allocation9 + $0x408] sm:$0xff]
    %v1498 = vld [vmem:[#allocation9 + $0x410] sm:$0xff]
    %v1499 = vld [vmem:[#allocation9 + $0x418] sm:$0xff]
    %v1500 = vld [vmem:[#allocation9 + $0x420] sm:$0xff]
    %v1501 = vld [vmem:[#allocation9 + $0x428] sm:$0xff]
    %v1502 = vld [vmem:[#allocation9 + $0x430] sm:$0xff]
    %v1503 = vld [vmem:[#allocation9 + $0x438] sm:$0xff]
    %v1504 = vld [vmem:[#allocation9 + $0x440] sm:$0xff]
    %v1505 = vld [vmem:[#allocation9 + $0x448] sm:$0xff]
    %v1506 = vld [vmem:[#allocation9 + $0x450] sm:$0xff]
    %v1507 = vld [vmem:[#allocation9 + $0x458] sm:$0xff]
    %v1508 = vld [vmem:[#allocation9 + $0x460] sm:$0xff]
    %v1509 = vld [vmem:[#allocation9 + $0x468] sm:$0xff]
    %v1510 = vld [vmem:[#allocation9 + $0x470] sm:$0xff]
    %v1511 = vld [vmem:[#allocation9 + $0x478] sm:$0xff]
    %v1512 = vld [vmem:[#allocation9 + $0x480] sm:$0xff]
    %v1513 = vld [vmem:[#allocation9 + $0x488] sm:$0xff]
    %v1514 = vld [vmem:[#allocation9 + $0x490] sm:$0xff]
    %v1515 = vld [vmem:[#allocation9 + $0x498] sm:$0xff]
    %v1516 = vld [vmem:[#allocation9 + $0x4a0] sm:$0xff]
    %v1517 = vld [vmem:[#allocation9 + $0x4a8] sm:$0xff]
    %v1518 = vld [vmem:[#allocation9 + $0x4b0] sm:$0xff]
    %v1519 = vld [vmem:[#allocation9 + $0x4b8] sm:$0xff]
    %v1520 = vld [vmem:[#allocation9 + $0x4c0] sm:$0xff]
    %v1521 = vld [vmem:[#allocation9 + $0x4c8] sm:$0xff]
    %v1522 = vld [vmem:[#allocation9 + $0x4d0] sm:$0xff]
    %v1523 = vld [vmem:[#allocation9 + $0x4d8] sm:$0xff]
    %v1524 = vld [vmem:[#allocation9 + $0x4e0] sm:$0xff]
    %v1525 = vld [vmem:[#allocation9 + $0x4e8] sm:$0xff]
    %v1526 = vld [vmem:[#allocation9 + $0x4f0] sm:$0xff]
    %v1527 = vld [vmem:[#allocation9 + $0x4f8] sm:$0xff]
    %1528 = vmatprep.subr.mxu0 %v1369
    %1529 = vmatpush1.msra.mxu0 %v1368
    %1530 = vmatprep.subr.mxu0 %v1371
    %1531 = vmatpush1.msra.mxu0 %v1370
    %1532 = vmatprep.subr.mxu0 %v1373
    %1533 = vmatpush1.msra.mxu0 %v1372
    %1534 = vmatprep.subr.mxu0 %v1375
    %1535 = vmatpush1.msra.mxu0 %v1374
    %1536 = vmatprep.subr.mxu0 %v1377
    %1537 = vmatpush1.msra.mxu0 %v1376
    %1538 = vmatprep.subr.mxu0 %v1379
    %1539 = vmatpush1.msra.mxu0 %v1378
    %1540 = vmatprep.subr.mxu0 %v1381
    %1541 = vmatpush1.msra.mxu0 %v1380
    %1542 = vmatprep.subr.mxu0 %v1383
    %1543 = vmatpush1.msra.mxu0 %v1382
    %1544 = vmatprep.subr.mxu0 %v1385
    %1545 = vmatpush1.msra.mxu0 %v1384
    %1546 = vmatprep.subr.mxu0 %v1387
    %1547 = vmatpush1.msra.mxu0 %v1386
    %1548 = vmatprep.subr.mxu0 %v1389
    %1549 = vmatpush1.msra.mxu0 %v1388
    %1550 = vmatprep.subr.mxu0 %v1391
    %1551 = vmatpush1.msra.mxu0 %v1390
    %1552 = vmatprep.subr.mxu0 %v1393
    %1553 = vmatpush1.msra.mxu0 %v1392
    %1554 = vmatprep.subr.mxu0 %v1395
    %1555 = vmatpush1.msra.mxu0 %v1394
    %1556 = vmatprep.subr.mxu0 %v1397
    %1557 = vmatpush1.msra.mxu0 %v1396
    %1558 = vmatprep.subr.mxu0 %v1399
    %1559 = vmatpush1.msra.mxu0 %v1398
    %1560 = vmatprep.subr.mxu0 %v1401
    %1561 = vmatpush1.msra.mxu0 %v1400
    %1562 = vmatprep.subr.mxu0 %v1403
    %1563 = vmatpush1.msra.mxu0 %v1402
    %1564 = vmatprep.subr.mxu0 %v1405
    %1565 = vmatpush1.msra.mxu0 %v1404
    %1566 = vmatprep.subr.mxu0 %v1407
    %1567 = vmatpush1.msra.mxu0 %v1406
    %1568 = vmatprep.subr.mxu0 %v1409
    %1569 = vmatpush1.msra.mxu0 %v1408
    %1570 = vmatprep.subr.mxu0 %v1411
    %1571 = vmatpush1.msra.mxu0 %v1410
    %1572 = vmatprep.subr.mxu0 %v1413
    %1573 = vmatpush1.msra.mxu0 %v1412
    %1574 = vmatprep.subr.mxu0 %v1415
    %1575 = vmatpush1.msra.mxu0 %v1414
    %1576 = vmatprep.subr.mxu0 %v1417
    %1577 = vmatpush1.msra.mxu0 %v1416
    %1578 = vmatprep.subr.mxu0 %v1419
    %1579 = vmatpush1.msra.mxu0 %v1418
    %1580 = vmatprep.subr.mxu0 %v1421
    %1581 = vmatpush1.msra.mxu0 %v1420
    %1582 = vmatprep.subr.mxu0 %v1423
    %1583 = vmatpush1.msra.mxu0 %v1422
    %1584 = vmatprep.subr.mxu0 %v1425
    %1585 = vmatpush1.msra.mxu0 %v1424
    %1586 = vmatprep.subr.mxu0 %v1427
    %1587 = vmatpush1.msra.mxu0 %v1426
    %1588 = vmatprep.subr.mxu0 %v1429
    %1589 = vmatpush1.msra.mxu0 %v1428
    %1590 = vmatprep.subr.mxu0 %v1431
    %1591 = vmatpush1.msra.mxu0 %v1430
    %1592 = vmatprep.mubr.f32.mxu0 %v1364
    %1593 = vmatmul.mubr.f32.gmra.mrb[0].mxu0 %v1363
    %v1594 = vpop.f32.mrb[0].mxu0
    %v1595 = vadd.f32 %v210, %v1594
    %v1596 = vpop.f32.mrb[0].mxu0
    %v1597 = vadd.f32 %v214, %v1596
    %1598 = vdwg.mxu0
    %1599 = vmatprep.subr.mxu0 %v1433
    %1600 = vmatpush1.msra.mxu0 %v1432
    %1601 = vmatprep.subr.mxu0 %v1435
    %1602 = vmatpush1.msra.mxu0 %v1434
    %1603 = vmatprep.subr.mxu0 %v1437
    %1604 = vmatpush1.msra.mxu0 %v1436
    %1605 = vmatprep.subr.mxu0 %v1439
    %1606 = vmatpush1.msra.mxu0 %v1438
    %1607 = vmatprep.subr.mxu0 %v1441
    %1608 = vmatpush1.msra.mxu0 %v1440
    %1609 = vmatprep.subr.mxu0 %v1443
    %1610 = vmatpush1.msra.mxu0 %v1442
    %1611 = vmatprep.subr.mxu0 %v1445
    %1612 = vmatpush1.msra.mxu0 %v1444
    %1613 = vmatprep.subr.mxu0 %v1447
    %1614 = vmatpush1.msra.mxu0 %v1446
    %1615 = vmatprep.subr.mxu0 %v1449
    %1616 = vmatpush1.msra.mxu0 %v1448
    %1617 = vmatprep.subr.mxu0 %v1451
    %1618 = vmatpush1.msra.mxu0 %v1450
    %1619 = vmatprep.subr.mxu0 %v1453
    %1620 = vmatpush1.msra.mxu0 %v1452
    %1621 = vmatprep.subr.mxu0 %v1455
    %1622 = vmatpush1.msra.mxu0 %v1454
    %1623 = vmatprep.subr.mxu0 %v1457
    %1624 = vmatpush1.msra.mxu0 %v1456
    %1625 = vmatprep.subr.mxu0 %v1459
    %1626 = vmatpush1.msra.mxu0 %v1458
    %1627 = vmatprep.subr.mxu0 %v1461
    %1628 = vmatpush1.msra.mxu0 %v1460
    %1629 = vmatprep.subr.mxu0 %v1463
    %1630 = vmatpush1.msra.mxu0 %v1462
    %1631 = vmatprep.subr.mxu0 %v1465
    %1632 = vmatpush1.msra.mxu0 %v1464
    %1633 = vmatprep.subr.mxu0 %v1467
    %1634 = vmatpush1.msra.mxu0 %v1466
    %1635 = vmatprep.subr.mxu0 %v1469
    %1636 = vmatpush1.msra.mxu0 %v1468
    %1637 = vmatprep.subr.mxu0 %v1471
    %1638 = vmatpush1.msra.mxu0 %v1470
    %1639 = vmatprep.subr.mxu0 %v1473
    %1640 = vmatpush1.msra.mxu0 %v1472
    %1641 = vmatprep.subr.mxu0 %v1475
    %1642 = vmatpush1.msra.mxu0 %v1474
    %1643 = vmatprep.subr.mxu0 %v1477
    %1644 = vmatpush1.msra.mxu0 %v1476
    %1645 = vmatprep.subr.mxu0 %v1479
    %1646 = vmatpush1.msra.mxu0 %v1478
    %1647 = vmatprep.subr.mxu0 %v1481
    %1648 = vmatpush1.msra.mxu0 %v1480
    %1649 = vmatprep.subr.mxu0 %v1483
    %1650 = vmatpush1.msra.mxu0 %v1482
    %1651 = vmatprep.subr.mxu0 %v1485
    %1652 = vmatpush1.msra.mxu0 %v1484
    %1653 = vmatprep.subr.mxu0 %v1487
    %1654 = vmatpush1.msra.mxu0 %v1486
    %1655 = vmatprep.subr.mxu0 %v1489
    %1656 = vmatpush1.msra.mxu0 %v1488
    %1657 = vmatprep.subr.mxu0 %v1491
    %1658 = vmatpush1.msra.mxu0 %v1490
    %1659 = vmatprep.subr.mxu0 %v1493
    %1660 = vmatpush1.msra.mxu0 %v1492
    %1661 = vmatprep.subr.mxu0 %v1495
    %1662 = vmatpush1.msra.mxu0 %v1494
    %1663 = vmatprep.mubr.f32.mxu0 %v1366
    %1664 = vmatmul.mubr.f32.gmra.mrb[0].mxu0 %v1365
    %v1665 = vpop.f32.mrb[0].mxu0
    %v1666 = vadd.f32 %v1595, %v1665
    %v1667 = vpop.f32.mrb[0].mxu0
    %v1668 = vadd.f32 %v1597, %v1667
    %1669 = vdwg.mxu0
    %1670 = vmatprep.subr.mxu0 %v1497
    %1671 = vmatpush1.msra.mxu0 %v1496
    %1672 = vmatprep.subr.mxu0 %v1499
    %1673 = vmatpush1.msra.mxu0 %v1498
    %1674 = vmatprep.subr.mxu0 %v1501
    %1675 = vmatpush1.msra.mxu0 %v1500
    %1676 = vmatprep.subr.mxu0 %v1503
    %1677 = vmatpush1.msra.mxu0 %v1502
    %1678 = vmatprep.subr.mxu0 %v1505
    %1679 = vmatpush1.msra.mxu0 %v1504
    %1680 = vmatprep.subr.mxu0 %v1507
    %1681 = vmatpush1.msra.mxu0 %v1506
    %1682 = vmatprep.subr.mxu0 %v1509
    %1683 = vmatpush1.msra.mxu0 %v1508
    %1684 = vmatprep.subr.mxu0 %v1511
    %1685 = vmatpush1.msra.mxu0 %v1510
    %1686 = vmatprep.subr.mxu0 %v1513
    %1687 = vmatpush1.msra.mxu0 %v1512
    %1688 = vmatprep.subr.mxu0 %v1515
    %1689 = vmatpush1.msra.mxu0 %v1514
    %1690 = vmatprep.subr.mxu0 %v1517
    %1691 = vmatpush1.msra.mxu0 %v1516
    %1692 = vmatprep.subr.mxu0 %v1519
    %1693 = vmatpush1.msra.mxu0 %v1518
    %1694 = vmatprep.subr.mxu0 %v1521
    %1695 = vmatpush1.msra.mxu0 %v1520
    %1696 = vmatprep.subr.mxu0 %v1523
    %1697 = vmatpush1.msra.mxu0 %v1522
    %1698 = vmatprep.subr.mxu0 %v1525
    %1699 = vmatpush1.msra.mxu0 %v1524
    %1700 = vmatprep.subr.mxu0 %v1527
    %1701 = vmatpush1.msra.mxu0 %v1526
    %1702 = vmatprep.subr.mxu0 0.0
    %1703 = vmatpush1.msra.mxu0 0.0
    %1704 = vmatprep.subr.mxu0 0.0
    %1705 = vmatpush1.msra.mxu0 0.0
    %1706 = vmatprep.subr.mxu0 0.0
    %1707 = vmatpush1.msra.mxu0 0.0
    %1708 = vmatprep.subr.mxu0 0.0
    %1709 = vmatpush1.msra.mxu0 0.0
    %1710 = vmatprep.subr.mxu0 0.0
    %1711 = vmatpush1.msra.mxu0 0.0
    %1712 = vmatprep.subr.mxu0 0.0
    %1713 = vmatpush1.msra.mxu0 0.0
    %1714 = vmatprep.subr.mxu0 0.0
    %1715 = vmatpush1.msra.mxu0 0.0
    %1716 = vmatprep.subr.mxu0 0.0
    %1717 = vmatpush1.msra.mxu0 0.0
    %1718 = vmatprep.subr.mxu0 0.0
    %1719 = vmatpush1.msra.mxu0 0.0
    %1720 = vmatprep.subr.mxu0 0.0
    %1721 = vmatpush1.msra.mxu0 0.0
    %1722 = vmatprep.subr.mxu0 0.0
    %1723 = vmatpush1.msra.mxu0 0.0
    %1724 = vmatprep.subr.mxu0 0.0
    %1725 = vmatpush1.msra.mxu0 0.0
    %1726 = vmatprep.subr.mxu0 0.0
    %1727 = vmatpush1.msra.mxu0 0.0
    %1728 = vmatprep.subr.mxu0 0.0
    %1729 = vmatpush1.msra.mxu0 0.0
    %1730 = vmatprep.subr.mxu0 0.0
    %1731 = vmatpush1.msra.mxu0 0.0
    %1732 = vmatprep.subr.mxu0 0.0
    %1733 = vmatpush1.msra.mxu0 0.0
    %1734 = vmatprep.mubr.f32.mxu0 0.0
    %1735 = vmatmul.mubr.f32.gmra.mrb[0].mxu0 %v1367
    %v1736 = vpop.f32.mrb[0].mxu0
    %v1737 = vadd.f32 %v1666, %v1736
    %v1738 = vpop.f32.mrb[0].mxu0
    %v1739 = vadd.f32 %v1668, %v1738
    %1740 = vdwg.mxu0
    %v1741 = vmax.f32 %v1737, 0.0
    %v1742 = vmax.f32 %v1739, 0.0
    %1743 = vst [vmem:[#allocation2 + $0x30] sm:$0xff] %v1741
    %1744 = vst [vmem:[#allocation2 + $0x38] sm:$0xff] %v1742
    %v1745 = vld [vmem:[#allocation4 + $0x40] sm:$0xff]
    %v1746 = vld [vmem:[#allocation4 + $0x48] sm:$0xff]
    %v1747 = vld [vmem:[#allocation4 + $0x50] sm:$0xff]
    %v1748 = vld [vmem:[#allocation4 + $0x58] sm:$0xff]
    %v1749 = vld [vmem:[#allocation4 + $0x60] sm:$0xff]
    %v1750 = vld [vmem:[#allocation9] sm:$0xff]
    %v1751 = vld [vmem:[#allocation9 + $0x8] sm:$0xff]
    %v1752 = vld [vmem:[#allocation9 + $0x10] sm:$0xff]
    %v1753 = vld [vmem:[#allocation9 + $0x18] sm:$0xff]
    %v1754 = vld [vmem:[#allocation9 + $0x20] sm:$0xff]
    %v1755 = vld [vmem:[#allocation9 + $0x28] sm:$0xff]
    %v1756 = vld [vmem:[#allocation9 + $0x30] sm:$0xff]
    %v1757 = vld [vmem:[#allocation9 + $0x38] sm:$0xff]
    %v1758 = vld [vmem:[#allocation9 + $0x40] sm:$0xff]
    %v1759 = vld [vmem:[#allocation9 + $0x48] sm:$0xff]
    %v1760 = vld [vmem:[#allocation9 + $0x50] sm:$0xff]
    %v1761 = vld [vmem:[#allocation9 + $0x58] sm:$0xff]
    %v1762 = vld [vmem:[#allocation9 + $0x60] sm:$0xff]
    %v1763 = vld [vmem:[#allocation9 + $0x68] sm:$0xff]
    %v1764 = vld [vmem:[#allocation9 + $0x70] sm:$0xff]
    %v1765 = vld [vmem:[#allocation9 + $0x78] sm:$0xff]
    %v1766 = vld [vmem:[#allocation9 + $0x80] sm:$0xff]
    %v1767 = vld [vmem:[#allocation9 + $0x88] sm:$0xff]
    %v1768 = vld [vmem:[#allocation9 + $0x90] sm:$0xff]
    %v1769 = vld [vmem:[#allocation9 + $0x98] sm:$0xff]
    %v1770 = vld [vmem:[#allocation9 + $0xa0] sm:$0xff]
    %v1771 = vld [vmem:[#allocation9 + $0xa8] sm:$0xff]
    %v1772 = vld [vmem:[#allocation9 + $0xb0] sm:$0xff]
    %v1773 = vld [vmem:[#allocation9 + $0xb8] sm:$0xff]
    %v1774 = vld [vmem:[#allocation9 + $0xc0] sm:$0xff]
    %v1775 = vld [vmem:[#allocation9 + $0xc8] sm:$0xff]
    %v1776 = vld [vmem:[#allocation9 + $0xd0] sm:$0xff]
    %v1777 = vld [vmem:[#allocation9 + $0xd8] sm:$0xff]
    %v1778 = vld [vmem:[#allocation9 + $0xe0] sm:$0xff]
    %v1779 = vld [vmem:[#allocation9 + $0xe8] sm:$0xff]
    %v1780 = vld [vmem:[#allocation9 + $0xf0] sm:$0xff]
    %v1781 = vld [vmem:[#allocation9 + $0xf8] sm:$0xff]
    %v1782 = vld [vmem:[#allocation9 + $0x100] sm:$0xff]
    %v1783 = vld [vmem:[#allocation9 + $0x108] sm:$0xff]
    %v1784 = vld [vmem:[#allocation9 + $0x110] sm:$0xff]
    %v1785 = vld [vmem:[#allocation9 + $0x118] sm:$0xff]
    %v1786 = vld [vmem:[#allocation9 + $0x120] sm:$0xff]
    %v1787 = vld [vmem:[#allocation9 + $0x128] sm:$0xff]
    %v1788 = vld [vmem:[#allocation9 + $0x130] sm:$0xff]
    %v1789 = vld [vmem:[#allocation9 + $0x138] sm:$0xff]
    %v1790 = vld [vmem:[#allocation9 + $0x140] sm:$0xff]
    %v1791 = vld [vmem:[#allocation9 + $0x148] sm:$0xff]
    %v1792 = vld [vmem:[#allocation9 + $0x150] sm:$0xff]
    %v1793 = vld [vmem:[#allocation9 + $0x158] sm:$0xff]
    %v1794 = vld [vmem:[#allocation9 + $0x160] sm:$0xff]
    %v1795 = vld [vmem:[#allocation9 + $0x168] sm:$0xff]
    %v1796 = vld [vmem:[#allocation9 + $0x170] sm:$0xff]
    %v1797 = vld [vmem:[#allocation9 + $0x178] sm:$0xff]
    %v1798 = vld [vmem:[#allocation9 + $0x180] sm:$0xff]
    %v1799 = vld [vmem:[#allocation9 + $0x188] sm:$0xff]
    %v1800 = vld [vmem:[#allocation9 + $0x190] sm:$0xff]
    %v1801 = vld [vmem:[#allocation9 + $0x198] sm:$0xff]
    %v1802 = vld [vmem:[#allocation9 + $0x1a0] sm:$0xff]
    %v1803 = vld [vmem:[#allocation9 + $0x1a8] sm:$0xff]
    %v1804 = vld [vmem:[#allocation9 + $0x1b0] sm:$0xff]
    %v1805 = vld [vmem:[#allocation9 + $0x1b8] sm:$0xff]
    %v1806 = vld [vmem:[#allocation9 + $0x1c0] sm:$0xff]
    %v1807 = vld [vmem:[#allocation9 + $0x1c8] sm:$0xff]
    %v1808 = vld [vmem:[#allocation9 + $0x1d0] sm:$0xff]
    %v1809 = vld [vmem:[#allocation9 + $0x1d8] sm:$0xff]
    %v1810 = vld [vmem:[#allocation9 + $0x1e0] sm:$0xff]
    %v1811 = vld [vmem:[#allocation9 + $0x1e8] sm:$0xff]
    %v1812 = vld [vmem:[#allocation9 + $0x1f0] sm:$0xff]
    %v1813 = vld [vmem:[#allocation9 + $0x1f8] sm:$0xff]
    %v1814 = vld [vmem:[#allocation9 + $0x200] sm:$0xff]
    %v1815 = vld [vmem:[#allocation9 + $0x208] sm:$0xff]
    %v1816 = vld [vmem:[#allocation9 + $0x210] sm:$0xff]
    %v1817 = vld [vmem:[#allocation9 + $0x218] sm:$0xff]
    %v1818 = vld [vmem:[#allocation9 + $0x220] sm:$0xff]
    %v1819 = vld [vmem:[#allocation9 + $0x228] sm:$0xff]
    %v1820 = vld [vmem:[#allocation9 + $0x230] sm:$0xff]
    %v1821 = vld [vmem:[#allocation9 + $0x238] sm:$0xff]
    %v1822 = vld [vmem:[#allocation9 + $0x240] sm:$0xff]
    %v1823 = vld [vmem:[#allocation9 + $0x248] sm:$0xff]
    %v1824 = vld [vmem:[#allocation9 + $0x250] sm:$0xff]
    %v1825 = vld [vmem:[#allocation9 + $0x258] sm:$0xff]
    %v1826 = vld [vmem:[#allocation9 + $0x260] sm:$0xff]
    %v1827 = vld [vmem:[#allocation9 + $0x268] sm:$0xff]
    %v1828 = vld [vmem:[#allocation9 + $0x270] sm:$0xff]
    %v1829 = vld [vmem:[#allocation9 + $0x278] sm:$0xff]
    %v1830 = vld [vmem:[#allocation9 + $0x280] sm:$0xff]
    %v1831 = vld [vmem:[#allocation9 + $0x288] sm:$0xff]
    %v1832 = vld [vmem:[#allocation9 + $0x290] sm:$0xff]
    %v1833 = vld [vmem:[#allocation9 + $0x298] sm:$0xff]
    %v1834 = vld [vmem:[#allocation9 + $0x2a0] sm:$0xff]
    %v1835 = vld [vmem:[#allocation9 + $0x2a8] sm:$0xff]
    %v1836 = vld [vmem:[#allocation9 + $0x2b0] sm:$0xff]
    %v1837 = vld [vmem:[#allocation9 + $0x2b8] sm:$0xff]
    %v1838 = vld [vmem:[#allocation9 + $0x2c0] sm:$0xff]
    %v1839 = vld [vmem:[#allocation9 + $0x2c8] sm:$0xff]
    %v1840 = vld [vmem:[#allocation9 + $0x2d0] sm:$0xff]
    %v1841 = vld [vmem:[#allocation9 + $0x2d8] sm:$0xff]
    %v1842 = vld [vmem:[#allocation9 + $0x2e0] sm:$0xff]
    %v1843 = vld [vmem:[#allocation9 + $0x2e8] sm:$0xff]
    %v1844 = vld [vmem:[#allocation9 + $0x2f0] sm:$0xff]
    %v1845 = vld [vmem:[#allocation9 + $0x2f8] sm:$0xff]
    %v1846 = vld [vmem:[#allocation9 + $0x300] sm:$0xff]
    %v1847 = vld [vmem:[#allocation9 + $0x308] sm:$0xff]
    %v1848 = vld [vmem:[#allocation9 + $0x310] sm:$0xff]
    %v1849 = vld [vmem:[#allocation9 + $0x318] sm:$0xff]
    %v1850 = vld [vmem:[#allocation9 + $0x320] sm:$0xff]
    %v1851 = vld [vmem:[#allocation9 + $0x328] sm:$0xff]
    %v1852 = vld [vmem:[#allocation9 + $0x330] sm:$0xff]
    %v1853 = vld [vmem:[#allocation9 + $0x338] sm:$0xff]
    %v1854 = vld [vmem:[#allocation9 + $0x340] sm:$0xff]
    %v1855 = vld [vmem:[#allocation9 + $0x348] sm:$0xff]
    %v1856 = vld [vmem:[#allocation9 + $0x350] sm:$0xff]
    %v1857 = vld [vmem:[#allocation9 + $0x358] sm:$0xff]
    %v1858 = vld [vmem:[#allocation9 + $0x360] sm:$0xff]
    %v1859 = vld [vmem:[#allocation9 + $0x368] sm:$0xff]
    %v1860 = vld [vmem:[#allocation9 + $0x370] sm:$0xff]
    %v1861 = vld [vmem:[#allocation9 + $0x378] sm:$0xff]
    %v1862 = vld [vmem:[#allocation9 + $0x380] sm:$0xff]
    %v1863 = vld [vmem:[#allocation9 + $0x388] sm:$0xff]
    %v1864 = vld [vmem:[#allocation9 + $0x390] sm:$0xff]
    %v1865 = vld [vmem:[#allocation9 + $0x398] sm:$0xff]
    %v1866 = vld [vmem:[#allocation9 + $0x3a0] sm:$0xff]
    %v1867 = vld [vmem:[#allocation9 + $0x3a8] sm:$0xff]
    %v1868 = vld [vmem:[#allocation9 + $0x3b0] sm:$0xff]
    %v1869 = vld [vmem:[#allocation9 + $0x3b8] sm:$0xff]
    %v1870 = vld [vmem:[#allocation9 + $0x3c0] sm:$0xff]
    %v1871 = vld [vmem:[#allocation9 + $0x3c8] sm:$0xff]
    %v1872 = vld [vmem:[#allocation9 + $0x3d0] sm:$0xff]
    %v1873 = vld [vmem:[#allocation9 + $0x3d8] sm:$0xff]
    %v1874 = vld [vmem:[#allocation9 + $0x3e0] sm:$0xff]
    %v1875 = vld [vmem:[#allocation9 + $0x3e8] sm:$0xff]
    %v1876 = vld [vmem:[#allocation9 + $0x3f0] sm:$0xff]
    %v1877 = vld [vmem:[#allocation9 + $0x3f8] sm:$0xff]
    %v1878 = vld [vmem:[#allocation9 + $0x400] sm:$0xff]
    %v1879 = vld [vmem:[#allocation9 + $0x408] sm:$0xff]
    %v1880 = vld [vmem:[#allocation9 + $0x410] sm:$0xff]
    %v1881 = vld [vmem:[#allocation9 + $0x418] sm:$0xff]
    %v1882 = vld [vmem:[#allocation9 + $0x420] sm:$0xff]
    %v1883 = vld [vmem:[#allocation9 + $0x428] sm:$0xff]
    %v1884 = vld [vmem:[#allocation9 + $0x430] sm:$0xff]
    %v1885 = vld [vmem:[#allocation9 + $0x438] sm:$0xff]
    %v1886 = vld [vmem:[#allocation9 + $0x440] sm:$0xff]
    %v1887 = vld [vmem:[#allocation9 + $0x448] sm:$0xff]
    %v1888 = vld [vmem:[#allocation9 + $0x450] sm:$0xff]
    %v1889 = vld [vmem:[#allocation9 + $0x458] sm:$0xff]
    %v1890 = vld [vmem:[#allocation9 + $0x460] sm:$0xff]
    %v1891 = vld [vmem:[#allocation9 + $0x468] sm:$0xff]
    %v1892 = vld [vmem:[#allocation9 + $0x470] sm:$0xff]
    %v1893 = vld [vmem:[#allocation9 + $0x478] sm:$0xff]
    %v1894 = vld [vmem:[#allocation9 + $0x480] sm:$0xff]
    %v1895 = vld [vmem:[#allocation9 + $0x488] sm:$0xff]
    %v1896 = vld [vmem:[#allocation9 + $0x490] sm:$0xff]
    %v1897 = vld [vmem:[#allocation9 + $0x498] sm:$0xff]
    %v1898 = vld [vmem:[#allocation9 + $0x4a0] sm:$0xff]
    %v1899 = vld [vmem:[#allocation9 + $0x4a8] sm:$0xff]
    %v1900 = vld [vmem:[#allocation9 + $0x4b0] sm:$0xff]
    %v1901 = vld [vmem:[#allocation9 + $0x4b8] sm:$0xff]
    %v1902 = vld [vmem:[#allocation9 + $0x4c0] sm:$0xff]
    %v1903 = vld [vmem:[#allocation9 + $0x4c8] sm:$0xff]
    %v1904 = vld [vmem:[#allocation9 + $0x4d0] sm:$0xff]
    %v1905 = vld [vmem:[#allocation9 + $0x4d8] sm:$0xff]
    %v1906 = vld [vmem:[#allocation9 + $0x4e0] sm:$0xff]
    %v1907 = vld [vmem:[#allocation9 + $0x4e8] sm:$0xff]
    %v1908 = vld [vmem:[#allocation9 + $0x4f0] sm:$0xff]
    %v1909 = vld [vmem:[#allocation9 + $0x4f8] sm:$0xff]
    %1910 = vmatprep.subr.mxu0 %v1751
    %1911 = vmatpush1.msra.mxu0 %v1750
    %1912 = vmatprep.subr.mxu0 %v1753
    %1913 = vmatpush1.msra.mxu0 %v1752
    %1914 = vmatprep.subr.mxu0 %v1755
    %1915 = vmatpush1.msra.mxu0 %v1754
    %1916 = vmatprep.subr.mxu0 %v1757
    %1917 = vmatpush1.msra.mxu0 %v1756
    %1918 = vmatprep.subr.mxu0 %v1759
    %1919 = vmatpush1.msra.mxu0 %v1758
    %1920 = vmatprep.subr.mxu0 %v1761
    %1921 = vmatpush1.msra.mxu0 %v1760
    %1922 = vmatprep.subr.mxu0 %v1763
    %1923 = vmatpush1.msra.mxu0 %v1762
    %1924 = vmatprep.subr.mxu0 %v1765
    %1925 = vmatpush1.msra.mxu0 %v1764
    %1926 = vmatprep.subr.mxu0 %v1767
    %1927 = vmatpush1.msra.mxu0 %v1766
    %1928 = vmatprep.subr.mxu0 %v1769
    %1929 = vmatpush1.msra.mxu0 %v1768
    %1930 = vmatprep.subr.mxu0 %v1771
    %1931 = vmatpush1.msra.mxu0 %v1770
    %1932 = vmatprep.subr.mxu0 %v1773
    %1933 = vmatpush1.msra.mxu0 %v1772
    %1934 = vmatprep.subr.mxu0 %v1775
    %1935 = vmatpush1.msra.mxu0 %v1774
    %1936 = vmatprep.subr.mxu0 %v1777
    %1937 = vmatpush1.msra.mxu0 %v1776
    %1938 = vmatprep.subr.mxu0 %v1779
    %1939 = vmatpush1.msra.mxu0 %v1778
    %1940 = vmatprep.subr.mxu0 %v1781
    %1941 = vmatpush1.msra.mxu0 %v1780
    %1942 = vmatprep.subr.mxu0 %v1783
    %1943 = vmatpush1.msra.mxu0 %v1782
    %1944 = vmatprep.subr.mxu0 %v1785
    %1945 = vmatpush1.msra.mxu0 %v1784
    %1946 = vmatprep.subr.mxu0 %v1787
    %1947 = vmatpush1.msra.mxu0 %v1786
    %1948 = vmatprep.subr.mxu0 %v1789
    %1949 = vmatpush1.msra.mxu0 %v1788
    %1950 = vmatprep.subr.mxu0 %v1791
    %1951 = vmatpush1.msra.mxu0 %v1790
    %1952 = vmatprep.subr.mxu0 %v1793
    %1953 = vmatpush1.msra.mxu0 %v1792
    %1954 = vmatprep.subr.mxu0 %v1795
    %1955 = vmatpush1.msra.mxu0 %v1794
    %1956 = vmatprep.subr.mxu0 %v1797
    %1957 = vmatpush1.msra.mxu0 %v1796
    %1958 = vmatprep.subr.mxu0 %v1799
    %1959 = vmatpush1.msra.mxu0 %v1798
    %1960 = vmatprep.subr.mxu0 %v1801
    %1961 = vmatpush1.msra.mxu0 %v1800
    %1962 = vmatprep.subr.mxu0 %v1803
    %1963 = vmatpush1.msra.mxu0 %v1802
    %1964 = vmatprep.subr.mxu0 %v1805
    %1965 = vmatpush1.msra.mxu0 %v1804
    %1966 = vmatprep.subr.mxu0 %v1807
    %1967 = vmatpush1.msra.mxu0 %v1806
    %1968 = vmatprep.subr.mxu0 %v1809
    %1969 = vmatpush1.msra.mxu0 %v1808
    %1970 = vmatprep.subr.mxu0 %v1811
    %1971 = vmatpush1.msra.mxu0 %v1810
    %1972 = vmatprep.subr.mxu0 %v1813
    %1973 = vmatpush1.msra.mxu0 %v1812
    %1974 = vmatprep.mubr.f32.mxu0 %v1746
    %1975 = vmatmul.mubr.f32.gmra.mrb[0].mxu0 %v1745
    %v1976 = vpop.f32.mrb[0].mxu0
    %v1977 = vadd.f32 %v210, %v1976
    %v1978 = vpop.f32.mrb[0].mxu0
    %v1979 = vadd.f32 %v214, %v1978
    %1980 = vdwg.mxu0
    %1981 = vmatprep.subr.mxu0 %v1815
    %1982 = vmatpush1.msra.mxu0 %v1814
    %1983 = vmatprep.subr.mxu0 %v1817
    %1984 = vmatpush1.msra.mxu0 %v1816
    %1985 = vmatprep.subr.mxu0 %v1819
    %1986 = vmatpush1.msra.mxu0 %v1818
    %1987 = vmatprep.subr.mxu0 %v1821
    %1988 = vmatpush1.msra.mxu0 %v1820
    %1989 = vmatprep.subr.mxu0 %v1823
    %1990 = vmatpush1.msra.mxu0 %v1822
    %1991 = vmatprep.subr.mxu0 %v1825
    %1992 = vmatpush1.msra.mxu0 %v1824
    %1993 = vmatprep.subr.mxu0 %v1827
    %1994 = vmatpush1.msra.mxu0 %v1826
    %1995 = vmatprep.subr.mxu0 %v1829
    %1996 = vmatpush1.msra.mxu0 %v1828
    %1997 = vmatprep.subr.mxu0 %v1831
    %1998 = vmatpush1.msra.mxu0 %v1830
    %1999 = vmatprep.subr.mxu0 %v1833
    %2000 = vmatpush1.msra.mxu0 %v1832
    %2001 = vmatprep.subr.mxu0 %v1835
    %2002 = vmatpush1.msra.mxu0 %v1834
    %2003 = vmatprep.subr.mxu0 %v1837
    %2004 = vmatpush1.msra.mxu0 %v1836
    %2005 = vmatprep.subr.mxu0 %v1839
    %2006 = vmatpush1.msra.mxu0 %v1838
    %2007 = vmatprep.subr.mxu0 %v1841
    %2008 = vmatpush1.msra.mxu0 %v1840
    %2009 = vmatprep.subr.mxu0 %v1843
    %2010 = vmatpush1.msra.mxu0 %v1842
    %2011 = vmatprep.subr.mxu0 %v1845
    %2012 = vmatpush1.msra.mxu0 %v1844
    %2013 = vmatprep.subr.mxu0 %v1847
    %2014 = vmatpush1.msra.mxu0 %v1846
    %2015 = vmatprep.subr.mxu0 %v1849
    %2016 = vmatpush1.msra.mxu0 %v1848
    %2017 = vmatprep.subr.mxu0 %v1851
    %2018 = vmatpush1.msra.mxu0 %v1850
    %2019 = vmatprep.subr.mxu0 %v1853
    %2020 = vmatpush1.msra.mxu0 %v1852
    %2021 = vmatprep.subr.mxu0 %v1855
    %2022 = vmatpush1.msra.mxu0 %v1854
    %2023 = vmatprep.subr.mxu0 %v1857
    %2024 = vmatpush1.msra.mxu0 %v1856
    %2025 = vmatprep.subr.mxu0 %v1859
    %2026 = vmatpush1.msra.mxu0 %v1858
    %2027 = vmatprep.subr.mxu0 %v1861
    %2028 = vmatpush1.msra.mxu0 %v1860
    %2029 = vmatprep.subr.mxu0 %v1863
    %2030 = vmatpush1.msra.mxu0 %v1862
    %2031 = vmatprep.subr.mxu0 %v1865
    %2032 = vmatpush1.msra.mxu0 %v1864
    %2033 = vmatprep.subr.mxu0 %v1867
    %2034 = vmatpush1.msra.mxu0 %v1866
    %2035 = vmatprep.subr.mxu0 %v1869
    %2036 = vmatpush1.msra.mxu0 %v1868
    %2037 = vmatprep.subr.mxu0 %v1871
    %2038 = vmatpush1.msra.mxu0 %v1870
    %2039 = vmatprep.subr.mxu0 %v1873
    %2040 = vmatpush1.msra.mxu0 %v1872
    %2041 = vmatprep.subr.mxu0 %v1875
    %2042 = vmatpush1.msra.mxu0 %v1874
    %2043 = vmatprep.subr.mxu0 %v1877
    %2044 = vmatpush1.msra.mxu0 %v1876
    %2045 = vmatprep.mubr.f32.mxu0 %v1748
    %2046 = vmatmul.mubr.f32.gmra.mrb[0].mxu0 %v1747
    %v2047 = vpop.f32.mrb[0].mxu0
    %v2048 = vadd.f32 %v1977, %v2047
    %v2049 = vpop.f32.mrb[0].mxu0
    %v2050 = vadd.f32 %v1979, %v2049
    %2051 = vdwg.mxu0
    %2052 = vmatprep.subr.mxu0 %v1879
    %2053 = vmatpush1.msra.mxu0 %v1878
    %2054 = vmatprep.subr.mxu0 %v1881
    %2055 = vmatpush1.msra.mxu0 %v1880
    %2056 = vmatprep.subr.mxu0 %v1883
    %2057 = vmatpush1.msra.mxu0 %v1882
    %2058 = vmatprep.subr.mxu0 %v1885
    %2059 = vmatpush1.msra.mxu0 %v1884
    %2060 = vmatprep.subr.mxu0 %v1887
    %2061 = vmatpush1.msra.mxu0 %v1886
    %2062 = vmatprep.subr.mxu0 %v1889
    %2063 = vmatpush1.msra.mxu0 %v1888
    %2064 = vmatprep.subr.mxu0 %v1891
    %2065 = vmatpush1.msra.mxu0 %v1890
    %2066 = vmatprep.subr.mxu0 %v1893
    %2067 = vmatpush1.msra.mxu0 %v1892
    %2068 = vmatprep.subr.mxu0 %v1895
    %2069 = vmatpush1.msra.mxu0 %v1894
    %2070 = vmatprep.subr.mxu0 %v1897
    %2071 = vmatpush1.msra.mxu0 %v1896
    %2072 = vmatprep.subr.mxu0 %v1899
    %2073 = vmatpush1.msra.mxu0 %v1898
    %2074 = vmatprep.subr.mxu0 %v1901
    %2075 = vmatpush1.msra.mxu0 %v1900
    %2076 = vmatprep.subr.mxu0 %v1903
    %2077 = vmatpush1.msra.mxu0 %v1902
    %2078 = vmatprep.subr.mxu0 %v1905
    %2079 = vmatpush1.msra.mxu0 %v1904
    %2080 = vmatprep.subr.mxu0 %v1907
    %2081 = vmatpush1.msra.mxu0 %v1906
    %2082 = vmatprep.subr.mxu0 %v1909
    %2083 = vmatpush1.msra.mxu0 %v1908
    %2084 = vmatprep.subr.mxu0 0.0
    %2085 = vmatpush1.msra.mxu0 0.0
    %2086 = vmatprep.subr.mxu0 0.0
    %2087 = vmatpush1.msra.mxu0 0.0
    %2088 = vmatprep.subr.mxu0 0.0
    %2089 = vmatpush1.msra.mxu0 0.0
    %2090 = vmatprep.subr.mxu0 0.0
    %2091 = vmatpush1.msra.mxu0 0.0
    %2092 = vmatprep.subr.mxu0 0.0
    %2093 = vmatpush1.msra.mxu0 0.0
    %2094 = vmatprep.subr.mxu0 0.0
    %2095 = vmatpush1.msra.mxu0 0.0
    %2096 = vmatprep.subr.mxu0 0.0
    %2097 = vmatpush1.msra.mxu0 0.0
    %2098 = vmatprep.subr.mxu0 0.0
    %2099 = vmatpush1.msra.mxu0 0.0
    %2100 = vmatprep.subr.mxu0 0.0
    %2101 = vmatpush1.msra.mxu0 0.0
    %2102 = vmatprep.subr.mxu0 0.0
    %2103 = vmatpush1.msra.mxu0 0.0
    %2104 = vmatprep.subr.mxu0 0.0
    %2105 = vmatpush1.msra.mxu0 0.0
    %2106 = vmatprep.subr.mxu0 0.0
    %2107 = vmatpush1.msra.mxu0 0.0
    %2108 = vmatprep.subr.mxu0 0.0
    %2109 = vmatpush1.msra.mxu0 0.0
    %2110 = vmatprep.subr.mxu0 0.0
    %2111 = vmatpush1.msra.mxu0 0.0
    %2112 = vmatprep.subr.mxu0 0.0
    %2113 = vmatpush1.msra.mxu0 0.0
    %2114 = vmatprep.subr.mxu0 0.0
    %2115 = vmatpush1.msra.mxu0 0.0
    %2116 = vmatprep.mubr.f32.mxu0 0.0
    %2117 = vmatmul.mubr.f32.gmra.mrb[0].mxu0 %v1749
    %v2118 = vpop.f32.mrb[0].mxu0
    %v2119 = vadd.f32 %v2048, %v2118
    %v2120 = vpop.f32.mrb[0].mxu0
    %v2121 = vadd.f32 %v2050, %v2120
    %2122 = vdwg.mxu0
    %v2123 = vmax.f32 %v2119, 0.0
    %v2124 = vmax.f32 %v2121, 0.0
    %2125 = vst [vmem:[#allocation2 + $0x40] sm:$0xff] %v2123
    %2126 = vst [vmem:[#allocation2 + $0x48] sm:$0xff] %v2124
    %v2127 = vld [vmem:[#allocation4 + $0x50] sm:$0xff]
    %v2128 = vld [vmem:[#allocation4 + $0x58] sm:$0xff]
    %v2129 = vld [vmem:[#allocation4 + $0x60] sm:$0xff]
    %v2130 = vld [vmem:[#allocation4 + $0x68] sm:$0xff]
    %v2131 = vld [vmem:[#allocation4 + $0x70] sm:$0xff]
    %v2132 = vld [vmem:[#allocation9] sm:$0xff]
    %v2133 = vld [vmem:[#allocation9 + $0x8] sm:$0xff]
    %v2134 = vld [vmem:[#allocation9 + $0x10] sm:$0xff]
    %v2135 = vld [vmem:[#allocation9 + $0x18] sm:$0xff]
    %v2136 = vld [vmem:[#allocation9 + $0x20] sm:$0xff]
    %v2137 = vld [vmem:[#allocation9 + $0x28] sm:$0xff]
    %v2138 = vld [vmem:[#allocation9 + $0x30] sm:$0xff]
    %v2139 = vld [vmem:[#allocation9 + $0x38] sm:$0xff]
    %v2140 = vld [vmem:[#allocation9 + $0x40] sm:$0xff]
    %v2141 = vld [vmem:[#allocation9 + $0x48] sm:$0xff]
    %v2142 = vld [vmem:[#allocation9 + $0x50] sm:$0xff]
    %v2143 = vld [vmem:[#allocation9 + $0x58] sm:$0xff]
    %v2144 = vld [vmem:[#allocation9 + $0x60] sm:$0xff]
    %v2145 = vld [vmem:[#allocation9 + $0x68] sm:$0xff]
    %v2146 = vld [vmem:[#allocation9 + $0x70] sm:$0xff]
    %v2147 = vld [vmem:[#allocation9 + $0x78] sm:$0xff]
    %v2148 = vld [vmem:[#allocation9 + $0x80] sm:$0xff]
    %v2149 = vld [vmem:[#allocation9 + $0x88] sm:$0xff]
    %v2150 = vld [vmem:[#allocation9 + $0x90] sm:$0xff]
    %v2151 = vld [vmem:[#allocation9 + $0x98] sm:$0xff]
    %v2152 = vld [vmem:[#allocation9 + $0xa0] sm:$0xff]
    %v2153 = vld [vmem:[#allocation9 + $0xa8] sm:$0xff]
    %v2154 = vld [vmem:[#allocation9 + $0xb0] sm:$0xff]
    %v2155 = vld [vmem:[#allocation9 + $0xb8] sm:$0xff]
    %v2156 = vld [vmem:[#allocation9 + $0xc0] sm:$0xff]
    %v2157 = vld [vmem:[#allocation9 + $0xc8] sm:$0xff]
    %v2158 = vld [vmem:[#allocation9 + $0xd0] sm:$0xff]
    %v2159 = vld [vmem:[#allocation9 + $0xd8] sm:$0xff]
    %v2160 = vld [vmem:[#allocation9 + $0xe0] sm:$0xff]
    %v2161 = vld [vmem:[#allocation9 + $0xe8] sm:$0xff]
    %v2162 = vld [vmem:[#allocation9 + $0xf0] sm:$0xff]
    %v2163 = vld [vmem:[#allocation9 + $0xf8] sm:$0xff]
    %v2164 = vld [vmem:[#allocation9 + $0x100] sm:$0xff]
    %v2165 = vld [vmem:[#allocation9 + $0x108] sm:$0xff]
    %v2166 = vld [vmem:[#allocation9 + $0x110] sm:$0xff]
    %v2167 = vld [vmem:[#allocation9 + $0x118] sm:$0xff]
    %v2168 = vld [vmem:[#allocation9 + $0x120] sm:$0xff]
    %v2169 = vld [vmem:[#allocation9 + $0x128] sm:$0xff]
    %v2170 = vld [vmem:[#allocation9 + $0x130] sm:$0xff]
    %v2171 = vld [vmem:[#allocation9 + $0x138] sm:$0xff]
    %v2172 = vld [vmem:[#allocation9 + $0x140] sm:$0xff]
    %v2173 = vld [vmem:[#allocation9 + $0x148] sm:$0xff]
    %v2174 = vld [vmem:[#allocation9 + $0x150] sm:$0xff]
    %v2175 = vld [vmem:[#allocation9 + $0x158] sm:$0xff]
    %v2176 = vld [vmem:[#allocation9 + $0x160] sm:$0xff]
    %v2177 = vld [vmem:[#allocation9 + $0x168] sm:$0xff]
    %v2178 = vld [vmem:[#allocation9 + $0x170] sm:$0xff]
    %v2179 = vld [vmem:[#allocation9 + $0x178] sm:$0xff]
    %v2180 = vld [vmem:[#allocation9 + $0x180] sm:$0xff]
    %v2181 = vld [vmem:[#allocation9 + $0x188] sm:$0xff]
    %v2182 = vld [vmem:[#allocation9 + $0x190] sm:$0xff]
    %v2183 = vld [vmem:[#allocation9 + $0x198] sm:$0xff]
    %v2184 = vld [vmem:[#allocation9 + $0x1a0] sm:$0xff]
    %v2185 = vld [vmem:[#allocation9 + $0x1a8] sm:$0xff]
    %v2186 = vld [vmem:[#allocation9 + $0x1b0] sm:$0xff]
    %v2187 = vld [vmem:[#allocation9 + $0x1b8] sm:$0xff]
    %v2188 = vld [vmem:[#allocation9 + $0x1c0] sm:$0xff]
    %v2189 = vld [vmem:[#allocation9 + $0x1c8] sm:$0xff]
    %v2190 = vld [vmem:[#allocation9 + $0x1d0] sm:$0xff]
    %v2191 = vld [vmem:[#allocation9 + $0x1d8] sm:$0xff]
    %v2192 = vld [vmem:[#allocation9 + $0x1e0] sm:$0xff]
    %v2193 = vld [vmem:[#allocation9 + $0x1e8] sm:$0xff]
    %v2194 = vld [vmem:[#allocation9 + $0x1f0] sm:$0xff]
    %v2195 = vld [vmem:[#allocation9 + $0x1f8] sm:$0xff]
    %v2196 = vld [vmem:[#allocation9 + $0x200] sm:$0xff]
    %v2197 = vld [vmem:[#allocation9 + $0x208] sm:$0xff]
    %v2198 = vld [vmem:[#allocation9 + $0x210] sm:$0xff]
    %v2199 = vld [vmem:[#allocation9 + $0x218] sm:$0xff]
    %v2200 = vld [vmem:[#allocation9 + $0x220] sm:$0xff]
    %v2201 = vld [vmem:[#allocation9 + $0x228] sm:$0xff]
    %v2202 = vld [vmem:[#allocation9 + $0x230] sm:$0xff]
    %v2203 = vld [vmem:[#allocation9 + $0x238] sm:$0xff]
    %v2204 = vld [vmem:[#allocation9 + $0x240] sm:$0xff]
    %v2205 = vld [vmem:[#allocation9 + $0x248] sm:$0xff]
    %v2206 = vld [vmem:[#allocation9 + $0x250] sm:$0xff]
    %v2207 = vld [vmem:[#allocation9 + $0x258] sm:$0xff]
    %v2208 = vld [vmem:[#allocation9 + $0x260] sm:$0xff]
    %v2209 = vld [vmem:[#allocation9 + $0x268] sm:$0xff]
    %v2210 = vld [vmem:[#allocation9 + $0x270] sm:$0xff]
    %v2211 = vld [vmem:[#allocation9 + $0x278] sm:$0xff]
    %v2212 = vld [vmem:[#allocation9 + $0x280] sm:$0xff]
    %v2213 = vld [vmem:[#allocation9 + $0x288] sm:$0xff]
    %v2214 = vld [vmem:[#allocation9 + $0x290] sm:$0xff]
    %v2215 = vld [vmem:[#allocation9 + $0x298] sm:$0xff]
    %v2216 = vld [vmem:[#allocation9 + $0x2a0] sm:$0xff]
    %v2217 = vld [vmem:[#allocation9 + $0x2a8] sm:$0xff]
    %v2218 = vld [vmem:[#allocation9 + $0x2b0] sm:$0xff]
    %v2219 = vld [vmem:[#allocation9 + $0x2b8] sm:$0xff]
    %v2220 = vld [vmem:[#allocation9 + $0x2c0] sm:$0xff]
    %v2221 = vld [vmem:[#allocation9 + $0x2c8] sm:$0xff]
    %v2222 = vld [vmem:[#allocation9 + $0x2d0] sm:$0xff]
    %v2223 = vld [vmem:[#allocation9 + $0x2d8] sm:$0xff]
    %v2224 = vld [vmem:[#allocation9 + $0x2e0] sm:$0xff]
    %v2225 = vld [vmem:[#allocation9 + $0x2e8] sm:$0xff]
    %v2226 = vld [vmem:[#allocation9 + $0x2f0] sm:$0xff]
    %v2227 = vld [vmem:[#allocation9 + $0x2f8] sm:$0xff]
    %v2228 = vld [vmem:[#allocation9 + $0x300] sm:$0xff]
    %v2229 = vld [vmem:[#allocation9 + $0x308] sm:$0xff]
    %v2230 = vld [vmem:[#allocation9 + $0x310] sm:$0xff]
    %v2231 = vld [vmem:[#allocation9 + $0x318] sm:$0xff]
    %v2232 = vld [vmem:[#allocation9 + $0x320] sm:$0xff]
    %v2233 = vld [vmem:[#allocation9 + $0x328] sm:$0xff]
    %v2234 = vld [vmem:[#allocation9 + $0x330] sm:$0xff]
    %v2235 = vld [vmem:[#allocation9 + $0x338] sm:$0xff]
    %v2236 = vld [vmem:[#allocation9 + $0x340] sm:$0xff]
    %v2237 = vld [vmem:[#allocation9 + $0x348] sm:$0xff]
    %v2238 = vld [vmem:[#allocation9 + $0x350] sm:$0xff]
    %v2239 = vld [vmem:[#allocation9 + $0x358] sm:$0xff]
    %v2240 = vld [vmem:[#allocation9 + $0x360] sm:$0xff]
    %v2241 = vld [vmem:[#allocation9 + $0x368] sm:$0xff]
    %v2242 = vld [vmem:[#allocation9 + $0x370] sm:$0xff]
    %v2243 = vld [vmem:[#allocation9 + $0x378] sm:$0xff]
    %v2244 = vld [vmem:[#allocation9 + $0x380] sm:$0xff]
    %v2245 = vld [vmem:[#allocation9 + $0x388] sm:$0xff]
    %v2246 = vld [vmem:[#allocation9 + $0x390] sm:$0xff]
    %v2247 = vld [vmem:[#allocation9 + $0x398] sm:$0xff]
    %v2248 = vld [vmem:[#allocation9 + $0x3a0] sm:$0xff]
    %v2249 = vld [vmem:[#allocation9 + $0x3a8] sm:$0xff]
    %v2250 = vld [vmem:[#allocation9 + $0x3b0] sm:$0xff]
    %v2251 = vld [vmem:[#allocation9 + $0x3b8] sm:$0xff]
    %v2252 = vld [vmem:[#allocation9 + $0x3c0] sm:$0xff]
    %v2253 = vld [vmem:[#allocation9 + $0x3c8] sm:$0xff]
    %v2254 = vld [vmem:[#allocation9 + $0x3d0] sm:$0xff]
    %v2255 = vld [vmem:[#allocation9 + $0x3d8] sm:$0xff]
    %v2256 = vld [vmem:[#allocation9 + $0x3e0] sm:$0xff]
    %v2257 = vld [vmem:[#allocation9 + $0x3e8] sm:$0xff]
    %v2258 = vld [vmem:[#allocation9 + $0x3f0] sm:$0xff]
    %v2259 = vld [vmem:[#allocation9 + $0x3f8] sm:$0xff]
    %v2260 = vld [vmem:[#allocation9 + $0x400] sm:$0xff]
    %v2261 = vld [vmem:[#allocation9 + $0x408] sm:$0xff]
    %v2262 = vld [vmem:[#allocation9 + $0x410] sm:$0xff]
    %v2263 = vld [vmem:[#allocation9 + $0x418] sm:$0xff]
    %v2264 = vld [vmem:[#allocation9 + $0x420] sm:$0xff]
    %v2265 = vld [vmem:[#allocation9 + $0x428] sm:$0xff]
    %v2266 = vld [vmem:[#allocation9 + $0x430] sm:$0xff]
    %v2267 = vld [vmem:[#allocation9 + $0x438] sm:$0xff]
    %v2268 = vld [vmem:[#allocation9 + $0x440] sm:$0xff]
    %v2269 = vld [vmem:[#allocation9 + $0x448] sm:$0xff]
    %v2270 = vld [vmem:[#allocation9 + $0x450] sm:$0xff]
    %v2271 = vld [vmem:[#allocation9 + $0x458] sm:$0xff]
    %v2272 = vld [vmem:[#allocation9 + $0x460] sm:$0xff]
    %v2273 = vld [vmem:[#allocation9 + $0x468] sm:$0xff]
    %v2274 = vld [vmem:[#allocation9 + $0x470] sm:$0xff]
    %v2275 = vld [vmem:[#allocation9 + $0x478] sm:$0xff]
    %v2276 = vld [vmem:[#allocation9 + $0x480] sm:$0xff]
    %v2277 = vld [vmem:[#allocation9 + $0x488] sm:$0xff]
    %v2278 = vld [vmem:[#allocation9 + $0x490] sm:$0xff]
    %v2279 = vld [vmem:[#allocation9 + $0x498] sm:$0xff]
    %v2280 = vld [vmem:[#allocation9 + $0x4a0] sm:$0xff]
    %v2281 = vld [vmem:[#allocation9 + $0x4a8] sm:$0xff]
    %v2282 = vld [vmem:[#allocation9 + $0x4b0] sm:$0xff]
    %v2283 = vld [vmem:[#allocation9 + $0x4b8] sm:$0xff]
    %v2284 = vld [vmem:[#allocation9 + $0x4c0] sm:$0xff]
    %v2285 = vld [vmem:[#allocation9 + $0x4c8] sm:$0xff]
    %v2286 = vld [vmem:[#allocation9 + $0x4d0] sm:$0xff]
    %v2287 = vld [vmem:[#allocation9 + $0x4d8] sm:$0xff]
    %v2288 = vld [vmem:[#allocation9 + $0x4e0] sm:$0xff]
    %v2289 = vld [vmem:[#allocation9 + $0x4e8] sm:$0xff]
    %v2290 = vld [vmem:[#allocation9 + $0x4f0] sm:$0xff]
    %v2291 = vld [vmem:[#allocation9 + $0x4f8] sm:$0xff]
    %2292 = vmatprep.subr.mxu0 %v2133
    %2293 = vmatpush1.msra.mxu0 %v2132
    %2294 = vmatprep.subr.mxu0 %v2135
    %2295 = vmatpush1.msra.mxu0 %v2134
    %2296 = vmatprep.subr.mxu0 %v2137
    %2297 = vmatpush1.msra.mxu0 %v2136
    %2298 = vmatprep.subr.mxu0 %v2139
    %2299 = vmatpush1.msra.mxu0 %v2138
    %2300 = vmatprep.subr.mxu0 %v2141
    %2301 = vmatpush1.msra.mxu0 %v2140
    %2302 = vmatprep.subr.mxu0 %v2143
    %2303 = vmatpush1.msra.mxu0 %v2142
    %2304 = vmatprep.subr.mxu0 %v2145
    %2305 = vmatpush1.msra.mxu0 %v2144
    %2306 = vmatprep.subr.mxu0 %v2147
    %2307 = vmatpush1.msra.mxu0 %v2146
    %2308 = vmatprep.subr.mxu0 %v2149
    %2309 = vmatpush1.msra.mxu0 %v2148
    %2310 = vmatprep.subr.mxu0 %v2151
    %2311 = vmatpush1.msra.mxu0 %v2150
    %2312 = vmatprep.subr.mxu0 %v2153
    %2313 = vmatpush1.msra.mxu0 %v2152
    %2314 = vmatprep.subr.mxu0 %v2155
    %2315 = vmatpush1.msra.mxu0 %v2154
    %2316 = vmatprep.subr.mxu0 %v2157
    %2317 = vmatpush1.msra.mxu0 %v2156
    %2318 = vmatprep.subr.mxu0 %v2159
    %2319 = vmatpush1.msra.mxu0 %v2158
    %2320 = vmatprep.subr.mxu0 %v2161
    %2321 = vmatpush1.msra.mxu0 %v2160
    %2322 = vmatprep.subr.mxu0 %v2163
    %2323 = vmatpush1.msra.mxu0 %v2162
    %2324 = vmatprep.subr.mxu0 %v2165
    %2325 = vmatpush1.msra.mxu0 %v2164
    %2326 = vmatprep.subr.mxu0 %v2167
    %2327 = vmatpush1.msra.mxu0 %v2166
    %2328 = vmatprep.subr.mxu0 %v2169
    %2329 = vmatpush1.msra.mxu0 %v2168
    %2330 = vmatprep.subr.mxu0 %v2171
    %2331 = vmatpush1.msra.mxu0 %v2170
    %2332 = vmatprep.subr.mxu0 %v2173
    %2333 = vmatpush1.msra.mxu0 %v2172
    %2334 = vmatprep.subr.mxu0 %v2175
    %2335 = vmatpush1.msra.mxu0 %v2174
    %2336 = vmatprep.subr.mxu0 %v2177
    %2337 = vmatpush1.msra.mxu0 %v2176
    %2338 = vmatprep.subr.mxu0 %v2179
    %2339 = vmatpush1.msra.mxu0 %v2178
    %2340 = vmatprep.subr.mxu0 %v2181
    %2341 = vmatpush1.msra.mxu0 %v2180
    %2342 = vmatprep.subr.mxu0 %v2183
    %2343 = vmatpush1.msra.mxu0 %v2182
    %2344 = vmatprep.subr.mxu0 %v2185
    %2345 = vmatpush1.msra.mxu0 %v2184
    %2346 = vmatprep.subr.mxu0 %v2187
    %2347 = vmatpush1.msra.mxu0 %v2186
    %2348 = vmatprep.subr.mxu0 %v2189
    %2349 = vmatpush1.msra.mxu0 %v2188
    %2350 = vmatprep.subr.mxu0 %v2191
    %2351 = vmatpush1.msra.mxu0 %v2190
    %2352 = vmatprep.subr.mxu0 %v2193
    %2353 = vmatpush1.msra.mxu0 %v2192
    %2354 = vmatprep.subr.mxu0 %v2195
    %2355 = vmatpush1.msra.mxu0 %v2194
    %2356 = vmatprep.mubr.f32.mxu0 %v2128
    %2357 = vmatmul.mubr.f32.gmra.mrb[0].mxu0 %v2127
    %v2358 = vpop.f32.mrb[0].mxu0
    %v2359 = vadd.f32 %v210, %v2358
    %v2360 = vpop.f32.mrb[0].mxu0
    %v2361 = vadd.f32 %v214, %v2360
    %2362 = vdwg.mxu0
    %2363 = vmatprep.subr.mxu0 %v2197
    %2364 = vmatpush1.msra.mxu0 %v2196
    %2365 = vmatprep.subr.mxu0 %v2199
    %2366 = vmatpush1.msra.mxu0 %v2198
    %2367 = vmatprep.subr.mxu0 %v2201
    %2368 = vmatpush1.msra.mxu0 %v2200
    %2369 = vmatprep.subr.mxu0 %v2203
    %2370 = vmatpush1.msra.mxu0 %v2202
    %2371 = vmatprep.subr.mxu0 %v2205
    %2372 = vmatpush1.msra.mxu0 %v2204
    %2373 = vmatprep.subr.mxu0 %v2207
    %2374 = vmatpush1.msra.mxu0 %v2206
    %2375 = vmatprep.subr.mxu0 %v2209
    %2376 = vmatpush1.msra.mxu0 %v2208
    %2377 = vmatprep.subr.mxu0 %v2211
    %2378 = vmatpush1.msra.mxu0 %v2210
    %2379 = vmatprep.subr.mxu0 %v2213
    %2380 = vmatpush1.msra.mxu0 %v2212
    %2381 = vmatprep.subr.mxu0 %v2215
    %2382 = vmatpush1.msra.mxu0 %v2214
    %2383 = vmatprep.subr.mxu0 %v2217
    %2384 = vmatpush1.msra.mxu0 %v2216
    %2385 = vmatprep.subr.mxu0 %v2219
    %2386 = vmatpush1.msra.mxu0 %v2218
    %2387 = vmatprep.subr.mxu0 %v2221
    %2388 = vmatpush1.msra.mxu0 %v2220
    %2389 = vmatprep.subr.mxu0 %v2223
    %2390 = vmatpush1.msra.mxu0 %v2222
    %2391 = vmatprep.subr.mxu0 %v2225
    %2392 = vmatpush1.msra.mxu0 %v2224
    %2393 = vmatprep.subr.mxu0 %v2227
    %2394 = vmatpush1.msra.mxu0 %v2226
    %2395 = vmatprep.subr.mxu0 %v2229
    %2396 = vmatpush1.msra.mxu0 %v2228
    %2397 = vmatprep.subr.mxu0 %v2231
    %2398 = vmatpush1.msra.mxu0 %v2230
    %2399 = vmatprep.subr.mxu0 %v2233
    %2400 = vmatpush1.msra.mxu0 %v2232
    %2401 = vmatprep.subr.mxu0 %v2235
    %2402 = vmatpush1.msra.mxu0 %v2234
    %2403 = vmatprep.subr.mxu0 %v2237
    %2404 = vmatpush1.msra.mxu0 %v2236
    %2405 = vmatprep.subr.mxu0 %v2239
    %2406 = vmatpush1.msra.mxu0 %v2238
    %2407 = vmatprep.subr.mxu0 %v2241
    %2408 = vmatpush1.msra.mxu0 %v2240
    %2409 = vmatprep.subr.mxu0 %v2243
    %2410 = vmatpush1.msra.mxu0 %v2242
    %2411 = vmatprep.subr.mxu0 %v2245
    %2412 = vmatpush1.msra.mxu0 %v2244
    %2413 = vmatprep.subr.mxu0 %v2247
    %2414 = vmatpush1.msra.mxu0 %v2246
    %2415 = vmatprep.subr.mxu0 %v2249
    %2416 = vmatpush1.msra.mxu0 %v2248
    %2417 = vmatprep.subr.mxu0 %v2251
    %2418 = vmatpush1.msra.mxu0 %v2250
    %2419 = vmatprep.subr.mxu0 %v2253
    %2420 = vmatpush1.msra.mxu0 %v2252
    %2421 = vmatprep.subr.mxu0 %v2255
    %2422 = vmatpush1.msra.mxu0 %v2254
    %2423 = vmatprep.subr.mxu0 %v2257
    %2424 = vmatpush1.msra.mxu0 %v2256
    %2425 = vmatprep.subr.mxu0 %v2259
    %2426 = vmatpush1.msra.mxu0 %v2258
    %2427 = vmatprep.mubr.f32.mxu0 %v2130
    %2428 = vmatmul.mubr.f32.gmra.mrb[0].mxu0 %v2129
    %v2429 = vpop.f32.mrb[0].mxu0
    %v2430 = vadd.f32 %v2359, %v2429
    %v2431 = vpop.f32.mrb[0].mxu0
    %v2432 = vadd.f32 %v2361, %v2431
    %2433 = vdwg.mxu0
    %2434 = vmatprep.subr.mxu0 %v2261
    %2435 = vmatpush1.msra.mxu0 %v2260
    %2436 = vmatprep.subr.mxu0 %v2263
    %2437 = vmatpush1.msra.mxu0 %v2262
    %2438 = vmatprep.subr.mxu0 %v2265
    %2439 = vmatpush1.msra.mxu0 %v2264
    %2440 = vmatprep.subr.mxu0 %v2267
    %2441 = vmatpush1.msra.mxu0 %v2266
    %2442 = vmatprep.subr.mxu0 %v2269
    %2443 = vmatpush1.msra.mxu0 %v2268
    %2444 = vmatprep.subr.mxu0 %v2271
    %2445 = vmatpush1.msra.mxu0 %v2270
    %2446 = vmatprep.subr.mxu0 %v2273
    %2447 = vmatpush1.msra.mxu0 %v2272
    %2448 = vmatprep.subr.mxu0 %v2275
    %2449 = vmatpush1.msra.mxu0 %v2274
    %2450 = vmatprep.subr.mxu0 %v2277
    %2451 = vmatpush1.msra.mxu0 %v2276
    %2452 = vmatprep.subr.mxu0 %v2279
    %2453 = vmatpush1.msra.mxu0 %v2278
    %2454 = vmatprep.subr.mxu0 %v2281
    %2455 = vmatpush1.msra.mxu0 %v2280
    %2456 = vmatprep.subr.mxu0 %v2283
    %2457 = vmatpush1.msra.mxu0 %v2282
    %2458 = vmatprep.subr.mxu0 %v2285
    %2459 = vmatpush1.msra.mxu0 %v2284
    %2460 = vmatprep.subr.mxu0 %v2287
    %2461 = vmatpush1.msra.mxu0 %v2286
    %2462 = vmatprep.subr.mxu0 %v2289
    %2463 = vmatpush1.msra.mxu0 %v2288
    %2464 = vmatprep.subr.mxu0 %v2291
    %2465 = vmatpush1.msra.mxu0 %v2290
    %2466 = vmatprep.subr.mxu0 0.0
    %2467 = vmatpush1.msra.mxu0 0.0
    %2468 = vmatprep.subr.mxu0 0.0
    %2469 = vmatpush1.msra.mxu0 0.0
    %2470 = vmatprep.subr.mxu0 0.0
    %2471 = vmatpush1.msra.mxu0 0.0
    %2472 = vmatprep.subr.mxu0 0.0
    %2473 = vmatpush1.msra.mxu0 0.0
    %2474 = vmatprep.subr.mxu0 0.0
    %2475 = vmatpush1.msra.mxu0 0.0
    %2476 = vmatprep.subr.mxu0 0.0
    %2477 = vmatpush1.msra.mxu0 0.0
    %2478 = vmatprep.subr.mxu0 0.0
    %2479 = vmatpush1.msra.mxu0 0.0
    %2480 = vmatprep.subr.mxu0 0.0
    %2481 = vmatpush1.msra.mxu0 0.0
    %2482 = vmatprep.subr.mxu0 0.0
    %2483 = vmatpush1.msra.mxu0 0.0
    %2484 = vmatprep.subr.mxu0 0.0
    %2485 = vmatpush1.msra.mxu0 0.0
    %2486 = vmatprep.subr.mxu0 0.0
    %2487 = vmatpush1.msra.mxu0 0.0
    %2488 = vmatprep.subr.mxu0 0.0
    %2489 = vmatpush1.msra.mxu0 0.0
    %2490 = vmatprep.subr.mxu0 0.0
    %2491 = vmatpush1.msra.mxu0 0.0
    %2492 = vmatprep.subr.mxu0 0.0
    %2493 = vmatpush1.msra.mxu0 0.0
    %2494 = vmatprep.subr.mxu0 0.0
    %2495 = vmatpush1.msra.mxu0 0.0
    %2496 = vmatprep.subr.mxu0 0.0
    %2497 = vmatpush1.msra.mxu0 0.0
    %2498 = vmatprep.mubr.f32.mxu0 0.0
    %2499 = vmatmul.mubr.f32.gmra.mrb[0].mxu0 %v2131
    %v2500 = vpop.f32.mrb[0].mxu0
    %v2501 = vadd.f32 %v2430, %v2500
    %v2502 = vpop.f32.mrb[0].mxu0
    %v2503 = vadd.f32 %v2432, %v2502
    %2504 = vdwg.mxu0
    %v2505 = vmax.f32 %v2501, 0.0
    %v2506 = vmax.f32 %v2503, 0.0
    %2507 = vst [vmem:[#allocation2 + $0x50] sm:$0xff] %v2505
    %2508 = vst [vmem:[#allocation2 + $0x58] sm:$0xff] %v2506
    %v2509 = vld [vmem:[#allocation4 + $0x60] sm:$0xff]
    %v2510 = vld [vmem:[#allocation4 + $0x68] sm:$0xff]
    %v2511 = vld [vmem:[#allocation4 + $0x70] sm:$0xff]
    %v2512 = vld [vmem:[#allocation4 + $0x78] sm:$0xff]
    %v2513 = vld [vmem:[#allocation4 + $0x80] sm:$0xff]
    %v2514 = vld [vmem:[#allocation9] sm:$0xff]
    %v2515 = vld [vmem:[#allocation9 + $0x8] sm:$0xff]
    %v2516 = vld [vmem:[#allocation9 + $0x10] sm:$0xff]
    %v2517 = vld [vmem:[#allocation9 + $0x18] sm:$0xff]
    %v2518 = vld [vmem:[#allocation9 + $0x20] sm:$0xff]
    %v2519 = vld [vmem:[#allocation9 + $0x28] sm:$0xff]
    %v2520 = vld [vmem:[#allocation9 + $0x30] sm:$0xff]
    %v2521 = vld [vmem:[#allocation9 + $0x38] sm:$0xff]
    %v2522 = vld [vmem:[#allocation9 + $0x40] sm:$0xff]
    %v2523 = vld [vmem:[#allocation9 + $0x48] sm:$0xff]
    %v2524 = vld [vmem:[#allocation9 + $0x50] sm:$0xff]
    %v2525 = vld [vmem:[#allocation9 + $0x58] sm:$0xff]
    %v2526 = vld [vmem:[#allocation9 + $0x60] sm:$0xff]
    %v2527 = vld [vmem:[#allocation9 + $0x68] sm:$0xff]
    %v2528 = vld [vmem:[#allocation9 + $0x70] sm:$0xff]
    %v2529 = vld [vmem:[#allocation9 + $0x78] sm:$0xff]
    %v2530 = vld [vmem:[#allocation9 + $0x80] sm:$0xff]
    %v2531 = vld [vmem:[#allocation9 + $0x88] sm:$0xff]
    %v2532 = vld [vmem:[#allocation9 + $0x90] sm:$0xff]
    %v2533 = vld [vmem:[#allocation9 + $0x98] sm:$0xff]
    %v2534 = vld [vmem:[#allocation9 + $0xa0] sm:$0xff]
    %v2535 = vld [vmem:[#allocation9 + $0xa8] sm:$0xff]
    %v2536 = vld [vmem:[#allocation9 + $0xb0] sm:$0xff]
    %v2537 = vld [vmem:[#allocation9 + $0xb8] sm:$0xff]
    %v2538 = vld [vmem:[#allocation9 + $0xc0] sm:$0xff]
    %v2539 = vld [vmem:[#allocation9 + $0xc8] sm:$0xff]
    %v2540 = vld [vmem:[#allocation9 + $0xd0] sm:$0xff]
    %v2541 = vld [vmem:[#allocation9 + $0xd8] sm:$0xff]
    %v2542 = vld [vmem:[#allocation9 + $0xe0] sm:$0xff]
    %v2543 = vld [vmem:[#allocation9 + $0xe8] sm:$0xff]
    %v2544 = vld [vmem:[#allocation9 + $0xf0] sm:$0xff]
    %v2545 = vld [vmem:[#allocation9 + $0xf8] sm:$0xff]
    %v2546 = vld [vmem:[#allocation9 + $0x100] sm:$0xff]
    %v2547 = vld [vmem:[#allocation9 + $0x108] sm:$0xff]
    %v2548 = vld [vmem:[#allocation9 + $0x110] sm:$0xff]
    %v2549 = vld [vmem:[#allocation9 + $0x118] sm:$0xff]
    %v2550 = vld [vmem:[#allocation9 + $0x120] sm:$0xff]
    %v2551 = vld [vmem:[#allocation9 + $0x128] sm:$0xff]
    %v2552 = vld [vmem:[#allocation9 + $0x130] sm:$0xff]
    %v2553 = vld [vmem:[#allocation9 + $0x138] sm:$0xff]
    %v2554 = vld [vmem:[#allocation9 + $0x140] sm:$0xff]
    %v2555 = vld [vmem:[#allocation9 + $0x148] sm:$0xff]
    %v2556 = vld [vmem:[#allocation9 + $0x150] sm:$0xff]
    %v2557 = vld [vmem:[#allocation9 + $0x158] sm:$0xff]
    %v2558 = vld [vmem:[#allocation9 + $0x160] sm:$0xff]
    %v2559 = vld [vmem:[#allocation9 + $0x168] sm:$0xff]
    %v2560 = vld [vmem:[#allocation9 + $0x170] sm:$0xff]
    %v2561 = vld [vmem:[#allocation9 + $0x178] sm:$0xff]
    %v2562 = vld [vmem:[#allocation9 + $0x180] sm:$0xff]
    %v2563 = vld [vmem:[#allocation9 + $0x188] sm:$0xff]
    %v2564 = vld [vmem:[#allocation9 + $0x190] sm:$0xff]
    %v2565 = vld [vmem:[#allocation9 + $0x198] sm:$0xff]
    %v2566 = vld [vmem:[#allocation9 + $0x1a0] sm:$0xff]
    %v2567 = vld [vmem:[#allocation9 + $0x1a8] sm:$0xff]
    %v2568 = vld [vmem:[#allocation9 + $0x1b0] sm:$0xff]
    %v2569 = vld [vmem:[#allocation9 + $0x1b8] sm:$0xff]
    %v2570 = vld [vmem:[#allocation9 + $0x1c0] sm:$0xff]
    %v2571 = vld [vmem:[#allocation9 + $0x1c8] sm:$0xff]
    %v2572 = vld [vmem:[#allocation9 + $0x1d0] sm:$0xff]
    %v2573 = vld [vmem:[#allocation9 + $0x1d8] sm:$0xff]
    %v2574 = vld [vmem:[#allocation9 + $0x1e0] sm:$0xff]
    %v2575 = vld [vmem:[#allocation9 + $0x1e8] sm:$0xff]
    %v2576 = vld [vmem:[#allocation9 + $0x1f0] sm:$0xff]
    %v2577 = vld [vmem:[#allocation9 + $0x1f8] sm:$0xff]
    %v2578 = vld [vmem:[#allocation9 + $0x200] sm:$0xff]
    %v2579 = vld [vmem:[#allocation9 + $0x208] sm:$0xff]
    %v2580 = vld [vmem:[#allocation9 + $0x210] sm:$0xff]
    %v2581 = vld [vmem:[#allocation9 + $0x218] sm:$0xff]
    %v2582 = vld [vmem:[#allocation9 + $0x220] sm:$0xff]
    %v2583 = vld [vmem:[#allocation9 + $0x228] sm:$0xff]
    %v2584 = vld [vmem:[#allocation9 + $0x230] sm:$0xff]
    %v2585 = vld [vmem:[#allocation9 + $0x238] sm:$0xff]
    %v2586 = vld [vmem:[#allocation9 + $0x240] sm:$0xff]
    %v2587 = vld [vmem:[#allocation9 + $0x248] sm:$0xff]
    %v2588 = vld [vmem:[#allocation9 + $0x250] sm:$0xff]
    %v2589 = vld [vmem:[#allocation9 + $0x258] sm:$0xff]
    %v2590 = vld [vmem:[#allocation9 + $0x260] sm:$0xff]
    %v2591 = vld [vmem:[#allocation9 + $0x268] sm:$0xff]
    %v2592 = vld [vmem:[#allocation9 + $0x270] sm:$0xff]
    %v2593 = vld [vmem:[#allocation9 + $0x278] sm:$0xff]
    %v2594 = vld [vmem:[#allocation9 + $0x280] sm:$0xff]
    %v2595 = vld [vmem:[#allocation9 + $0x288] sm:$0xff]
    %v2596 = vld [vmem:[#allocation9 + $0x290] sm:$0xff]
    %v2597 = vld [vmem:[#allocation9 + $0x298] sm:$0xff]
    %v2598 = vld [vmem:[#allocation9 + $0x2a0] sm:$0xff]
    %v2599 = vld [vmem:[#allocation9 + $0x2a8] sm:$0xff]
    %v2600 = vld [vmem:[#allocation9 + $0x2b0] sm:$0xff]
    %v2601 = vld [vmem:[#allocation9 + $0x2b8] sm:$0xff]
    %v2602 = vld [vmem:[#allocation9 + $0x2c0] sm:$0xff]
    %v2603 = vld [vmem:[#allocation9 + $0x2c8] sm:$0xff]
    %v2604 = vld [vmem:[#allocation9 + $0x2d0] sm:$0xff]
    %v2605 = vld [vmem:[#allocation9 + $0x2d8] sm:$0xff]
    %v2606 = vld [vmem:[#allocation9 + $0x2e0] sm:$0xff]
    %v2607 = vld [vmem:[#allocation9 + $0x2e8] sm:$0xff]
    %v2608 = vld [vmem:[#allocation9 + $0x2f0] sm:$0xff]
    %v2609 = vld [vmem:[#allocation9 + $0x2f8] sm:$0xff]
    %v2610 = vld [vmem:[#allocation9 + $0x300] sm:$0xff]
    %v2611 = vld [vmem:[#allocation9 + $0x308] sm:$0xff]
    %v2612 = vld [vmem:[#allocation9 + $0x310] sm:$0xff]
    %v2613 = vld [vmem:[#allocation9 + $0x318] sm:$0xff]
    %v2614 = vld [vmem:[#allocation9 + $0x320] sm:$0xff]
    %v2615 = vld [vmem:[#allocation9 + $0x328] sm:$0xff]
    %v2616 = vld [vmem:[#allocation9 + $0x330] sm:$0xff]
    %v2617 = vld [vmem:[#allocation9 + $0x338] sm:$0xff]
    %v2618 = vld [vmem:[#allocation9 + $0x340] sm:$0xff]
    %v2619 = vld [vmem:[#allocation9 + $0x348] sm:$0xff]
    %v2620 = vld [vmem:[#allocation9 + $0x350] sm:$0xff]
    %v2621 = vld [vmem:[#allocation9 + $0x358] sm:$0xff]
    %v2622 = vld [vmem:[#allocation9 + $0x360] sm:$0xff]
    %v2623 = vld [vmem:[#allocation9 + $0x368] sm:$0xff]
    %v2624 = vld [vmem:[#allocation9 + $0x370] sm:$0xff]
    %v2625 = vld [vmem:[#allocation9 + $0x378] sm:$0xff]
    %v2626 = vld [vmem:[#allocation9 + $0x380] sm:$0xff]
    %v2627 = vld [vmem:[#allocation9 + $0x388] sm:$0xff]
    %v2628 = vld [vmem:[#allocation9 + $0x390] sm:$0xff]
    %v2629 = vld [vmem:[#allocation9 + $0x398] sm:$0xff]
    %v2630 = vld [vmem:[#allocation9 + $0x3a0] sm:$0xff]
    %v2631 = vld [vmem:[#allocation9 + $0x3a8] sm:$0xff]
    %v2632 = vld [vmem:[#allocation9 + $0x3b0] sm:$0xff]
    %v2633 = vld [vmem:[#allocation9 + $0x3b8] sm:$0xff]
    %v2634 = vld [vmem:[#allocation9 + $0x3c0] sm:$0xff]
    %v2635 = vld [vmem:[#allocation9 + $0x3c8] sm:$0xff]
    %v2636 = vld [vmem:[#allocation9 + $0x3d0] sm:$0xff]
    %v2637 = vld [vmem:[#allocation9 + $0x3d8] sm:$0xff]
    %v2638 = vld [vmem:[#allocation9 + $0x3e0] sm:$0xff]
    %v2639 = vld [vmem:[#allocation9 + $0x3e8] sm:$0xff]
    %v2640 = vld [vmem:[#allocation9 + $0x3f0] sm:$0xff]
    %v2641 = vld [vmem:[#allocation9 + $0x3f8] sm:$0xff]
    %v2642 = vld [vmem:[#allocation9 + $0x400] sm:$0xff]
    %v2643 = vld [vmem:[#allocation9 + $0x408] sm:$0xff]
    %v2644 = vld [vmem:[#allocation9 + $0x410] sm:$0xff]
    %v2645 = vld [vmem:[#allocation9 + $0x418] sm:$0xff]
    %v2646 = vld [vmem:[#allocation9 + $0x420] sm:$0xff]
    %v2647 = vld [vmem:[#allocation9 + $0x428] sm:$0xff]
    %v2648 = vld [vmem:[#allocation9 + $0x430] sm:$0xff]
    %v2649 = vld [vmem:[#allocation9 + $0x438] sm:$0xff]
    %v2650 = vld [vmem:[#allocation9 + $0x440] sm:$0xff]
    %v2651 = vld [vmem:[#allocation9 + $0x448] sm:$0xff]
    %v2652 = vld [vmem:[#allocation9 + $0x450] sm:$0xff]
    %v2653 = vld [vmem:[#allocation9 + $0x458] sm:$0xff]
    %v2654 = vld [vmem:[#allocation9 + $0x460] sm:$0xff]
    %v2655 = vld [vmem:[#allocation9 + $0x468] sm:$0xff]
    %v2656 = vld [vmem:[#allocation9 + $0x470] sm:$0xff]
    %v2657 = vld [vmem:[#allocation9 + $0x478] sm:$0xff]
    %v2658 = vld [vmem:[#allocation9 + $0x480] sm:$0xff]
    %v2659 = vld [vmem:[#allocation9 + $0x488] sm:$0xff]
    %v2660 = vld [vmem:[#allocation9 + $0x490] sm:$0xff]
    %v2661 = vld [vmem:[#allocation9 + $0x498] sm:$0xff]
    %v2662 = vld [vmem:[#allocation9 + $0x4a0] sm:$0xff]
    %v2663 = vld [vmem:[#allocation9 + $0x4a8] sm:$0xff]
    %v2664 = vld [vmem:[#allocation9 + $0x4b0] sm:$0xff]
    %v2665 = vld [vmem:[#allocation9 + $0x4b8] sm:$0xff]
    %v2666 = vld [vmem:[#allocation9 + $0x4c0] sm:$0xff]
    %v2667 = vld [vmem:[#allocation9 + $0x4c8] sm:$0xff]
    %v2668 = vld [vmem:[#allocation9 + $0x4d0] sm:$0xff]
    %v2669 = vld [vmem:[#allocation9 + $0x4d8] sm:$0xff]
    %v2670 = vld [vmem:[#allocation9 + $0x4e0] sm:$0xff]
    %v2671 = vld [vmem:[#allocation9 + $0x4e8] sm:$0xff]
    %v2672 = vld [vmem:[#allocation9 + $0x4f0] sm:$0xff]
    %v2673 = vld [vmem:[#allocation9 + $0x4f8] sm:$0xff]
    %2674 = vmatprep.subr.mxu0 %v2515
    %2675 = vmatpush1.msra.mxu0 %v2514
    %2676 = vmatprep.subr.mxu0 %v2517
    %2677 = vmatpush1.msra.mxu0 %v2516
    %2678 = vmatprep.subr.mxu0 %v2519
    %2679 = vmatpush1.msra.mxu0 %v2518
    %2680 = vmatprep.subr.mxu0 %v2521
    %2681 = vmatpush1.msra.mxu0 %v2520
    %2682 = vmatprep.subr.mxu0 %v2523
    %2683 = vmatpush1.msra.mxu0 %v2522
    %2684 = vmatprep.subr.mxu0 %v2525
    %2685 = vmatpush1.msra.mxu0 %v2524
    %2686 = vmatprep.subr.mxu0 %v2527
    %2687 = vmatpush1.msra.mxu0 %v2526
    %2688 = vmatprep.subr.mxu0 %v2529
    %2689 = vmatpush1.msra.mxu0 %v2528
    %2690 = vmatprep.subr.mxu0 %v2531
    %2691 = vmatpush1.msra.mxu0 %v2530
    %2692 = vmatprep.subr.mxu0 %v2533
    %2693 = vmatpush1.msra.mxu0 %v2532
    %2694 = vmatprep.subr.mxu0 %v2535
    %2695 = vmatpush1.msra.mxu0 %v2534
    %2696 = vmatprep.subr.mxu0 %v2537
    %2697 = vmatpush1.msra.mxu0 %v2536
    %2698 = vmatprep.subr.mxu0 %v2539
    %2699 = vmatpush1.msra.mxu0 %v2538
    %2700 = vmatprep.subr.mxu0 %v2541
    %2701 = vmatpush1.msra.mxu0 %v2540
    %2702 = vmatprep.subr.mxu0 %v2543
    %2703 = vmatpush1.msra.mxu0 %v2542
    %2704 = vmatprep.subr.mxu0 %v2545
    %2705 = vmatpush1.msra.mxu0 %v2544
    %2706 = vmatprep.subr.mxu0 %v2547
    %2707 = vmatpush1.msra.mxu0 %v2546
    %2708 = vmatprep.subr.mxu0 %v2549
    %2709 = vmatpush1.msra.mxu0 %v2548
    %2710 = vmatprep.subr.mxu0 %v2551
    %2711 = vmatpush1.msra.mxu0 %v2550
    %2712 = vmatprep.subr.mxu0 %v2553
    %2713 = vmatpush1.msra.mxu0 %v2552
    %2714 = vmatprep.subr.mxu0 %v2555
    %2715 = vmatpush1.msra.mxu0 %v2554
    %2716 = vmatprep.subr.mxu0 %v2557
    %2717 = vmatpush1.msra.mxu0 %v2556
    %2718 = vmatprep.subr.mxu0 %v2559
    %2719 = vmatpush1.msra.mxu0 %v2558
    %2720 = vmatprep.subr.mxu0 %v2561
    %2721 = vmatpush1.msra.mxu0 %v2560
    %2722 = vmatprep.subr.mxu0 %v2563
    %2723 = vmatpush1.msra.mxu0 %v2562
    %2724 = vmatprep.subr.mxu0 %v2565
    %2725 = vmatpush1.msra.mxu0 %v2564
    %2726 = vmatprep.subr.mxu0 %v2567
    %2727 = vmatpush1.msra.mxu0 %v2566
    %2728 = vmatprep.subr.mxu0 %v2569
    %2729 = vmatpush1.msra.mxu0 %v2568
    %2730 = vmatprep.subr.mxu0 %v2571
    %2731 = vmatpush1.msra.mxu0 %v2570
    %2732 = vmatprep.subr.mxu0 %v2573
    %2733 = vmatpush1.msra.mxu0 %v2572
    %2734 = vmatprep.subr.mxu0 %v2575
    %2735 = vmatpush1.msra.mxu0 %v2574
    %2736 = vmatprep.subr.mxu0 %v2577
    %2737 = vmatpush1.msra.mxu0 %v2576
    %2738 = vmatprep.mubr.f32.mxu0 %v2510
    %2739 = vmatmul.mubr.f32.gmra.mrb[0].mxu0 %v2509
    %v2740 = vpop.f32.mrb[0].mxu0
    %v2741 = vadd.f32 %v210, %v2740
    %v2742 = vpop.f32.mrb[0].mxu0
    %v2743 = vadd.f32 %v214, %v2742
    %2744 = vdwg.mxu0
    %2745 = vmatprep.subr.mxu0 %v2579
    %2746 = vmatpush1.msra.mxu0 %v2578
    %2747 = vmatprep.subr.mxu0 %v2581
    %2748 = vmatpush1.msra.mxu0 %v2580
    %2749 = vmatprep.subr.mxu0 %v2583
    %2750 = vmatpush1.msra.mxu0 %v2582
    %2751 = vmatprep.subr.mxu0 %v2585
    %2752 = vmatpush1.msra.mxu0 %v2584
    %2753 = vmatprep.subr.mxu0 %v2587
    %2754 = vmatpush1.msra.mxu0 %v2586
    %2755 = vmatprep.subr.mxu0 %v2589
    %2756 = vmatpush1.msra.mxu0 %v2588
    %2757 = vmatprep.subr.mxu0 %v2591
    %2758 = vmatpush1.msra.mxu0 %v2590
    %2759 = vmatprep.subr.mxu0 %v2593
    %2760 = vmatpush1.msra.mxu0 %v2592
    %2761 = vmatprep.subr.mxu0 %v2595
    %2762 = vmatpush1.msra.mxu0 %v2594
    %2763 = vmatprep.subr.mxu0 %v2597
    %2764 = vmatpush1.msra.mxu0 %v2596
    %2765 = vmatprep.subr.mxu0 %v2599
    %2766 = vmatpush1.msra.mxu0 %v2598
    %2767 = vmatprep.subr.mxu0 %v2601
    %2768 = vmatpush1.msra.mxu0 %v2600
    %2769 = vmatprep.subr.mxu0 %v2603
    %2770 = vmatpush1.msra.mxu0 %v2602
    %2771 = vmatprep.subr.mxu0 %v2605
    %2772 = vmatpush1.msra.mxu0 %v2604
    %2773 = vmatprep.subr.mxu0 %v2607
    %2774 = vmatpush1.msra.mxu0 %v2606
    %2775 = vmatprep.subr.mxu0 %v2609
    %2776 = vmatpush1.msra.mxu0 %v2608
    %2777 = vmatprep.subr.mxu0 %v2611
    %2778 = vmatpush1.msra.mxu0 %v2610
    %2779 = vmatprep.subr.mxu0 %v2613
    %2780 = vmatpush1.msra.mxu0 %v2612
    %2781 = vmatprep.subr.mxu0 %v2615
    %2782 = vmatpush1.msra.mxu0 %v2614
    %2783 = vmatprep.subr.mxu0 %v2617
    %2784 = vmatpush1.msra.mxu0 %v2616
    %2785 = vmatprep.subr.mxu0 %v2619
    %2786 = vmatpush1.msra.mxu0 %v2618
    %2787 = vmatprep.subr.mxu0 %v2621
    %2788 = vmatpush1.msra.mxu0 %v2620
    %2789 = vmatprep.subr.mxu0 %v2623
    %2790 = vmatpush1.msra.mxu0 %v2622
    %2791 = vmatprep.subr.mxu0 %v2625
    %2792 = vmatpush1.msra.mxu0 %v2624
    %2793 = vmatprep.subr.mxu0 %v2627
    %2794 = vmatpush1.msra.mxu0 %v2626
    %2795 = vmatprep.subr.mxu0 %v2629
    %2796 = vmatpush1.msra.mxu0 %v2628
    %2797 = vmatprep.subr.mxu0 %v2631
    %2798 = vmatpush1.msra.mxu0 %v2630
    %2799 = vmatprep.subr.mxu0 %v2633
    %2800 = vmatpush1.msra.mxu0 %v2632
    %2801 = vmatprep.subr.mxu0 %v2635
    %2802 = vmatpush1.msra.mxu0 %v2634
    %2803 = vmatprep.subr.mxu0 %v2637
    %2804 = vmatpush1.msra.mxu0 %v2636
    %2805 = vmatprep.subr.mxu0 %v2639
    %2806 = vmatpush1.msra.mxu0 %v2638
    %2807 = vmatprep.subr.mxu0 %v2641
    %2808 = vmatpush1.msra.mxu0 %v2640
    %2809 = vmatprep.mubr.f32.mxu0 %v2512
    %2810 = vmatmul.mubr.f32.gmra.mrb[0].mxu0 %v2511
    %v2811 = vpop.f32.mrb[0].mxu0
    %v2812 = vadd.f32 %v2741, %v2811
    %v2813 = vpop.f32.mrb[0].mxu0
    %v2814 = vadd.f32 %v2743, %v2813
    %2815 = vdwg.mxu0
    %2816 = vmatprep.subr.mxu0 %v2643
    %2817 = vmatpush1.msra.mxu0 %v2642
    %2818 = vmatprep.subr.mxu0 %v2645
    %2819 = vmatpush1.msra.mxu0 %v2644
    %2820 = vmatprep.subr.mxu0 %v2647
    %2821 = vmatpush1.msra.mxu0 %v2646
    %2822 = vmatprep.subr.mxu0 %v2649
    %2823 = vmatpush1.msra.mxu0 %v2648
    %2824 = vmatprep.subr.mxu0 %v2651
    %2825 = vmatpush1.msra.mxu0 %v2650
    %2826 = vmatprep.subr.mxu0 %v2653
    %2827 = vmatpush1.msra.mxu0 %v2652
    %2828 = vmatprep.subr.mxu0 %v2655
    %2829 = vmatpush1.msra.mxu0 %v2654
    %2830 = vmatprep.subr.mxu0 %v2657
    %2831 = vmatpush1.msra.mxu0 %v2656
    %2832 = vmatprep.subr.mxu0 %v2659
    %2833 = vmatpush1.msra.mxu0 %v2658
    %2834 = vmatprep.subr.mxu0 %v2661
    %2835 = vmatpush1.msra.mxu0 %v2660
    %2836 = vmatprep.subr.mxu0 %v2663
    %2837 = vmatpush1.msra.mxu0 %v2662
    %2838 = vmatprep.subr.mxu0 %v2665
    %2839 = vmatpush1.msra.mxu0 %v2664
    %2840 = vmatprep.subr.mxu0 %v2667
    %2841 = vmatpush1.msra.mxu0 %v2666
    %2842 = vmatprep.subr.mxu0 %v2669
    %2843 = vmatpush1.msra.mxu0 %v2668
    %2844 = vmatprep.subr.mxu0 %v2671
    %2845 = vmatpush1.msra.mxu0 %v2670
    %2846 = vmatprep.subr.mxu0 %v2673
    %2847 = vmatpush1.msra.mxu0 %v2672
    %2848 = vmatprep.subr.mxu0 0.0
    %2849 = vmatpush1.msra.mxu0 0.0
    %2850 = vmatprep.subr.mxu0 0.0
    %2851 = vmatpush1.msra.mxu0 0.0
    %2852 = vmatprep.subr.mxu0 0.0
    %2853 = vmatpush1.msra.mxu0 0.0
    %2854 = vmatprep.subr.mxu0 0.0
    %2855 = vmatpush1.msra.mxu0 0.0
    %2856 = vmatprep.subr.mxu0 0.0
    %2857 = vmatpush1.msra.mxu0 0.0
    %2858 = vmatprep.subr.mxu0 0.0
    %2859 = vmatpush1.msra.mxu0 0.0
    %2860 = vmatprep.subr.mxu0 0.0
    %2861 = vmatpush1.msra.mxu0 0.0
    %2862 = vmatprep.subr.mxu0 0.0
    %2863 = vmatpush1.msra.mxu0 0.0
    %2864 = vmatprep.subr.mxu0 0.0
    %2865 = vmatpush1.msra.mxu0 0.0
    %2866 = vmatprep.subr.mxu0 0.0
    %2867 = vmatpush1.msra.mxu0 0.0
    %2868 = vmatprep.subr.mxu0 0.0
    %2869 = vmatpush1.msra.mxu0 0.0
    %2870 = vmatprep.subr.mxu0 0.0
    %2871 = vmatpush1.msra.mxu0 0.0
    %2872 = vmatprep.subr.mxu0 0.0
    %2873 = vmatpush1.msra.mxu0 0.0
    %2874 = vmatprep.subr.mxu0 0.0
    %2875 = vmatpush1.msra.mxu0 0.0
    %2876 = vmatprep.subr.mxu0 0.0
    %2877 = vmatpush1.msra.mxu0 0.0
    %2878 = vmatprep.subr.mxu0 0.0
    %2879 = vmatpush1.msra.mxu0 0.0
    %2880 = vmatprep.mubr.f32.mxu0 0.0
    %2881 = vmatmul.mubr.f32.gmra.mrb[0].mxu0 %v2513
    %v2882 = vpop.f32.mrb[0].mxu0
    %v2883 = vadd.f32 %v2812, %v2882
    %v2884 = vpop.f32.mrb[0].mxu0
    %v2885 = vadd.f32 %v2814, %v2884
    %2886 = vdwg.mxu0
    %v2887 = vmax.f32 %v2883, 0.0
    %v2888 = vmax.f32 %v2885, 0.0
    %2889 = vst [vmem:[#allocation2 + $0x60] sm:$0xff] %v2887
    %2890 = vst [vmem:[#allocation2 + $0x68] sm:$0xff] %v2888
    %v2891 = vld [vmem:[#allocation4 + $0x70] sm:$0xff]
    %v2892 = vld [vmem:[#allocation4 + $0x78] sm:$0xff]
    %v2893 = vld [vmem:[#allocation4 + $0x80] sm:$0xff]
    %v2894 = vld [vmem:[#allocation4 + $0x88] sm:$0xff]
    %v2895 = vld [vmem:[#allocation4 + $0x90] sm:$0xff]
    %v2896 = vld [vmem:[#allocation9] sm:$0xff]
    %v2897 = vld [vmem:[#allocation9 + $0x8] sm:$0xff]
    %v2898 = vld [vmem:[#allocation9 + $0x10] sm:$0xff]
    %v2899 = vld [vmem:[#allocation9 + $0x18] sm:$0xff]
    %v2900 = vld [vmem:[#allocation9 + $0x20] sm:$0xff]
    %v2901 = vld [vmem:[#allocation9 + $0x28] sm:$0xff]
    %v2902 = vld [vmem:[#allocation9 + $0x30] sm:$0xff]
    %v2903 = vld [vmem:[#allocation9 + $0x38] sm:$0xff]
    %v2904 = vld [vmem:[#allocation9 + $0x40] sm:$0xff]
    %v2905 = vld [vmem:[#allocation9 + $0x48] sm:$0xff]
    %v2906 = vld [vmem:[#allocation9 + $0x50] sm:$0xff]
    %v2907 = vld [vmem:[#allocation9 + $0x58] sm:$0xff]
    %v2908 = vld [vmem:[#allocation9 + $0x60] sm:$0xff]
    %v2909 = vld [vmem:[#allocation9 + $0x68] sm:$0xff]
    %v2910 = vld [vmem:[#allocation9 + $0x70] sm:$0xff]
    %v2911 = vld [vmem:[#allocation9 + $0x78] sm:$0xff]
    %v2912 = vld [vmem:[#allocation9 + $0x80] sm:$0xff]
    %v2913 = vld [vmem:[#allocation9 + $0x88] sm:$0xff]
    %v2914 = vld [vmem:[#allocation9 + $0x90] sm:$0xff]
    %v2915 = vld [vmem:[#allocation9 + $0x98] sm:$0xff]
    %v2916 = vld [vmem:[#allocation9 + $0xa0] sm:$0xff]
    %v2917 = vld [vmem:[#allocation9 + $0xa8] sm:$0xff]
    %v2918 = vld [vmem:[#allocation9 + $0xb0] sm:$0xff]
    %v2919 = vld [vmem:[#allocation9 + $0xb8] sm:$0xff]
    %v2920 = vld [vmem:[#allocation9 + $0xc0] sm:$0xff]
    %v2921 = vld [vmem:[#allocation9 + $0xc8] sm:$0xff]
    %v2922 = vld [vmem:[#allocation9 + $0xd0] sm:$0xff]
    %v2923 = vld [vmem:[#allocation9 + $0xd8] sm:$0xff]
    %v2924 = vld [vmem:[#allocation9 + $0xe0] sm:$0xff]
    %v2925 = vld [vmem:[#allocation9 + $0xe8] sm:$0xff]
    %v2926 = vld [vmem:[#allocation9 + $0xf0] sm:$0xff]
    %v2927 = vld [vmem:[#allocation9 + $0xf8] sm:$0xff]
    %v2928 = vld [vmem:[#allocation9 + $0x100] sm:$0xff]
    %v2929 = vld [vmem:[#allocation9 + $0x108] sm:$0xff]
    %v2930 = vld [vmem:[#allocation9 + $0x110] sm:$0xff]
    %v2931 = vld [vmem:[#allocation9 + $0x118] sm:$0xff]
    %v2932 = vld [vmem:[#allocation9 + $0x120] sm:$0xff]
    %v2933 = vld [vmem:[#allocation9 + $0x128] sm:$0xff]
    %v2934 = vld [vmem:[#allocation9 + $0x130] sm:$0xff]
    %v2935 = vld [vmem:[#allocation9 + $0x138] sm:$0xff]
    %v2936 = vld [vmem:[#allocation9 + $0x140] sm:$0xff]
    %v2937 = vld [vmem:[#allocation9 + $0x148] sm:$0xff]
    %v2938 = vld [vmem:[#allocation9 + $0x150] sm:$0xff]
    %v2939 = vld [vmem:[#allocation9 + $0x158] sm:$0xff]
    %v2940 = vld [vmem:[#allocation9 + $0x160] sm:$0xff]
    %v2941 = vld [vmem:[#allocation9 + $0x168] sm:$0xff]
    %v2942 = vld [vmem:[#allocation9 + $0x170] sm:$0xff]
    %v2943 = vld [vmem:[#allocation9 + $0x178] sm:$0xff]
    %v2944 = vld [vmem:[#allocation9 + $0x180] sm:$0xff]
    %v2945 = vld [vmem:[#allocation9 + $0x188] sm:$0xff]
    %v2946 = vld [vmem:[#allocation9 + $0x190] sm:$0xff]
    %v2947 = vld [vmem:[#allocation9 + $0x198] sm:$0xff]
    %v2948 = vld [vmem:[#allocation9 + $0x1a0] sm:$0xff]
    %v2949 = vld [vmem:[#allocation9 + $0x1a8] sm:$0xff]
    %v2950 = vld [vmem:[#allocation9 + $0x1b0] sm:$0xff]
    %v2951 = vld [vmem:[#allocation9 + $0x1b8] sm:$0xff]
    %v2952 = vld [vmem:[#allocation9 + $0x1c0] sm:$0xff]
    %v2953 = vld [vmem:[#allocation9 + $0x1c8] sm:$0xff]
    %v2954 = vld [vmem:[#allocation9 + $0x1d0] sm:$0xff]
    %v2955 = vld [vmem:[#allocation9 + $0x1d8] sm:$0xff]
    %v2956 = vld [vmem:[#allocation9 + $0x1e0] sm:$0xff]
    %v2957 = vld [vmem:[#allocation9 + $0x1e8] sm:$0xff]
    %v2958 = vld [vmem:[#allocation9 + $0x1f0] sm:$0xff]
    %v2959 = vld [vmem:[#allocation9 + $0x1f8] sm:$0xff]
    %v2960 = vld [vmem:[#allocation9 + $0x200] sm:$0xff]
    %v2961 = vld [vmem:[#allocation9 + $0x208] sm:$0xff]
    %v2962 = vld [vmem:[#allocation9 + $0x210] sm:$0xff]
    %v2963 = vld [vmem:[#allocation9 + $0x218] sm:$0xff]
    %v2964 = vld [vmem:[#allocation9 + $0x220] sm:$0xff]
    %v2965 = vld [vmem:[#allocation9 + $0x228] sm:$0xff]
    %v2966 = vld [vmem:[#allocation9 + $0x230] sm:$0xff]
    %v2967 = vld [vmem:[#allocation9 + $0x238] sm:$0xff]
    %v2968 = vld [vmem:[#allocation9 + $0x240] sm:$0xff]
    %v2969 = vld [vmem:[#allocation9 + $0x248] sm:$0xff]
    %v2970 = vld [vmem:[#allocation9 + $0x250] sm:$0xff]
    %v2971 = vld [vmem:[#allocation9 + $0x258] sm:$0xff]
    %v2972 = vld [vmem:[#allocation9 + $0x260] sm:$0xff]
    %v2973 = vld [vmem:[#allocation9 + $0x268] sm:$0xff]
    %v2974 = vld [vmem:[#allocation9 + $0x270] sm:$0xff]
    %v2975 = vld [vmem:[#allocation9 + $0x278] sm:$0xff]
    %v2976 = vld [vmem:[#allocation9 + $0x280] sm:$0xff]
    %v2977 = vld [vmem:[#allocation9 + $0x288] sm:$0xff]
    %v2978 = vld [vmem:[#allocation9 + $0x290] sm:$0xff]
    %v2979 = vld [vmem:[#allocation9 + $0x298] sm:$0xff]
    %v2980 = vld [vmem:[#allocation9 + $0x2a0] sm:$0xff]
    %v2981 = vld [vmem:[#allocation9 + $0x2a8] sm:$0xff]
    %v2982 = vld [vmem:[#allocation9 + $0x2b0] sm:$0xff]
    %v2983 = vld [vmem:[#allocation9 + $0x2b8] sm:$0xff]
    %v2984 = vld [vmem:[#allocation9 + $0x2c0] sm:$0xff]
    %v2985 = vld [vmem:[#allocation9 + $0x2c8] sm:$0xff]
    %v2986 = vld [vmem:[#allocation9 + $0x2d0] sm:$0xff]
    %v2987 = vld [vmem:[#allocation9 + $0x2d8] sm:$0xff]
    %v2988 = vld [vmem:[#allocation9 + $0x2e0] sm:$0xff]
    %v2989 = vld [vmem:[#allocation9 + $0x2e8] sm:$0xff]
    %v2990 = vld [vmem:[#allocation9 + $0x2f0] sm:$0xff]
    %v2991 = vld [vmem:[#allocation9 + $0x2f8] sm:$0xff]
    %v2992 = vld [vmem:[#allocation9 + $0x300] sm:$0xff]
    %v2993 = vld [vmem:[#allocation9 + $0x308] sm:$0xff]
    %v2994 = vld [vmem:[#allocation9 + $0x310] sm:$0xff]
    %v2995 = vld [vmem:[#allocation9 + $0x318] sm:$0xff]
    %v2996 = vld [vmem:[#allocation9 + $0x320] sm:$0xff]
    %v2997 = vld [vmem:[#allocation9 + $0x328] sm:$0xff]
    %v2998 = vld [vmem:[#allocation9 + $0x330] sm:$0xff]
    %v2999 = vld [vmem:[#allocation9 + $0x338] sm:$0xff]
    %v3000 = vld [vmem:[#allocation9 + $0x340] sm:$0xff]
    %v3001 = vld [vmem:[#allocation9 + $0x348] sm:$0xff]
    %v3002 = vld [vmem:[#allocation9 + $0x350] sm:$0xff]
    %v3003 = vld [vmem:[#allocation9 + $0x358] sm:$0xff]
    %v3004 = vld [vmem:[#allocation9 + $0x360] sm:$0xff]
    %v3005 = vld [vmem:[#allocation9 + $0x368] sm:$0xff]
    %v3006 = vld [vmem:[#allocation9 + $0x370] sm:$0xff]
    %v3007 = vld [vmem:[#allocation9 + $0x378] sm:$0xff]
    %v3008 = vld [vmem:[#allocation9 + $0x380] sm:$0xff]
    %v3009 = vld [vmem:[#allocation9 + $0x388] sm:$0xff]
    %v3010 = vld [vmem:[#allocation9 + $0x390] sm:$0xff]
    %v3011 = vld [vmem:[#allocation9 + $0x398] sm:$0xff]
    %v3012 = vld [vmem:[#allocation9 + $0x3a0] sm:$0xff]
    %v3013 = vld [vmem:[#allocation9 + $0x3a8] sm:$0xff]
    %v3014 = vld [vmem:[#allocation9 + $0x3b0] sm:$0xff]
    %v3015 = vld [vmem:[#allocation9 + $0x3b8] sm:$0xff]
    %v3016 = vld [vmem:[#allocation9 + $0x3c0] sm:$0xff]
    %v3017 = vld [vmem:[#allocation9 + $0x3c8] sm:$0xff]
    %v3018 = vld [vmem:[#allocation9 + $0x3d0] sm:$0xff]
    %v3019 = vld [vmem:[#allocation9 + $0x3d8] sm:$0xff]
    %v3020 = vld [vmem:[#allocation9 + $0x3e0] sm:$0xff]
    %v3021 = vld [vmem:[#allocation9 + $0x3e8] sm:$0xff]
    %v3022 = vld [vmem:[#allocation9 + $0x3f0] sm:$0xff]
    %v3023 = vld [vmem:[#allocation9 + $0x3f8] sm:$0xff]
    %v3024 = vld [vmem:[#allocation9 + $0x400] sm:$0xff]
    %v3025 = vld [vmem:[#allocation9 + $0x408] sm:$0xff]
    %v3026 = vld [vmem:[#allocation9 + $0x410] sm:$0xff]
    %v3027 = vld [vmem:[#allocation9 + $0x418] sm:$0xff]
    %v3028 = vld [vmem:[#allocation9 + $0x420] sm:$0xff]
    %v3029 = vld [vmem:[#allocation9 + $0x428] sm:$0xff]
    %v3030 = vld [vmem:[#allocation9 + $0x430] sm:$0xff]
    %v3031 = vld [vmem:[#allocation9 + $0x438] sm:$0xff]
    %v3032 = vld [vmem:[#allocation9 + $0x440] sm:$0xff]
    %v3033 = vld [vmem:[#allocation9 + $0x448] sm:$0xff]
    %v3034 = vld [vmem:[#allocation9 + $0x450] sm:$0xff]
    %v3035 = vld [vmem:[#allocation9 + $0x458] sm:$0xff]
    %v3036 = vld [vmem:[#allocation9 + $0x460] sm:$0xff]
    %v3037 = vld [vmem:[#allocation9 + $0x468] sm:$0xff]
    %v3038 = vld [vmem:[#allocation9 + $0x470] sm:$0xff]
    %v3039 = vld [vmem:[#allocation9 + $0x478] sm:$0xff]
    %v3040 = vld [vmem:[#allocation9 + $0x480] sm:$0xff]
    %v3041 = vld [vmem:[#allocation9 + $0x488] sm:$0xff]
    %v3042 = vld [vmem:[#allocation9 + $0x490] sm:$0xff]
    %v3043 = vld [vmem:[#allocation9 + $0x498] sm:$0xff]
    %v3044 = vld [vmem:[#allocation9 + $0x4a0] sm:$0xff]
    %v3045 = vld [vmem:[#allocation9 + $0x4a8] sm:$0xff]
    %v3046 = vld [vmem:[#allocation9 + $0x4b0] sm:$0xff]
    %v3047 = vld [vmem:[#allocation9 + $0x4b8] sm:$0xff]
    %v3048 = vld [vmem:[#allocation9 + $0x4c0] sm:$0xff]
    %v3049 = vld [vmem:[#allocation9 + $0x4c8] sm:$0xff]
    %v3050 = vld [vmem:[#allocation9 + $0x4d0] sm:$0xff]
    %v3051 = vld [vmem:[#allocation9 + $0x4d8] sm:$0xff]
    %v3052 = vld [vmem:[#allocation9 + $0x4e0] sm:$0xff]
    %v3053 = vld [vmem:[#allocation9 + $0x4e8] sm:$0xff]
    %v3054 = vld [vmem:[#allocation9 + $0x4f0] sm:$0xff]
    %v3055 = vld [vmem:[#allocation9 + $0x4f8] sm:$0xff]
    %3056 = vmatprep.subr.mxu0 %v2897
    %3057 = vmatpush1.msra.mxu0 %v2896
    %3058 = vmatprep.subr.mxu0 %v2899
    %3059 = vmatpush1.msra.mxu0 %v2898
    %3060 = vmatprep.subr.mxu0 %v2901
    %3061 = vmatpush1.msra.mxu0 %v2900
    %3062 = vmatprep.subr.mxu0 %v2903
    %3063 = vmatpush1.msra.mxu0 %v2902
    %3064 = vmatprep.subr.mxu0 %v2905
    %3065 = vmatpush1.msra.mxu0 %v2904
    %3066 = vmatprep.subr.mxu0 %v2907
    %3067 = vmatpush1.msra.mxu0 %v2906
    %3068 = vmatprep.subr.mxu0 %v2909
    %3069 = vmatpush1.msra.mxu0 %v2908
    %3070 = vmatprep.subr.mxu0 %v2911
    %3071 = vmatpush1.msra.mxu0 %v2910
    %3072 = vmatprep.subr.mxu0 %v2913
    %3073 = vmatpush1.msra.mxu0 %v2912
    %3074 = vmatprep.subr.mxu0 %v2915
    %3075 = vmatpush1.msra.mxu0 %v2914
    %3076 = vmatprep.subr.mxu0 %v2917
    %3077 = vmatpush1.msra.mxu0 %v2916
    %3078 = vmatprep.subr.mxu0 %v2919
    %3079 = vmatpush1.msra.mxu0 %v2918
    %3080 = vmatprep.subr.mxu0 %v2921
    %3081 = vmatpush1.msra.mxu0 %v2920
    %3082 = vmatprep.subr.mxu0 %v2923
    %3083 = vmatpush1.msra.mxu0 %v2922
    %3084 = vmatprep.subr.mxu0 %v2925
    %3085 = vmatpush1.msra.mxu0 %v2924
    %3086 = vmatprep.subr.mxu0 %v2927
    %3087 = vmatpush1.msra.mxu0 %v2926
    %3088 = vmatprep.subr.mxu0 %v2929
    %3089 = vmatpush1.msra.mxu0 %v2928
    %3090 = vmatprep.subr.mxu0 %v2931
    %3091 = vmatpush1.msra.mxu0 %v2930
    %3092 = vmatprep.subr.mxu0 %v2933
    %3093 = vmatpush1.msra.mxu0 %v2932
    %3094 = vmatprep.subr.mxu0 %v2935
    %3095 = vmatpush1.msra.mxu0 %v2934
    %3096 = vmatprep.subr.mxu0 %v2937
    %3097 = vmatpush1.msra.mxu0 %v2936
    %3098 = vmatprep.subr.mxu0 %v2939
    %3099 = vmatpush1.msra.mxu0 %v2938
    %3100 = vmatprep.subr.mxu0 %v2941
    %3101 = vmatpush1.msra.mxu0 %v2940
    %3102 = vmatprep.subr.mxu0 %v2943
    %3103 = vmatpush1.msra.mxu0 %v2942
    %3104 = vmatprep.subr.mxu0 %v2945
    %3105 = vmatpush1.msra.mxu0 %v2944
    %3106 = vmatprep.subr.mxu0 %v2947
    %3107 = vmatpush1.msra.mxu0 %v2946
    %3108 = vmatprep.subr.mxu0 %v2949
    %3109 = vmatpush1.msra.mxu0 %v2948
    %3110 = vmatprep.subr.mxu0 %v2951
    %3111 = vmatpush1.msra.mxu0 %v2950
    %3112 = vmatprep.subr.mxu0 %v2953
    %3113 = vmatpush1.msra.mxu0 %v2952
    %3114 = vmatprep.subr.mxu0 %v2955
    %3115 = vmatpush1.msra.mxu0 %v2954
    %3116 = vmatprep.subr.mxu0 %v2957
    %3117 = vmatpush1.msra.mxu0 %v2956
    %3118 = vmatprep.subr.mxu0 %v2959
    %3119 = vmatpush1.msra.mxu0 %v2958
    %3120 = vmatprep.mubr.f32.mxu0 %v2892
    %3121 = vmatmul.mubr.f32.gmra.mrb[0].mxu0 %v2891
    %v3122 = vpop.f32.mrb[0].mxu0
    %v3123 = vadd.f32 %v210, %v3122
    %v3124 = vpop.f32.mrb[0].mxu0
    %v3125 = vadd.f32 %v214, %v3124
    %3126 = vdwg.mxu0
    %3127 = vmatprep.subr.mxu0 %v2961
    %3128 = vmatpush1.msra.mxu0 %v2960
    %3129 = vmatprep.subr.mxu0 %v2963
    %3130 = vmatpush1.msra.mxu0 %v2962
    %3131 = vmatprep.subr.mxu0 %v2965
    %3132 = vmatpush1.msra.mxu0 %v2964
    %3133 = vmatprep.subr.mxu0 %v2967
    %3134 = vmatpush1.msra.mxu0 %v2966
    %3135 = vmatprep.subr.mxu0 %v2969
    %3136 = vmatpush1.msra.mxu0 %v2968
    %3137 = vmatprep.subr.mxu0 %v2971
    %3138 = vmatpush1.msra.mxu0 %v2970
    %3139 = vmatprep.subr.mxu0 %v2973
    %3140 = vmatpush1.msra.mxu0 %v2972
    %3141 = vmatprep.subr.mxu0 %v2975
    %3142 = vmatpush1.msra.mxu0 %v2974
    %3143 = vmatprep.subr.mxu0 %v2977
    %3144 = vmatpush1.msra.mxu0 %v2976
    %3145 = vmatprep.subr.mxu0 %v2979
    %3146 = vmatpush1.msra.mxu0 %v2978
    %3147 = vmatprep.subr.mxu0 %v2981
    %3148 = vmatpush1.msra.mxu0 %v2980
    %3149 = vmatprep.subr.mxu0 %v2983
    %3150 = vmatpush1.msra.mxu0 %v2982
    %3151 = vmatprep.subr.mxu0 %v2985
    %3152 = vmatpush1.msra.mxu0 %v2984
    %3153 = vmatprep.subr.mxu0 %v2987
    %3154 = vmatpush1.msra.mxu0 %v2986
    %3155 = vmatprep.subr.mxu0 %v2989
    %3156 = vmatpush1.msra.mxu0 %v2988
    %3157 = vmatprep.subr.mxu0 %v2991
    %3158 = vmatpush1.msra.mxu0 %v2990
    %3159 = vmatprep.subr.mxu0 %v2993
    %3160 = vmatpush1.msra.mxu0 %v2992
    %3161 = vmatprep.subr.mxu0 %v2995
    %3162 = vmatpush1.msra.mxu0 %v2994
    %3163 = vmatprep.subr.mxu0 %v2997
    %3164 = vmatpush1.msra.mxu0 %v2996
    %3165 = vmatprep.subr.mxu0 %v2999
    %3166 = vmatpush1.msra.mxu0 %v2998
    %3167 = vmatprep.subr.mxu0 %v3001
    %3168 = vmatpush1.msra.mxu0 %v3000
    %3169 = vmatprep.subr.mxu0 %v3003
    %3170 = vmatpush1.msra.mxu0 %v3002
    %3171 = vmatprep.subr.mxu0 %v3005
    %3172 = vmatpush1.msra.mxu0 %v3004
    %3173 = vmatprep.subr.mxu0 %v3007
    %3174 = vmatpush1.msra.mxu0 %v3006
    %3175 = vmatprep.subr.mxu0 %v3009
    %3176 = vmatpush1.msra.mxu0 %v3008
    %3177 = vmatprep.subr.mxu0 %v3011
    %3178 = vmatpush1.msra.mxu0 %v3010
    %3179 = vmatprep.subr.mxu0 %v3013
    %3180 = vmatpush1.msra.mxu0 %v3012
    %3181 = vmatprep.subr.mxu0 %v3015
    %3182 = vmatpush1.msra.mxu0 %v3014
    %3183 = vmatprep.subr.mxu0 %v3017
    %3184 = vmatpush1.msra.mxu0 %v3016
    %3185 = vmatprep.subr.mxu0 %v3019
    %3186 = vmatpush1.msra.mxu0 %v3018
    %3187 = vmatprep.subr.mxu0 %v3021
    %3188 = vmatpush1.msra.mxu0 %v3020
    %3189 = vmatprep.subr.mxu0 %v3023
    %3190 = vmatpush1.msra.mxu0 %v3022
    %3191 = vmatprep.mubr.f32.mxu0 %v2894
    %3192 = vmatmul.mubr.f32.gmra.mrb[0].mxu0 %v2893
    %v3193 = vpop.f32.mrb[0].mxu0
    %v3194 = vadd.f32 %v3123, %v3193
    %v3195 = vpop.f32.mrb[0].mxu0
    %v3196 = vadd.f32 %v3125, %v3195
    %3197 = vdwg.mxu0
    %3198 = vmatprep.subr.mxu0 %v3025
    %3199 = vmatpush1.msra.mxu0 %v3024
    %3200 = vmatprep.subr.mxu0 %v3027
    %3201 = vmatpush1.msra.mxu0 %v3026
    %3202 = vmatprep.subr.mxu0 %v3029
    %3203 = vmatpush1.msra.mxu0 %v3028
    %3204 = vmatprep.subr.mxu0 %v3031
    %3205 = vmatpush1.msra.mxu0 %v3030
    %3206 = vmatprep.subr.mxu0 %v3033
    %3207 = vmatpush1.msra.mxu0 %v3032
    %3208 = vmatprep.subr.mxu0 %v3035
    %3209 = vmatpush1.msra.mxu0 %v3034
    %3210 = vmatprep.subr.mxu0 %v3037
    %3211 = vmatpush1.msra.mxu0 %v3036
    %3212 = vmatprep.subr.mxu0 %v3039
    %3213 = vmatpush1.msra.mxu0 %v3038
    %3214 = vmatprep.subr.mxu0 %v3041
    %3215 = vmatpush1.msra.mxu0 %v3040
    %3216 = vmatprep.subr.mxu0 %v3043
    %3217 = vmatpush1.msra.mxu0 %v3042
    %3218 = vmatprep.subr.mxu0 %v3045
    %3219 = vmatpush1.msra.mxu0 %v3044
    %3220 = vmatprep.subr.mxu0 %v3047
    %3221 = vmatpush1.msra.mxu0 %v3046
    %3222 = vmatprep.subr.mxu0 %v3049
    %3223 = vmatpush1.msra.mxu0 %v3048
    %3224 = vmatprep.subr.mxu0 %v3051
    %3225 = vmatpush1.msra.mxu0 %v3050
    %3226 = vmatprep.subr.mxu0 %v3053
    %3227 = vmatpush1.msra.mxu0 %v3052
    %3228 = vmatprep.subr.mxu0 %v3055
    %3229 = vmatpush1.msra.mxu0 %v3054
    %3230 = vmatprep.subr.mxu0 0.0
    %3231 = vmatpush1.msra.mxu0 0.0
    %3232 = vmatprep.subr.mxu0 0.0
    %3233 = vmatpush1.msra.mxu0 0.0
    %3234 = vmatprep.subr.mxu0 0.0
    %3235 = vmatpush1.msra.mxu0 0.0
    %3236 = vmatprep.subr.mxu0 0.0
    %3237 = vmatpush1.msra.mxu0 0.0
    %3238 = vmatprep.subr.mxu0 0.0
    %3239 = vmatpush1.msra.mxu0 0.0
    %3240 = vmatprep.subr.mxu0 0.0
    %3241 = vmatpush1.msra.mxu0 0.0
    %3242 = vmatprep.subr.mxu0 0.0
    %3243 = vmatpush1.msra.mxu0 0.0
    %3244 = vmatprep.subr.mxu0 0.0
    %3245 = vmatpush1.msra.mxu0 0.0
    %3246 = vmatprep.subr.mxu0 0.0
    %3247 = vmatpush1.msra.mxu0 0.0
    %3248 = vmatprep.subr.mxu0 0.0
    %3249 = vmatpush1.msra.mxu0 0.0
    %3250 = vmatprep.subr.mxu0 0.0
    %3251 = vmatpush1.msra.mxu0 0.0
    %3252 = vmatprep.subr.mxu0 0.0
    %3253 = vmatpush1.msra.mxu0 0.0
    %3254 = vmatprep.subr.mxu0 0.0
    %3255 = vmatpush1.msra.mxu0 0.0
    %3256 = vmatprep.subr.mxu0 0.0
    %3257 = vmatpush1.msra.mxu0 0.0
    %3258 = vmatprep.subr.mxu0 0.0
    %3259 = vmatpush1.msra.mxu0 0.0
    %3260 = vmatprep.subr.mxu0 0.0
    %3261 = vmatpush1.msra.mxu0 0.0
    %3262 = vmatprep.mubr.f32.mxu0 0.0
    %3263 = vmatmul.mubr.f32.gmra.mrb[0].mxu0 %v2895
    %v3264 = vpop.f32.mrb[0].mxu0
    %v3265 = vadd.f32 %v3194, %v3264
    %v3266 = vpop.f32.mrb[0].mxu0
    %v3267 = vadd.f32 %v3196, %v3266
    %3268 = vdwg.mxu0
    %v3269 = vmax.f32 %v3265, 0.0
    %v3270 = vmax.f32 %v3267, 0.0
    %3271 = vst [vmem:[#allocation2 + $0x70] sm:$0xff] %v3269
    %3272 = vst [vmem:[#allocation2 + $0x78] sm:$0xff] %v3270
    %v3273 = vld [vmem:[#allocation4 + $0x80] sm:$0xff]
    %v3274 = vld [vmem:[#allocation4 + $0x88] sm:$0xff]
    %v3275 = vld [vmem:[#allocation4 + $0x90] sm:$0xff]
    %v3276 = vld [vmem:[#allocation4 + $0x98] sm:$0xff]
    %v3277 = vld [vmem:[#allocation4 + $0xa0] sm:$0xff]
    %v3278 = vld [vmem:[#allocation9] sm:$0xff]
    %v3279 = vld [vmem:[#allocation9 + $0x8] sm:$0xff]
    %v3280 = vld [vmem:[#allocation9 + $0x10] sm:$0xff]
    %v3281 = vld [vmem:[#allocation9 + $0x18] sm:$0xff]
    %v3282 = vld [vmem:[#allocation9 + $0x20] sm:$0xff]
    %v3283 = vld [vmem:[#allocation9 + $0x28] sm:$0xff]
    %v3284 = vld [vmem:[#allocation9 + $0x30] sm:$0xff]
    %v3285 = vld [vmem:[#allocation9 + $0x38] sm:$0xff]
    %v3286 = vld [vmem:[#allocation9 + $0x40] sm:$0xff]
    %v3287 = vld [vmem:[#allocation9 + $0x48] sm:$0xff]
    %v3288 = vld [vmem:[#allocation9 + $0x50] sm:$0xff]
    %v3289 = vld [vmem:[#allocation9 + $0x58] sm:$0xff]
    %v3290 = vld [vmem:[#allocation9 + $0x60] sm:$0xff]
    %v3291 = vld [vmem:[#allocation9 + $0x68] sm:$0xff]
    %v3292 = vld [vmem:[#allocation9 + $0x70] sm:$0xff]
    %v3293 = vld [vmem:[#allocation9 + $0x78] sm:$0xff]
    %v3294 = vld [vmem:[#allocation9 + $0x80] sm:$0xff]
    %v3295 = vld [vmem:[#allocation9 + $0x88] sm:$0xff]
    %v3296 = vld [vmem:[#allocation9 + $0x90] sm:$0xff]
    %v3297 = vld [vmem:[#allocation9 + $0x98] sm:$0xff]
    %v3298 = vld [vmem:[#allocation9 + $0xa0] sm:$0xff]
    %v3299 = vld [vmem:[#allocation9 + $0xa8] sm:$0xff]
    %v3300 = vld [vmem:[#allocation9 + $0xb0] sm:$0xff]
    %v3301 = vld [vmem:[#allocation9 + $0xb8] sm:$0xff]
    %v3302 = vld [vmem:[#allocation9 + $0xc0] sm:$0xff]
    %v3303 = vld [vmem:[#allocation9 + $0xc8] sm:$0xff]
    %v3304 = vld [vmem:[#allocation9 + $0xd0] sm:$0xff]
    %v3305 = vld [vmem:[#allocation9 + $0xd8] sm:$0xff]
    %v3306 = vld [vmem:[#allocation9 + $0xe0] sm:$0xff]
    %v3307 = vld [vmem:[#allocation9 + $0xe8] sm:$0xff]
    %v3308 = vld [vmem:[#allocation9 + $0xf0] sm:$0xff]
    %v3309 = vld [vmem:[#allocation9 + $0xf8] sm:$0xff]
    %v3310 = vld [vmem:[#allocation9 + $0x100] sm:$0xff]
    %v3311 = vld [vmem:[#allocation9 + $0x108] sm:$0xff]
    %v3312 = vld [vmem:[#allocation9 + $0x110] sm:$0xff]
    %v3313 = vld [vmem:[#allocation9 + $0x118] sm:$0xff]
    %v3314 = vld [vmem:[#allocation9 + $0x120] sm:$0xff]
    %v3315 = vld [vmem:[#allocation9 + $0x128] sm:$0xff]
    %v3316 = vld [vmem:[#allocation9 + $0x130] sm:$0xff]
    %v3317 = vld [vmem:[#allocation9 + $0x138] sm:$0xff]
    %v3318 = vld [vmem:[#allocation9 + $0x140] sm:$0xff]
    %v3319 = vld [vmem:[#allocation9 + $0x148] sm:$0xff]
    %v3320 = vld [vmem:[#allocation9 + $0x150] sm:$0xff]
    %v3321 = vld [vmem:[#allocation9 + $0x158] sm:$0xff]
    %v3322 = vld [vmem:[#allocation9 + $0x160] sm:$0xff]
    %v3323 = vld [vmem:[#allocation9 + $0x168] sm:$0xff]
    %v3324 = vld [vmem:[#allocation9 + $0x170] sm:$0xff]
    %v3325 = vld [vmem:[#allocation9 + $0x178] sm:$0xff]
    %v3326 = vld [vmem:[#allocation9 + $0x180] sm:$0xff]
    %v3327 = vld [vmem:[#allocation9 + $0x188] sm:$0xff]
    %v3328 = vld [vmem:[#allocation9 + $0x190] sm:$0xff]
    %v3329 = vld [vmem:[#allocation9 + $0x198] sm:$0xff]
    %v3330 = vld [vmem:[#allocation9 + $0x1a0] sm:$0xff]
    %v3331 = vld [vmem:[#allocation9 + $0x1a8] sm:$0xff]
    %v3332 = vld [vmem:[#allocation9 + $0x1b0] sm:$0xff]
    %v3333 = vld [vmem:[#allocation9 + $0x1b8] sm:$0xff]
    %v3334 = vld [vmem:[#allocation9 + $0x1c0] sm:$0xff]
    %v3335 = vld [vmem:[#allocation9 + $0x1c8] sm:$0xff]
    %v3336 = vld [vmem:[#allocation9 + $0x1d0] sm:$0xff]
    %v3337 = vld [vmem:[#allocation9 + $0x1d8] sm:$0xff]
    %v3338 = vld [vmem:[#allocation9 + $0x1e0] sm:$0xff]
    %v3339 = vld [vmem:[#allocation9 + $0x1e8] sm:$0xff]
    %v3340 = vld [vmem:[#allocation9 + $0x1f0] sm:$0xff]
    %v3341 = vld [vmem:[#allocation9 + $0x1f8] sm:$0xff]
    %v3342 = vld [vmem:[#allocation9 + $0x200] sm:$0xff]
    %v3343 = vld [vmem:[#allocation9 + $0x208] sm:$0xff]
    %v3344 = vld [vmem:[#allocation9 + $0x210] sm:$0xff]
    %v3345 = vld [vmem:[#allocation9 + $0x218] sm:$0xff]
    %v3346 = vld [vmem:[#allocation9 + $0x220] sm:$0xff]
    %v3347 = vld [vmem:[#allocation9 + $0x228] sm:$0xff]
    %v3348 = vld [vmem:[#allocation9 + $0x230] sm:$0xff]
    %v3349 = vld [vmem:[#allocation9 + $0x238] sm:$0xff]
    %v3350 = vld [vmem:[#allocation9 + $0x240] sm:$0xff]
    %v3351 = vld [vmem:[#allocation9 + $0x248] sm:$0xff]
    %v3352 = vld [vmem:[#allocation9 + $0x250] sm:$0xff]
    %v3353 = vld [vmem:[#allocation9 + $0x258] sm:$0xff]
    %v3354 = vld [vmem:[#allocation9 + $0x260] sm:$0xff]
    %v3355 = vld [vmem:[#allocation9 + $0x268] sm:$0xff]
    %v3356 = vld [vmem:[#allocation9 + $0x270] sm:$0xff]
    %v3357 = vld [vmem:[#allocation9 + $0x278] sm:$0xff]
    %v3358 = vld [vmem:[#allocation9 + $0x280] sm:$0xff]
    %v3359 = vld [vmem:[#allocation9 + $0x288] sm:$0xff]
    %v3360 = vld [vmem:[#allocation9 + $0x290] sm:$0xff]
    %v3361 = vld [vmem:[#allocation9 + $0x298] sm:$0xff]
    %v3362 = vld [vmem:[#allocation9 + $0x2a0] sm:$0xff]
    %v3363 = vld [vmem:[#allocation9 + $0x2a8] sm:$0xff]
    %v3364 = vld [vmem:[#allocation9 + $0x2b0] sm:$0xff]
    %v3365 = vld [vmem:[#allocation9 + $0x2b8] sm:$0xff]
    %v3366 = vld [vmem:[#allocation9 + $0x2c0] sm:$0xff]
    %v3367 = vld [vmem:[#allocation9 + $0x2c8] sm:$0xff]
    %v3368 = vld [vmem:[#allocation9 + $0x2d0] sm:$0xff]
    %v3369 = vld [vmem:[#allocation9 + $0x2d8] sm:$0xff]
    %v3370 = vld [vmem:[#allocation9 + $0x2e0] sm:$0xff]
    %v3371 = vld [vmem:[#allocation9 + $0x2e8] sm:$0xff]
    %v3372 = vld [vmem:[#allocation9 + $0x2f0] sm:$0xff]
    %v3373 = vld [vmem:[#allocation9 + $0x2f8] sm:$0xff]
    %v3374 = vld [vmem:[#allocation9 + $0x300] sm:$0xff]
    %v3375 = vld [vmem:[#allocation9 + $0x308] sm:$0xff]
    %v3376 = vld [vmem:[#allocation9 + $0x310] sm:$0xff]
    %v3377 = vld [vmem:[#allocation9 + $0x318] sm:$0xff]
    %v3378 = vld [vmem:[#allocation9 + $0x320] sm:$0xff]
    %v3379 = vld [vmem:[#allocation9 + $0x328] sm:$0xff]
    %v3380 = vld [vmem:[#allocation9 + $0x330] sm:$0xff]
    %v3381 = vld [vmem:[#allocation9 + $0x338] sm:$0xff]
    %v3382 = vld [vmem:[#allocation9 + $0x340] sm:$0xff]
    %v3383 = vld [vmem:[#allocation9 + $0x348] sm:$0xff]
    %v3384 = vld [vmem:[#allocation9 + $0x350] sm:$0xff]
    %v3385 = vld [vmem:[#allocation9 + $0x358] sm:$0xff]
    %v3386 = vld [vmem:[#allocation9 + $0x360] sm:$0xff]
    %v3387 = vld [vmem:[#allocation9 + $0x368] sm:$0xff]
    %v3388 = vld [vmem:[#allocation9 + $0x370] sm:$0xff]
    %v3389 = vld [vmem:[#allocation9 + $0x378] sm:$0xff]
    %v3390 = vld [vmem:[#allocation9 + $0x380] sm:$0xff]
    %v3391 = vld [vmem:[#allocation9 + $0x388] sm:$0xff]
    %v3392 = vld [vmem:[#allocation9 + $0x390] sm:$0xff]
    %v3393 = vld [vmem:[#allocation9 + $0x398] sm:$0xff]
    %v3394 = vld [vmem:[#allocation9 + $0x3a0] sm:$0xff]
    %v3395 = vld [vmem:[#allocation9 + $0x3a8] sm:$0xff]
    %v3396 = vld [vmem:[#allocation9 + $0x3b0] sm:$0xff]
    %v3397 = vld [vmem:[#allocation9 + $0x3b8] sm:$0xff]
    %v3398 = vld [vmem:[#allocation9 + $0x3c0] sm:$0xff]
    %v3399 = vld [vmem:[#allocation9 + $0x3c8] sm:$0xff]
    %v3400 = vld [vmem:[#allocation9 + $0x3d0] sm:$0xff]
    %v3401 = vld [vmem:[#allocation9 + $0x3d8] sm:$0xff]
    %v3402 = vld [vmem:[#allocation9 + $0x3e0] sm:$0xff]
    %v3403 = vld [vmem:[#allocation9 + $0x3e8] sm:$0xff]
    %v3404 = vld [vmem:[#allocation9 + $0x3f0] sm:$0xff]
    %v3405 = vld [vmem:[#allocation9 + $0x3f8] sm:$0xff]
    %v3406 = vld [vmem:[#allocation9 + $0x400] sm:$0xff]
    %v3407 = vld [vmem:[#allocation9 + $0x408] sm:$0xff]
    %v3408 = vld [vmem:[#allocation9 + $0x410] sm:$0xff]
    %v3409 = vld [vmem:[#allocation9 + $0x418] sm:$0xff]
    %v3410 = vld [vmem:[#allocation9 + $0x420] sm:$0xff]
    %v3411 = vld [vmem:[#allocation9 + $0x428] sm:$0xff]
    %v3412 = vld [vmem:[#allocation9 + $0x430] sm:$0xff]
    %v3413 = vld [vmem:[#allocation9 + $0x438] sm:$0xff]
    %v3414 = vld [vmem:[#allocation9 + $0x440] sm:$0xff]
    %v3415 = vld [vmem:[#allocation9 + $0x448] sm:$0xff]
    %v3416 = vld [vmem:[#allocation9 + $0x450] sm:$0xff]
    %v3417 = vld [vmem:[#allocation9 + $0x458] sm:$0xff]
    %v3418 = vld [vmem:[#allocation9 + $0x460] sm:$0xff]
    %v3419 = vld [vmem:[#allocation9 + $0x468] sm:$0xff]
    %v3420 = vld [vmem:[#allocation9 + $0x470] sm:$0xff]
    %v3421 = vld [vmem:[#allocation9 + $0x478] sm:$0xff]
    %v3422 = vld [vmem:[#allocation9 + $0x480] sm:$0xff]
    %v3423 = vld [vmem:[#allocation9 + $0x488] sm:$0xff]
    %v3424 = vld [vmem:[#allocation9 + $0x490] sm:$0xff]
    %v3425 = vld [vmem:[#allocation9 + $0x498] sm:$0xff]
    %v3426 = vld [vmem:[#allocation9 + $0x4a0] sm:$0xff]
    %v3427 = vld [vmem:[#allocation9 + $0x4a8] sm:$0xff]
    %v3428 = vld [vmem:[#allocation9 + $0x4b0] sm:$0xff]
    %v3429 = vld [vmem:[#allocation9 + $0x4b8] sm:$0xff]
    %v3430 = vld [vmem:[#allocation9 + $0x4c0] sm:$0xff]
    %v3431 = vld [vmem:[#allocation9 + $0x4c8] sm:$0xff]
    %v3432 = vld [vmem:[#allocation9 + $0x4d0] sm:$0xff]
    %v3433 = vld [vmem:[#allocation9 + $0x4d8] sm:$0xff]
    %v3434 = vld [vmem:[#allocation9 + $0x4e0] sm:$0xff]
    %v3435 = vld [vmem:[#allocation9 + $0x4e8] sm:$0xff]
    %v3436 = vld [vmem:[#allocation9 + $0x4f0] sm:$0xff]
    %v3437 = vld [vmem:[#allocation9 + $0x4f8] sm:$0xff]
    %3438 = vmatprep.subr.mxu0 %v3279
    %3439 = vmatpush1.msra.mxu0 %v3278
    %3440 = vmatprep.subr.mxu0 %v3281
    %3441 = vmatpush1.msra.mxu0 %v3280
    %3442 = vmatprep.subr.mxu0 %v3283
    %3443 = vmatpush1.msra.mxu0 %v3282
    %3444 = vmatprep.subr.mxu0 %v3285
    %3445 = vmatpush1.msra.mxu0 %v3284
    %3446 = vmatprep.subr.mxu0 %v3287
    %3447 = vmatpush1.msra.mxu0 %v3286
    %3448 = vmatprep.subr.mxu0 %v3289
    %3449 = vmatpush1.msra.mxu0 %v3288
    %3450 = vmatprep.subr.mxu0 %v3291
    %3451 = vmatpush1.msra.mxu0 %v3290
    %3452 = vmatprep.subr.mxu0 %v3293
    %3453 = vmatpush1.msra.mxu0 %v3292
    %3454 = vmatprep.subr.mxu0 %v3295
    %3455 = vmatpush1.msra.mxu0 %v3294
    %3456 = vmatprep.subr.mxu0 %v3297
    %3457 = vmatpush1.msra.mxu0 %v3296
    %3458 = vmatprep.subr.mxu0 %v3299
    %3459 = vmatpush1.msra.mxu0 %v3298
    %3460 = vmatprep.subr.mxu0 %v3301
    %3461 = vmatpush1.msra.mxu0 %v3300
    %3462 = vmatprep.subr.mxu0 %v3303
    %3463 = vmatpush1.msra.mxu0 %v3302
    %3464 = vmatprep.subr.mxu0 %v3305
    %3465 = vmatpush1.msra.mxu0 %v3304
    %3466 = vmatprep.subr.mxu0 %v3307
    %3467 = vmatpush1.msra.mxu0 %v3306
    %3468 = vmatprep.subr.mxu0 %v3309
    %3469 = vmatpush1.msra.mxu0 %v3308
    %3470 = vmatprep.subr.mxu0 %v3311
    %3471 = vmatpush1.msra.mxu0 %v3310
    %3472 = vmatprep.subr.mxu0 %v3313
    %3473 = vmatpush1.msra.mxu0 %v3312
    %3474 = vmatprep.subr.mxu0 %v3315
    %3475 = vmatpush1.msra.mxu0 %v3314
    %3476 = vmatprep.subr.mxu0 %v3317
    %3477 = vmatpush1.msra.mxu0 %v3316
    %3478 = vmatprep.subr.mxu0 %v3319
    %3479 = vmatpush1.msra.mxu0 %v3318
    %3480 = vmatprep.subr.mxu0 %v3321
    %3481 = vmatpush1.msra.mxu0 %v3320
    %3482 = vmatprep.subr.mxu0 %v3323
    %3483 = vmatpush1.msra.mxu0 %v3322
    %3484 = vmatprep.subr.mxu0 %v3325
    %3485 = vmatpush1.msra.mxu0 %v3324
    %3486 = vmatprep.subr.mxu0 %v3327
    %3487 = vmatpush1.msra.mxu0 %v3326
    %3488 = vmatprep.subr.mxu0 %v3329
    %3489 = vmatpush1.msra.mxu0 %v3328
    %3490 = vmatprep.subr.mxu0 %v3331
    %3491 = vmatpush1.msra.mxu0 %v3330
    %3492 = vmatprep.subr.mxu0 %v3333
    %3493 = vmatpush1.msra.mxu0 %v3332
    %3494 = vmatprep.subr.mxu0 %v3335
    %3495 = vmatpush1.msra.mxu0 %v3334
    %3496 = vmatprep.subr.mxu0 %v3337
    %3497 = vmatpush1.msra.mxu0 %v3336
    %3498 = vmatprep.subr.mxu0 %v3339
    %3499 = vmatpush1.msra.mxu0 %v3338
    %3500 = vmatprep.subr.mxu0 %v3341
    %3501 = vmatpush1.msra.mxu0 %v3340
    %3502 = vmatprep.mubr.f32.mxu0 %v3274
    %3503 = vmatmul.mubr.f32.gmra.mrb[0].mxu0 %v3273
    %v3504 = vpop.f32.mrb[0].mxu0
    %v3505 = vadd.f32 %v210, %v3504
    %v3506 = vpop.f32.mrb[0].mxu0
    %v3507 = vadd.f32 %v214, %v3506
    %3508 = vdwg.mxu0
    %3509 = vmatprep.subr.mxu0 %v3343
    %3510 = vmatpush1.msra.mxu0 %v3342
    %3511 = vmatprep.subr.mxu0 %v3345
    %3512 = vmatpush1.msra.mxu0 %v3344
    %3513 = vmatprep.subr.mxu0 %v3347
    %3514 = vmatpush1.msra.mxu0 %v3346
    %3515 = vmatprep.subr.mxu0 %v3349
    %3516 = vmatpush1.msra.mxu0 %v3348
    %3517 = vmatprep.subr.mxu0 %v3351
    %3518 = vmatpush1.msra.mxu0 %v3350
    %3519 = vmatprep.subr.mxu0 %v3353
    %3520 = vmatpush1.msra.mxu0 %v3352
    %3521 = vmatprep.subr.mxu0 %v3355
    %3522 = vmatpush1.msra.mxu0 %v3354
    %3523 = vmatprep.subr.mxu0 %v3357
    %3524 = vmatpush1.msra.mxu0 %v3356
    %3525 = vmatprep.subr.mxu0 %v3359
    %3526 = vmatpush1.msra.mxu0 %v3358
    %3527 = vmatprep.subr.mxu0 %v3361
    %3528 = vmatpush1.msra.mxu0 %v3360
    %3529 = vmatprep.subr.mxu0 %v3363
    %3530 = vmatpush1.msra.mxu0 %v3362
    %3531 = vmatprep.subr.mxu0 %v3365
    %3532 = vmatpush1.msra.mxu0 %v3364
    %3533 = vmatprep.subr.mxu0 %v3367
    %3534 = vmatpush1.msra.mxu0 %v3366
    %3535 = vmatprep.subr.mxu0 %v3369
    %3536 = vmatpush1.msra.mxu0 %v3368
    %3537 = vmatprep.subr.mxu0 %v3371
    %3538 = vmatpush1.msra.mxu0 %v3370
    %3539 = vmatprep.subr.mxu0 %v3373
    %3540 = vmatpush1.msra.mxu0 %v3372
    %3541 = vmatprep.subr.mxu0 %v3375
    %3542 = vmatpush1.msra.mxu0 %v3374
    %3543 = vmatprep.subr.mxu0 %v3377
    %3544 = vmatpush1.msra.mxu0 %v3376
    %3545 = vmatprep.subr.mxu0 %v3379
    %3546 = vmatpush1.msra.mxu0 %v3378
    %3547 = vmatprep.subr.mxu0 %v3381
    %3548 = vmatpush1.msra.mxu0 %v3380
    %3549 = vmatprep.subr.mxu0 %v3383
    %3550 = vmatpush1.msra.mxu0 %v3382
    %3551 = vmatprep.subr.mxu0 %v3385
    %3552 = vmatpush1.msra.mxu0 %v3384
    %3553 = vmatprep.subr.mxu0 %v3387
    %3554 = vmatpush1.msra.mxu0 %v3386
    %3555 = vmatprep.subr.mxu0 %v3389
    %3556 = vmatpush1.msra.mxu0 %v3388
    %3557 = vmatprep.subr.mxu0 %v3391
    %3558 = vmatpush1.msra.mxu0 %v3390
    %3559 = vmatprep.subr.mxu0 %v3393
    %3560 = vmatpush1.msra.mxu0 %v3392
    %3561 = vmatprep.subr.mxu0 %v3395
    %3562 = vmatpush1.msra.mxu0 %v3394
    %3563 = vmatprep.subr.mxu0 %v3397
    %3564 = vmatpush1.msra.mxu0 %v3396
    %3565 = vmatprep.subr.mxu0 %v3399
    %3566 = vmatpush1.msra.mxu0 %v3398
    %3567 = vmatprep.subr.mxu0 %v3401
    %3568 = vmatpush1.msra.mxu0 %v3400
    %3569 = vmatprep.subr.mxu0 %v3403
    %3570 = vmatpush1.msra.mxu0 %v3402
    %3571 = vmatprep.subr.mxu0 %v3405
    %3572 = vmatpush1.msra.mxu0 %v3404
    %3573 = vmatprep.mubr.f32.mxu0 %v3276
    %3574 = vmatmul.mubr.f32.gmra.mrb[0].mxu0 %v3275
    %v3575 = vpop.f32.mrb[0].mxu0
    %v3576 = vadd.f32 %v3505, %v3575
    %v3577 = vpop.f32.mrb[0].mxu0
    %v3578 = vadd.f32 %v3507, %v3577
    %3579 = vdwg.mxu0
    %3580 = vmatprep.subr.mxu0 %v3407
    %3581 = vmatpush1.msra.mxu0 %v3406
    %3582 = vmatprep.subr.mxu0 %v3409
    %3583 = vmatpush1.msra.mxu0 %v3408
    %3584 = vmatprep.subr.mxu0 %v3411
    %3585 = vmatpush1.msra.mxu0 %v3410
    %3586 = vmatprep.subr.mxu0 %v3413
    %3587 = vmatpush1.msra.mxu0 %v3412
    %3588 = vmatprep.subr.mxu0 %v3415
    %3589 = vmatpush1.msra.mxu0 %v3414
    %3590 = vmatprep.subr.mxu0 %v3417
    %3591 = vmatpush1.msra.mxu0 %v3416
    %3592 = vmatprep.subr.mxu0 %v3419
    %3593 = vmatpush1.msra.mxu0 %v3418
    %3594 = vmatprep.subr.mxu0 %v3421
    %3595 = vmatpush1.msra.mxu0 %v3420
    %3596 = vmatprep.subr.mxu0 %v3423
    %3597 = vmatpush1.msra.mxu0 %v3422
    %3598 = vmatprep.subr.mxu0 %v3425
    %3599 = vmatpush1.msra.mxu0 %v3424
    %3600 = vmatprep.subr.mxu0 %v3427
    %3601 = vmatpush1.msra.mxu0 %v3426
    %3602 = vmatprep.subr.mxu0 %v3429
    %3603 = vmatpush1.msra.mxu0 %v3428
    %3604 = vmatprep.subr.mxu0 %v3431
    %3605 = vmatpush1.msra.mxu0 %v3430
    %3606 = vmatprep.subr.mxu0 %v3433
    %3607 = vmatpush1.msra.mxu0 %v3432
    %3608 = vmatprep.subr.mxu0 %v3435
    %3609 = vmatpush1.msra.mxu0 %v3434
    %3610 = vmatprep.subr.mxu0 %v3437
    %3611 = vmatpush1.msra.mxu0 %v3436
    %3612 = vmatprep.subr.mxu0 0.0
    %3613 = vmatpush1.msra.mxu0 0.0
    %3614 = vmatprep.subr.mxu0 0.0
    %3615 = vmatpush1.msra.mxu0 0.0
    %3616 = vmatprep.subr.mxu0 0.0
    %3617 = vmatpush1.msra.mxu0 0.0
    %3618 = vmatprep.subr.mxu0 0.0
    %3619 = vmatpush1.msra.mxu0 0.0
    %3620 = vmatprep.subr.mxu0 0.0
    %3621 = vmatpush1.msra.mxu0 0.0
    %3622 = vmatprep.subr.mxu0 0.0
    %3623 = vmatpush1.msra.mxu0 0.0
    %3624 = vmatprep.subr.mxu0 0.0
    %3625 = vmatpush1.msra.mxu0 0.0
    %3626 = vmatprep.subr.mxu0 0.0
    %3627 = vmatpush1.msra.mxu0 0.0
    %3628 = vmatprep.subr.mxu0 0.0
    %3629 = vmatpush1.msra.mxu0 0.0
    %3630 = vmatprep.subr.mxu0 0.0
    %3631 = vmatpush1.msra.mxu0 0.0
    %3632 = vmatprep.subr.mxu0 0.0
    %3633 = vmatpush1.msra.mxu0 0.0
    %3634 = vmatprep.subr.mxu0 0.0
    %3635 = vmatpush1.msra.mxu0 0.0
    %3636 = vmatprep.subr.mxu0 0.0
    %3637 = vmatpush1.msra.mxu0 0.0
    %3638 = vmatprep.subr.mxu0 0.0
    %3639 = vmatpush1.msra.mxu0 0.0
    %3640 = vmatprep.subr.mxu0 0.0
    %3641 = vmatpush1.msra.mxu0 0.0
    %3642 = vmatprep.subr.mxu0 0.0
    %3643 = vmatpush1.msra.mxu0 0.0
    %3644 = vmatprep.mubr.f32.mxu0 0.0
    %3645 = vmatmul.mubr.f32.gmra.mrb[0].mxu0 %v3277
    %v3646 = vpop.f32.mrb[0].mxu0
    %v3647 = vadd.f32 %v3576, %v3646
    %v3648 = vpop.f32.mrb[0].mxu0
    %v3649 = vadd.f32 %v3578, %v3648
    %3650 = vdwg.mxu0
    %v3651 = vmax.f32 %v3647, 0.0
    %v3652 = vmax.f32 %v3649, 0.0
    %3653 = vst [vmem:[#allocation2 + $0x80] sm:$0xff] %v3651
    %3654 = vst [vmem:[#allocation2 + $0x88] sm:$0xff] %v3652
    %v3655 = vld [vmem:[#allocation4 + $0x90] sm:$0xff]
    %v3656 = vld [vmem:[#allocation4 + $0x98] sm:$0xff]
    %v3657 = vld [vmem:[#allocation4 + $0xa0] sm:$0xff]
    %v3658 = vld [vmem:[#allocation4 + $0xa8] sm:$0xff]
    %v3659 = vld [vmem:[#allocation4 + $0xb0] sm:$0xff]
    %v3660 = vld [vmem:[#allocation9] sm:$0xff]
    %v3661 = vld [vmem:[#allocation9 + $0x8] sm:$0xff]
    %v3662 = vld [vmem:[#allocation9 + $0x10] sm:$0xff]
    %v3663 = vld [vmem:[#allocation9 + $0x18] sm:$0xff]
    %v3664 = vld [vmem:[#allocation9 + $0x20] sm:$0xff]
    %v3665 = vld [vmem:[#allocation9 + $0x28] sm:$0xff]
    %v3666 = vld [vmem:[#allocation9 + $0x30] sm:$0xff]
    %v3667 = vld [vmem:[#allocation9 + $0x38] sm:$0xff]
    %v3668 = vld [vmem:[#allocation9 + $0x40] sm:$0xff]
    %v3669 = vld [vmem:[#allocation9 + $0x48] sm:$0xff]
    %v3670 = vld [vmem:[#allocation9 + $0x50] sm:$0xff]
    %v3671 = vld [vmem:[#allocation9 + $0x58] sm:$0xff]
    %v3672 = vld [vmem:[#allocation9 + $0x60] sm:$0xff]
    %v3673 = vld [vmem:[#allocation9 + $0x68] sm:$0xff]
    %v3674 = vld [vmem:[#allocation9 + $0x70] sm:$0xff]
    %v3675 = vld [vmem:[#allocation9 + $0x78] sm:$0xff]
    %v3676 = vld [vmem:[#allocation9 + $0x80] sm:$0xff]
    %v3677 = vld [vmem:[#allocation9 + $0x88] sm:$0xff]
    %v3678 = vld [vmem:[#allocation9 + $0x90] sm:$0xff]
    %v3679 = vld [vmem:[#allocation9 + $0x98] sm:$0xff]
    %v3680 = vld [vmem:[#allocation9 + $0xa0] sm:$0xff]
    %v3681 = vld [vmem:[#allocation9 + $0xa8] sm:$0xff]
    %v3682 = vld [vmem:[#allocation9 + $0xb0] sm:$0xff]
    %v3683 = vld [vmem:[#allocation9 + $0xb8] sm:$0xff]
    %v3684 = vld [vmem:[#allocation9 + $0xc0] sm:$0xff]
    %v3685 = vld [vmem:[#allocation9 + $0xc8] sm:$0xff]
    %v3686 = vld [vmem:[#allocation9 + $0xd0] sm:$0xff]
    %v3687 = vld [vmem:[#allocation9 + $0xd8] sm:$0xff]
    %v3688 = vld [vmem:[#allocation9 + $0xe0] sm:$0xff]
    %v3689 = vld [vmem:[#allocation9 + $0xe8] sm:$0xff]
    %v3690 = vld [vmem:[#allocation9 + $0xf0] sm:$0xff]
    %v3691 = vld [vmem:[#allocation9 + $0xf8] sm:$0xff]
    %v3692 = vld [vmem:[#allocation9 + $0x100] sm:$0xff]
    %v3693 = vld [vmem:[#allocation9 + $0x108] sm:$0xff]
    %v3694 = vld [vmem:[#allocation9 + $0x110] sm:$0xff]
    %v3695 = vld [vmem:[#allocation9 + $0x118] sm:$0xff]
    %v3696 = vld [vmem:[#allocation9 + $0x120] sm:$0xff]
    %v3697 = vld [vmem:[#allocation9 + $0x128] sm:$0xff]
    %v3698 = vld [vmem:[#allocation9 + $0x130] sm:$0xff]
    %v3699 = vld [vmem:[#allocation9 + $0x138] sm:$0xff]
    %v3700 = vld [vmem:[#allocation9 + $0x140] sm:$0xff]
    %v3701 = vld [vmem:[#allocation9 + $0x148] sm:$0xff]
    %v3702 = vld [vmem:[#allocation9 + $0x150] sm:$0xff]
    %v3703 = vld [vmem:[#allocation9 + $0x158] sm:$0xff]
    %v3704 = vld [vmem:[#allocation9 + $0x160] sm:$0xff]
    %v3705 = vld [vmem:[#allocation9 + $0x168] sm:$0xff]
    %v3706 = vld [vmem:[#allocation9 + $0x170] sm:$0xff]
    %v3707 = vld [vmem:[#allocation9 + $0x178] sm:$0xff]
    %v3708 = vld [vmem:[#allocation9 + $0x180] sm:$0xff]
    %v3709 = vld [vmem:[#allocation9 + $0x188] sm:$0xff]
    %v3710 = vld [vmem:[#allocation9 + $0x190] sm:$0xff]
    %v3711 = vld [vmem:[#allocation9 + $0x198] sm:$0xff]
    %v3712 = vld [vmem:[#allocation9 + $0x1a0] sm:$0xff]
    %v3713 = vld [vmem:[#allocation9 + $0x1a8] sm:$0xff]
    %v3714 = vld [vmem:[#allocation9 + $0x1b0] sm:$0xff]
    %v3715 = vld [vmem:[#allocation9 + $0x1b8] sm:$0xff]
    %v3716 = vld [vmem:[#allocation9 + $0x1c0] sm:$0xff]
    %v3717 = vld [vmem:[#allocation9 + $0x1c8] sm:$0xff]
    %v3718 = vld [vmem:[#allocation9 + $0x1d0] sm:$0xff]
    %v3719 = vld [vmem:[#allocation9 + $0x1d8] sm:$0xff]
    %v3720 = vld [vmem:[#allocation9 + $0x1e0] sm:$0xff]
    %v3721 = vld [vmem:[#allocation9 + $0x1e8] sm:$0xff]
    %v3722 = vld [vmem:[#allocation9 + $0x1f0] sm:$0xff]
    %v3723 = vld [vmem:[#allocation9 + $0x1f8] sm:$0xff]
    %v3724 = vld [vmem:[#allocation9 + $0x200] sm:$0xff]
    %v3725 = vld [vmem:[#allocation9 + $0x208] sm:$0xff]
    %v3726 = vld [vmem:[#allocation9 + $0x210] sm:$0xff]
    %v3727 = vld [vmem:[#allocation9 + $0x218] sm:$0xff]
    %v3728 = vld [vmem:[#allocation9 + $0x220] sm:$0xff]
    %v3729 = vld [vmem:[#allocation9 + $0x228] sm:$0xff]
    %v3730 = vld [vmem:[#allocation9 + $0x230] sm:$0xff]
    %v3731 = vld [vmem:[#allocation9 + $0x238] sm:$0xff]
    %v3732 = vld [vmem:[#allocation9 + $0x240] sm:$0xff]
    %v3733 = vld [vmem:[#allocation9 + $0x248] sm:$0xff]
    %v3734 = vld [vmem:[#allocation9 + $0x250] sm:$0xff]
    %v3735 = vld [vmem:[#allocation9 + $0x258] sm:$0xff]
    %v3736 = vld [vmem:[#allocation9 + $0x260] sm:$0xff]
    %v3737 = vld [vmem:[#allocation9 + $0x268] sm:$0xff]
    %v3738 = vld [vmem:[#allocation9 + $0x270] sm:$0xff]
    %v3739 = vld [vmem:[#allocation9 + $0x278] sm:$0xff]
    %v3740 = vld [vmem:[#allocation9 + $0x280] sm:$0xff]
    %v3741 = vld [vmem:[#allocation9 + $0x288] sm:$0xff]
    %v3742 = vld [vmem:[#allocation9 + $0x290] sm:$0xff]
    %v3743 = vld [vmem:[#allocation9 + $0x298] sm:$0xff]
    %v3744 = vld [vmem:[#allocation9 + $0x2a0] sm:$0xff]
    %v3745 = vld [vmem:[#allocation9 + $0x2a8] sm:$0xff]
    %v3746 = vld [vmem:[#allocation9 + $0x2b0] sm:$0xff]
    %v3747 = vld [vmem:[#allocation9 + $0x2b8] sm:$0xff]
    %v3748 = vld [vmem:[#allocation9 + $0x2c0] sm:$0xff]
    %v3749 = vld [vmem:[#allocation9 + $0x2c8] sm:$0xff]
    %v3750 = vld [vmem:[#allocation9 + $0x2d0] sm:$0xff]
    %v3751 = vld [vmem:[#allocation9 + $0x2d8] sm:$0xff]
    %v3752 = vld [vmem:[#allocation9 + $0x2e0] sm:$0xff]
    %v3753 = vld [vmem:[#allocation9 + $0x2e8] sm:$0xff]
    %v3754 = vld [vmem:[#allocation9 + $0x2f0] sm:$0xff]
    %v3755 = vld [vmem:[#allocation9 + $0x2f8] sm:$0xff]
    %v3756 = vld [vmem:[#allocation9 + $0x300] sm:$0xff]
    %v3757 = vld [vmem:[#allocation9 + $0x308] sm:$0xff]
    %v3758 = vld [vmem:[#allocation9 + $0x310] sm:$0xff]
    %v3759 = vld [vmem:[#allocation9 + $0x318] sm:$0xff]
    %v3760 = vld [vmem:[#allocation9 + $0x320] sm:$0xff]
    %v3761 = vld [vmem:[#allocation9 + $0x328] sm:$0xff]
    %v3762 = vld [vmem:[#allocation9 + $0x330] sm:$0xff]
    %v3763 = vld [vmem:[#allocation9 + $0x338] sm:$0xff]
    %v3764 = vld [vmem:[#allocation9 + $0x340] sm:$0xff]
    %v3765 = vld [vmem:[#allocation9 + $0x348] sm:$0xff]
    %v3766 = vld [vmem:[#allocation9 + $0x350] sm:$0xff]
    %v3767 = vld [vmem:[#allocation9 + $0x358] sm:$0xff]
    %v3768 = vld [vmem:[#allocation9 + $0x360] sm:$0xff]
    %v3769 = vld [vmem:[#allocation9 + $0x368] sm:$0xff]
    %v3770 = vld [vmem:[#allocation9 + $0x370] sm:$0xff]
    %v3771 = vld [vmem:[#allocation9 + $0x378] sm:$0xff]
    %v3772 = vld [vmem:[#allocation9 + $0x380] sm:$0xff]
    %v3773 = vld [vmem:[#allocation9 + $0x388] sm:$0xff]
    %v3774 = vld [vmem:[#allocation9 + $0x390] sm:$0xff]
    %v3775 = vld [vmem:[#allocation9 + $0x398] sm:$0xff]
    %v3776 = vld [vmem:[#allocation9 + $0x3a0] sm:$0xff]
    %v3777 = vld [vmem:[#allocation9 + $0x3a8] sm:$0xff]
    %v3778 = vld [vmem:[#allocation9 + $0x3b0] sm:$0xff]
    %v3779 = vld [vmem:[#allocation9 + $0x3b8] sm:$0xff]
    %v3780 = vld [vmem:[#allocation9 + $0x3c0] sm:$0xff]
    %v3781 = vld [vmem:[#allocation9 + $0x3c8] sm:$0xff]
    %v3782 = vld [vmem:[#allocation9 + $0x3d0] sm:$0xff]
    %v3783 = vld [vmem:[#allocation9 + $0x3d8] sm:$0xff]
    %v3784 = vld [vmem:[#allocation9 + $0x3e0] sm:$0xff]
    %v3785 = vld [vmem:[#allocation9 + $0x3e8] sm:$0xff]
    %v3786 = vld [vmem:[#allocation9 + $0x3f0] sm:$0xff]
    %v3787 = vld [vmem:[#allocation9 + $0x3f8] sm:$0xff]
    %v3788 = vld [vmem:[#allocation9 + $0x400] sm:$0xff]
    %v3789 = vld [vmem:[#allocation9 + $0x408] sm:$0xff]
    %v3790 = vld [vmem:[#allocation9 + $0x410] sm:$0xff]
    %v3791 = vld [vmem:[#allocation9 + $0x418] sm:$0xff]
    %v3792 = vld [vmem:[#allocation9 + $0x420] sm:$0xff]
    %v3793 = vld [vmem:[#allocation9 + $0x428] sm:$0xff]
    %v3794 = vld [vmem:[#allocation9 + $0x430] sm:$0xff]
    %v3795 = vld [vmem:[#allocation9 + $0x438] sm:$0xff]
    %v3796 = vld [vmem:[#allocation9 + $0x440] sm:$0xff]
    %v3797 = vld [vmem:[#allocation9 + $0x448] sm:$0xff]
    %v3798 = vld [vmem:[#allocation9 + $0x450] sm:$0xff]
    %v3799 = vld [vmem:[#allocation9 + $0x458] sm:$0xff]
    %v3800 = vld [vmem:[#allocation9 + $0x460] sm:$0xff]
    %v3801 = vld [vmem:[#allocation9 + $0x468] sm:$0xff]
    %v3802 = vld [vmem:[#allocation9 + $0x470] sm:$0xff]
    %v3803 = vld [vmem:[#allocation9 + $0x478] sm:$0xff]
    %v3804 = vld [vmem:[#allocation9 + $0x480] sm:$0xff]
    %v3805 = vld [vmem:[#allocation9 + $0x488] sm:$0xff]
    %v3806 = vld [vmem:[#allocation9 + $0x490] sm:$0xff]
    %v3807 = vld [vmem:[#allocation9 + $0x498] sm:$0xff]
    %v3808 = vld [vmem:[#allocation9 + $0x4a0] sm:$0xff]
    %v3809 = vld [vmem:[#allocation9 + $0x4a8] sm:$0xff]
    %v3810 = vld [vmem:[#allocation9 + $0x4b0] sm:$0xff]
    %v3811 = vld [vmem:[#allocation9 + $0x4b8] sm:$0xff]
    %v3812 = vld [vmem:[#allocation9 + $0x4c0] sm:$0xff]
    %v3813 = vld [vmem:[#allocation9 + $0x4c8] sm:$0xff]
    %v3814 = vld [vmem:[#allocation9 + $0x4d0] sm:$0xff]
    %v3815 = vld [vmem:[#allocation9 + $0x4d8] sm:$0xff]
    %v3816 = vld [vmem:[#allocation9 + $0x4e0] sm:$0xff]
    %v3817 = vld [vmem:[#allocation9 + $0x4e8] sm:$0xff]
    %v3818 = vld [vmem:[#allocation9 + $0x4f0] sm:$0xff]
    %v3819 = vld [vmem:[#allocation9 + $0x4f8] sm:$0xff]
    %3820 = vmatprep.subr.mxu0 %v3661
    %3821 = vmatpush1.msra.mxu0 %v3660
    %3822 = vmatprep.subr.mxu0 %v3663
    %3823 = vmatpush1.msra.mxu0 %v3662
    %3824 = vmatprep.subr.mxu0 %v3665
    %3825 = vmatpush1.msra.mxu0 %v3664
    %3826 = vmatprep.subr.mxu0 %v3667
    %3827 = vmatpush1.msra.mxu0 %v3666
    %3828 = vmatprep.subr.mxu0 %v3669
    %3829 = vmatpush1.msra.mxu0 %v3668
    %3830 = vmatprep.subr.mxu0 %v3671
    %3831 = vmatpush1.msra.mxu0 %v3670
    %3832 = vmatprep.subr.mxu0 %v3673
    %3833 = vmatpush1.msra.mxu0 %v3672
    %3834 = vmatprep.subr.mxu0 %v3675
    %3835 = vmatpush1.msra.mxu0 %v3674
    %3836 = vmatprep.subr.mxu0 %v3677
    %3837 = vmatpush1.msra.mxu0 %v3676
    %3838 = vmatprep.subr.mxu0 %v3679
    %3839 = vmatpush1.msra.mxu0 %v3678
    %3840 = vmatprep.subr.mxu0 %v3681
    %3841 = vmatpush1.msra.mxu0 %v3680
    %3842 = vmatprep.subr.mxu0 %v3683
    %3843 = vmatpush1.msra.mxu0 %v3682
    %3844 = vmatprep.subr.mxu0 %v3685
    %3845 = vmatpush1.msra.mxu0 %v3684
    %3846 = vmatprep.subr.mxu0 %v3687
    %3847 = vmatpush1.msra.mxu0 %v3686
    %3848 = vmatprep.subr.mxu0 %v3689
    %3849 = vmatpush1.msra.mxu0 %v3688
    %3850 = vmatprep.subr.mxu0 %v3691
    %3851 = vmatpush1.msra.mxu0 %v3690
    %3852 = vmatprep.subr.mxu0 %v3693
    %3853 = vmatpush1.msra.mxu0 %v3692
    %3854 = vmatprep.subr.mxu0 %v3695
    %3855 = vmatpush1.msra.mxu0 %v3694
    %3856 = vmatprep.subr.mxu0 %v3697
    %3857 = vmatpush1.msra.mxu0 %v3696
    %3858 = vmatprep.subr.mxu0 %v3699
    %3859 = vmatpush1.msra.mxu0 %v3698
    %3860 = vmatprep.subr.mxu0 %v3701
    %3861 = vmatpush1.msra.mxu0 %v3700
    %3862 = vmatprep.subr.mxu0 %v3703
    %3863 = vmatpush1.msra.mxu0 %v3702
    %3864 = vmatprep.subr.mxu0 %v3705
    %3865 = vmatpush1.msra.mxu0 %v3704
    %3866 = vmatprep.subr.mxu0 %v3707
    %3867 = vmatpush1.msra.mxu0 %v3706
    %3868 = vmatprep.subr.mxu0 %v3709
    %3869 = vmatpush1.msra.mxu0 %v3708
    %3870 = vmatprep.subr.mxu0 %v3711
    %3871 = vmatpush1.msra.mxu0 %v3710
    %3872 = vmatprep.subr.mxu0 %v3713
    %3873 = vmatpush1.msra.mxu0 %v3712
    %3874 = vmatprep.subr.mxu0 %v3715
    %3875 = vmatpush1.msra.mxu0 %v3714
    %3876 = vmatprep.subr.mxu0 %v3717
    %3877 = vmatpush1.msra.mxu0 %v3716
    %3878 = vmatprep.subr.mxu0 %v3719
    %3879 = vmatpush1.msra.mxu0 %v3718
    %3880 = vmatprep.subr.mxu0 %v3721
    %3881 = vmatpush1.msra.mxu0 %v3720
    %3882 = vmatprep.subr.mxu0 %v3723
    %3883 = vmatpush1.msra.mxu0 %v3722
    %3884 = vmatprep.mubr.f32.mxu0 %v3656
    %3885 = vmatmul.mubr.f32.gmra.mrb[0].mxu0 %v3655
    %v3886 = vpop.f32.mrb[0].mxu0
    %v3887 = vadd.f32 %v210, %v3886
    %v3888 = vpop.f32.mrb[0].mxu0
    %v3889 = vadd.f32 %v214, %v3888
    %3890 = vdwg.mxu0
    %3891 = vmatprep.subr.mxu0 %v3725
    %3892 = vmatpush1.msra.mxu0 %v3724
    %3893 = vmatprep.subr.mxu0 %v3727
    %3894 = vmatpush1.msra.mxu0 %v3726
    %3895 = vmatprep.subr.mxu0 %v3729
    %3896 = vmatpush1.msra.mxu0 %v3728
    %3897 = vmatprep.subr.mxu0 %v3731
    %3898 = vmatpush1.msra.mxu0 %v3730
    %3899 = vmatprep.subr.mxu0 %v3733
    %3900 = vmatpush1.msra.mxu0 %v3732
    %3901 = vmatprep.subr.mxu0 %v3735
    %3902 = vmatpush1.msra.mxu0 %v3734
    %3903 = vmatprep.subr.mxu0 %v3737
    %3904 = vmatpush1.msra.mxu0 %v3736
    %3905 = vmatprep.subr.mxu0 %v3739
    %3906 = vmatpush1.msra.mxu0 %v3738
    %3907 = vmatprep.subr.mxu0 %v3741
    %3908 = vmatpush1.msra.mxu0 %v3740
    %3909 = vmatprep.subr.mxu0 %v3743
    %3910 = vmatpush1.msra.mxu0 %v3742
    %3911 = vmatprep.subr.mxu0 %v3745
    %3912 = vmatpush1.msra.mxu0 %v3744
    %3913 = vmatprep.subr.mxu0 %v3747
    %3914 = vmatpush1.msra.mxu0 %v3746
    %3915 = vmatprep.subr.mxu0 %v3749
    %3916 = vmatpush1.msra.mxu0 %v3748
    %3917 = vmatprep.subr.mxu0 %v3751
    %3918 = vmatpush1.msra.mxu0 %v3750
    %3919 = vmatprep.subr.mxu0 %v3753
    %3920 = vmatpush1.msra.mxu0 %v3752
    %3921 = vmatprep.subr.mxu0 %v3755
    %3922 = vmatpush1.msra.mxu0 %v3754
    %3923 = vmatprep.subr.mxu0 %v3757
    %3924 = vmatpush1.msra.mxu0 %v3756
    %3925 = vmatprep.subr.mxu0 %v3759
    %3926 = vmatpush1.msra.mxu0 %v3758
    %3927 = vmatprep.subr.mxu0 %v3761
    %3928 = vmatpush1.msra.mxu0 %v3760
    %3929 = vmatprep.subr.mxu0 %v3763
    %3930 = vmatpush1.msra.mxu0 %v3762
    %3931 = vmatprep.subr.mxu0 %v3765
    %3932 = vmatpush1.msra.mxu0 %v3764
    %3933 = vmatprep.subr.mxu0 %v3767
    %3934 = vmatpush1.msra.mxu0 %v3766
    %3935 = vmatprep.subr.mxu0 %v3769
    %3936 = vmatpush1.msra.mxu0 %v3768
    %3937 = vmatprep.subr.mxu0 %v3771
    %3938 = vmatpush1.msra.mxu0 %v3770
    %3939 = vmatprep.subr.mxu0 %v3773
    %3940 = vmatpush1.msra.mxu0 %v3772
    %3941 = vmatprep.subr.mxu0 %v3775
    %3942 = vmatpush1.msra.mxu0 %v3774
    %3943 = vmatprep.subr.mxu0 %v3777
    %3944 = vmatpush1.msra.mxu0 %v3776
    %3945 = vmatprep.subr.mxu0 %v3779
    %3946 = vmatpush1.msra.mxu0 %v3778
    %3947 = vmatprep.subr.mxu0 %v3781
    %3948 = vmatpush1.msra.mxu0 %v3780
    %3949 = vmatprep.subr.mxu0 %v3783
    %3950 = vmatpush1.msra.mxu0 %v3782
    %3951 = vmatprep.subr.mxu0 %v3785
    %3952 = vmatpush1.msra.mxu0 %v3784
    %3953 = vmatprep.subr.mxu0 %v3787
    %3954 = vmatpush1.msra.mxu0 %v3786
    %3955 = vmatprep.mubr.f32.mxu0 %v3658
    %3956 = vmatmul.mubr.f32.gmra.mrb[0].mxu0 %v3657
    %v3957 = vpop.f32.mrb[0].mxu0
    %v3958 = vadd.f32 %v3887, %v3957
    %v3959 = vpop.f32.mrb[0].mxu0
    %v3960 = vadd.f32 %v3889, %v3959
    %3961 = vdwg.mxu0
    %3962 = vmatprep.subr.mxu0 %v3789
    %3963 = vmatpush1.msra.mxu0 %v3788
    %3964 = vmatprep.subr.mxu0 %v3791
    %3965 = vmatpush1.msra.mxu0 %v3790
    %3966 = vmatprep.subr.mxu0 %v3793
    %3967 = vmatpush1.msra.mxu0 %v3792
    %3968 = vmatprep.subr.mxu0 %v3795
    %3969 = vmatpush1.msra.mxu0 %v3794
    %3970 = vmatprep.subr.mxu0 %v3797
    %3971 = vmatpush1.msra.mxu0 %v3796
    %3972 = vmatprep.subr.mxu0 %v3799
    %3973 = vmatpush1.msra.mxu0 %v3798
    %3974 = vmatprep.subr.mxu0 %v3801
    %3975 = vmatpush1.msra.mxu0 %v3800
    %3976 = vmatprep.subr.mxu0 %v3803
    %3977 = vmatpush1.msra.mxu0 %v3802
    %3978 = vmatprep.subr.mxu0 %v3805
    %3979 = vmatpush1.msra.mxu0 %v3804
    %3980 = vmatprep.subr.mxu0 %v3807
    %3981 = vmatpush1.msra.mxu0 %v3806
    %3982 = vmatprep.subr.mxu0 %v3809
    %3983 = vmatpush1.msra.mxu0 %v3808
    %3984 = vmatprep.subr.mxu0 %v3811
    %3985 = vmatpush1.msra.mxu0 %v3810
    %3986 = vmatprep.subr.mxu0 %v3813
    %3987 = vmatpush1.msra.mxu0 %v3812
    %3988 = vmatprep.subr.mxu0 %v3815
    %3989 = vmatpush1.msra.mxu0 %v3814
    %3990 = vmatprep.subr.mxu0 %v3817
    %3991 = vmatpush1.msra.mxu0 %v3816
    %3992 = vmatprep.subr.mxu0 %v3819
    %3993 = vmatpush1.msra.mxu0 %v3818
    %3994 = vmatprep.subr.mxu0 0.0
    %3995 = vmatpush1.msra.mxu0 0.0
    %3996 = vmatprep.subr.mxu0 0.0
    %3997 = vmatpush1.msra.mxu0 0.0
    %3998 = vmatprep.subr.mxu0 0.0
    %3999 = vmatpush1.msra.mxu0 0.0
    %4000 = vmatprep.subr.mxu0 0.0
    %4001 = vmatpush1.msra.mxu0 0.0
    %4002 = vmatprep.subr.mxu0 0.0
    %4003 = vmatpush1.msra.mxu0 0.0
    %4004 = vmatprep.subr.mxu0 0.0
    %4005 = vmatpush1.msra.mxu0 0.0
    %4006 = vmatprep.subr.mxu0 0.0
    %4007 = vmatpush1.msra.mxu0 0.0
    %4008 = vmatprep.subr.mxu0 0.0
    %4009 = vmatpush1.msra.mxu0 0.0
    %4010 = vmatprep.subr.mxu0 0.0
    %4011 = vmatpush1.msra.mxu0 0.0
    %4012 = vmatprep.subr.mxu0 0.0
    %4013 = vmatpush1.msra.mxu0 0.0
    %4014 = vmatprep.subr.mxu0 0.0
    %4015 = vmatpush1.msra.mxu0 0.0
    %4016 = vmatprep.subr.mxu0 0.0
    %4017 = vmatpush1.msra.mxu0 0.0
    %4018 = vmatprep.subr.mxu0 0.0
    %4019 = vmatpush1.msra.mxu0 0.0
    %4020 = vmatprep.subr.mxu0 0.0
    %4021 = vmatpush1.msra.mxu0 0.0
    %4022 = vmatprep.subr.mxu0 0.0
    %4023 = vmatpush1.msra.mxu0 0.0
    %4024 = vmatprep.subr.mxu0 0.0
    %4025 = vmatpush1.msra.mxu0 0.0
    %4026 = vmatprep.mubr.f32.mxu0 0.0
    %4027 = vmatmul.mubr.f32.gmra.mrb[0].mxu0 %v3659
    %v4028 = vpop.f32.mrb[0].mxu0
    %v4029 = vadd.f32 %v3958, %v4028
    %v4030 = vpop.f32.mrb[0].mxu0
    %v4031 = vadd.f32 %v3960, %v4030
    %4032 = vdwg.mxu0
    %v4033 = vmax.f32 %v4029, 0.0
    %v4034 = vmax.f32 %v4031, 0.0
    %4035 = vst [vmem:[#allocation2 + $0x90] sm:$0xff] %v4033
    %4036 = vst [vmem:[#allocation2 + $0x98] sm:$0xff] %v4034
    %v4037 = vld [vmem:[#allocation4 + $0xa0] sm:$0xff]
    %v4038 = vld [vmem:[#allocation4 + $0xa8] sm:$0xff]
    %v4039 = vld [vmem:[#allocation4 + $0xb0] sm:$0xff]
    %v4040 = vld [vmem:[#allocation4 + $0xb8] sm:$0xff]
    %v4041 = vld [vmem:[#allocation4 + $0xc0] sm:$0xff]
    %v4042 = vld [vmem:[#allocation9] sm:$0xff]
    %v4043 = vld [vmem:[#allocation9 + $0x8] sm:$0xff]
    %v4044 = vld [vmem:[#allocation9 + $0x10] sm:$0xff]
    %v4045 = vld [vmem:[#allocation9 + $0x18] sm:$0xff]
    %v4046 = vld [vmem:[#allocation9 + $0x20] sm:$0xff]
    %v4047 = vld [vmem:[#allocation9 + $0x28] sm:$0xff]
    %v4048 = vld [vmem:[#allocation9 + $0x30] sm:$0xff]
    %v4049 = vld [vmem:[#allocation9 + $0x38] sm:$0xff]
    %v4050 = vld [vmem:[#allocation9 + $0x40] sm:$0xff]
    %v4051 = vld [vmem:[#allocation9 + $0x48] sm:$0xff]
    %v4052 = vld [vmem:[#allocation9 + $0x50] sm:$0xff]
    %v4053 = vld [vmem:[#allocation9 + $0x58] sm:$0xff]
    %v4054 = vld [vmem:[#allocation9 + $0x60] sm:$0xff]
    %v4055 = vld [vmem:[#allocation9 + $0x68] sm:$0xff]
    %v4056 = vld [vmem:[#allocation9 + $0x70] sm:$0xff]
    %v4057 = vld [vmem:[#allocation9 + $0x78] sm:$0xff]
    %v4058 = vld [vmem:[#allocation9 + $0x80] sm:$0xff]
    %v4059 = vld [vmem:[#allocation9 + $0x88] sm:$0xff]
    %v4060 = vld [vmem:[#allocation9 + $0x90] sm:$0xff]
    %v4061 = vld [vmem:[#allocation9 + $0x98] sm:$0xff]
    %v4062 = vld [vmem:[#allocation9 + $0xa0] sm:$0xff]
    %v4063 = vld [vmem:[#allocation9 + $0xa8] sm:$0xff]
    %v4064 = vld [vmem:[#allocation9 + $0xb0] sm:$0xff]
    %v4065 = vld [vmem:[#allocation9 + $0xb8] sm:$0xff]
    %v4066 = vld [vmem:[#allocation9 + $0xc0] sm:$0xff]
    %v4067 = vld [vmem:[#allocation9 + $0xc8] sm:$0xff]
    %v4068 = vld [vmem:[#allocation9 + $0xd0] sm:$0xff]
    %v4069 = vld [vmem:[#allocation9 + $0xd8] sm:$0xff]
    %v4070 = vld [vmem:[#allocation9 + $0xe0] sm:$0xff]
    %v4071 = vld [vmem:[#allocation9 + $0xe8] sm:$0xff]
    %v4072 = vld [vmem:[#allocation9 + $0xf0] sm:$0xff]
    %v4073 = vld [vmem:[#allocation9 + $0xf8] sm:$0xff]
    %v4074 = vld [vmem:[#allocation9 + $0x100] sm:$0xff]
    %v4075 = vld [vmem:[#allocation9 + $0x108] sm:$0xff]
    %v4076 = vld [vmem:[#allocation9 + $0x110] sm:$0xff]
    %v4077 = vld [vmem:[#allocation9 + $0x118] sm:$0xff]
    %v4078 = vld [vmem:[#allocation9 + $0x120] sm:$0xff]
    %v4079 = vld [vmem:[#allocation9 + $0x128] sm:$0xff]
    %v4080 = vld [vmem:[#allocation9 + $0x130] sm:$0xff]
    %v4081 = vld [vmem:[#allocation9 + $0x138] sm:$0xff]
    %v4082 = vld [vmem:[#allocation9 + $0x140] sm:$0xff]
    %v4083 = vld [vmem:[#allocation9 + $0x148] sm:$0xff]
    %v4084 = vld [vmem:[#allocation9 + $0x150] sm:$0xff]
    %v4085 = vld [vmem:[#allocation9 + $0x158] sm:$0xff]
    %v4086 = vld [vmem:[#allocation9 + $0x160] sm:$0xff]
    %v4087 = vld [vmem:[#allocation9 + $0x168] sm:$0xff]
    %v4088 = vld [vmem:[#allocation9 + $0x170] sm:$0xff]
    %v4089 = vld [vmem:[#allocation9 + $0x178] sm:$0xff]
    %v4090 = vld [vmem:[#allocation9 + $0x180] sm:$0xff]
    %v4091 = vld [vmem:[#allocation9 + $0x188] sm:$0xff]
    %v4092 = vld [vmem:[#allocation9 + $0x190] sm:$0xff]
    %v4093 = vld [vmem:[#allocation9 + $0x198] sm:$0xff]
    %v4094 = vld [vmem:[#allocation9 + $0x1a0] sm:$0xff]
    %v4095 = vld [vmem:[#allocation9 + $0x1a8] sm:$0xff]
    %v4096 = vld [vmem:[#allocation9 + $0x1b0] sm:$0xff]
    %v4097 = vld [vmem:[#allocation9 + $0x1b8] sm:$0xff]
    %v4098 = vld [vmem:[#allocation9 + $0x1c0] sm:$0xff]
    %v4099 = vld [vmem:[#allocation9 + $0x1c8] sm:$0xff]
    %v4100 = vld [vmem:[#allocation9 + $0x1d0] sm:$0xff]
    %v4101 = vld [vmem:[#allocation9 + $0x1d8] sm:$0xff]
    %v4102 = vld [vmem:[#allocation9 + $0x1e0] sm:$0xff]
    %v4103 = vld [vmem:[#allocation9 + $0x1e8] sm:$0xff]
    %v4104 = vld [vmem:[#allocation9 + $0x1f0] sm:$0xff]
    %v4105 = vld [vmem:[#allocation9 + $0x1f8] sm:$0xff]
    %v4106 = vld [vmem:[#allocation9 + $0x200] sm:$0xff]
    %v4107 = vld [vmem:[#allocation9 + $0x208] sm:$0xff]
    %v4108 = vld [vmem:[#allocation9 + $0x210] sm:$0xff]
    %v4109 = vld [vmem:[#allocation9 + $0x218] sm:$0xff]
    %v4110 = vld [vmem:[#allocation9 + $0x220] sm:$0xff]
    %v4111 = vld [vmem:[#allocation9 + $0x228] sm:$0xff]
    %v4112 = vld [vmem:[#allocation9 + $0x230] sm:$0xff]
    %v4113 = vld [vmem:[#allocation9 + $0x238] sm:$0xff]
    %v4114 = vld [vmem:[#allocation9 + $0x240] sm:$0xff]
    %v4115 = vld [vmem:[#allocation9 + $0x248] sm:$0xff]
    %v4116 = vld [vmem:[#allocation9 + $0x250] sm:$0xff]
    %v4117 = vld [vmem:[#allocation9 + $0x258] sm:$0xff]
    %v4118 = vld [vmem:[#allocation9 + $0x260] sm:$0xff]
    %v4119 = vld [vmem:[#allocation9 + $0x268] sm:$0xff]
    %v4120 = vld [vmem:[#allocation9 + $0x270] sm:$0xff]
    %v4121 = vld [vmem:[#allocation9 + $0x278] sm:$0xff]
    %v4122 = vld [vmem:[#allocation9 + $0x280] sm:$0xff]
    %v4123 = vld [vmem:[#allocation9 + $0x288] sm:$0xff]
    %v4124 = vld [vmem:[#allocation9 + $0x290] sm:$0xff]
    %v4125 = vld [vmem:[#allocation9 + $0x298] sm:$0xff]
    %v4126 = vld [vmem:[#allocation9 + $0x2a0] sm:$0xff]
    %v4127 = vld [vmem:[#allocation9 + $0x2a8] sm:$0xff]
    %v4128 = vld [vmem:[#allocation9 + $0x2b0] sm:$0xff]
    %v4129 = vld [vmem:[#allocation9 + $0x2b8] sm:$0xff]
    %v4130 = vld [vmem:[#allocation9 + $0x2c0] sm:$0xff]
    %v4131 = vld [vmem:[#allocation9 + $0x2c8] sm:$0xff]
    %v4132 = vld [vmem:[#allocation9 + $0x2d0] sm:$0xff]
    %v4133 = vld [vmem:[#allocation9 + $0x2d8] sm:$0xff]
    %v4134 = vld [vmem:[#allocation9 + $0x2e0] sm:$0xff]
    %v4135 = vld [vmem:[#allocation9 + $0x2e8] sm:$0xff]
    %v4136 = vld [vmem:[#allocation9 + $0x2f0] sm:$0xff]
    %v4137 = vld [vmem:[#allocation9 + $0x2f8] sm:$0xff]
    %v4138 = vld [vmem:[#allocation9 + $0x300] sm:$0xff]
    %v4139 = vld [vmem:[#allocation9 + $0x308] sm:$0xff]
    %v4140 = vld [vmem:[#allocation9 + $0x310] sm:$0xff]
    %v4141 = vld [vmem:[#allocation9 + $0x318] sm:$0xff]
    %v4142 = vld [vmem:[#allocation9 + $0x320] sm:$0xff]
    %v4143 = vld [vmem:[#allocation9 + $0x328] sm:$0xff]
    %v4144 = vld [vmem:[#allocation9 + $0x330] sm:$0xff]
    %v4145 = vld [vmem:[#allocation9 + $0x338] sm:$0xff]
    %v4146 = vld [vmem:[#allocation9 + $0x340] sm:$0xff]
    %v4147 = vld [vmem:[#allocation9 + $0x348] sm:$0xff]
    %v4148 = vld [vmem:[#allocation9 + $0x350] sm:$0xff]
    %v4149 = vld [vmem:[#allocation9 + $0x358] sm:$0xff]
    %v4150 = vld [vmem:[#allocation9 + $0x360] sm:$0xff]
    %v4151 = vld [vmem:[#allocation9 + $0x368] sm:$0xff]
    %v4152 = vld [vmem:[#allocation9 + $0x370] sm:$0xff]
    %v4153 = vld [vmem:[#allocation9 + $0x378] sm:$0xff]
    %v4154 = vld [vmem:[#allocation9 + $0x380] sm:$0xff]
    %v4155 = vld [vmem:[#allocation9 + $0x388] sm:$0xff]
    %v4156 = vld [vmem:[#allocation9 + $0x390] sm:$0xff]
    %v4157 = vld [vmem:[#allocation9 + $0x398] sm:$0xff]
    %v4158 = vld [vmem:[#allocation9 + $0x3a0] sm:$0xff]
    %v4159 = vld [vmem:[#allocation9 + $0x3a8] sm:$0xff]
    %v4160 = vld [vmem:[#allocation9 + $0x3b0] sm:$0xff]
    %v4161 = vld [vmem:[#allocation9 + $0x3b8] sm:$0xff]
    %v4162 = vld [vmem:[#allocation9 + $0x3c0] sm:$0xff]
    %v4163 = vld [vmem:[#allocation9 + $0x3c8] sm:$0xff]
    %v4164 = vld [vmem:[#allocation9 + $0x3d0] sm:$0xff]
    %v4165 = vld [vmem:[#allocation9 + $0x3d8] sm:$0xff]
    %v4166 = vld [vmem:[#allocation9 + $0x3e0] sm:$0xff]
    %v4167 = vld [vmem:[#allocation9 + $0x3e8] sm:$0xff]
    %v4168 = vld [vmem:[#allocation9 + $0x3f0] sm:$0xff]
    %v4169 = vld [vmem:[#allocation9 + $0x3f8] sm:$0xff]
    %v4170 = vld [vmem:[#allocation9 + $0x400] sm:$0xff]
    %v4171 = vld [vmem:[#allocation9 + $0x408] sm:$0xff]
    %v4172 = vld [vmem:[#allocation9 + $0x410] sm:$0xff]
    %v4173 = vld [vmem:[#allocation9 + $0x418] sm:$0xff]
    %v4174 = vld [vmem:[#allocation9 + $0x420] sm:$0xff]
    %v4175 = vld [vmem:[#allocation9 + $0x428] sm:$0xff]
    %v4176 = vld [vmem:[#allocation9 + $0x430] sm:$0xff]
    %v4177 = vld [vmem:[#allocation9 + $0x438] sm:$0xff]
    %v4178 = vld [vmem:[#allocation9 + $0x440] sm:$0xff]
    %v4179 = vld [vmem:[#allocation9 + $0x448] sm:$0xff]
    %v4180 = vld [vmem:[#allocation9 + $0x450] sm:$0xff]
    %v4181 = vld [vmem:[#allocation9 + $0x458] sm:$0xff]
    %v4182 = vld [vmem:[#allocation9 + $0x460] sm:$0xff]
    %v4183 = vld [vmem:[#allocation9 + $0x468] sm:$0xff]
    %v4184 = vld [vmem:[#allocation9 + $0x470] sm:$0xff]
    %v4185 = vld [vmem:[#allocation9 + $0x478] sm:$0xff]
    %v4186 = vld [vmem:[#allocation9 + $0x480] sm:$0xff]
    %v4187 = vld [vmem:[#allocation9 + $0x488] sm:$0xff]
    %v4188 = vld [vmem:[#allocation9 + $0x490] sm:$0xff]
    %v4189 = vld [vmem:[#allocation9 + $0x498] sm:$0xff]
    %v4190 = vld [vmem:[#allocation9 + $0x4a0] sm:$0xff]
    %v4191 = vld [vmem:[#allocation9 + $0x4a8] sm:$0xff]
    %v4192 = vld [vmem:[#allocation9 + $0x4b0] sm:$0xff]
    %v4193 = vld [vmem:[#allocation9 + $0x4b8] sm:$0xff]
    %v4194 = vld [vmem:[#allocation9 + $0x4c0] sm:$0xff]
    %v4195 = vld [vmem:[#allocation9 + $0x4c8] sm:$0xff]
    %v4196 = vld [vmem:[#allocation9 + $0x4d0] sm:$0xff]
    %v4197 = vld [vmem:[#allocation9 + $0x4d8] sm:$0xff]
    %v4198 = vld [vmem:[#allocation9 + $0x4e0] sm:$0xff]
    %v4199 = vld [vmem:[#allocation9 + $0x4e8] sm:$0xff]
    %v4200 = vld [vmem:[#allocation9 + $0x4f0] sm:$0xff]
    %v4201 = vld [vmem:[#allocation9 + $0x4f8] sm:$0xff]
    %4202 = vmatprep.subr.mxu0 %v4043
    %4203 = vmatpush1.msra.mxu0 %v4042
    %4204 = vmatprep.subr.mxu0 %v4045
    %4205 = vmatpush1.msra.mxu0 %v4044
    %4206 = vmatprep.subr.mxu0 %v4047
    %4207 = vmatpush1.msra.mxu0 %v4046
    %4208 = vmatprep.subr.mxu0 %v4049
    %4209 = vmatpush1.msra.mxu0 %v4048
    %4210 = vmatprep.subr.mxu0 %v4051
    %4211 = vmatpush1.msra.mxu0 %v4050
    %4212 = vmatprep.subr.mxu0 %v4053
    %4213 = vmatpush1.msra.mxu0 %v4052
    %4214 = vmatprep.subr.mxu0 %v4055
    %4215 = vmatpush1.msra.mxu0 %v4054
    %4216 = vmatprep.subr.mxu0 %v4057
    %4217 = vmatpush1.msra.mxu0 %v4056
    %4218 = vmatprep.subr.mxu0 %v4059
    %4219 = vmatpush1.msra.mxu0 %v4058
    %4220 = vmatprep.subr.mxu0 %v4061
    %4221 = vmatpush1.msra.mxu0 %v4060
    %4222 = vmatprep.subr.mxu0 %v4063
    %4223 = vmatpush1.msra.mxu0 %v4062
    %4224 = vmatprep.subr.mxu0 %v4065
    %4225 = vmatpush1.msra.mxu0 %v4064
    %4226 = vmatprep.subr.mxu0 %v4067
    %4227 = vmatpush1.msra.mxu0 %v4066
    %4228 = vmatprep.subr.mxu0 %v4069
    %4229 = vmatpush1.msra.mxu0 %v4068
    %4230 = vmatprep.subr.mxu0 %v4071
    %4231 = vmatpush1.msra.mxu0 %v4070
    %4232 = vmatprep.subr.mxu0 %v4073
    %4233 = vmatpush1.msra.mxu0 %v4072
    %4234 = vmatprep.subr.mxu0 %v4075
    %4235 = vmatpush1.msra.mxu0 %v4074
    %4236 = vmatprep.subr.mxu0 %v4077
    %4237 = vmatpush1.msra.mxu0 %v4076
    %4238 = vmatprep.subr.mxu0 %v4079
    %4239 = vmatpush1.msra.mxu0 %v4078
    %4240 = vmatprep.subr.mxu0 %v4081
    %4241 = vmatpush1.msra.mxu0 %v4080
    %4242 = vmatprep.subr.mxu0 %v4083
    %4243 = vmatpush1.msra.mxu0 %v4082
    %4244 = vmatprep.subr.mxu0 %v4085
    %4245 = vmatpush1.msra.mxu0 %v4084
    %4246 = vmatprep.subr.mxu0 %v4087
    %4247 = vmatpush1.msra.mxu0 %v4086
    %4248 = vmatprep.subr.mxu0 %v4089
    %4249 = vmatpush1.msra.mxu0 %v4088
    %4250 = vmatprep.subr.mxu0 %v4091
    %4251 = vmatpush1.msra.mxu0 %v4090
    %4252 = vmatprep.subr.mxu0 %v4093
    %4253 = vmatpush1.msra.mxu0 %v4092
    %4254 = vmatprep.subr.mxu0 %v4095
    %4255 = vmatpush1.msra.mxu0 %v4094
    %4256 = vmatprep.subr.mxu0 %v4097
    %4257 = vmatpush1.msra.mxu0 %v4096
    %4258 = vmatprep.subr.mxu0 %v4099
    %4259 = vmatpush1.msra.mxu0 %v4098
    %4260 = vmatprep.subr.mxu0 %v4101
    %4261 = vmatpush1.msra.mxu0 %v4100
    %4262 = vmatprep.subr.mxu0 %v4103
    %4263 = vmatpush1.msra.mxu0 %v4102
    %4264 = vmatprep.subr.mxu0 %v4105
    %4265 = vmatpush1.msra.mxu0 %v4104
    %4266 = vmatprep.mubr.f32.mxu0 %v4038
    %4267 = vmatmul.mubr.f32.gmra.mrb[0].mxu0 %v4037
    %v4268 = vpop.f32.mrb[0].mxu0
    %v4269 = vadd.f32 %v210, %v4268
    %v4270 = vpop.f32.mrb[0].mxu0
    %v4271 = vadd.f32 %v214, %v4270
    %4272 = vdwg.mxu0
    %4273 = vmatprep.subr.mxu0 %v4107
    %4274 = vmatpush1.msra.mxu0 %v4106
    %4275 = vmatprep.subr.mxu0 %v4109
    %4276 = vmatpush1.msra.mxu0 %v4108
    %4277 = vmatprep.subr.mxu0 %v4111
    %4278 = vmatpush1.msra.mxu0 %v4110
    %4279 = vmatprep.subr.mxu0 %v4113
    %4280 = vmatpush1.msra.mxu0 %v4112
    %4281 = vmatprep.subr.mxu0 %v4115
    %4282 = vmatpush1.msra.mxu0 %v4114
    %4283 = vmatprep.subr.mxu0 %v4117
    %4284 = vmatpush1.msra.mxu0 %v4116
    %4285 = vmatprep.subr.mxu0 %v4119
    %4286 = vmatpush1.msra.mxu0 %v4118
    %4287 = vmatprep.subr.mxu0 %v4121
    %4288 = vmatpush1.msra.mxu0 %v4120
    %4289 = vmatprep.subr.mxu0 %v4123
    %4290 = vmatpush1.msra.mxu0 %v4122
    %4291 = vmatprep.subr.mxu0 %v4125
    %4292 = vmatpush1.msra.mxu0 %v4124
    %4293 = vmatprep.subr.mxu0 %v4127
    %4294 = vmatpush1.msra.mxu0 %v4126
    %4295 = vmatprep.subr.mxu0 %v4129
    %4296 = vmatpush1.msra.mxu0 %v4128
    %4297 = vmatprep.subr.mxu0 %v4131
    %4298 = vmatpush1.msra.mxu0 %v4130
    %4299 = vmatprep.subr.mxu0 %v4133
    %4300 = vmatpush1.msra.mxu0 %v4132
    %4301 = vmatprep.subr.mxu0 %v4135
    %4302 = vmatpush1.msra.mxu0 %v4134
    %4303 = vmatprep.subr.mxu0 %v4137
    %4304 = vmatpush1.msra.mxu0 %v4136
    %4305 = vmatprep.subr.mxu0 %v4139
    %4306 = vmatpush1.msra.mxu0 %v4138
    %4307 = vmatprep.subr.mxu0 %v4141
    %4308 = vmatpush1.msra.mxu0 %v4140
    %4309 = vmatprep.subr.mxu0 %v4143
    %4310 = vmatpush1.msra.mxu0 %v4142
    %4311 = vmatprep.subr.mxu0 %v4145
    %4312 = vmatpush1.msra.mxu0 %v4144
    %4313 = vmatprep.subr.mxu0 %v4147
    %4314 = vmatpush1.msra.mxu0 %v4146
    %4315 = vmatprep.subr.mxu0 %v4149
    %4316 = vmatpush1.msra.mxu0 %v4148
    %4317 = vmatprep.subr.mxu0 %v4151
    %4318 = vmatpush1.msra.mxu0 %v4150
    %4319 = vmatprep.subr.mxu0 %v4153
    %4320 = vmatpush1.msra.mxu0 %v4152
    %4321 = vmatprep.subr.mxu0 %v4155
    %4322 = vmatpush1.msra.mxu0 %v4154
    %4323 = vmatprep.subr.mxu0 %v4157
    %4324 = vmatpush1.msra.mxu0 %v4156
    %4325 = vmatprep.subr.mxu0 %v4159
    %4326 = vmatpush1.msra.mxu0 %v4158
    %4327 = vmatprep.subr.mxu0 %v4161
    %4328 = vmatpush1.msra.mxu0 %v4160
    %4329 = vmatprep.subr.mxu0 %v4163
    %4330 = vmatpush1.msra.mxu0 %v4162
    %4331 = vmatprep.subr.mxu0 %v4165
    %4332 = vmatpush1.msra.mxu0 %v4164
    %4333 = vmatprep.subr.mxu0 %v4167
    %4334 = vmatpush1.msra.mxu0 %v4166
    %4335 = vmatprep.subr.mxu0 %v4169
    %4336 = vmatpush1.msra.mxu0 %v4168
    %4337 = vmatprep.mubr.f32.mxu0 %v4040
    %4338 = vmatmul.mubr.f32.gmra.mrb[0].mxu0 %v4039
    %v4339 = vpop.f32.mrb[0].mxu0
    %v4340 = vadd.f32 %v4269, %v4339
    %v4341 = vpop.f32.mrb[0].mxu0
    %v4342 = vadd.f32 %v4271, %v4341
    %4343 = vdwg.mxu0
    %4344 = vmatprep.subr.mxu0 %v4171
    %4345 = vmatpush1.msra.mxu0 %v4170
    %4346 = vmatprep.subr.mxu0 %v4173
    %4347 = vmatpush1.msra.mxu0 %v4172
    %4348 = vmatprep.subr.mxu0 %v4175
    %4349 = vmatpush1.msra.mxu0 %v4174
    %4350 = vmatprep.subr.mxu0 %v4177
    %4351 = vmatpush1.msra.mxu0 %v4176
    %4352 = vmatprep.subr.mxu0 %v4179
    %4353 = vmatpush1.msra.mxu0 %v4178
    %4354 = vmatprep.subr.mxu0 %v4181
    %4355 = vmatpush1.msra.mxu0 %v4180
    %4356 = vmatprep.subr.mxu0 %v4183
    %4357 = vmatpush1.msra.mxu0 %v4182
    %4358 = vmatprep.subr.mxu0 %v4185
    %4359 = vmatpush1.msra.mxu0 %v4184
    %4360 = vmatprep.subr.mxu0 %v4187
    %4361 = vmatpush1.msra.mxu0 %v4186
    %4362 = vmatprep.subr.mxu0 %v4189
    %4363 = vmatpush1.msra.mxu0 %v4188
    %4364 = vmatprep.subr.mxu0 %v4191
    %4365 = vmatpush1.msra.mxu0 %v4190
    %4366 = vmatprep.subr.mxu0 %v4193
    %4367 = vmatpush1.msra.mxu0 %v4192
    %4368 = vmatprep.subr.mxu0 %v4195
    %4369 = vmatpush1.msra.mxu0 %v4194
    %4370 = vmatprep.subr.mxu0 %v4197
    %4371 = vmatpush1.msra.mxu0 %v4196
    %4372 = vmatprep.subr.mxu0 %v4199
    %4373 = vmatpush1.msra.mxu0 %v4198
    %4374 = vmatprep.subr.mxu0 %v4201
    %4375 = vmatpush1.msra.mxu0 %v4200
    %4376 = vmatprep.subr.mxu0 0.0
    %4377 = vmatpush1.msra.mxu0 0.0
    %4378 = vmatprep.subr.mxu0 0.0
    %4379 = vmatpush1.msra.mxu0 0.0
    %4380 = vmatprep.subr.mxu0 0.0
    %4381 = vmatpush1.msra.mxu0 0.0
    %4382 = vmatprep.subr.mxu0 0.0
    %4383 = vmatpush1.msra.mxu0 0.0
    %4384 = vmatprep.subr.mxu0 0.0
    %4385 = vmatpush1.msra.mxu0 0.0
    %4386 = vmatprep.subr.mxu0 0.0
    %4387 = vmatpush1.msra.mxu0 0.0
    %4388 = vmatprep.subr.mxu0 0.0
    %4389 = vmatpush1.msra.mxu0 0.0
    %4390 = vmatprep.subr.mxu0 0.0
    %4391 = vmatpush1.msra.mxu0 0.0
    %4392 = vmatprep.subr.mxu0 0.0
    %4393 = vmatpush1.msra.mxu0 0.0
    %4394 = vmatprep.subr.mxu0 0.0
    %4395 = vmatpush1.msra.mxu0 0.0
    %4396 = vmatprep.subr.mxu0 0.0
    %4397 = vmatpush1.msra.mxu0 0.0
    %4398 = vmatprep.subr.mxu0 0.0
    %4399 = vmatpush1.msra.mxu0 0.0
    %4400 = vmatprep.subr.mxu0 0.0
    %4401 = vmatpush1.msra.mxu0 0.0
    %4402 = vmatprep.subr.mxu0 0.0
    %4403 = vmatpush1.msra.mxu0 0.0
    %4404 = vmatprep.subr.mxu0 0.0
    %4405 = vmatpush1.msra.mxu0 0.0
    %4406 = vmatprep.subr.mxu0 0.0
    %4407 = vmatpush1.msra.mxu0 0.0
    %4408 = vmatprep.mubr.f32.mxu0 0.0
    %4409 = vmatmul.mubr.f32.gmra.mrb[0].mxu0 %v4041
    %v4410 = vpop.f32.mrb[0].mxu0
    %v4411 = vadd.f32 %v4340, %v4410
    %v4412 = vpop.f32.mrb[0].mxu0
    %v4413 = vadd.f32 %v4342, %v4412
    %4414 = vdwg.mxu0
    %v4415 = vmax.f32 %v4411, 0.0
    %v4416 = vmax.f32 %v4413, 0.0
    %4417 = vst [vmem:[#allocation2 + $0xa0] sm:$0xff] %v4415
    %4418 = vst [vmem:[#allocation2 + $0xa8] sm:$0xff] %v4416
    %v4419 = vld [vmem:[#allocation4 + $0xb0] sm:$0xff]
    %v4420 = vld [vmem:[#allocation4 + $0xb8] sm:$0xff]
    %v4421 = vld [vmem:[#allocation4 + $0xc0] sm:$0xff]
    %v4422 = vld [vmem:[#allocation4 + $0xc8] sm:$0xff]
    %v4423 = vld [vmem:[#allocation4 + $0xd0] sm:$0xff]
    %v4424 = vld [vmem:[#allocation9] sm:$0xff]
    %v4425 = vld [vmem:[#allocation9 + $0x8] sm:$0xff]
    %v4426 = vld [vmem:[#allocation9 + $0x10] sm:$0xff]
    %v4427 = vld [vmem:[#allocation9 + $0x18] sm:$0xff]
    %v4428 = vld [vmem:[#allocation9 + $0x20] sm:$0xff]
    %v4429 = vld [vmem:[#allocation9 + $0x28] sm:$0xff]
    %v4430 = vld [vmem:[#allocation9 + $0x30] sm:$0xff]
    %v4431 = vld [vmem:[#allocation9 + $0x38] sm:$0xff]
    %v4432 = vld [vmem:[#allocation9 + $0x40] sm:$0xff]
    %v4433 = vld [vmem:[#allocation9 + $0x48] sm:$0xff]
    %v4434 = vld [vmem:[#allocation9 + $0x50] sm:$0xff]
    %v4435 = vld [vmem:[#allocation9 + $0x58] sm:$0xff]
    %v4436 = vld [vmem:[#allocation9 + $0x60] sm:$0xff]
    %v4437 = vld [vmem:[#allocation9 + $0x68] sm:$0xff]
    %v4438 = vld [vmem:[#allocation9 + $0x70] sm:$0xff]
    %v4439 = vld [vmem:[#allocation9 + $0x78] sm:$0xff]
    %v4440 = vld [vmem:[#allocation9 + $0x80] sm:$0xff]
    %v4441 = vld [vmem:[#allocation9 + $0x88] sm:$0xff]
    %v4442 = vld [vmem:[#allocation9 + $0x90] sm:$0xff]
    %v4443 = vld [vmem:[#allocation9 + $0x98] sm:$0xff]
    %v4444 = vld [vmem:[#allocation9 + $0xa0] sm:$0xff]
    %v4445 = vld [vmem:[#allocation9 + $0xa8] sm:$0xff]
    %v4446 = vld [vmem:[#allocation9 + $0xb0] sm:$0xff]
    %v4447 = vld [vmem:[#allocation9 + $0xb8] sm:$0xff]
    %v4448 = vld [vmem:[#allocation9 + $0xc0] sm:$0xff]
    %v4449 = vld [vmem:[#allocation9 + $0xc8] sm:$0xff]
    %v4450 = vld [vmem:[#allocation9 + $0xd0] sm:$0xff]
    %v4451 = vld [vmem:[#allocation9 + $0xd8] sm:$0xff]
    %v4452 = vld [vmem:[#allocation9 + $0xe0] sm:$0xff]
    %v4453 = vld [vmem:[#allocation9 + $0xe8] sm:$0xff]
    %v4454 = vld [vmem:[#allocation9 + $0xf0] sm:$0xff]
    %v4455 = vld [vmem:[#allocation9 + $0xf8] sm:$0xff]
    %v4456 = vld [vmem:[#allocation9 + $0x100] sm:$0xff]
    %v4457 = vld [vmem:[#allocation9 + $0x108] sm:$0xff]
    %v4458 = vld [vmem:[#allocation9 + $0x110] sm:$0xff]
    %v4459 = vld [vmem:[#allocation9 + $0x118] sm:$0xff]
    %v4460 = vld [vmem:[#allocation9 + $0x120] sm:$0xff]
    %v4461 = vld [vmem:[#allocation9 + $0x128] sm:$0xff]
    %v4462 = vld [vmem:[#allocation9 + $0x130] sm:$0xff]
    %v4463 = vld [vmem:[#allocation9 + $0x138] sm:$0xff]
    %v4464 = vld [vmem:[#allocation9 + $0x140] sm:$0xff]
    %v4465 = vld [vmem:[#allocation9 + $0x148] sm:$0xff]
    %v4466 = vld [vmem:[#allocation9 + $0x150] sm:$0xff]
    %v4467 = vld [vmem:[#allocation9 + $0x158] sm:$0xff]
    %v4468 = vld [vmem:[#allocation9 + $0x160] sm:$0xff]
    %v4469 = vld [vmem:[#allocation9 + $0x168] sm:$0xff]
    %v4470 = vld [vmem:[#allocation9 + $0x170] sm:$0xff]
    %v4471 = vld [vmem:[#allocation9 + $0x178] sm:$0xff]
    %v4472 = vld [vmem:[#allocation9 + $0x180] sm:$0xff]
    %v4473 = vld [vmem:[#allocation9 + $0x188] sm:$0xff]
    %v4474 = vld [vmem:[#allocation9 + $0x190] sm:$0xff]
    %v4475 = vld [vmem:[#allocation9 + $0x198] sm:$0xff]
    %v4476 = vld [vmem:[#allocation9 + $0x1a0] sm:$0xff]
    %v4477 = vld [vmem:[#allocation9 + $0x1a8] sm:$0xff]
    %v4478 = vld [vmem:[#allocation9 + $0x1b0] sm:$0xff]
    %v4479 = vld [vmem:[#allocation9 + $0x1b8] sm:$0xff]
    %v4480 = vld [vmem:[#allocation9 + $0x1c0] sm:$0xff]
    %v4481 = vld [vmem:[#allocation9 + $0x1c8] sm:$0xff]
    %v4482 = vld [vmem:[#allocation9 + $0x1d0] sm:$0xff]
    %v4483 = vld [vmem:[#allocation9 + $0x1d8] sm:$0xff]
    %v4484 = vld [vmem:[#allocation9 + $0x1e0] sm:$0xff]
    %v4485 = vld [vmem:[#allocation9 + $0x1e8] sm:$0xff]
    %v4486 = vld [vmem:[#allocation9 + $0x1f0] sm:$0xff]
    %v4487 = vld [vmem:[#allocation9 + $0x1f8] sm:$0xff]
    %v4488 = vld [vmem:[#allocation9 + $0x200] sm:$0xff]
    %v4489 = vld [vmem:[#allocation9 + $0x208] sm:$0xff]
    %v4490 = vld [vmem:[#allocation9 + $0x210] sm:$0xff]
    %v4491 = vld [vmem:[#allocation9 + $0x218] sm:$0xff]
    %v4492 = vld [vmem:[#allocation9 + $0x220] sm:$0xff]
    %v4493 = vld [vmem:[#allocation9 + $0x228] sm:$0xff]
    %v4494 = vld [vmem:[#allocation9 + $0x230] sm:$0xff]
    %v4495 = vld [vmem:[#allocation9 + $0x238] sm:$0xff]
    %v4496 = vld [vmem:[#allocation9 + $0x240] sm:$0xff]
    %v4497 = vld [vmem:[#allocation9 + $0x248] sm:$0xff]
    %v4498 = vld [vmem:[#allocation9 + $0x250] sm:$0xff]
    %v4499 = vld [vmem:[#allocation9 + $0x258] sm:$0xff]
    %v4500 = vld [vmem:[#allocation9 + $0x260] sm:$0xff]
    %v4501 = vld [vmem:[#allocation9 + $0x268] sm:$0xff]
    %v4502 = vld [vmem:[#allocation9 + $0x270] sm:$0xff]
    %v4503 = vld [vmem:[#allocation9 + $0x278] sm:$0xff]
    %v4504 = vld [vmem:[#allocation9 + $0x280] sm:$0xff]
    %v4505 = vld [vmem:[#allocation9 + $0x288] sm:$0xff]
    %v4506 = vld [vmem:[#allocation9 + $0x290] sm:$0xff]
    %v4507 = vld [vmem:[#allocation9 + $0x298] sm:$0xff]
    %v4508 = vld [vmem:[#allocation9 + $0x2a0] sm:$0xff]
    %v4509 = vld [vmem:[#allocation9 + $0x2a8] sm:$0xff]
    %v4510 = vld [vmem:[#allocation9 + $0x2b0] sm:$0xff]
    %v4511 = vld [vmem:[#allocation9 + $0x2b8] sm:$0xff]
    %v4512 = vld [vmem:[#allocation9 + $0x2c0] sm:$0xff]
    %v4513 = vld [vmem:[#allocation9 + $0x2c8] sm:$0xff]
    %v4514 = vld [vmem:[#allocation9 + $0x2d0] sm:$0xff]
    %v4515 = vld [vmem:[#allocation9 + $0x2d8] sm:$0xff]
    %v4516 = vld [vmem:[#allocation9 + $0x2e0] sm:$0xff]
    %v4517 = vld [vmem:[#allocation9 + $0x2e8] sm:$0xff]
    %v4518 = vld [vmem:[#allocation9 + $0x2f0] sm:$0xff]
    %v4519 = vld [vmem:[#allocation9 + $0x2f8] sm:$0xff]
    %v4520 = vld [vmem:[#allocation9 + $0x300] sm:$0xff]
    %v4521 = vld [vmem:[#allocation9 + $0x308] sm:$0xff]
    %v4522 = vld [vmem:[#allocation9 + $0x310] sm:$0xff]
    %v4523 = vld [vmem:[#allocation9 + $0x318] sm:$0xff]
    %v4524 = vld [vmem:[#allocation9 + $0x320] sm:$0xff]
    %v4525 = vld [vmem:[#allocation9 + $0x328] sm:$0xff]
    %v4526 = vld [vmem:[#allocation9 + $0x330] sm:$0xff]
    %v4527 = vld [vmem:[#allocation9 + $0x338] sm:$0xff]
    %v4528 = vld [vmem:[#allocation9 + $0x340] sm:$0xff]
    %v4529 = vld [vmem:[#allocation9 + $0x348] sm:$0xff]
    %v4530 = vld [vmem:[#allocation9 + $0x350] sm:$0xff]
    %v4531 = vld [vmem:[#allocation9 + $0x358] sm:$0xff]
    %v4532 = vld [vmem:[#allocation9 + $0x360] sm:$0xff]
    %v4533 = vld [vmem:[#allocation9 + $0x368] sm:$0xff]
    %v4534 = vld [vmem:[#allocation9 + $0x370] sm:$0xff]
    %v4535 = vld [vmem:[#allocation9 + $0x378] sm:$0xff]
    %v4536 = vld [vmem:[#allocation9 + $0x380] sm:$0xff]
    %v4537 = vld [vmem:[#allocation9 + $0x388] sm:$0xff]
    %v4538 = vld [vmem:[#allocation9 + $0x390] sm:$0xff]
    %v4539 = vld [vmem:[#allocation9 + $0x398] sm:$0xff]
    %v4540 = vld [vmem:[#allocation9 + $0x3a0] sm:$0xff]
    %v4541 = vld [vmem:[#allocation9 + $0x3a8] sm:$0xff]
    %v4542 = vld [vmem:[#allocation9 + $0x3b0] sm:$0xff]
    %v4543 = vld [vmem:[#allocation9 + $0x3b8] sm:$0xff]
    %v4544 = vld [vmem:[#allocation9 + $0x3c0] sm:$0xff]
    %v4545 = vld [vmem:[#allocation9 + $0x3c8] sm:$0xff]
    %v4546 = vld [vmem:[#allocation9 + $0x3d0] sm:$0xff]
    %v4547 = vld [vmem:[#allocation9 + $0x3d8] sm:$0xff]
    %v4548 = vld [vmem:[#allocation9 + $0x3e0] sm:$0xff]
    %v4549 = vld [vmem:[#allocation9 + $0x3e8] sm:$0xff]
    %v4550 = vld [vmem:[#allocation9 + $0x3f0] sm:$0xff]
    %v4551 = vld [vmem:[#allocation9 + $0x3f8] sm:$0xff]
    %v4552 = vld [vmem:[#allocation9 + $0x400] sm:$0xff]
    %v4553 = vld [vmem:[#allocation9 + $0x408] sm:$0xff]
    %v4554 = vld [vmem:[#allocation9 + $0x410] sm:$0xff]
    %v4555 = vld [vmem:[#allocation9 + $0x418] sm:$0xff]
    %v4556 = vld [vmem:[#allocation9 + $0x420] sm:$0xff]
    %v4557 = vld [vmem:[#allocation9 + $0x428] sm:$0xff]
    %v4558 = vld [vmem:[#allocation9 + $0x430] sm:$0xff]
    %v4559 = vld [vmem:[#allocation9 + $0x438] sm:$0xff]
    %v4560 = vld [vmem:[#allocation9 + $0x440] sm:$0xff]
    %v4561 = vld [vmem:[#allocation9 + $0x448] sm:$0xff]
    %v4562 = vld [vmem:[#allocation9 + $0x450] sm:$0xff]
    %v4563 = vld [vmem:[#allocation9 + $0x458] sm:$0xff]
    %v4564 = vld [vmem:[#allocation9 + $0x460] sm:$0xff]
    %v4565 = vld [vmem:[#allocation9 + $0x468] sm:$0xff]
    %v4566 = vld [vmem:[#allocation9 + $0x470] sm:$0xff]
    %v4567 = vld [vmem:[#allocation9 + $0x478] sm:$0xff]
    %v4568 = vld [vmem:[#allocation9 + $0x480] sm:$0xff]
    %v4569 = vld [vmem:[#allocation9 + $0x488] sm:$0xff]
    %v4570 = vld [vmem:[#allocation9 + $0x490] sm:$0xff]
    %v4571 = vld [vmem:[#allocation9 + $0x498] sm:$0xff]
    %v4572 = vld [vmem:[#allocation9 + $0x4a0] sm:$0xff]
    %v4573 = vld [vmem:[#allocation9 + $0x4a8] sm:$0xff]
    %v4574 = vld [vmem:[#allocation9 + $0x4b0] sm:$0xff]
    %v4575 = vld [vmem:[#allocation9 + $0x4b8] sm:$0xff]
    %v4576 = vld [vmem:[#allocation9 + $0x4c0] sm:$0xff]
    %v4577 = vld [vmem:[#allocation9 + $0x4c8] sm:$0xff]
    %v4578 = vld [vmem:[#allocation9 + $0x4d0] sm:$0xff]
    %v4579 = vld [vmem:[#allocation9 + $0x4d8] sm:$0xff]
    %v4580 = vld [vmem:[#allocation9 + $0x4e0] sm:$0xff]
    %v4581 = vld [vmem:[#allocation9 + $0x4e8] sm:$0xff]
    %v4582 = vld [vmem:[#allocation9 + $0x4f0] sm:$0xff]
    %v4583 = vld [vmem:[#allocation9 + $0x4f8] sm:$0xff]
    %4584 = vmatprep.subr.mxu0 %v4425
    %4585 = vmatpush1.msra.mxu0 %v4424
    %4586 = vmatprep.subr.mxu0 %v4427
    %4587 = vmatpush1.msra.mxu0 %v4426
    %4588 = vmatprep.subr.mxu0 %v4429
    %4589 = vmatpush1.msra.mxu0 %v4428
    %4590 = vmatprep.subr.mxu0 %v4431
    %4591 = vmatpush1.msra.mxu0 %v4430
    %4592 = vmatprep.subr.mxu0 %v4433
    %4593 = vmatpush1.msra.mxu0 %v4432
    %4594 = vmatprep.subr.mxu0 %v4435
    %4595 = vmatpush1.msra.mxu0 %v4434
    %4596 = vmatprep.subr.mxu0 %v4437
    %4597 = vmatpush1.msra.mxu0 %v4436
    %4598 = vmatprep.subr.mxu0 %v4439
    %4599 = vmatpush1.msra.mxu0 %v4438
    %4600 = vmatprep.subr.mxu0 %v4441
    %4601 = vmatpush1.msra.mxu0 %v4440
    %4602 = vmatprep.subr.mxu0 %v4443
    %4603 = vmatpush1.msra.mxu0 %v4442
    %4604 = vmatprep.subr.mxu0 %v4445
    %4605 = vmatpush1.msra.mxu0 %v4444
    %4606 = vmatprep.subr.mxu0 %v4447
    %4607 = vmatpush1.msra.mxu0 %v4446
    %4608 = vmatprep.subr.mxu0 %v4449
    %4609 = vmatpush1.msra.mxu0 %v4448
    %4610 = vmatprep.subr.mxu0 %v4451
    %4611 = vmatpush1.msra.mxu0 %v4450
    %4612 = vmatprep.subr.mxu0 %v4453
    %4613 = vmatpush1.msra.mxu0 %v4452
    %4614 = vmatprep.subr.mxu0 %v4455
    %4615 = vmatpush1.msra.mxu0 %v4454
    %4616 = vmatprep.subr.mxu0 %v4457
    %4617 = vmatpush1.msra.mxu0 %v4456
    %4618 = vmatprep.subr.mxu0 %v4459
    %4619 = vmatpush1.msra.mxu0 %v4458
    %4620 = vmatprep.subr.mxu0 %v4461
    %4621 = vmatpush1.msra.mxu0 %v4460
    %4622 = vmatprep.subr.mxu0 %v4463
    %4623 = vmatpush1.msra.mxu0 %v4462
    %4624 = vmatprep.subr.mxu0 %v4465
    %4625 = vmatpush1.msra.mxu0 %v4464
    %4626 = vmatprep.subr.mxu0 %v4467
    %4627 = vmatpush1.msra.mxu0 %v4466
    %4628 = vmatprep.subr.mxu0 %v4469
    %4629 = vmatpush1.msra.mxu0 %v4468
    %4630 = vmatprep.subr.mxu0 %v4471
    %4631 = vmatpush1.msra.mxu0 %v4470
    %4632 = vmatprep.subr.mxu0 %v4473
    %4633 = vmatpush1.msra.mxu0 %v4472
    %4634 = vmatprep.subr.mxu0 %v4475
    %4635 = vmatpush1.msra.mxu0 %v4474
    %4636 = vmatprep.subr.mxu0 %v4477
    %4637 = vmatpush1.msra.mxu0 %v4476
    %4638 = vmatprep.subr.mxu0 %v4479
    %4639 = vmatpush1.msra.mxu0 %v4478
    %4640 = vmatprep.subr.mxu0 %v4481
    %4641 = vmatpush1.msra.mxu0 %v4480
    %4642 = vmatprep.subr.mxu0 %v4483
    %4643 = vmatpush1.msra.mxu0 %v4482
    %4644 = vmatprep.subr.mxu0 %v4485
    %4645 = vmatpush1.msra.mxu0 %v4484
    %4646 = vmatprep.subr.mxu0 %v4487
    %4647 = vmatpush1.msra.mxu0 %v4486
    %4648 = vmatprep.mubr.f32.mxu0 %v4420
    %4649 = vmatmul.mubr.f32.gmra.mrb[0].mxu0 %v4419
    %v4650 = vpop.f32.mrb[0].mxu0
    %v4651 = vadd.f32 %v210, %v4650
    %v4652 = vpop.f32.mrb[0].mxu0
    %v4653 = vadd.f32 %v214, %v4652
    %4654 = vdwg.mxu0
    %4655 = vmatprep.subr.mxu0 %v4489
    %4656 = vmatpush1.msra.mxu0 %v4488
    %4657 = vmatprep.subr.mxu0 %v4491
    %4658 = vmatpush1.msra.mxu0 %v4490
    %4659 = vmatprep.subr.mxu0 %v4493
    %4660 = vmatpush1.msra.mxu0 %v4492
    %4661 = vmatprep.subr.mxu0 %v4495
    %4662 = vmatpush1.msra.mxu0 %v4494
    %4663 = vmatprep.subr.mxu0 %v4497
    %4664 = vmatpush1.msra.mxu0 %v4496
    %4665 = vmatprep.subr.mxu0 %v4499
    %4666 = vmatpush1.msra.mxu0 %v4498
    %4667 = vmatprep.subr.mxu0 %v4501
    %4668 = vmatpush1.msra.mxu0 %v4500
    %4669 = vmatprep.subr.mxu0 %v4503
    %4670 = vmatpush1.msra.mxu0 %v4502
    %4671 = vmatprep.subr.mxu0 %v4505
    %4672 = vmatpush1.msra.mxu0 %v4504
    %4673 = vmatprep.subr.mxu0 %v4507
    %4674 = vmatpush1.msra.mxu0 %v4506
    %4675 = vmatprep.subr.mxu0 %v4509
    %4676 = vmatpush1.msra.mxu0 %v4508
    %4677 = vmatprep.subr.mxu0 %v4511
    %4678 = vmatpush1.msra.mxu0 %v4510
    %4679 = vmatprep.subr.mxu0 %v4513
    %4680 = vmatpush1.msra.mxu0 %v4512
    %4681 = vmatprep.subr.mxu0 %v4515
    %4682 = vmatpush1.msra.mxu0 %v4514
    %4683 = vmatprep.subr.mxu0 %v4517
    %4684 = vmatpush1.msra.mxu0 %v4516
    %4685 = vmatprep.subr.mxu0 %v4519
    %4686 = vmatpush1.msra.mxu0 %v4518
    %4687 = vmatprep.subr.mxu0 %v4521
    %4688 = vmatpush1.msra.mxu0 %v4520
    %4689 = vmatprep.subr.mxu0 %v4523
    %4690 = vmatpush1.msra.mxu0 %v4522
    %4691 = vmatprep.subr.mxu0 %v4525
    %4692 = vmatpush1.msra.mxu0 %v4524
    %4693 = vmatprep.subr.mxu0 %v4527
    %4694 = vmatpush1.msra.mxu0 %v4526
    %4695 = vmatprep.subr.mxu0 %v4529
    %4696 = vmatpush1.msra.mxu0 %v4528
    %4697 = vmatprep.subr.mxu0 %v4531
    %4698 = vmatpush1.msra.mxu0 %v4530
    %4699 = vmatprep.subr.mxu0 %v4533
    %4700 = vmatpush1.msra.mxu0 %v4532
    %4701 = vmatprep.subr.mxu0 %v4535
    %4702 = vmatpush1.msra.mxu0 %v4534
    %4703 = vmatprep.subr.mxu0 %v4537
    %4704 = vmatpush1.msra.mxu0 %v4536
    %4705 = vmatprep.subr.mxu0 %v4539
    %4706 = vmatpush1.msra.mxu0 %v4538
    %4707 = vmatprep.subr.mxu0 %v4541
    %4708 = vmatpush1.msra.mxu0 %v4540
    %4709 = vmatprep.subr.mxu0 %v4543
    %4710 = vmatpush1.msra.mxu0 %v4542
    %4711 = vmatprep.subr.mxu0 %v4545
    %4712 = vmatpush1.msra.mxu0 %v4544
    %4713 = vmatprep.subr.mxu0 %v4547
    %4714 = vmatpush1.msra.mxu0 %v4546
    %4715 = vmatprep.subr.mxu0 %v4549
    %4716 = vmatpush1.msra.mxu0 %v4548
    %4717 = vmatprep.subr.mxu0 %v4551
    %4718 = vmatpush1.msra.mxu0 %v4550
    %4719 = vmatprep.mubr.f32.mxu0 %v4422
    %4720 = vmatmul.mubr.f32.gmra.mrb[0].mxu0 %v4421
    %v4721 = vpop.f32.mrb[0].mxu0
    %v4722 = vadd.f32 %v4651, %v4721
    %v4723 = vpop.f32.mrb[0].mxu0
    %v4724 = vadd.f32 %v4653, %v4723
    %4725 = vdwg.mxu0
    %4726 = vmatprep.subr.mxu0 %v4553
    %4727 = vmatpush1.msra.mxu0 %v4552
    %4728 = vmatprep.subr.mxu0 %v4555
    %4729 = vmatpush1.msra.mxu0 %v4554
    %4730 = vmatprep.subr.mxu0 %v4557
    %4731 = vmatpush1.msra.mxu0 %v4556
    %4732 = vmatprep.subr.mxu0 %v4559
    %4733 = vmatpush1.msra.mxu0 %v4558
    %4734 = vmatprep.subr.mxu0 %v4561
    %4735 = vmatpush1.msra.mxu0 %v4560
    %4736 = vmatprep.subr.mxu0 %v4563
    %4737 = vmatpush1.msra.mxu0 %v4562
    %4738 = vmatprep.subr.mxu0 %v4565
    %4739 = vmatpush1.msra.mxu0 %v4564
    %4740 = vmatprep.subr.mxu0 %v4567
    %4741 = vmatpush1.msra.mxu0 %v4566
    %4742 = vmatprep.subr.mxu0 %v4569
    %4743 = vmatpush1.msra.mxu0 %v4568
    %4744 = vmatprep.subr.mxu0 %v4571
    %4745 = vmatpush1.msra.mxu0 %v4570
    %4746 = vmatprep.subr.mxu0 %v4573
    %4747 = vmatpush1.msra.mxu0 %v4572
    %4748 = vmatprep.subr.mxu0 %v4575
    %4749 = vmatpush1.msra.mxu0 %v4574
    %4750 = vmatprep.subr.mxu0 %v4577
    %4751 = vmatpush1.msra.mxu0 %v4576
    %4752 = vmatprep.subr.mxu0 %v4579
    %4753 = vmatpush1.msra.mxu0 %v4578
    %4754 = vmatprep.subr.mxu0 %v4581
    %4755 = vmatpush1.msra.mxu0 %v4580
    %4756 = vmatprep.subr.mxu0 %v4583
    %4757 = vmatpush1.msra.mxu0 %v4582
    %4758 = vmatprep.subr.mxu0 0.0
    %4759 = vmatpush1.msra.mxu0 0.0
    %4760 = vmatprep.subr.mxu0 0.0
    %4761 = vmatpush1.msra.mxu0 0.0
    %4762 = vmatprep.subr.mxu0 0.0
    %4763 = vmatpush1.msra.mxu0 0.0
    %4764 = vmatprep.subr.mxu0 0.0
    %4765 = vmatpush1.msra.mxu0 0.0
    %4766 = vmatprep.subr.mxu0 0.0
    %4767 = vmatpush1.msra.mxu0 0.0
    %4768 = vmatprep.subr.mxu0 0.0
    %4769 = vmatpush1.msra.mxu0 0.0
    %4770 = vmatprep.subr.mxu0 0.0
    %4771 = vmatpush1.msra.mxu0 0.0
    %4772 = vmatprep.subr.mxu0 0.0
    %4773 = vmatpush1.msra.mxu0 0.0
    %4774 = vmatprep.subr.mxu0 0.0
    %4775 = vmatpush1.msra.mxu0 0.0
    %4776 = vmatprep.subr.mxu0 0.0
    %4777 = vmatpush1.msra.mxu0 0.0
    %4778 = vmatprep.subr.mxu0 0.0
    %4779 = vmatpush1.msra.mxu0 0.0
    %4780 = vmatprep.subr.mxu0 0.0
    %4781 = vmatpush1.msra.mxu0 0.0
    %4782 = vmatprep.subr.mxu0 0.0
    %4783 = vmatpush1.msra.mxu0 0.0
    %4784 = vmatprep.subr.mxu0 0.0
    %4785 = vmatpush1.msra.mxu0 0.0
    %4786 = vmatprep.subr.mxu0 0.0
    %4787 = vmatpush1.msra.mxu0 0.0
    %4788 = vmatprep.subr.mxu0 0.0
    %4789 = vmatpush1.msra.mxu0 0.0
    %4790 = vmatprep.mubr.f32.mxu0 0.0
    %4791 = vmatmul.mubr.f32.gmra.mrb[0].mxu0 %v4423
    %v4792 = vpop.f32.mrb[0].mxu0
    %v4793 = vadd.f32 %v4722, %v4792
    %v4794 = vpop.f32.mrb[0].mxu0
    %v4795 = vadd.f32 %v4724, %v4794
    %4796 = vdwg.mxu0
    %v4797 = vmax.f32 %v4793, 0.0
    %v4798 = vmax.f32 %v4795, 0.0
    %4799 = vst [vmem:[#allocation2 + $0xb0] sm:$0xff] %v4797
    %4800 = vst [vmem:[#allocation2 + $0xb8] sm:$0xff] %v4798
    %v4801 = vld [vmem:[#allocation4 + $0xc0] sm:$0xff]
    %v4802 = vld [vmem:[#allocation4 + $0xc8] sm:$0xff]
    %v4803 = vld [vmem:[#allocation4 + $0xd0] sm:$0xff]
    %v4804 = vld [vmem:[#allocation4 + $0xd8] sm:$0xff]
    %v4805 = vld [vmem:[#allocation4 + $0xe0] sm:$0xff]
    %v4806 = vld [vmem:[#allocation9] sm:$0xff]
    %v4807 = vld [vmem:[#allocation9 + $0x8] sm:$0xff]
    %v4808 = vld [vmem:[#allocation9 + $0x10] sm:$0xff]
    %v4809 = vld [vmem:[#allocation9 + $0x18] sm:$0xff]
    %v4810 = vld [vmem:[#allocation9 + $0x20] sm:$0xff]
    %v4811 = vld [vmem:[#allocation9 + $0x28] sm:$0xff]
    %v4812 = vld [vmem:[#allocation9 + $0x30] sm:$0xff]
    %v4813 = vld [vmem:[#allocation9 + $0x38] sm:$0xff]
    %v4814 = vld [vmem:[#allocation9 + $0x40] sm:$0xff]
    %v4815 = vld [vmem:[#allocation9 + $0x48] sm:$0xff]
    %v4816 = vld [vmem:[#allocation9 + $0x50] sm:$0xff]
    %v4817 = vld [vmem:[#allocation9 + $0x58] sm:$0xff]
    %v4818 = vld [vmem:[#allocation9 + $0x60] sm:$0xff]
    %v4819 = vld [vmem:[#allocation9 + $0x68] sm:$0xff]
    %v4820 = vld [vmem:[#allocation9 + $0x70] sm:$0xff]
    %v4821 = vld [vmem:[#allocation9 + $0x78] sm:$0xff]
    %v4822 = vld [vmem:[#allocation9 + $0x80] sm:$0xff]
    %v4823 = vld [vmem:[#allocation9 + $0x88] sm:$0xff]
    %v4824 = vld [vmem:[#allocation9 + $0x90] sm:$0xff]
    %v4825 = vld [vmem:[#allocation9 + $0x98] sm:$0xff]
    %v4826 = vld [vmem:[#allocation9 + $0xa0] sm:$0xff]
    %v4827 = vld [vmem:[#allocation9 + $0xa8] sm:$0xff]
    %v4828 = vld [vmem:[#allocation9 + $0xb0] sm:$0xff]
    %v4829 = vld [vmem:[#allocation9 + $0xb8] sm:$0xff]
    %v4830 = vld [vmem:[#allocation9 + $0xc0] sm:$0xff]
    %v4831 = vld [vmem:[#allocation9 + $0xc8] sm:$0xff]
    %v4832 = vld [vmem:[#allocation9 + $0xd0] sm:$0xff]
    %v4833 = vld [vmem:[#allocation9 + $0xd8] sm:$0xff]
    %v4834 = vld [vmem:[#allocation9 + $0xe0] sm:$0xff]
    %v4835 = vld [vmem:[#allocation9 + $0xe8] sm:$0xff]
    %v4836 = vld [vmem:[#allocation9 + $0xf0] sm:$0xff]
    %v4837 = vld [vmem:[#allocation9 + $0xf8] sm:$0xff]
    %v4838 = vld [vmem:[#allocation9 + $0x100] sm:$0xff]
    %v4839 = vld [vmem:[#allocation9 + $0x108] sm:$0xff]
    %v4840 = vld [vmem:[#allocation9 + $0x110] sm:$0xff]
    %v4841 = vld [vmem:[#allocation9 + $0x118] sm:$0xff]
    %v4842 = vld [vmem:[#allocation9 + $0x120] sm:$0xff]
    %v4843 = vld [vmem:[#allocation9 + $0x128] sm:$0xff]
    %v4844 = vld [vmem:[#allocation9 + $0x130] sm:$0xff]
    %v4845 = vld [vmem:[#allocation9 + $0x138] sm:$0xff]
    %v4846 = vld [vmem:[#allocation9 + $0x140] sm:$0xff]
    %v4847 = vld [vmem:[#allocation9 + $0x148] sm:$0xff]
    %v4848 = vld [vmem:[#allocation9 + $0x150] sm:$0xff]
    %v4849 = vld [vmem:[#allocation9 + $0x158] sm:$0xff]
    %v4850 = vld [vmem:[#allocation9 + $0x160] sm:$0xff]
    %v4851 = vld [vmem:[#allocation9 + $0x168] sm:$0xff]
    %v4852 = vld [vmem:[#allocation9 + $0x170] sm:$0xff]
    %v4853 = vld [vmem:[#allocation9 + $0x178] sm:$0xff]
    %v4854 = vld [vmem:[#allocation9 + $0x180] sm:$0xff]
    %v4855 = vld [vmem:[#allocation9 + $0x188] sm:$0xff]
    %v4856 = vld [vmem:[#allocation9 + $0x190] sm:$0xff]
    %v4857 = vld [vmem:[#allocation9 + $0x198] sm:$0xff]
    %v4858 = vld [vmem:[#allocation9 + $0x1a0] sm:$0xff]
    %v4859 = vld [vmem:[#allocation9 + $0x1a8] sm:$0xff]
    %v4860 = vld [vmem:[#allocation9 + $0x1b0] sm:$0xff]
    %v4861 = vld [vmem:[#allocation9 + $0x1b8] sm:$0xff]
    %v4862 = vld [vmem:[#allocation9 + $0x1c0] sm:$0xff]
    %v4863 = vld [vmem:[#allocation9 + $0x1c8] sm:$0xff]
    %v4864 = vld [vmem:[#allocation9 + $0x1d0] sm:$0xff]
    %v4865 = vld [vmem:[#allocation9 + $0x1d8] sm:$0xff]
    %v4866 = vld [vmem:[#allocation9 + $0x1e0] sm:$0xff]
    %v4867 = vld [vmem:[#allocation9 + $0x1e8] sm:$0xff]
    %v4868 = vld [vmem:[#allocation9 + $0x1f0] sm:$0xff]
    %v4869 = vld [vmem:[#allocation9 + $0x1f8] sm:$0xff]
    %v4870 = vld [vmem:[#allocation9 + $0x200] sm:$0xff]
    %v4871 = vld [vmem:[#allocation9 + $0x208] sm:$0xff]
    %v4872 = vld [vmem:[#allocation9 + $0x210] sm:$0xff]
    %v4873 = vld [vmem:[#allocation9 + $0x218] sm:$0xff]
    %v4874 = vld [vmem:[#allocation9 + $0x220] sm:$0xff]
    %v4875 = vld [vmem:[#allocation9 + $0x228] sm:$0xff]
    %v4876 = vld [vmem:[#allocation9 + $0x230] sm:$0xff]
    %v4877 = vld [vmem:[#allocation9 + $0x238] sm:$0xff]
    %v4878 = vld [vmem:[#allocation9 + $0x240] sm:$0xff]
    %v4879 = vld [vmem:[#allocation9 + $0x248] sm:$0xff]
    %v4880 = vld [vmem:[#allocation9 + $0x250] sm:$0xff]
    %v4881 = vld [vmem:[#allocation9 + $0x258] sm:$0xff]
    %v4882 = vld [vmem:[#allocation9 + $0x260] sm:$0xff]
    %v4883 = vld [vmem:[#allocation9 + $0x268] sm:$0xff]
    %v4884 = vld [vmem:[#allocation9 + $0x270] sm:$0xff]
    %v4885 = vld [vmem:[#allocation9 + $0x278] sm:$0xff]
    %v4886 = vld [vmem:[#allocation9 + $0x280] sm:$0xff]
    %v4887 = vld [vmem:[#allocation9 + $0x288] sm:$0xff]
    %v4888 = vld [vmem:[#allocation9 + $0x290] sm:$0xff]
    %v4889 = vld [vmem:[#allocation9 + $0x298] sm:$0xff]
    %v4890 = vld [vmem:[#allocation9 + $0x2a0] sm:$0xff]
    %v4891 = vld [vmem:[#allocation9 + $0x2a8] sm:$0xff]
    %v4892 = vld [vmem:[#allocation9 + $0x2b0] sm:$0xff]
    %v4893 = vld [vmem:[#allocation9 + $0x2b8] sm:$0xff]
    %v4894 = vld [vmem:[#allocation9 + $0x2c0] sm:$0xff]
    %v4895 = vld [vmem:[#allocation9 + $0x2c8] sm:$0xff]
    %v4896 = vld [vmem:[#allocation9 + $0x2d0] sm:$0xff]
    %v4897 = vld [vmem:[#allocation9 + $0x2d8] sm:$0xff]
    %v4898 = vld [vmem:[#allocation9 + $0x2e0] sm:$0xff]
    %v4899 = vld [vmem:[#allocation9 + $0x2e8] sm:$0xff]
    %v4900 = vld [vmem:[#allocation9 + $0x2f0] sm:$0xff]
    %v4901 = vld [vmem:[#allocation9 + $0x2f8] sm:$0xff]
    %v4902 = vld [vmem:[#allocation9 + $0x300] sm:$0xff]
    %v4903 = vld [vmem:[#allocation9 + $0x308] sm:$0xff]
    %v4904 = vld [vmem:[#allocation9 + $0x310] sm:$0xff]
    %v4905 = vld [vmem:[#allocation9 + $0x318] sm:$0xff]
    %v4906 = vld [vmem:[#allocation9 + $0x320] sm:$0xff]
    %v4907 = vld [vmem:[#allocation9 + $0x328] sm:$0xff]
    %v4908 = vld [vmem:[#allocation9 + $0x330] sm:$0xff]
    %v4909 = vld [vmem:[#allocation9 + $0x338] sm:$0xff]
    %v4910 = vld [vmem:[#allocation9 + $0x340] sm:$0xff]
    %v4911 = vld [vmem:[#allocation9 + $0x348] sm:$0xff]
    %v4912 = vld [vmem:[#allocation9 + $0x350] sm:$0xff]
    %v4913 = vld [vmem:[#allocation9 + $0x358] sm:$0xff]
    %v4914 = vld [vmem:[#allocation9 + $0x360] sm:$0xff]
    %v4915 = vld [vmem:[#allocation9 + $0x368] sm:$0xff]
    %v4916 = vld [vmem:[#allocation9 + $0x370] sm:$0xff]
    %v4917 = vld [vmem:[#allocation9 + $0x378] sm:$0xff]
    %v4918 = vld [vmem:[#allocation9 + $0x380] sm:$0xff]
    %v4919 = vld [vmem:[#allocation9 + $0x388] sm:$0xff]
    %v4920 = vld [vmem:[#allocation9 + $0x390] sm:$0xff]
    %v4921 = vld [vmem:[#allocation9 + $0x398] sm:$0xff]
    %v4922 = vld [vmem:[#allocation9 + $0x3a0] sm:$0xff]
    %v4923 = vld [vmem:[#allocation9 + $0x3a8] sm:$0xff]
    %v4924 = vld [vmem:[#allocation9 + $0x3b0] sm:$0xff]
    %v4925 = vld [vmem:[#allocation9 + $0x3b8] sm:$0xff]
    %v4926 = vld [vmem:[#allocation9 + $0x3c0] sm:$0xff]
    %v4927 = vld [vmem:[#allocation9 + $0x3c8] sm:$0xff]
    %v4928 = vld [vmem:[#allocation9 + $0x3d0] sm:$0xff]
    %v4929 = vld [vmem:[#allocation9 + $0x3d8] sm:$0xff]
    %v4930 = vld [vmem:[#allocation9 + $0x3e0] sm:$0xff]
    %v4931 = vld [vmem:[#allocation9 + $0x3e8] sm:$0xff]
    %v4932 = vld [vmem:[#allocation9 + $0x3f0] sm:$0xff]
    %v4933 = vld [vmem:[#allocation9 + $0x3f8] sm:$0xff]
    %v4934 = vld [vmem:[#allocation9 + $0x400] sm:$0xff]
    %v4935 = vld [vmem:[#allocation9 + $0x408] sm:$0xff]
    %v4936 = vld [vmem:[#allocation9 + $0x410] sm:$0xff]
    %v4937 = vld [vmem:[#allocation9 + $0x418] sm:$0xff]
    %v4938 = vld [vmem:[#allocation9 + $0x420] sm:$0xff]
    %v4939 = vld [vmem:[#allocation9 + $0x428] sm:$0xff]
    %v4940 = vld [vmem:[#allocation9 + $0x430] sm:$0xff]
    %v4941 = vld [vmem:[#allocation9 + $0x438] sm:$0xff]
    %v4942 = vld [vmem:[#allocation9 + $0x440] sm:$0xff]
    %v4943 = vld [vmem:[#allocation9 + $0x448] sm:$0xff]
    %v4944 = vld [vmem:[#allocation9 + $0x450] sm:$0xff]
    %v4945 = vld [vmem:[#allocation9 + $0x458] sm:$0xff]
    %v4946 = vld [vmem:[#allocation9 + $0x460] sm:$0xff]
    %v4947 = vld [vmem:[#allocation9 + $0x468] sm:$0xff]
    %v4948 = vld [vmem:[#allocation9 + $0x470] sm:$0xff]
    %v4949 = vld [vmem:[#allocation9 + $0x478] sm:$0xff]
    %v4950 = vld [vmem:[#allocation9 + $0x480] sm:$0xff]
    %v4951 = vld [vmem:[#allocation9 + $0x488] sm:$0xff]
    %v4952 = vld [vmem:[#allocation9 + $0x490] sm:$0xff]
    %v4953 = vld [vmem:[#allocation9 + $0x498] sm:$0xff]
    %v4954 = vld [vmem:[#allocation9 + $0x4a0] sm:$0xff]
    %v4955 = vld [vmem:[#allocation9 + $0x4a8] sm:$0xff]
    %v4956 = vld [vmem:[#allocation9 + $0x4b0] sm:$0xff]
    %v4957 = vld [vmem:[#allocation9 + $0x4b8] sm:$0xff]
    %v4958 = vld [vmem:[#allocation9 + $0x4c0] sm:$0xff]
    %v4959 = vld [vmem:[#allocation9 + $0x4c8] sm:$0xff]
    %v4960 = vld [vmem:[#allocation9 + $0x4d0] sm:$0xff]
    %v4961 = vld [vmem:[#allocation9 + $0x4d8] sm:$0xff]
    %v4962 = vld [vmem:[#allocation9 + $0x4e0] sm:$0xff]
    %v4963 = vld [vmem:[#allocation9 + $0x4e8] sm:$0xff]
    %v4964 = vld [vmem:[#allocation9 + $0x4f0] sm:$0xff]
    %v4965 = vld [vmem:[#allocation9 + $0x4f8] sm:$0xff]
    %4966 = vmatprep.subr.mxu0 %v4807
    %4967 = vmatpush1.msra.mxu0 %v4806
    %4968 = vmatprep.subr.mxu0 %v4809
    %4969 = vmatpush1.msra.mxu0 %v4808
    %4970 = vmatprep.subr.mxu0 %v4811
    %4971 = vmatpush1.msra.mxu0 %v4810
    %4972 = vmatprep.subr.mxu0 %v4813
    %4973 = vmatpush1.msra.mxu0 %v4812
    %4974 = vmatprep.subr.mxu0 %v4815
    %4975 = vmatpush1.msra.mxu0 %v4814
    %4976 = vmatprep.subr.mxu0 %v4817
    %4977 = vmatpush1.msra.mxu0 %v4816
    %4978 = vmatprep.subr.mxu0 %v4819
    %4979 = vmatpush1.msra.mxu0 %v4818
    %4980 = vmatprep.subr.mxu0 %v4821
    %4981 = vmatpush1.msra.mxu0 %v4820
    %4982 = vmatprep.subr.mxu0 %v4823
    %4983 = vmatpush1.msra.mxu0 %v4822
    %4984 = vmatprep.subr.mxu0 %v4825
    %4985 = vmatpush1.msra.mxu0 %v4824
    %4986 = vmatprep.subr.mxu0 %v4827
    %4987 = vmatpush1.msra.mxu0 %v4826
    %4988 = vmatprep.subr.mxu0 %v4829
    %4989 = vmatpush1.msra.mxu0 %v4828
    %4990 = vmatprep.subr.mxu0 %v4831
    %4991 = vmatpush1.msra.mxu0 %v4830
    %4992 = vmatprep.subr.mxu0 %v4833
    %4993 = vmatpush1.msra.mxu0 %v4832
    %4994 = vmatprep.subr.mxu0 %v4835
    %4995 = vmatpush1.msra.mxu0 %v4834
    %4996 = vmatprep.subr.mxu0 %v4837
    %4997 = vmatpush1.msra.mxu0 %v4836
    %4998 = vmatprep.subr.mxu0 %v4839
    %4999 = vmatpush1.msra.mxu0 %v4838
    %5000 = vmatprep.subr.mxu0 %v4841
    %5001 = vmatpush1.msra.mxu0 %v4840
    %5002 = vmatprep.subr.mxu0 %v4843
    %5003 = vmatpush1.msra.mxu0 %v4842
    %5004 = vmatprep.subr.mxu0 %v4845
    %5005 = vmatpush1.msra.mxu0 %v4844
    %5006 = vmatprep.subr.mxu0 %v4847
    %5007 = vmatpush1.msra.mxu0 %v4846
    %5008 = vmatprep.subr.mxu0 %v4849
    %5009 = vmatpush1.msra.mxu0 %v4848
    %5010 = vmatprep.subr.mxu0 %v4851
    %5011 = vmatpush1.msra.mxu0 %v4850
    %5012 = vmatprep.subr.mxu0 %v4853
    %5013 = vmatpush1.msra.mxu0 %v4852
    %5014 = vmatprep.subr.mxu0 %v4855
    %5015 = vmatpush1.msra.mxu0 %v4854
    %5016 = vmatprep.subr.mxu0 %v4857
    %5017 = vmatpush1.msra.mxu0 %v4856
    %5018 = vmatprep.subr.mxu0 %v4859
    %5019 = vmatpush1.msra.mxu0 %v4858
    %5020 = vmatprep.subr.mxu0 %v4861
    %5021 = vmatpush1.msra.mxu0 %v4860
    %5022 = vmatprep.subr.mxu0 %v4863
    %5023 = vmatpush1.msra.mxu0 %v4862
    %5024 = vmatprep.subr.mxu0 %v4865
    %5025 = vmatpush1.msra.mxu0 %v4864
    %5026 = vmatprep.subr.mxu0 %v4867
    %5027 = vmatpush1.msra.mxu0 %v4866
    %5028 = vmatprep.subr.mxu0 %v4869
    %5029 = vmatpush1.msra.mxu0 %v4868
    %5030 = vmatprep.mubr.f32.mxu0 %v4802
    %5031 = vmatmul.mubr.f32.gmra.mrb[0].mxu0 %v4801
    %v5032 = vpop.f32.mrb[0].mxu0
    %v5033 = vadd.f32 %v210, %v5032
    %v5034 = vpop.f32.mrb[0].mxu0
    %v5035 = vadd.f32 %v214, %v5034
    %5036 = vdwg.mxu0
    %5037 = vmatprep.subr.mxu0 %v4871
    %5038 = vmatpush1.msra.mxu0 %v4870
    %5039 = vmatprep.subr.mxu0 %v4873
    %5040 = vmatpush1.msra.mxu0 %v4872
    %5041 = vmatprep.subr.mxu0 %v4875
    %5042 = vmatpush1.msra.mxu0 %v4874
    %5043 = vmatprep.subr.mxu0 %v4877
    %5044 = vmatpush1.msra.mxu0 %v4876
    %5045 = vmatprep.subr.mxu0 %v4879
    %5046 = vmatpush1.msra.mxu0 %v4878
    %5047 = vmatprep.subr.mxu0 %v4881
    %5048 = vmatpush1.msra.mxu0 %v4880
    %5049 = vmatprep.subr.mxu0 %v4883
    %5050 = vmatpush1.msra.mxu0 %v4882
    %5051 = vmatprep.subr.mxu0 %v4885
    %5052 = vmatpush1.msra.mxu0 %v4884
    %5053 = vmatprep.subr.mxu0 %v4887
    %5054 = vmatpush1.msra.mxu0 %v4886
    %5055 = vmatprep.subr.mxu0 %v4889
    %5056 = vmatpush1.msra.mxu0 %v4888
    %5057 = vmatprep.subr.mxu0 %v4891
    %5058 = vmatpush1.msra.mxu0 %v4890
    %5059 = vmatprep.subr.mxu0 %v4893
    %5060 = vmatpush1.msra.mxu0 %v4892
    %5061 = vmatprep.subr.mxu0 %v4895
    %5062 = vmatpush1.msra.mxu0 %v4894
    %5063 = vmatprep.subr.mxu0 %v4897
    %5064 = vmatpush1.msra.mxu0 %v4896
    %5065 = vmatprep.subr.mxu0 %v4899
    %5066 = vmatpush1.msra.mxu0 %v4898
    %5067 = vmatprep.subr.mxu0 %v4901
    %5068 = vmatpush1.msra.mxu0 %v4900
    %5069 = vmatprep.subr.mxu0 %v4903
    %5070 = vmatpush1.msra.mxu0 %v4902
    %5071 = vmatprep.subr.mxu0 %v4905
    %5072 = vmatpush1.msra.mxu0 %v4904
    %5073 = vmatprep.subr.mxu0 %v4907
    %5074 = vmatpush1.msra.mxu0 %v4906
    %5075 = vmatprep.subr.mxu0 %v4909
    %5076 = vmatpush1.msra.mxu0 %v4908
    %5077 = vmatprep.subr.mxu0 %v4911
    %5078 = vmatpush1.msra.mxu0 %v4910
    %5079 = vmatprep.subr.mxu0 %v4913
    %5080 = vmatpush1.msra.mxu0 %v4912
    %5081 = vmatprep.subr.mxu0 %v4915
    %5082 = vmatpush1.msra.mxu0 %v4914
    %5083 = vmatprep.subr.mxu0 %v4917
    %5084 = vmatpush1.msra.mxu0 %v4916
    %5085 = vmatprep.subr.mxu0 %v4919
    %5086 = vmatpush1.msra.mxu0 %v4918
    %5087 = vmatprep.subr.mxu0 %v4921
    %5088 = vmatpush1.msra.mxu0 %v4920
    %5089 = vmatprep.subr.mxu0 %v4923
    %5090 = vmatpush1.msra.mxu0 %v4922
    %5091 = vmatprep.subr.mxu0 %v4925
    %5092 = vmatpush1.msra.mxu0 %v4924
    %5093 = vmatprep.subr.mxu0 %v4927
    %5094 = vmatpush1.msra.mxu0 %v4926
    %5095 = vmatprep.subr.mxu0 %v4929
    %5096 = vmatpush1.msra.mxu0 %v4928
    %5097 = vmatprep.subr.mxu0 %v4931
    %5098 = vmatpush1.msra.mxu0 %v4930
    %5099 = vmatprep.subr.mxu0 %v4933
    %5100 = vmatpush1.msra.mxu0 %v4932
    %5101 = vmatprep.mubr.f32.mxu0 %v4804
    %5102 = vmatmul.mubr.f32.gmra.mrb[0].mxu0 %v4803
    %v5103 = vpop.f32.mrb[0].mxu0
    %v5104 = vadd.f32 %v5033, %v5103
    %v5105 = vpop.f32.mrb[0].mxu0
    %v5106 = vadd.f32 %v5035, %v5105
    %5107 = vdwg.mxu0
    %5108 = vmatprep.subr.mxu0 %v4935
    %5109 = vmatpush1.msra.mxu0 %v4934
    %5110 = vmatprep.subr.mxu0 %v4937
    %5111 = vmatpush1.msra.mxu0 %v4936
    %5112 = vmatprep.subr.mxu0 %v4939
    %5113 = vmatpush1.msra.mxu0 %v4938
    %5114 = vmatprep.subr.mxu0 %v4941
    %5115 = vmatpush1.msra.mxu0 %v4940
    %5116 = vmatprep.subr.mxu0 %v4943
    %5117 = vmatpush1.msra.mxu0 %v4942
    %5118 = vmatprep.subr.mxu0 %v4945
    %5119 = vmatpush1.msra.mxu0 %v4944
    %5120 = vmatprep.subr.mxu0 %v4947
    %5121 = vmatpush1.msra.mxu0 %v4946
    %5122 = vmatprep.subr.mxu0 %v4949
    %5123 = vmatpush1.msra.mxu0 %v4948
    %5124 = vmatprep.subr.mxu0 %v4951
    %5125 = vmatpush1.msra.mxu0 %v4950
    %5126 = vmatprep.subr.mxu0 %v4953
    %5127 = vmatpush1.msra.mxu0 %v4952
    %5128 = vmatprep.subr.mxu0 %v4955
    %5129 = vmatpush1.msra.mxu0 %v4954
    %5130 = vmatprep.subr.mxu0 %v4957
    %5131 = vmatpush1.msra.mxu0 %v4956
    %5132 = vmatprep.subr.mxu0 %v4959
    %5133 = vmatpush1.msra.mxu0 %v4958
    %5134 = vmatprep.subr.mxu0 %v4961
    %5135 = vmatpush1.msra.mxu0 %v4960
    %5136 = vmatprep.subr.mxu0 %v4963
    %5137 = vmatpush1.msra.mxu0 %v4962
    %5138 = vmatprep.subr.mxu0 %v4965
    %5139 = vmatpush1.msra.mxu0 %v4964
    %5140 = vmatprep.subr.mxu0 0.0
    %5141 = vmatpush1.msra.mxu0 0.0
    %5142 = vmatprep.subr.mxu0 0.0
    %5143 = vmatpush1.msra.mxu0 0.0
    %5144 = vmatprep.subr.mxu0 0.0
    %5145 = vmatpush1.msra.mxu0 0.0
    %5146 = vmatprep.subr.mxu0 0.0
    %5147 = vmatpush1.msra.mxu0 0.0
    %5148 = vmatprep.subr.mxu0 0.0
    %5149 = vmatpush1.msra.mxu0 0.0
    %5150 = vmatprep.subr.mxu0 0.0
    %5151 = vmatpush1.msra.mxu0 0.0
    %5152 = vmatprep.subr.mxu0 0.0
    %5153 = vmatpush1.msra.mxu0 0.0
    %5154 = vmatprep.subr.mxu0 0.0
    %5155 = vmatpush1.msra.mxu0 0.0
    %5156 = vmatprep.subr.mxu0 0.0
    %5157 = vmatpush1.msra.mxu0 0.0
    %5158 = vmatprep.subr.mxu0 0.0
    %5159 = vmatpush1.msra.mxu0 0.0
    %5160 = vmatprep.subr.mxu0 0.0
    %5161 = vmatpush1.msra.mxu0 0.0
    %5162 = vmatprep.subr.mxu0 0.0
    %5163 = vmatpush1.msra.mxu0 0.0
    %5164 = vmatprep.subr.mxu0 0.0
    %5165 = vmatpush1.msra.mxu0 0.0
    %5166 = vmatprep.subr.mxu0 0.0
    %5167 = vmatpush1.msra.mxu0 0.0
    %5168 = vmatprep.subr.mxu0 0.0
    %5169 = vmatpush1.msra.mxu0 0.0
    %5170 = vmatprep.subr.mxu0 0.0
    %5171 = vmatpush1.msra.mxu0 0.0
    %5172 = vmatprep.mubr.f32.mxu0 0.0
    %5173 = vmatmul.mubr.f32.gmra.mrb[0].mxu0 %v4805
    %v5174 = vpop.f32.mrb[0].mxu0
    %v5175 = vadd.f32 %v5104, %v5174
    %v5176 = vpop.f32.mrb[0].mxu0
    %v5177 = vadd.f32 %v5106, %v5176
    %5178 = vdwg.mxu0
    %v5179 = vmax.f32 %v5175, 0.0
    %v5180 = vmax.f32 %v5177, 0.0
    %5181 = vst [vmem:[#allocation2 + $0xc0] sm:$0xff] %v5179
    %5182 = vst [vmem:[#allocation2 + $0xc8] sm:$0xff] %v5180
    %v5183 = vld [vmem:[#allocation13] sm:$0x3]
    %v5185 = vlaneseq
    %v5186 = vshrl.u32 %v5185, 7
    %v5187 = vsub.s32 0, %v5186
    %v5188 = vrot.slane %v5183, %v5187
    %v5189 = vlaneseq
    %v5190 = vshrl.u32 %v5189, 7
    %v5191 = vsub.s32 1, %v5190
    %v5192 = vrot.slane %v5183, %v5191
    %v5195 = vld [vmem:[#allocation2] sm:$0xff]
    %v5196 = vld [vmem:[#allocation2 + $0x8] sm:$0xff]
    %v5197 = vld [vmem:[#allocation2 + $0x10] sm:$0xff]
    %v5198 = vld [vmem:[#allocation2 + $0x18] sm:$0xff]
    %v5199 = vld [vmem:[#allocation2 + $0x20] sm:$0xff]
    %v5200 = vld [vmem:[#allocation2 + $0x28] sm:$0xff]
    %v5201 = vld [vmem:[#allocation2 + $0x30] sm:$0xff]
    %v5202 = vld [vmem:[#allocation2 + $0x38] sm:$0xff]
    %v5203 = vld [vmem:[#allocation2 + $0x40] sm:$0xff]
    %v5204 = vld [vmem:[#allocation2 + $0x48] sm:$0xff]
    %v5205 = vld [vmem:[#allocation12] sm:$0xff]
    %v5206 = vld [vmem:[#allocation12 + $0x8] sm:$0xff]
    %v5207 = vld [vmem:[#allocation12 + $0x10] sm:$0xff]
    %v5208 = vld [vmem:[#allocation12 + $0x18] sm:$0xff]
    %v5209 = vld [vmem:[#allocation12 + $0x20] sm:$0xff]
    %v5210 = vld [vmem:[#allocation12 + $0x28] sm:$0xff]
    %v5211 = vld [vmem:[#allocation12 + $0x30] sm:$0xff]
    %v5212 = vld [vmem:[#allocation12 + $0x38] sm:$0xff]
    %v5213 = vld [vmem:[#allocation12 + $0x40] sm:$0xff]
    %v5214 = vld [vmem:[#allocation12 + $0x48] sm:$0xff]
    %v5215 = vld [vmem:[#allocation12 + $0x50] sm:$0xff]
    %v5216 = vld [vmem:[#allocation12 + $0x58] sm:$0xff]
    %v5217 = vld [vmem:[#allocation12 + $0x60] sm:$0xff]
    %v5218 = vld [vmem:[#allocation12 + $0x68] sm:$0xff]
    %v5219 = vld [vmem:[#allocation12 + $0x70] sm:$0xff]
    %v5220 = vld [vmem:[#allocation12 + $0x78] sm:$0xff]
    %v5221 = vld [vmem:[#allocation12 + $0x80] sm:$0xff]
    %v5222 = vld [vmem:[#allocation12 + $0x88] sm:$0xff]
    %v5223 = vld [vmem:[#allocation12 + $0x90] sm:$0xff]
    %v5224 = vld [vmem:[#allocation12 + $0x98] sm:$0xff]
    %v5225 = vld [vmem:[#allocation12 + $0xa0] sm:$0xff]
    %v5226 = vld [vmem:[#allocation12 + $0xa8] sm:$0xff]
    %v5227 = vld [vmem:[#allocation12 + $0xb0] sm:$0xff]
    %v5228 = vld [vmem:[#allocation12 + $0xb8] sm:$0xff]
    %v5229 = vld [vmem:[#allocation12 + $0xc0] sm:$0xff]
    %v5230 = vld [vmem:[#allocation12 + $0xc8] sm:$0xff]
    %v5231 = vld [vmem:[#allocation12 + $0xd0] sm:$0xff]
    %v5232 = vld [vmem:[#allocation12 + $0xd8] sm:$0xff]
    %v5233 = vld [vmem:[#allocation12 + $0xe0] sm:$0xff]
    %v5234 = vld [vmem:[#allocation12 + $0xe8] sm:$0xff]
    %v5235 = vld [vmem:[#allocation12 + $0xf0] sm:$0xff]
    %v5236 = vld [vmem:[#allocation12 + $0xf8] sm:$0xff]
    %v5237 = vld [vmem:[#allocation12 + $0x100] sm:$0xff]
    %v5238 = vld [vmem:[#allocation12 + $0x108] sm:$0xff]
    %v5239 = vld [vmem:[#allocation12 + $0x110] sm:$0xff]
    %v5240 = vld [vmem:[#allocation12 + $0x118] sm:$0xff]
    %v5241 = vld [vmem:[#allocation12 + $0x120] sm:$0xff]
    %v5242 = vld [vmem:[#allocation12 + $0x128] sm:$0xff]
    %v5243 = vld [vmem:[#allocation12 + $0x130] sm:$0xff]
    %v5244 = vld [vmem:[#allocation12 + $0x138] sm:$0xff]
    %v5245 = vld [vmem:[#allocation12 + $0x140] sm:$0xff]
    %v5246 = vld [vmem:[#allocation12 + $0x148] sm:$0xff]
    %v5247 = vld [vmem:[#allocation12 + $0x150] sm:$0xff]
    %v5248 = vld [vmem:[#allocation12 + $0x158] sm:$0xff]
    %v5249 = vld [vmem:[#allocation12 + $0x160] sm:$0xff]
    %v5250 = vld [vmem:[#allocation12 + $0x168] sm:$0xff]
    %v5251 = vld [vmem:[#allocation12 + $0x170] sm:$0xff]
    %v5252 = vld [vmem:[#allocation12 + $0x178] sm:$0xff]
    %v5253 = vld [vmem:[#allocation12 + $0x180] sm:$0xff]
    %v5254 = vld [vmem:[#allocation12 + $0x188] sm:$0xff]
    %v5255 = vld [vmem:[#allocation12 + $0x190] sm:$0xff]
    %v5256 = vld [vmem:[#allocation12 + $0x198] sm:$0xff]
    %v5257 = vld [vmem:[#allocation12 + $0x1a0] sm:$0xff]
    %v5258 = vld [vmem:[#allocation12 + $0x1a8] sm:$0xff]
    %v5259 = vld [vmem:[#allocation12 + $0x1b0] sm:$0xff]
    %v5260 = vld [vmem:[#allocation12 + $0x1b8] sm:$0xff]
    %v5261 = vld [vmem:[#allocation12 + $0x1c0] sm:$0xff]
    %v5262 = vld [vmem:[#allocation12 + $0x1c8] sm:$0xff]
    %v5263 = vld [vmem:[#allocation12 + $0x1d0] sm:$0xff]
    %v5264 = vld [vmem:[#allocation12 + $0x1d8] sm:$0xff]
    %v5265 = vld [vmem:[#allocation12 + $0x1e0] sm:$0xff]
    %v5266 = vld [vmem:[#allocation12 + $0x1e8] sm:$0xff]
    %v5267 = vld [vmem:[#allocation12 + $0x1f0] sm:$0xff]
    %v5268 = vld [vmem:[#allocation12 + $0x1f8] sm:$0xff]
    %v5269 = vld [vmem:[#allocation12 + $0x200] sm:$0xff]
    %v5270 = vld [vmem:[#allocation12 + $0x208] sm:$0xff]
    %v5271 = vld [vmem:[#allocation12 + $0x210] sm:$0xff]
    %v5272 = vld [vmem:[#allocation12 + $0x218] sm:$0xff]
    %v5273 = vld [vmem:[#allocation12 + $0x220] sm:$0xff]
    %v5274 = vld [vmem:[#allocation12 + $0x228] sm:$0xff]
    %v5275 = vld [vmem:[#allocation12 + $0x230] sm:$0xff]
    %v5276 = vld [vmem:[#allocation12 + $0x238] sm:$0xff]
    %v5277 = vld [vmem:[#allocation12 + $0x240] sm:$0xff]
    %v5278 = vld [vmem:[#allocation12 + $0x248] sm:$0xff]
    %v5279 = vld [vmem:[#allocation12 + $0x250] sm:$0xff]
    %v5280 = vld [vmem:[#allocation12 + $0x258] sm:$0xff]
    %v5281 = vld [vmem:[#allocation12 + $0x260] sm:$0xff]
    %v5282 = vld [vmem:[#allocation12 + $0x268] sm:$0xff]
    %v5283 = vld [vmem:[#allocation12 + $0x270] sm:$0xff]
    %v5284 = vld [vmem:[#allocation12 + $0x278] sm:$0xff]
    %v5285 = vld [vmem:[#allocation12 + $0x280] sm:$0xff]
    %v5286 = vld [vmem:[#allocation12 + $0x288] sm:$0xff]
    %v5287 = vld [vmem:[#allocation12 + $0x290] sm:$0xff]
    %v5288 = vld [vmem:[#allocation12 + $0x298] sm:$0xff]
    %v5289 = vld [vmem:[#allocation12 + $0x2a0] sm:$0xff]
    %v5290 = vld [vmem:[#allocation12 + $0x2a8] sm:$0xff]
    %v5291 = vld [vmem:[#allocation12 + $0x2b0] sm:$0xff]
    %v5292 = vld [vmem:[#allocation12 + $0x2b8] sm:$0xff]
    %v5293 = vld [vmem:[#allocation12 + $0x2c0] sm:$0xff]
    %v5294 = vld [vmem:[#allocation12 + $0x2c8] sm:$0xff]
    %v5295 = vld [vmem:[#allocation12 + $0x2d0] sm:$0xff]
    %v5296 = vld [vmem:[#allocation12 + $0x2d8] sm:$0xff]
    %v5297 = vld [vmem:[#allocation12 + $0x2e0] sm:$0xff]
    %v5298 = vld [vmem:[#allocation12 + $0x2e8] sm:$0xff]
    %v5299 = vld [vmem:[#allocation12 + $0x2f0] sm:$0xff]
    %v5300 = vld [vmem:[#allocation12 + $0x2f8] sm:$0xff]
    %v5301 = vld [vmem:[#allocation12 + $0x300] sm:$0xff]
    %v5302 = vld [vmem:[#allocation12 + $0x308] sm:$0xff]
    %v5303 = vld [vmem:[#allocation12 + $0x310] sm:$0xff]
    %v5304 = vld [vmem:[#allocation12 + $0x318] sm:$0xff]
    %v5305 = vld [vmem:[#allocation12 + $0x320] sm:$0xff]
    %v5306 = vld [vmem:[#allocation12 + $0x328] sm:$0xff]
    %v5307 = vld [vmem:[#allocation12 + $0x330] sm:$0xff]
    %v5308 = vld [vmem:[#allocation12 + $0x338] sm:$0xff]
    %v5309 = vld [vmem:[#allocation12 + $0x340] sm:$0xff]
    %v5310 = vld [vmem:[#allocation12 + $0x348] sm:$0xff]
    %v5311 = vld [vmem:[#allocation12 + $0x350] sm:$0xff]
    %v5312 = vld [vmem:[#allocation12 + $0x358] sm:$0xff]
    %v5313 = vld [vmem:[#allocation12 + $0x360] sm:$0xff]
    %v5314 = vld [vmem:[#allocation12 + $0x368] sm:$0xff]
    %v5315 = vld [vmem:[#allocation12 + $0x370] sm:$0xff]
    %v5316 = vld [vmem:[#allocation12 + $0x378] sm:$0xff]
    %v5317 = vld [vmem:[#allocation12 + $0x380] sm:$0xff]
    %v5318 = vld [vmem:[#allocation12 + $0x388] sm:$0xff]
    %v5319 = vld [vmem:[#allocation12 + $0x390] sm:$0xff]
    %v5320 = vld [vmem:[#allocation12 + $0x398] sm:$0xff]
    %v5321 = vld [vmem:[#allocation12 + $0x3a0] sm:$0xff]
    %v5322 = vld [vmem:[#allocation12 + $0x3a8] sm:$0xff]
    %v5323 = vld [vmem:[#allocation12 + $0x3b0] sm:$0xff]
    %v5324 = vld [vmem:[#allocation12 + $0x3b8] sm:$0xff]
    %v5325 = vld [vmem:[#allocation12 + $0x3c0] sm:$0xff]
    %v5326 = vld [vmem:[#allocation12 + $0x3c8] sm:$0xff]
    %v5327 = vld [vmem:[#allocation12 + $0x3d0] sm:$0xff]
    %v5328 = vld [vmem:[#allocation12 + $0x3d8] sm:$0xff]
    %v5329 = vld [vmem:[#allocation12 + $0x3e0] sm:$0xff]
    %v5330 = vld [vmem:[#allocation12 + $0x3e8] sm:$0xff]
    %v5331 = vld [vmem:[#allocation12 + $0x3f0] sm:$0xff]
    %v5332 = vld [vmem:[#allocation12 + $0x3f8] sm:$0xff]
    %v5333 = vld [vmem:[#allocation12 + $0x400] sm:$0xff]
    %v5334 = vld [vmem:[#allocation12 + $0x408] sm:$0xff]
    %v5335 = vld [vmem:[#allocation12 + $0x410] sm:$0xff]
    %v5336 = vld [vmem:[#allocation12 + $0x418] sm:$0xff]
    %v5337 = vld [vmem:[#allocation12 + $0x420] sm:$0xff]
    %v5338 = vld [vmem:[#allocation12 + $0x428] sm:$0xff]
    %v5339 = vld [vmem:[#allocation12 + $0x430] sm:$0xff]
    %v5340 = vld [vmem:[#allocation12 + $0x438] sm:$0xff]
    %v5341 = vld [vmem:[#allocation12 + $0x440] sm:$0xff]
    %v5342 = vld [vmem:[#allocation12 + $0x448] sm:$0xff]
    %v5343 = vld [vmem:[#allocation12 + $0x450] sm:$0xff]
    %v5344 = vld [vmem:[#allocation12 + $0x458] sm:$0xff]
    %v5345 = vld [vmem:[#allocation12 + $0x460] sm:$0xff]
    %v5346 = vld [vmem:[#allocation12 + $0x468] sm:$0xff]
    %v5347 = vld [vmem:[#allocation12 + $0x470] sm:$0xff]
    %v5348 = vld [vmem:[#allocation12 + $0x478] sm:$0xff]
    %v5349 = vld [vmem:[#allocation12 + $0x480] sm:$0xff]
    %v5350 = vld [vmem:[#allocation12 + $0x488] sm:$0xff]
    %v5351 = vld [vmem:[#allocation12 + $0x490] sm:$0xff]
    %v5352 = vld [vmem:[#allocation12 + $0x498] sm:$0xff]
    %v5353 = vld [vmem:[#allocation12 + $0x4a0] sm:$0xff]
    %v5354 = vld [vmem:[#allocation12 + $0x4a8] sm:$0xff]
    %v5355 = vld [vmem:[#allocation12 + $0x4b0] sm:$0xff]
    %v5356 = vld [vmem:[#allocation12 + $0x4b8] sm:$0xff]
    %v5357 = vld [vmem:[#allocation12 + $0x4c0] sm:$0xff]
    %v5358 = vld [vmem:[#allocation12 + $0x4c8] sm:$0xff]
    %v5359 = vld [vmem:[#allocation12 + $0x4d0] sm:$0xff]
    %v5360 = vld [vmem:[#allocation12 + $0x4d8] sm:$0xff]
    %v5361 = vld [vmem:[#allocation12 + $0x4e0] sm:$0xff]
    %v5362 = vld [vmem:[#allocation12 + $0x4e8] sm:$0xff]
    %v5363 = vld [vmem:[#allocation12 + $0x4f0] sm:$0xff]
    %v5364 = vld [vmem:[#allocation12 + $0x4f8] sm:$0xff]
    %v5365 = vld [vmem:[#allocation12 + $0x500] sm:$0xff]
    %v5366 = vld [vmem:[#allocation12 + $0x508] sm:$0xff]
    %v5367 = vld [vmem:[#allocation12 + $0x510] sm:$0xff]
    %v5368 = vld [vmem:[#allocation12 + $0x518] sm:$0xff]
    %v5369 = vld [vmem:[#allocation12 + $0x520] sm:$0xff]
    %v5370 = vld [vmem:[#allocation12 + $0x528] sm:$0xff]
    %v5371 = vld [vmem:[#allocation12 + $0x530] sm:$0xff]
    %v5372 = vld [vmem:[#allocation12 + $0x538] sm:$0xff]
    %v5373 = vld [vmem:[#allocation12 + $0x540] sm:$0xff]
    %v5374 = vld [vmem:[#allocation12 + $0x548] sm:$0xff]
    %v5375 = vld [vmem:[#allocation12 + $0x550] sm:$0xff]
    %v5376 = vld [vmem:[#allocation12 + $0x558] sm:$0xff]
    %v5377 = vld [vmem:[#allocation12 + $0x560] sm:$0xff]
    %v5378 = vld [vmem:[#allocation12 + $0x568] sm:$0xff]
    %v5379 = vld [vmem:[#allocation12 + $0x570] sm:$0xff]
    %v5380 = vld [vmem:[#allocation12 + $0x578] sm:$0xff]
    %v5381 = vld [vmem:[#allocation12 + $0x580] sm:$0xff]
    %v5382 = vld [vmem:[#allocation12 + $0x588] sm:$0xff]
    %v5383 = vld [vmem:[#allocation12 + $0x590] sm:$0xff]
    %v5384 = vld [vmem:[#allocation12 + $0x598] sm:$0xff]
    %v5385 = vld [vmem:[#allocation12 + $0x5a0] sm:$0xff]
    %v5386 = vld [vmem:[#allocation12 + $0x5a8] sm:$0xff]
    %v5387 = vld [vmem:[#allocation12 + $0x5b0] sm:$0xff]
    %v5388 = vld [vmem:[#allocation12 + $0x5b8] sm:$0xff]
    %v5389 = vld [vmem:[#allocation12 + $0x5c0] sm:$0xff]
    %v5390 = vld [vmem:[#allocation12 + $0x5c8] sm:$0xff]
    %v5391 = vld [vmem:[#allocation12 + $0x5d0] sm:$0xff]
    %v5392 = vld [vmem:[#allocation12 + $0x5d8] sm:$0xff]
    %v5393 = vld [vmem:[#allocation12 + $0x5e0] sm:$0xff]
    %v5394 = vld [vmem:[#allocation12 + $0x5e8] sm:$0xff]
    %v5395 = vld [vmem:[#allocation12 + $0x5f0] sm:$0xff]
    %v5396 = vld [vmem:[#allocation12 + $0x5f8] sm:$0xff]
    %v5397 = vld [vmem:[#allocation12 + $0x600] sm:$0xff]
    %v5398 = vld [vmem:[#allocation12 + $0x608] sm:$0xff]
    %v5399 = vld [vmem:[#allocation12 + $0x610] sm:$0xff]
    %v5400 = vld [vmem:[#allocation12 + $0x618] sm:$0xff]
    %v5401 = vld [vmem:[#allocation12 + $0x620] sm:$0xff]
    %v5402 = vld [vmem:[#allocation12 + $0x628] sm:$0xff]
    %v5403 = vld [vmem:[#allocation12 + $0x630] sm:$0xff]
    %v5404 = vld [vmem:[#allocation12 + $0x638] sm:$0xff]
    %v5405 = vld [vmem:[#allocation12 + $0x640] sm:$0xff]
    %v5406 = vld [vmem:[#allocation12 + $0x648] sm:$0xff]
    %v5407 = vld [vmem:[#allocation12 + $0x650] sm:$0xff]
    %v5408 = vld [vmem:[#allocation12 + $0x658] sm:$0xff]
    %v5409 = vld [vmem:[#allocation12 + $0x660] sm:$0xff]
    %v5410 = vld [vmem:[#allocation12 + $0x668] sm:$0xff]
    %v5411 = vld [vmem:[#allocation12 + $0x670] sm:$0xff]
    %v5412 = vld [vmem:[#allocation12 + $0x678] sm:$0xff]
    %v5413 = vld [vmem:[#allocation12 + $0x680] sm:$0xff]
    %v5414 = vld [vmem:[#allocation12 + $0x688] sm:$0xff]
    %v5415 = vld [vmem:[#allocation12 + $0x690] sm:$0xff]
    %v5416 = vld [vmem:[#allocation12 + $0x698] sm:$0xff]
    %v5417 = vld [vmem:[#allocation12 + $0x6a0] sm:$0xff]
    %v5418 = vld [vmem:[#allocation12 + $0x6a8] sm:$0xff]
    %v5419 = vld [vmem:[#allocation12 + $0x6b0] sm:$0xff]
    %v5420 = vld [vmem:[#allocation12 + $0x6b8] sm:$0xff]
    %v5421 = vld [vmem:[#allocation12 + $0x6c0] sm:$0xff]
    %v5422 = vld [vmem:[#allocation12 + $0x6c8] sm:$0xff]
    %v5423 = vld [vmem:[#allocation12 + $0x6d0] sm:$0xff]
    %v5424 = vld [vmem:[#allocation12 + $0x6d8] sm:$0xff]
    %v5425 = vld [vmem:[#allocation12 + $0x6e0] sm:$0xff]
    %v5426 = vld [vmem:[#allocation12 + $0x6e8] sm:$0xff]
    %v5427 = vld [vmem:[#allocation12 + $0x6f0] sm:$0xff]
    %v5428 = vld [vmem:[#allocation12 + $0x6f8] sm:$0xff]
    %v5429 = vld [vmem:[#allocation12 + $0x700] sm:$0xff]
    %v5430 = vld [vmem:[#allocation12 + $0x708] sm:$0xff]
    %v5431 = vld [vmem:[#allocation12 + $0x710] sm:$0xff]
    %v5432 = vld [vmem:[#allocation12 + $0x718] sm:$0xff]
    %v5433 = vld [vmem:[#allocation12 + $0x720] sm:$0xff]
    %v5434 = vld [vmem:[#allocation12 + $0x728] sm:$0xff]
    %v5435 = vld [vmem:[#allocation12 + $0x730] sm:$0xff]
    %v5436 = vld [vmem:[#allocation12 + $0x738] sm:$0xff]
    %v5437 = vld [vmem:[#allocation12 + $0x740] sm:$0xff]
    %v5438 = vld [vmem:[#allocation12 + $0x748] sm:$0xff]
    %v5439 = vld [vmem:[#allocation12 + $0x750] sm:$0xff]
    %v5440 = vld [vmem:[#allocation12 + $0x758] sm:$0xff]
    %v5441 = vld [vmem:[#allocation12 + $0x760] sm:$0xff]
    %v5442 = vld [vmem:[#allocation12 + $0x768] sm:$0xff]
    %v5443 = vld [vmem:[#allocation12 + $0x770] sm:$0xff]
    %v5444 = vld [vmem:[#allocation12 + $0x778] sm:$0xff]
    %v5445 = vld [vmem:[#allocation12 + $0x780] sm:$0xff]
    %v5446 = vld [vmem:[#allocation12 + $0x788] sm:$0xff]
    %v5447 = vld [vmem:[#allocation12 + $0x790] sm:$0xff]
    %v5448 = vld [vmem:[#allocation12 + $0x798] sm:$0xff]
    %v5449 = vld [vmem:[#allocation12 + $0x7a0] sm:$0xff]
    %v5450 = vld [vmem:[#allocation12 + $0x7a8] sm:$0xff]
    %v5451 = vld [vmem:[#allocation12 + $0x7b0] sm:$0xff]
    %v5452 = vld [vmem:[#allocation12 + $0x7b8] sm:$0xff]
    %v5453 = vld [vmem:[#allocation12 + $0x7c0] sm:$0xff]
    %v5454 = vld [vmem:[#allocation12 + $0x7c8] sm:$0xff]
    %v5455 = vld [vmem:[#allocation12 + $0x7d0] sm:$0xff]
    %v5456 = vld [vmem:[#allocation12 + $0x7d8] sm:$0xff]
    %v5457 = vld [vmem:[#allocation12 + $0x7e0] sm:$0xff]
    %v5458 = vld [vmem:[#allocation12 + $0x7e8] sm:$0xff]
    %v5459 = vld [vmem:[#allocation12 + $0x7f0] sm:$0xff]
    %v5460 = vld [vmem:[#allocation12 + $0x7f8] sm:$0xff]
    %v5461 = vld [vmem:[#allocation12 + $0x800] sm:$0xff]
    %v5462 = vld [vmem:[#allocation12 + $0x808] sm:$0xff]
    %v5463 = vld [vmem:[#allocation12 + $0x810] sm:$0xff]
    %v5464 = vld [vmem:[#allocation12 + $0x818] sm:$0xff]
    %v5465 = vld [vmem:[#allocation12 + $0x820] sm:$0xff]
    %v5466 = vld [vmem:[#allocation12 + $0x828] sm:$0xff]
    %v5467 = vld [vmem:[#allocation12 + $0x830] sm:$0xff]
    %v5468 = vld [vmem:[#allocation12 + $0x838] sm:$0xff]
    %v5469 = vld [vmem:[#allocation12 + $0x840] sm:$0xff]
    %v5470 = vld [vmem:[#allocation12 + $0x848] sm:$0xff]
    %v5471 = vld [vmem:[#allocation12 + $0x850] sm:$0xff]
    %v5472 = vld [vmem:[#allocation12 + $0x858] sm:$0xff]
    %v5473 = vld [vmem:[#allocation12 + $0x860] sm:$0xff]
    %v5474 = vld [vmem:[#allocation12 + $0x868] sm:$0xff]
    %v5475 = vld [vmem:[#allocation12 + $0x870] sm:$0xff]
    %v5476 = vld [vmem:[#allocation12 + $0x878] sm:$0xff]
    %v5477 = vld [vmem:[#allocation12 + $0x880] sm:$0xff]
    %v5478 = vld [vmem:[#allocation12 + $0x888] sm:$0xff]
    %v5479 = vld [vmem:[#allocation12 + $0x890] sm:$0xff]
    %v5480 = vld [vmem:[#allocation12 + $0x898] sm:$0xff]
    %v5481 = vld [vmem:[#allocation12 + $0x8a0] sm:$0xff]
    %v5482 = vld [vmem:[#allocation12 + $0x8a8] sm:$0xff]
    %v5483 = vld [vmem:[#allocation12 + $0x8b0] sm:$0xff]
    %v5484 = vld [vmem:[#allocation12 + $0x8b8] sm:$0xff]
    %v5485 = vld [vmem:[#allocation12 + $0x8c0] sm:$0xff]
    %v5486 = vld [vmem:[#allocation12 + $0x8c8] sm:$0xff]
    %v5487 = vld [vmem:[#allocation12 + $0x8d0] sm:$0xff]
    %v5488 = vld [vmem:[#allocation12 + $0x8d8] sm:$0xff]
    %v5489 = vld [vmem:[#allocation12 + $0x8e0] sm:$0xff]
    %v5490 = vld [vmem:[#allocation12 + $0x8e8] sm:$0xff]
    %v5491 = vld [vmem:[#allocation12 + $0x8f0] sm:$0xff]
    %v5492 = vld [vmem:[#allocation12 + $0x8f8] sm:$0xff]
    %v5493 = vld [vmem:[#allocation12 + $0x900] sm:$0xff]
    %v5494 = vld [vmem:[#allocation12 + $0x908] sm:$0xff]
    %v5495 = vld [vmem:[#allocation12 + $0x910] sm:$0xff]
    %v5496 = vld [vmem:[#allocation12 + $0x918] sm:$0xff]
    %v5497 = vld [vmem:[#allocation12 + $0x920] sm:$0xff]
    %v5498 = vld [vmem:[#allocation12 + $0x928] sm:$0xff]
    %v5499 = vld [vmem:[#allocation12 + $0x930] sm:$0xff]
    %v5500 = vld [vmem:[#allocation12 + $0x938] sm:$0xff]
    %v5501 = vld [vmem:[#allocation12 + $0x940] sm:$0xff]
    %v5502 = vld [vmem:[#allocation12 + $0x948] sm:$0xff]
    %v5503 = vld [vmem:[#allocation12 + $0x950] sm:$0xff]
    %v5504 = vld [vmem:[#allocation12 + $0x958] sm:$0xff]
    %v5505 = vld [vmem:[#allocation12 + $0x960] sm:$0xff]
    %v5506 = vld [vmem:[#allocation12 + $0x968] sm:$0xff]
    %v5507 = vld [vmem:[#allocation12 + $0x970] sm:$0xff]
    %v5508 = vld [vmem:[#allocation12 + $0x978] sm:$0xff]
    %v5509 = vld [vmem:[#allocation12 + $0x980] sm:$0xff]
    %v5510 = vld [vmem:[#allocation12 + $0x988] sm:$0xff]
    %v5511 = vld [vmem:[#allocation12 + $0x990] sm:$0xff]
    %v5512 = vld [vmem:[#allocation12 + $0x998] sm:$0xff]
    %v5513 = vld [vmem:[#allocation12 + $0x9a0] sm:$0xff]
    %v5514 = vld [vmem:[#allocation12 + $0x9a8] sm:$0xff]
    %v5515 = vld [vmem:[#allocation12 + $0x9b0] sm:$0xff]
    %v5516 = vld [vmem:[#allocation12 + $0x9b8] sm:$0xff]
    %v5517 = vld [vmem:[#allocation12 + $0x9c0] sm:$0xff]
    %v5518 = vld [vmem:[#allocation12 + $0x9c8] sm:$0xff]
    %v5519 = vld [vmem:[#allocation12 + $0x9d0] sm:$0xff]
    %v5520 = vld [vmem:[#allocation12 + $0x9d8] sm:$0xff]
    %v5521 = vld [vmem:[#allocation12 + $0x9e0] sm:$0xff]
    %v5522 = vld [vmem:[#allocation12 + $0x9e8] sm:$0xff]
    %v5523 = vld [vmem:[#allocation12 + $0x9f0] sm:$0xff]
    %v5524 = vld [vmem:[#allocation12 + $0x9f8] sm:$0xff]
    %5525 = vmatprep.subr.mxu0 %v5206
    %5526 = vmatpush1.msra.mxu0 %v5205
    %5527 = vmatprep.subr.mxu0 %v5208
    %5528 = vmatpush1.msra.mxu0 %v5207
    %5529 = vmatprep.subr.mxu0 %v5210
    %5530 = vmatpush1.msra.mxu0 %v5209
    %5531 = vmatprep.subr.mxu0 %v5212
    %5532 = vmatpush1.msra.mxu0 %v5211
    %5533 = vmatprep.subr.mxu0 %v5214
    %5534 = vmatpush1.msra.mxu0 %v5213
    %5535 = vmatprep.subr.mxu0 %v5216
    %5536 = vmatpush1.msra.mxu0 %v5215
    %5537 = vmatprep.subr.mxu0 %v5218
    %5538 = vmatpush1.msra.mxu0 %v5217
    %5539 = vmatprep.subr.mxu0 %v5220
    %5540 = vmatpush1.msra.mxu0 %v5219
    %5541 = vmatprep.subr.mxu0 %v5222
    %5542 = vmatpush1.msra.mxu0 %v5221
    %5543 = vmatprep.subr.mxu0 %v5224
    %5544 = vmatpush1.msra.mxu0 %v5223
    %5545 = vmatprep.subr.mxu0 %v5226
    %5546 = vmatpush1.msra.mxu0 %v5225
    %5547 = vmatprep.subr.mxu0 %v5228
    %5548 = vmatpush1.msra.mxu0 %v5227
    %5549 = vmatprep.subr.mxu0 %v5230
    %5550 = vmatpush1.msra.mxu0 %v5229
    %5551 = vmatprep.subr.mxu0 %v5232
    %5552 = vmatpush1.msra.mxu0 %v5231
    %5553 = vmatprep.subr.mxu0 %v5234
    %5554 = vmatpush1.msra.mxu0 %v5233
    %5555 = vmatprep.subr.mxu0 %v5236
    %5556 = vmatpush1.msra.mxu0 %v5235
    %5557 = vmatprep.subr.mxu0 %v5238
    %5558 = vmatpush1.msra.mxu0 %v5237
    %5559 = vmatprep.subr.mxu0 %v5240
    %5560 = vmatpush1.msra.mxu0 %v5239
    %5561 = vmatprep.subr.mxu0 %v5242
    %5562 = vmatpush1.msra.mxu0 %v5241
    %5563 = vmatprep.subr.mxu0 %v5244
    %5564 = vmatpush1.msra.mxu0 %v5243
    %5565 = vmatprep.subr.mxu0 %v5246
    %5566 = vmatpush1.msra.mxu0 %v5245
    %5567 = vmatprep.subr.mxu0 %v5248
    %5568 = vmatpush1.msra.mxu0 %v5247
    %5569 = vmatprep.subr.mxu0 %v5250
    %5570 = vmatpush1.msra.mxu0 %v5249
    %5571 = vmatprep.subr.mxu0 %v5252
    %5572 = vmatpush1.msra.mxu0 %v5251
    %5573 = vmatprep.subr.mxu0 %v5254
    %5574 = vmatpush1.msra.mxu0 %v5253
    %5575 = vmatprep.subr.mxu0 %v5256
    %5576 = vmatpush1.msra.mxu0 %v5255
    %5577 = vmatprep.subr.mxu0 %v5258
    %5578 = vmatpush1.msra.mxu0 %v5257
    %5579 = vmatprep.subr.mxu0 %v5260
    %5580 = vmatpush1.msra.mxu0 %v5259
    %5581 = vmatprep.subr.mxu0 %v5262
    %5582 = vmatpush1.msra.mxu0 %v5261
    %5583 = vmatprep.subr.mxu0 %v5264
    %5584 = vmatpush1.msra.mxu0 %v5263
    %5585 = vmatprep.subr.mxu0 %v5266
    %5586 = vmatpush1.msra.mxu0 %v5265
    %5587 = vmatprep.subr.mxu0 %v5268
    %5588 = vmatpush1.msra.mxu0 %v5267
    %5589 = vmatprep.mubr.f32.mxu0 %v5196
    %5590 = vmatmul.mubr.f32.gmra.mrb[0].mxu0 %v5195
    %v5591 = vpop.f32.mrb[0].mxu0
    %v5592 = vadd.f32 %v5188, %v5591
    %v5593 = vpop.f32.mrb[0].mxu0
    %v5594 = vadd.f32 %v5192, %v5593
    %5595 = vdwg.mxu0
    %5596 = vmatprep.subr.mxu0 %v5270
    %5597 = vmatpush1.msra.mxu0 %v5269
    %5598 = vmatprep.subr.mxu0 %v5272
    %5599 = vmatpush1.msra.mxu0 %v5271
    %5600 = vmatprep.subr.mxu0 %v5274
    %5601 = vmatpush1.msra.mxu0 %v5273
    %5602 = vmatprep.subr.mxu0 %v5276
    %5603 = vmatpush1.msra.mxu0 %v5275
    %5604 = vmatprep.subr.mxu0 %v5278
    %5605 = vmatpush1.msra.mxu0 %v5277
    %5606 = vmatprep.subr.mxu0 %v5280
    %5607 = vmatpush1.msra.mxu0 %v5279
    %5608 = vmatprep.subr.mxu0 %v5282
    %5609 = vmatpush1.msra.mxu0 %v5281
    %5610 = vmatprep.subr.mxu0 %v5284
    %5611 = vmatpush1.msra.mxu0 %v5283
    %5612 = vmatprep.subr.mxu0 %v5286
    %5613 = vmatpush1.msra.mxu0 %v5285
    %5614 = vmatprep.subr.mxu0 %v5288
    %5615 = vmatpush1.msra.mxu0 %v5287
    %5616 = vmatprep.subr.mxu0 %v5290
    %5617 = vmatpush1.msra.mxu0 %v5289
    %5618 = vmatprep.subr.mxu0 %v5292
    %5619 = vmatpush1.msra.mxu0 %v5291
    %5620 = vmatprep.subr.mxu0 %v5294
    %5621 = vmatpush1.msra.mxu0 %v5293
    %5622 = vmatprep.subr.mxu0 %v5296
    %5623 = vmatpush1.msra.mxu0 %v5295
    %5624 = vmatprep.subr.mxu0 %v5298
    %5625 = vmatpush1.msra.mxu0 %v5297
    %5626 = vmatprep.subr.mxu0 %v5300
    %5627 = vmatpush1.msra.mxu0 %v5299
    %5628 = vmatprep.subr.mxu0 %v5302
    %5629 = vmatpush1.msra.mxu0 %v5301
    %5630 = vmatprep.subr.mxu0 %v5304
    %5631 = vmatpush1.msra.mxu0 %v5303
    %5632 = vmatprep.subr.mxu0 %v5306
    %5633 = vmatpush1.msra.mxu0 %v5305
    %5634 = vmatprep.subr.mxu0 %v5308
    %5635 = vmatpush1.msra.mxu0 %v5307
    %5636 = vmatprep.subr.mxu0 %v5310
    %5637 = vmatpush1.msra.mxu0 %v5309
    %5638 = vmatprep.subr.mxu0 %v5312
    %5639 = vmatpush1.msra.mxu0 %v5311
    %5640 = vmatprep.subr.mxu0 %v5314
    %5641 = vmatpush1.msra.mxu0 %v5313
    %5642 = vmatprep.subr.mxu0 %v5316
    %5643 = vmatpush1.msra.mxu0 %v5315
    %5644 = vmatprep.subr.mxu0 %v5318
    %5645 = vmatpush1.msra.mxu0 %v5317
    %5646 = vmatprep.subr.mxu0 %v5320
    %5647 = vmatpush1.msra.mxu0 %v5319
    %5648 = vmatprep.subr.mxu0 %v5322
    %5649 = vmatpush1.msra.mxu0 %v5321
    %5650 = vmatprep.subr.mxu0 %v5324
    %5651 = vmatpush1.msra.mxu0 %v5323
    %5652 = vmatprep.subr.mxu0 %v5326
    %5653 = vmatpush1.msra.mxu0 %v5325
    %5654 = vmatprep.subr.mxu0 %v5328
    %5655 = vmatpush1.msra.mxu0 %v5327
    %5656 = vmatprep.subr.mxu0 %v5330
    %5657 = vmatpush1.msra.mxu0 %v5329
    %5658 = vmatprep.subr.mxu0 %v5332
    %5659 = vmatpush1.msra.mxu0 %v5331
    %5660 = vmatprep.mubr.f32.mxu0 %v5198
    %5661 = vmatmul.mubr.f32.gmra.mrb[0].mxu0 %v5197
    %v5662 = vpop.f32.mrb[0].mxu0
    %v5663 = vadd.f32 %v5592, %v5662
    %v5664 = vpop.f32.mrb[0].mxu0
    %v5665 = vadd.f32 %v5594, %v5664
    %5666 = vdwg.mxu0
    %5667 = vmatprep.subr.mxu0 %v5334
    %5668 = vmatpush1.msra.mxu0 %v5333
    %5669 = vmatprep.subr.mxu0 %v5336
    %5670 = vmatpush1.msra.mxu0 %v5335
    %5671 = vmatprep.subr.mxu0 %v5338
    %5672 = vmatpush1.msra.mxu0 %v5337
    %5673 = vmatprep.subr.mxu0 %v5340
    %5674 = vmatpush1.msra.mxu0 %v5339
    %5675 = vmatprep.subr.mxu0 %v5342
    %5676 = vmatpush1.msra.mxu0 %v5341
    %5677 = vmatprep.subr.mxu0 %v5344
    %5678 = vmatpush1.msra.mxu0 %v5343
    %5679 = vmatprep.subr.mxu0 %v5346
    %5680 = vmatpush1.msra.mxu0 %v5345
    %5681 = vmatprep.subr.mxu0 %v5348
    %5682 = vmatpush1.msra.mxu0 %v5347
    %5683 = vmatprep.subr.mxu0 %v5350
    %5684 = vmatpush1.msra.mxu0 %v5349
    %5685 = vmatprep.subr.mxu0 %v5352
    %5686 = vmatpush1.msra.mxu0 %v5351
    %5687 = vmatprep.subr.mxu0 %v5354
    %5688 = vmatpush1.msra.mxu0 %v5353
    %5689 = vmatprep.subr.mxu0 %v5356
    %5690 = vmatpush1.msra.mxu0 %v5355
    %5691 = vmatprep.subr.mxu0 %v5358
    %5692 = vmatpush1.msra.mxu0 %v5357
    %5693 = vmatprep.subr.mxu0 %v5360
    %5694 = vmatpush1.msra.mxu0 %v5359
    %5695 = vmatprep.subr.mxu0 %v5362
    %5696 = vmatpush1.msra.mxu0 %v5361
    %5697 = vmatprep.subr.mxu0 %v5364
    %5698 = vmatpush1.msra.mxu0 %v5363
    %5699 = vmatprep.subr.mxu0 %v5366
    %5700 = vmatpush1.msra.mxu0 %v5365
    %5701 = vmatprep.subr.mxu0 %v5368
    %5702 = vmatpush1.msra.mxu0 %v5367
    %5703 = vmatprep.subr.mxu0 %v5370
    %5704 = vmatpush1.msra.mxu0 %v5369
    %5705 = vmatprep.subr.mxu0 %v5372
    %5706 = vmatpush1.msra.mxu0 %v5371
    %5707 = vmatprep.subr.mxu0 %v5374
    %5708 = vmatpush1.msra.mxu0 %v5373
    %5709 = vmatprep.subr.mxu0 %v5376
    %5710 = vmatpush1.msra.mxu0 %v5375
    %5711 = vmatprep.subr.mxu0 %v5378
    %5712 = vmatpush1.msra.mxu0 %v5377
    %5713 = vmatprep.subr.mxu0 %v5380
    %5714 = vmatpush1.msra.mxu0 %v5379
    %5715 = vmatprep.subr.mxu0 %v5382
    %5716 = vmatpush1.msra.mxu0 %v5381
    %5717 = vmatprep.subr.mxu0 %v5384
    %5718 = vmatpush1.msra.mxu0 %v5383
    %5719 = vmatprep.subr.mxu0 %v5386
    %5720 = vmatpush1.msra.mxu0 %v5385
    %5721 = vmatprep.subr.mxu0 %v5388
    %5722 = vmatpush1.msra.mxu0 %v5387
    %5723 = vmatprep.subr.mxu0 %v5390
    %5724 = vmatpush1.msra.mxu0 %v5389
    %5725 = vmatprep.subr.mxu0 %v5392
    %5726 = vmatpush1.msra.mxu0 %v5391
    %5727 = vmatprep.subr.mxu0 %v5394
    %5728 = vmatpush1.msra.mxu0 %v5393
    %5729 = vmatprep.subr.mxu0 %v5396
    %5730 = vmatpush1.msra.mxu0 %v5395
    %5731 = vmatprep.mubr.f32.mxu0 %v5200
    %5732 = vmatmul.mubr.f32.gmra.mrb[0].mxu0 %v5199
    %v5733 = vpop.f32.mrb[0].mxu0
    %v5734 = vadd.f32 %v5663, %v5733
    %v5735 = vpop.f32.mrb[0].mxu0
    %v5736 = vadd.f32 %v5665, %v5735
    %5737 = vdwg.mxu0
    %5738 = vmatprep.subr.mxu0 %v5398
    %5739 = vmatpush1.msra.mxu0 %v5397
    %5740 = vmatprep.subr.mxu0 %v5400
    %5741 = vmatpush1.msra.mxu0 %v5399
    %5742 = vmatprep.subr.mxu0 %v5402
    %5743 = vmatpush1.msra.mxu0 %v5401
    %5744 = vmatprep.subr.mxu0 %v5404
    %5745 = vmatpush1.msra.mxu0 %v5403
    %5746 = vmatprep.subr.mxu0 %v5406
    %5747 = vmatpush1.msra.mxu0 %v5405
    %5748 = vmatprep.subr.mxu0 %v5408
    %5749 = vmatpush1.msra.mxu0 %v5407
    %5750 = vmatprep.subr.mxu0 %v5410
    %5751 = vmatpush1.msra.mxu0 %v5409
    %5752 = vmatprep.subr.mxu0 %v5412
    %5753 = vmatpush1.msra.mxu0 %v5411
    %5754 = vmatprep.subr.mxu0 %v5414
    %5755 = vmatpush1.msra.mxu0 %v5413
    %5756 = vmatprep.subr.mxu0 %v5416
    %5757 = vmatpush1.msra.mxu0 %v5415
    %5758 = vmatprep.subr.mxu0 %v5418
    %5759 = vmatpush1.msra.mxu0 %v5417
    %5760 = vmatprep.subr.mxu0 %v5420
    %5761 = vmatpush1.msra.mxu0 %v5419
    %5762 = vmatprep.subr.mxu0 %v5422
    %5763 = vmatpush1.msra.mxu0 %v5421
    %5764 = vmatprep.subr.mxu0 %v5424
    %5765 = vmatpush1.msra.mxu0 %v5423
    %5766 = vmatprep.subr.mxu0 %v5426
    %5767 = vmatpush1.msra.mxu0 %v5425
    %5768 = vmatprep.subr.mxu0 %v5428
    %5769 = vmatpush1.msra.mxu0 %v5427
    %5770 = vmatprep.subr.mxu0 %v5430
    %5771 = vmatpush1.msra.mxu0 %v5429
    %5772 = vmatprep.subr.mxu0 %v5432
    %5773 = vmatpush1.msra.mxu0 %v5431
    %5774 = vmatprep.subr.mxu0 %v5434
    %5775 = vmatpush1.msra.mxu0 %v5433
    %5776 = vmatprep.subr.mxu0 %v5436
    %5777 = vmatpush1.msra.mxu0 %v5435
    %5778 = vmatprep.subr.mxu0 %v5438
    %5779 = vmatpush1.msra.mxu0 %v5437
    %5780 = vmatprep.subr.mxu0 %v5440
    %5781 = vmatpush1.msra.mxu0 %v5439
    %5782 = vmatprep.subr.mxu0 %v5442
    %5783 = vmatpush1.msra.mxu0 %v5441
    %5784 = vmatprep.subr.mxu0 %v5444
    %5785 = vmatpush1.msra.mxu0 %v5443
    %5786 = vmatprep.subr.mxu0 %v5446
    %5787 = vmatpush1.msra.mxu0 %v5445
    %5788 = vmatprep.subr.mxu0 %v5448
    %5789 = vmatpush1.msra.mxu0 %v5447
    %5790 = vmatprep.subr.mxu0 %v5450
    %5791 = vmatpush1.msra.mxu0 %v5449
    %5792 = vmatprep.subr.mxu0 %v5452
    %5793 = vmatpush1.msra.mxu0 %v5451
    %5794 = vmatprep.subr.mxu0 %v5454
    %5795 = vmatpush1.msra.mxu0 %v5453
    %5796 = vmatprep.subr.mxu0 %v5456
    %5797 = vmatpush1.msra.mxu0 %v5455
    %5798 = vmatprep.subr.mxu0 %v5458
    %5799 = vmatpush1.msra.mxu0 %v5457
    %5800 = vmatprep.subr.mxu0 %v5460
    %5801 = vmatpush1.msra.mxu0 %v5459
    %5802 = vmatprep.mubr.f32.mxu0 %v5202
    %5803 = vmatmul.mubr.f32.gmra.mrb[0].mxu0 %v5201
    %v5804 = vpop.f32.mrb[0].mxu0
    %v5805 = vadd.f32 %v5734, %v5804
    %v5806 = vpop.f32.mrb[0].mxu0
    %v5807 = vadd.f32 %v5736, %v5806
    %5808 = vdwg.mxu0
    %5809 = vmatprep.subr.mxu0 %v5462
    %5810 = vmatpush1.msra.mxu0 %v5461
    %5811 = vmatprep.subr.mxu0 %v5464
    %5812 = vmatpush1.msra.mxu0 %v5463
    %5813 = vmatprep.subr.mxu0 %v5466
    %5814 = vmatpush1.msra.mxu0 %v5465
    %5815 = vmatprep.subr.mxu0 %v5468
    %5816 = vmatpush1.msra.mxu0 %v5467
    %5817 = vmatprep.subr.mxu0 %v5470
    %5818 = vmatpush1.msra.mxu0 %v5469
    %5819 = vmatprep.subr.mxu0 %v5472
    %5820 = vmatpush1.msra.mxu0 %v5471
    %5821 = vmatprep.subr.mxu0 %v5474
    %5822 = vmatpush1.msra.mxu0 %v5473
    %5823 = vmatprep.subr.mxu0 %v5476
    %5824 = vmatpush1.msra.mxu0 %v5475
    %5825 = vmatprep.subr.mxu0 %v5478
    %5826 = vmatpush1.msra.mxu0 %v5477
    %5827 = vmatprep.subr.mxu0 %v5480
    %5828 = vmatpush1.msra.mxu0 %v5479
    %5829 = vmatprep.subr.mxu0 %v5482
    %5830 = vmatpush1.msra.mxu0 %v5481
    %5831 = vmatprep.subr.mxu0 %v5484
    %5832 = vmatpush1.msra.mxu0 %v5483
    %5833 = vmatprep.subr.mxu0 %v5486
    %5834 = vmatpush1.msra.mxu0 %v5485
    %5835 = vmatprep.subr.mxu0 %v5488
    %5836 = vmatpush1.msra.mxu0 %v5487
    %5837 = vmatprep.subr.mxu0 %v5490
    %5838 = vmatpush1.msra.mxu0 %v5489
    %5839 = vmatprep.subr.mxu0 %v5492
    %5840 = vmatpush1.msra.mxu0 %v5491
    %5841 = vmatprep.subr.mxu0 %v5494
    %5842 = vmatpush1.msra.mxu0 %v5493
    %5843 = vmatprep.subr.mxu0 %v5496
    %5844 = vmatpush1.msra.mxu0 %v5495
    %5845 = vmatprep.subr.mxu0 %v5498
    %5846 = vmatpush1.msra.mxu0 %v5497
    %5847 = vmatprep.subr.mxu0 %v5500
    %5848 = vmatpush1.msra.mxu0 %v5499
    %5849 = vmatprep.subr.mxu0 %v5502
    %5850 = vmatpush1.msra.mxu0 %v5501
    %5851 = vmatprep.subr.mxu0 %v5504
    %5852 = vmatpush1.msra.mxu0 %v5503
    %5853 = vmatprep.subr.mxu0 %v5506
    %5854 = vmatpush1.msra.mxu0 %v5505
    %5855 = vmatprep.subr.mxu0 %v5508
    %5856 = vmatpush1.msra.mxu0 %v5507
    %5857 = vmatprep.subr.mxu0 %v5510
    %5858 = vmatpush1.msra.mxu0 %v5509
    %5859 = vmatprep.subr.mxu0 %v5512
    %5860 = vmatpush1.msra.mxu0 %v5511
    %5861 = vmatprep.subr.mxu0 %v5514
    %5862 = vmatpush1.msra.mxu0 %v5513
    %5863 = vmatprep.subr.mxu0 %v5516
    %5864 = vmatpush1.msra.mxu0 %v5515
    %5865 = vmatprep.subr.mxu0 %v5518
    %5866 = vmatpush1.msra.mxu0 %v5517
    %5867 = vmatprep.subr.mxu0 %v5520
    %5868 = vmatpush1.msra.mxu0 %v5519
    %5869 = vmatprep.subr.mxu0 %v5522
    %5870 = vmatpush1.msra.mxu0 %v5521
    %5871 = vmatprep.subr.mxu0 %v5524
    %5872 = vmatpush1.msra.mxu0 %v5523
    %5873 = vmatprep.mubr.f32.mxu0 %v5204
    %5874 = vmatmul.mubr.f32.gmra.mrb[0].mxu0 %v5203
    %v5875 = vpop.f32.mrb[0].mxu0
    %v5876 = vadd.f32 %v5805, %v5875
    %v5877 = vpop.f32.mrb[0].mxu0
    %v5878 = vadd.f32 %v5807, %v5877
    %5879 = vdwg.mxu0
    %v5880 = vmax.f32 %v5876, 0.0
    %v5881 = vmax.f32 %v5878, 0.0
    %5882 = vst [vmem:[#allocation3] sm:$0xff] %v5880
    %5883 = vst [vmem:[#allocation3 + $0x8] sm:$0xff] %v5881
    %v5884 = vld [vmem:[#allocation2 + $0x20] sm:$0xff]
    %v5885 = vld [vmem:[#allocation2 + $0x28] sm:$0xff]
    %v5886 = vld [vmem:[#allocation2 + $0x30] sm:$0xff]
    %v5887 = vld [vmem:[#allocation2 + $0x38] sm:$0xff]
    %v5888 = vld [vmem:[#allocation2 + $0x40] sm:$0xff]
    %v5889 = vld [vmem:[#allocation2 + $0x48] sm:$0xff]
    %v5890 = vld [vmem:[#allocation2 + $0x50] sm:$0xff]
    %v5891 = vld [vmem:[#allocation2 + $0x58] sm:$0xff]
    %v5892 = vld [vmem:[#allocation2 + $0x60] sm:$0xff]
    %v5893 = vld [vmem:[#allocation2 + $0x68] sm:$0xff]
    %v5894 = vld [vmem:[#allocation12] sm:$0xff]
    %v5895 = vld [vmem:[#allocation12 + $0x8] sm:$0xff]
    %v5896 = vld [vmem:[#allocation12 + $0x10] sm:$0xff]
    %v5897 = vld [vmem:[#allocation12 + $0x18] sm:$0xff]
    %v5898 = vld [vmem:[#allocation12 + $0x20] sm:$0xff]
    %v5899 = vld [vmem:[#allocation12 + $0x28] sm:$0xff]
    %v5900 = vld [vmem:[#allocation12 + $0x30] sm:$0xff]
    %v5901 = vld [vmem:[#allocation12 + $0x38] sm:$0xff]
    %v5902 = vld [vmem:[#allocation12 + $0x40] sm:$0xff]
    %v5903 = vld [vmem:[#allocation12 + $0x48] sm:$0xff]
    %v5904 = vld [vmem:[#allocation12 + $0x50] sm:$0xff]
    %v5905 = vld [vmem:[#allocation12 + $0x58] sm:$0xff]
    %v5906 = vld [vmem:[#allocation12 + $0x60] sm:$0xff]
    %v5907 = vld [vmem:[#allocation12 + $0x68] sm:$0xff]
    %v5908 = vld [vmem:[#allocation12 + $0x70] sm:$0xff]
    %v5909 = vld [vmem:[#allocation12 + $0x78] sm:$0xff]
    %v5910 = vld [vmem:[#allocation12 + $0x80] sm:$0xff]
    %v5911 = vld [vmem:[#allocation12 + $0x88] sm:$0xff]
    %v5912 = vld [vmem:[#allocation12 + $0x90] sm:$0xff]
    %v5913 = vld [vmem:[#allocation12 + $0x98] sm:$0xff]
    %v5914 = vld [vmem:[#allocation12 + $0xa0] sm:$0xff]
    %v5915 = vld [vmem:[#allocation12 + $0xa8] sm:$0xff]
    %v5916 = vld [vmem:[#allocation12 + $0xb0] sm:$0xff]
    %v5917 = vld [vmem:[#allocation12 + $0xb8] sm:$0xff]
    %v5918 = vld [vmem:[#allocation12 + $0xc0] sm:$0xff]
    %v5919 = vld [vmem:[#allocation12 + $0xc8] sm:$0xff]
    %v5920 = vld [vmem:[#allocation12 + $0xd0] sm:$0xff]
    %v5921 = vld [vmem:[#allocation12 + $0xd8] sm:$0xff]
    %v5922 = vld [vmem:[#allocation12 + $0xe0] sm:$0xff]
    %v5923 = vld [vmem:[#allocation12 + $0xe8] sm:$0xff]
    %v5924 = vld [vmem:[#allocation12 + $0xf0] sm:$0xff]
    %v5925 = vld [vmem:[#allocation12 + $0xf8] sm:$0xff]
    %v5926 = vld [vmem:[#allocation12 + $0x100] sm:$0xff]
    %v5927 = vld [vmem:[#allocation12 + $0x108] sm:$0xff]
    %v5928 = vld [vmem:[#allocation12 + $0x110] sm:$0xff]
    %v5929 = vld [vmem:[#allocation12 + $0x118] sm:$0xff]
    %v5930 = vld [vmem:[#allocation12 + $0x120] sm:$0xff]
    %v5931 = vld [vmem:[#allocation12 + $0x128] sm:$0xff]
    %v5932 = vld [vmem:[#allocation12 + $0x130] sm:$0xff]
    %v5933 = vld [vmem:[#allocation12 + $0x138] sm:$0xff]
    %v5934 = vld [vmem:[#allocation12 + $0x140] sm:$0xff]
    %v5935 = vld [vmem:[#allocation12 + $0x148] sm:$0xff]
    %v5936 = vld [vmem:[#allocation12 + $0x150] sm:$0xff]
    %v5937 = vld [vmem:[#allocation12 + $0x158] sm:$0xff]
    %v5938 = vld [vmem:[#allocation12 + $0x160] sm:$0xff]
    %v5939 = vld [vmem:[#allocation12 + $0x168] sm:$0xff]
    %v5940 = vld [vmem:[#allocation12 + $0x170] sm:$0xff]
    %v5941 = vld [vmem:[#allocation12 + $0x178] sm:$0xff]
    %v5942 = vld [vmem:[#allocation12 + $0x180] sm:$0xff]
    %v5943 = vld [vmem:[#allocation12 + $0x188] sm:$0xff]
    %v5944 = vld [vmem:[#allocation12 + $0x190] sm:$0xff]
    %v5945 = vld [vmem:[#allocation12 + $0x198] sm:$0xff]
    %v5946 = vld [vmem:[#allocation12 + $0x1a0] sm:$0xff]
    %v5947 = vld [vmem:[#allocation12 + $0x1a8] sm:$0xff]
    %v5948 = vld [vmem:[#allocation12 + $0x1b0] sm:$0xff]
    %v5949 = vld [vmem:[#allocation12 + $0x1b8] sm:$0xff]
    %v5950 = vld [vmem:[#allocation12 + $0x1c0] sm:$0xff]
    %v5951 = vld [vmem:[#allocation12 + $0x1c8] sm:$0xff]
    %v5952 = vld [vmem:[#allocation12 + $0x1d0] sm:$0xff]
    %v5953 = vld [vmem:[#allocation12 + $0x1d8] sm:$0xff]
    %v5954 = vld [vmem:[#allocation12 + $0x1e0] sm:$0xff]
    %v5955 = vld [vmem:[#allocation12 + $0x1e8] sm:$0xff]
    %v5956 = vld [vmem:[#allocation12 + $0x1f0] sm:$0xff]
    %v5957 = vld [vmem:[#allocation12 + $0x1f8] sm:$0xff]
    %v5958 = vld [vmem:[#allocation12 + $0x200] sm:$0xff]
    %v5959 = vld [vmem:[#allocation12 + $0x208] sm:$0xff]
    %v5960 = vld [vmem:[#allocation12 + $0x210] sm:$0xff]
    %v5961 = vld [vmem:[#allocation12 + $0x218] sm:$0xff]
    %v5962 = vld [vmem:[#allocation12 + $0x220] sm:$0xff]
    %v5963 = vld [vmem:[#allocation12 + $0x228] sm:$0xff]
    %v5964 = vld [vmem:[#allocation12 + $0x230] sm:$0xff]
    %v5965 = vld [vmem:[#allocation12 + $0x238] sm:$0xff]
    %v5966 = vld [vmem:[#allocation12 + $0x240] sm:$0xff]
    %v5967 = vld [vmem:[#allocation12 + $0x248] sm:$0xff]
    %v5968 = vld [vmem:[#allocation12 + $0x250] sm:$0xff]
    %v5969 = vld [vmem:[#allocation12 + $0x258] sm:$0xff]
    %v5970 = vld [vmem:[#allocation12 + $0x260] sm:$0xff]
    %v5971 = vld [vmem:[#allocation12 + $0x268] sm:$0xff]
    %v5972 = vld [vmem:[#allocation12 + $0x270] sm:$0xff]
    %v5973 = vld [vmem:[#allocation12 + $0x278] sm:$0xff]
    %v5974 = vld [vmem:[#allocation12 + $0x280] sm:$0xff]
    %v5975 = vld [vmem:[#allocation12 + $0x288] sm:$0xff]
    %v5976 = vld [vmem:[#allocation12 + $0x290] sm:$0xff]
    %v5977 = vld [vmem:[#allocation12 + $0x298] sm:$0xff]
    %v5978 = vld [vmem:[#allocation12 + $0x2a0] sm:$0xff]
    %v5979 = vld [vmem:[#allocation12 + $0x2a8] sm:$0xff]
    %v5980 = vld [vmem:[#allocation12 + $0x2b0] sm:$0xff]
    %v5981 = vld [vmem:[#allocation12 + $0x2b8] sm:$0xff]
    %v5982 = vld [vmem:[#allocation12 + $0x2c0] sm:$0xff]
    %v5983 = vld [vmem:[#allocation12 + $0x2c8] sm:$0xff]
    %v5984 = vld [vmem:[#allocation12 + $0x2d0] sm:$0xff]
    %v5985 = vld [vmem:[#allocation12 + $0x2d8] sm:$0xff]
    %v5986 = vld [vmem:[#allocation12 + $0x2e0] sm:$0xff]
    %v5987 = vld [vmem:[#allocation12 + $0x2e8] sm:$0xff]
    %v5988 = vld [vmem:[#allocation12 + $0x2f0] sm:$0xff]
    %v5989 = vld [vmem:[#allocation12 + $0x2f8] sm:$0xff]
    %v5990 = vld [vmem:[#allocation12 + $0x300] sm:$0xff]
    %v5991 = vld [vmem:[#allocation12 + $0x308] sm:$0xff]
    %v5992 = vld [vmem:[#allocation12 + $0x310] sm:$0xff]
    %v5993 = vld [vmem:[#allocation12 + $0x318] sm:$0xff]
    %v5994 = vld [vmem:[#allocation12 + $0x320] sm:$0xff]
    %v5995 = vld [vmem:[#allocation12 + $0x328] sm:$0xff]
    %v5996 = vld [vmem:[#allocation12 + $0x330] sm:$0xff]
    %v5997 = vld [vmem:[#allocation12 + $0x338] sm:$0xff]
    %v5998 = vld [vmem:[#allocation12 + $0x340] sm:$0xff]
    %v5999 = vld [vmem:[#allocation12 + $0x348] sm:$0xff]
    %v6000 = vld [vmem:[#allocation12 + $0x350] sm:$0xff]
    %v6001 = vld [vmem:[#allocation12 + $0x358] sm:$0xff]
    %v6002 = vld [vmem:[#allocation12 + $0x360] sm:$0xff]
    %v6003 = vld [vmem:[#allocation12 + $0x368] sm:$0xff]
    %v6004 = vld [vmem:[#allocation12 + $0x370] sm:$0xff]
    %v6005 = vld [vmem:[#allocation12 + $0x378] sm:$0xff]
    %v6006 = vld [vmem:[#allocation12 + $0x380] sm:$0xff]
    %v6007 = vld [vmem:[#allocation12 + $0x388] sm:$0xff]
    %v6008 = vld [vmem:[#allocation12 + $0x390] sm:$0xff]
    %v6009 = vld [vmem:[#allocation12 + $0x398] sm:$0xff]
    %v6010 = vld [vmem:[#allocation12 + $0x3a0] sm:$0xff]
    %v6011 = vld [vmem:[#allocation12 + $0x3a8] sm:$0xff]
    %v6012 = vld [vmem:[#allocation12 + $0x3b0] sm:$0xff]
    %v6013 = vld [vmem:[#allocation12 + $0x3b8] sm:$0xff]
    %v6014 = vld [vmem:[#allocation12 + $0x3c0] sm:$0xff]
    %v6015 = vld [vmem:[#allocation12 + $0x3c8] sm:$0xff]
    %v6016 = vld [vmem:[#allocation12 + $0x3d0] sm:$0xff]
    %v6017 = vld [vmem:[#allocation12 + $0x3d8] sm:$0xff]
    %v6018 = vld [vmem:[#allocation12 + $0x3e0] sm:$0xff]
    %v6019 = vld [vmem:[#allocation12 + $0x3e8] sm:$0xff]
    %v6020 = vld [vmem:[#allocation12 + $0x3f0] sm:$0xff]
    %v6021 = vld [vmem:[#allocation12 + $0x3f8] sm:$0xff]
    %v6022 = vld [vmem:[#allocation12 + $0x400] sm:$0xff]
    %v6023 = vld [vmem:[#allocation12 + $0x408] sm:$0xff]
    %v6024 = vld [vmem:[#allocation12 + $0x410] sm:$0xff]
    %v6025 = vld [vmem:[#allocation12 + $0x418] sm:$0xff]
    %v6026 = vld [vmem:[#allocation12 + $0x420] sm:$0xff]
    %v6027 = vld [vmem:[#allocation12 + $0x428] sm:$0xff]
    %v6028 = vld [vmem:[#allocation12 + $0x430] sm:$0xff]
    %v6029 = vld [vmem:[#allocation12 + $0x438] sm:$0xff]
    %v6030 = vld [vmem:[#allocation12 + $0x440] sm:$0xff]
    %v6031 = vld [vmem:[#allocation12 + $0x448] sm:$0xff]
    %v6032 = vld [vmem:[#allocation12 + $0x450] sm:$0xff]
    %v6033 = vld [vmem:[#allocation12 + $0x458] sm:$0xff]
    %v6034 = vld [vmem:[#allocation12 + $0x460] sm:$0xff]
    %v6035 = vld [vmem:[#allocation12 + $0x468] sm:$0xff]
    %v6036 = vld [vmem:[#allocation12 + $0x470] sm:$0xff]
    %v6037 = vld [vmem:[#allocation12 + $0x478] sm:$0xff]
    %v6038 = vld [vmem:[#allocation12 + $0x480] sm:$0xff]
    %v6039 = vld [vmem:[#allocation12 + $0x488] sm:$0xff]
    %v6040 = vld [vmem:[#allocation12 + $0x490] sm:$0xff]
    %v6041 = vld [vmem:[#allocation12 + $0x498] sm:$0xff]
    %v6042 = vld [vmem:[#allocation12 + $0x4a0] sm:$0xff]
    %v6043 = vld [vmem:[#allocation12 + $0x4a8] sm:$0xff]
    %v6044 = vld [vmem:[#allocation12 + $0x4b0] sm:$0xff]
    %v6045 = vld [vmem:[#allocation12 + $0x4b8] sm:$0xff]
    %v6046 = vld [vmem:[#allocation12 + $0x4c0] sm:$0xff]
    %v6047 = vld [vmem:[#allocation12 + $0x4c8] sm:$0xff]
    %v6048 = vld [vmem:[#allocation12 + $0x4d0] sm:$0xff]
    %v6049 = vld [vmem:[#allocation12 + $0x4d8] sm:$0xff]
    %v6050 = vld [vmem:[#allocation12 + $0x4e0] sm:$0xff]
    %v6051 = vld [vmem:[#allocation12 + $0x4e8] sm:$0xff]
    %v6052 = vld [vmem:[#allocation12 + $0x4f0] sm:$0xff]
    %v6053 = vld [vmem:[#allocation12 + $0x4f8] sm:$0xff]
    %v6054 = vld [vmem:[#allocation12 + $0x500] sm:$0xff]
    %v6055 = vld [vmem:[#allocation12 + $0x508] sm:$0xff]
    %v6056 = vld [vmem:[#allocation12 + $0x510] sm:$0xff]
    %v6057 = vld [vmem:[#allocation12 + $0x518] sm:$0xff]
    %v6058 = vld [vmem:[#allocation12 + $0x520] sm:$0xff]
    %v6059 = vld [vmem:[#allocation12 + $0x528] sm:$0xff]
    %v6060 = vld [vmem:[#allocation12 + $0x530] sm:$0xff]
    %v6061 = vld [vmem:[#allocation12 + $0x538] sm:$0xff]
    %v6062 = vld [vmem:[#allocation12 + $0x540] sm:$0xff]
    %v6063 = vld [vmem:[#allocation12 + $0x548] sm:$0xff]
    %v6064 = vld [vmem:[#allocation12 + $0x550] sm:$0xff]
    %v6065 = vld [vmem:[#allocation12 + $0x558] sm:$0xff]
    %v6066 = vld [vmem:[#allocation12 + $0x560] sm:$0xff]
    %v6067 = vld [vmem:[#allocation12 + $0x568] sm:$0xff]
    %v6068 = vld [vmem:[#allocation12 + $0x570] sm:$0xff]
    %v6069 = vld [vmem:[#allocation12 + $0x578] sm:$0xff]
    %v6070 = vld [vmem:[#allocation12 + $0x580] sm:$0xff]
    %v6071 = vld [vmem:[#allocation12 + $0x588] sm:$0xff]
    %v6072 = vld [vmem:[#allocation12 + $0x590] sm:$0xff]
    %v6073 = vld [vmem:[#allocation12 + $0x598] sm:$0xff]
    %v6074 = vld [vmem:[#allocation12 + $0x5a0] sm:$0xff]
    %v6075 = vld [vmem:[#allocation12 + $0x5a8] sm:$0xff]
    %v6076 = vld [vmem:[#allocation12 + $0x5b0] sm:$0xff]
    %v6077 = vld [vmem:[#allocation12 + $0x5b8] sm:$0xff]
    %v6078 = vld [vmem:[#allocation12 + $0x5c0] sm:$0xff]
    %v6079 = vld [vmem:[#allocation12 + $0x5c8] sm:$0xff]
    %v6080 = vld [vmem:[#allocation12 + $0x5d0] sm:$0xff]
    %v6081 = vld [vmem:[#allocation12 + $0x5d8] sm:$0xff]
    %v6082 = vld [vmem:[#allocation12 + $0x5e0] sm:$0xff]
    %v6083 = vld [vmem:[#allocation12 + $0x5e8] sm:$0xff]
    %v6084 = vld [vmem:[#allocation12 + $0x5f0] sm:$0xff]
    %v6085 = vld [vmem:[#allocation12 + $0x5f8] sm:$0xff]
    %v6086 = vld [vmem:[#allocation12 + $0x600] sm:$0xff]
    %v6087 = vld [vmem:[#allocation12 + $0x608] sm:$0xff]
    %v6088 = vld [vmem:[#allocation12 + $0x610] sm:$0xff]
    %v6089 = vld [vmem:[#allocation12 + $0x618] sm:$0xff]
    %v6090 = vld [vmem:[#allocation12 + $0x620] sm:$0xff]
    %v6091 = vld [vmem:[#allocation12 + $0x628] sm:$0xff]
    %v6092 = vld [vmem:[#allocation12 + $0x630] sm:$0xff]
    %v6093 = vld [vmem:[#allocation12 + $0x638] sm:$0xff]
    %v6094 = vld [vmem:[#allocation12 + $0x640] sm:$0xff]
    %v6095 = vld [vmem:[#allocation12 + $0x648] sm:$0xff]
    %v6096 = vld [vmem:[#allocation12 + $0x650] sm:$0xff]
    %v6097 = vld [vmem:[#allocation12 + $0x658] sm:$0xff]
    %v6098 = vld [vmem:[#allocation12 + $0x660] sm:$0xff]
    %v6099 = vld [vmem:[#allocation12 + $0x668] sm:$0xff]
    %v6100 = vld [vmem:[#allocation12 + $0x670] sm:$0xff]
    %v6101 = vld [vmem:[#allocation12 + $0x678] sm:$0xff]
    %v6102 = vld [vmem:[#allocation12 + $0x680] sm:$0xff]
    %v6103 = vld [vmem:[#allocation12 + $0x688] sm:$0xff]
    %v6104 = vld [vmem:[#allocation12 + $0x690] sm:$0xff]
    %v6105 = vld [vmem:[#allocation12 + $0x698] sm:$0xff]
    %v6106 = vld [vmem:[#allocation12 + $0x6a0] sm:$0xff]
    %v6107 = vld [vmem:[#allocation12 + $0x6a8] sm:$0xff]
    %v6108 = vld [vmem:[#allocation12 + $0x6b0] sm:$0xff]
    %v6109 = vld [vmem:[#allocation12 + $0x6b8] sm:$0xff]
    %v6110 = vld [vmem:[#allocation12 + $0x6c0] sm:$0xff]
    %v6111 = vld [vmem:[#allocation12 + $0x6c8] sm:$0xff]
    %v6112 = vld [vmem:[#allocation12 + $0x6d0] sm:$0xff]
    %v6113 = vld [vmem:[#allocation12 + $0x6d8] sm:$0xff]
    %v6114 = vld [vmem:[#allocation12 + $0x6e0] sm:$0xff]
    %v6115 = vld [vmem:[#allocation12 + $0x6e8] sm:$0xff]
    %v6116 = vld [vmem:[#allocation12 + $0x6f0] sm:$0xff]
    %v6117 = vld [vmem:[#allocation12 + $0x6f8] sm:$0xff]
    %v6118 = vld [vmem:[#allocation12 + $0x700] sm:$0xff]
    %v6119 = vld [vmem:[#allocation12 + $0x708] sm:$0xff]
    %v6120 = vld [vmem:[#allocation12 + $0x710] sm:$0xff]
    %v6121 = vld [vmem:[#allocation12 + $0x718] sm:$0xff]
    %v6122 = vld [vmem:[#allocation12 + $0x720] sm:$0xff]
    %v6123 = vld [vmem:[#allocation12 + $0x728] sm:$0xff]
    %v6124 = vld [vmem:[#allocation12 + $0x730] sm:$0xff]
    %v6125 = vld [vmem:[#allocation12 + $0x738] sm:$0xff]
    %v6126 = vld [vmem:[#allocation12 + $0x740] sm:$0xff]
    %v6127 = vld [vmem:[#allocation12 + $0x748] sm:$0xff]
    %v6128 = vld [vmem:[#allocation12 + $0x750] sm:$0xff]
    %v6129 = vld [vmem:[#allocation12 + $0x758] sm:$0xff]
    %v6130 = vld [vmem:[#allocation12 + $0x760] sm:$0xff]
    %v6131 = vld [vmem:[#allocation12 + $0x768] sm:$0xff]
    %v6132 = vld [vmem:[#allocation12 + $0x770] sm:$0xff]
    %v6133 = vld [vmem:[#allocation12 + $0x778] sm:$0xff]
    %v6134 = vld [vmem:[#allocation12 + $0x780] sm:$0xff]
    %v6135 = vld [vmem:[#allocation12 + $0x788] sm:$0xff]
    %v6136 = vld [vmem:[#allocation12 + $0x790] sm:$0xff]
    %v6137 = vld [vmem:[#allocation12 + $0x798] sm:$0xff]
    %v6138 = vld [vmem:[#allocation12 + $0x7a0] sm:$0xff]
    %v6139 = vld [vmem:[#allocation12 + $0x7a8] sm:$0xff]
    %v6140 = vld [vmem:[#allocation12 + $0x7b0] sm:$0xff]
    %v6141 = vld [vmem:[#allocation12 + $0x7b8] sm:$0xff]
    %v6142 = vld [vmem:[#allocation12 + $0x7c0] sm:$0xff]
    %v6143 = vld [vmem:[#allocation12 + $0x7c8] sm:$0xff]
    %v6144 = vld [vmem:[#allocation12 + $0x7d0] sm:$0xff]
    %v6145 = vld [vmem:[#allocation12 + $0x7d8] sm:$0xff]
    %v6146 = vld [vmem:[#allocation12 + $0x7e0] sm:$0xff]
    %v6147 = vld [vmem:[#allocation12 + $0x7e8] sm:$0xff]
    %v6148 = vld [vmem:[#allocation12 + $0x7f0] sm:$0xff]
    %v6149 = vld [vmem:[#allocation12 + $0x7f8] sm:$0xff]
    %v6150 = vld [vmem:[#allocation12 + $0x800] sm:$0xff]
    %v6151 = vld [vmem:[#allocation12 + $0x808] sm:$0xff]
    %v6152 = vld [vmem:[#allocation12 + $0x810] sm:$0xff]
    %v6153 = vld [vmem:[#allocation12 + $0x818] sm:$0xff]
    %v6154 = vld [vmem:[#allocation12 + $0x820] sm:$0xff]
    %v6155 = vld [vmem:[#allocation12 + $0x828] sm:$0xff]
    %v6156 = vld [vmem:[#allocation12 + $0x830] sm:$0xff]
    %v6157 = vld [vmem:[#allocation12 + $0x838] sm:$0xff]
    %v6158 = vld [vmem:[#allocation12 + $0x840] sm:$0xff]
    %v6159 = vld [vmem:[#allocation12 + $0x848] sm:$0xff]
    %v6160 = vld [vmem:[#allocation12 + $0x850] sm:$0xff]
    %v6161 = vld [vmem:[#allocation12 + $0x858] sm:$0xff]
    %v6162 = vld [vmem:[#allocation12 + $0x860] sm:$0xff]
    %v6163 = vld [vmem:[#allocation12 + $0x868] sm:$0xff]
    %v6164 = vld [vmem:[#allocation12 + $0x870] sm:$0xff]
    %v6165 = vld [vmem:[#allocation12 + $0x878] sm:$0xff]
    %v6166 = vld [vmem:[#allocation12 + $0x880] sm:$0xff]
    %v6167 = vld [vmem:[#allocation12 + $0x888] sm:$0xff]
    %v6168 = vld [vmem:[#allocation12 + $0x890] sm:$0xff]
    %v6169 = vld [vmem:[#allocation12 + $0x898] sm:$0xff]
    %v6170 = vld [vmem:[#allocation12 + $0x8a0] sm:$0xff]
    %v6171 = vld [vmem:[#allocation12 + $0x8a8] sm:$0xff]
    %v6172 = vld [vmem:[#allocation12 + $0x8b0] sm:$0xff]
    %v6173 = vld [vmem:[#allocation12 + $0x8b8] sm:$0xff]
    %v6174 = vld [vmem:[#allocation12 + $0x8c0] sm:$0xff]
    %v6175 = vld [vmem:[#allocation12 + $0x8c8] sm:$0xff]
    %v6176 = vld [vmem:[#allocation12 + $0x8d0] sm:$0xff]
    %v6177 = vld [vmem:[#allocation12 + $0x8d8] sm:$0xff]
    %v6178 = vld [vmem:[#allocation12 + $0x8e0] sm:$0xff]
    %v6179 = vld [vmem:[#allocation12 + $0x8e8] sm:$0xff]
    %v6180 = vld [vmem:[#allocation12 + $0x8f0] sm:$0xff]
    %v6181 = vld [vmem:[#allocation12 + $0x8f8] sm:$0xff]
    %v6182 = vld [vmem:[#allocation12 + $0x900] sm:$0xff]
    %v6183 = vld [vmem:[#allocation12 + $0x908] sm:$0xff]
    %v6184 = vld [vmem:[#allocation12 + $0x910] sm:$0xff]
    %v6185 = vld [vmem:[#allocation12 + $0x918] sm:$0xff]
    %v6186 = vld [vmem:[#allocation12 + $0x920] sm:$0xff]
    %v6187 = vld [vmem:[#allocation12 + $0x928] sm:$0xff]
    %v6188 = vld [vmem:[#allocation12 + $0x930] sm:$0xff]
    %v6189 = vld [vmem:[#allocation12 + $0x938] sm:$0xff]
    %v6190 = vld [vmem:[#allocation12 + $0x940] sm:$0xff]
    %v6191 = vld [vmem:[#allocation12 + $0x948] sm:$0xff]
    %v6192 = vld [vmem:[#allocation12 + $0x950] sm:$0xff]
    %v6193 = vld [vmem:[#allocation12 + $0x958] sm:$0xff]
    %v6194 = vld [vmem:[#allocation12 + $0x960] sm:$0xff]
    %v6195 = vld [vmem:[#allocation12 + $0x968] sm:$0xff]
    %v6196 = vld [vmem:[#allocation12 + $0x970] sm:$0xff]
    %v6197 = vld [vmem:[#allocation12 + $0x978] sm:$0xff]
    %v6198 = vld [vmem:[#allocation12 + $0x980] sm:$0xff]
    %v6199 = vld [vmem:[#allocation12 + $0x988] sm:$0xff]
    %v6200 = vld [vmem:[#allocation12 + $0x990] sm:$0xff]
    %v6201 = vld [vmem:[#allocation12 + $0x998] sm:$0xff]
    %v6202 = vld [vmem:[#allocation12 + $0x9a0] sm:$0xff]
    %v6203 = vld [vmem:[#allocation12 + $0x9a8] sm:$0xff]
    %v6204 = vld [vmem:[#allocation12 + $0x9b0] sm:$0xff]
    %v6205 = vld [vmem:[#allocation12 + $0x9b8] sm:$0xff]
    %v6206 = vld [vmem:[#allocation12 + $0x9c0] sm:$0xff]
    %v6207 = vld [vmem:[#allocation12 + $0x9c8] sm:$0xff]
    %v6208 = vld [vmem:[#allocation12 + $0x9d0] sm:$0xff]
    %v6209 = vld [vmem:[#allocation12 + $0x9d8] sm:$0xff]
    %v6210 = vld [vmem:[#allocation12 + $0x9e0] sm:$0xff]
    %v6211 = vld [vmem:[#allocation12 + $0x9e8] sm:$0xff]
    %v6212 = vld [vmem:[#allocation12 + $0x9f0] sm:$0xff]
    %v6213 = vld [vmem:[#allocation12 + $0x9f8] sm:$0xff]
    %6214 = vmatprep.subr.mxu0 %v5895
    %6215 = vmatpush1.msra.mxu0 %v5894
    %6216 = vmatprep.subr.mxu0 %v5897
    %6217 = vmatpush1.msra.mxu0 %v5896
    %6218 = vmatprep.subr.mxu0 %v5899
    %6219 = vmatpush1.msra.mxu0 %v5898
    %6220 = vmatprep.subr.mxu0 %v5901
    %6221 = vmatpush1.msra.mxu0 %v5900
    %6222 = vmatprep.subr.mxu0 %v5903
    %6223 = vmatpush1.msra.mxu0 %v5902
    %6224 = vmatprep.subr.mxu0 %v5905
    %6225 = vmatpush1.msra.mxu0 %v5904
    %6226 = vmatprep.subr.mxu0 %v5907
    %6227 = vmatpush1.msra.mxu0 %v5906
    %6228 = vmatprep.subr.mxu0 %v5909
    %6229 = vmatpush1.msra.mxu0 %v5908
    %6230 = vmatprep.subr.mxu0 %v5911
    %6231 = vmatpush1.msra.mxu0 %v5910
    %6232 = vmatprep.subr.mxu0 %v5913
    %6233 = vmatpush1.msra.mxu0 %v5912
    %6234 = vmatprep.subr.mxu0 %v5915
    %6235 = vmatpush1.msra.mxu0 %v5914
    %6236 = vmatprep.subr.mxu0 %v5917
    %6237 = vmatpush1.msra.mxu0 %v5916
    %6238 = vmatprep.subr.mxu0 %v5919
    %6239 = vmatpush1.msra.mxu0 %v5918
    %6240 = vmatprep.subr.mxu0 %v5921
    %6241 = vmatpush1.msra.mxu0 %v5920
    %6242 = vmatprep.subr.mxu0 %v5923
    %6243 = vmatpush1.msra.mxu0 %v5922
    %6244 = vmatprep.subr.mxu0 %v5925
    %6245 = vmatpush1.msra.mxu0 %v5924
    %6246 = vmatprep.subr.mxu0 %v5927
    %6247 = vmatpush1.msra.mxu0 %v5926
    %6248 = vmatprep.subr.mxu0 %v5929
    %6249 = vmatpush1.msra.mxu0 %v5928
    %6250 = vmatprep.subr.mxu0 %v5931
    %6251 = vmatpush1.msra.mxu0 %v5930
    %6252 = vmatprep.subr.mxu0 %v5933
    %6253 = vmatpush1.msra.mxu0 %v5932
    %6254 = vmatprep.subr.mxu0 %v5935
    %6255 = vmatpush1.msra.mxu0 %v5934
    %6256 = vmatprep.subr.mxu0 %v5937
    %6257 = vmatpush1.msra.mxu0 %v5936
    %6258 = vmatprep.subr.mxu0 %v5939
    %6259 = vmatpush1.msra.mxu0 %v5938
    %6260 = vmatprep.subr.mxu0 %v5941
    %6261 = vmatpush1.msra.mxu0 %v5940
    %6262 = vmatprep.subr.mxu0 %v5943
    %6263 = vmatpush1.msra.mxu0 %v5942
    %6264 = vmatprep.subr.mxu0 %v5945
    %6265 = vmatpush1.msra.mxu0 %v5944
    %6266 = vmatprep.subr.mxu0 %v5947
    %6267 = vmatpush1.msra.mxu0 %v5946
    %6268 = vmatprep.subr.mxu0 %v5949
    %6269 = vmatpush1.msra.mxu0 %v5948
    %6270 = vmatprep.subr.mxu0 %v5951
    %6271 = vmatpush1.msra.mxu0 %v5950
    %6272 = vmatprep.subr.mxu0 %v5953
    %6273 = vmatpush1.msra.mxu0 %v5952
    %6274 = vmatprep.subr.mxu0 %v5955
    %6275 = vmatpush1.msra.mxu0 %v5954
    %6276 = vmatprep.subr.mxu0 %v5957
    %6277 = vmatpush1.msra.mxu0 %v5956
    %6278 = vmatprep.mubr.f32.mxu0 %v5885
    %6279 = vmatmul.mubr.f32.gmra.mrb[0].mxu0 %v5884
    %v6280 = vpop.f32.mrb[0].mxu0
    %v6281 = vadd.f32 %v5188, %v6280
    %v6282 = vpop.f32.mrb[0].mxu0
    %v6283 = vadd.f32 %v5192, %v6282
    %6284 = vdwg.mxu0
    %6285 = vmatprep.subr.mxu0 %v5959
    %6286 = vmatpush1.msra.mxu0 %v5958
    %6287 = vmatprep.subr.mxu0 %v5961
    %6288 = vmatpush1.msra.mxu0 %v5960
    %6289 = vmatprep.subr.mxu0 %v5963
    %6290 = vmatpush1.msra.mxu0 %v5962
    %6291 = vmatprep.subr.mxu0 %v5965
    %6292 = vmatpush1.msra.mxu0 %v5964
    %6293 = vmatprep.subr.mxu0 %v5967
    %6294 = vmatpush1.msra.mxu0 %v5966
    %6295 = vmatprep.subr.mxu0 %v5969
    %6296 = vmatpush1.msra.mxu0 %v5968
    %6297 = vmatprep.subr.mxu0 %v5971
    %6298 = vmatpush1.msra.mxu0 %v5970
    %6299 = vmatprep.subr.mxu0 %v5973
    %6300 = vmatpush1.msra.mxu0 %v5972
    %6301 = vmatprep.subr.mxu0 %v5975
    %6302 = vmatpush1.msra.mxu0 %v5974
    %6303 = vmatprep.subr.mxu0 %v5977
    %6304 = vmatpush1.msra.mxu0 %v5976
    %6305 = vmatprep.subr.mxu0 %v5979
    %6306 = vmatpush1.msra.mxu0 %v5978
    %6307 = vmatprep.subr.mxu0 %v5981
    %6308 = vmatpush1.msra.mxu0 %v5980
    %6309 = vmatprep.subr.mxu0 %v5983
    %6310 = vmatpush1.msra.mxu0 %v5982
    %6311 = vmatprep.subr.mxu0 %v5985
    %6312 = vmatpush1.msra.mxu0 %v5984
    %6313 = vmatprep.subr.mxu0 %v5987
    %6314 = vmatpush1.msra.mxu0 %v5986
    %6315 = vmatprep.subr.mxu0 %v5989
    %6316 = vmatpush1.msra.mxu0 %v5988
    %6317 = vmatprep.subr.mxu0 %v5991
    %6318 = vmatpush1.msra.mxu0 %v5990
    %6319 = vmatprep.subr.mxu0 %v5993
    %6320 = vmatpush1.msra.mxu0 %v5992
    %6321 = vmatprep.subr.mxu0 %v5995
    %6322 = vmatpush1.msra.mxu0 %v5994
    %6323 = vmatprep.subr.mxu0 %v5997
    %6324 = vmatpush1.msra.mxu0 %v5996
    %6325 = vmatprep.subr.mxu0 %v5999
    %6326 = vmatpush1.msra.mxu0 %v5998
    %6327 = vmatprep.subr.mxu0 %v6001
    %6328 = vmatpush1.msra.mxu0 %v6000
    %6329 = vmatprep.subr.mxu0 %v6003
    %6330 = vmatpush1.msra.mxu0 %v6002
    %6331 = vmatprep.subr.mxu0 %v6005
    %6332 = vmatpush1.msra.mxu0 %v6004
    %6333 = vmatprep.subr.mxu0 %v6007
    %6334 = vmatpush1.msra.mxu0 %v6006
    %6335 = vmatprep.subr.mxu0 %v6009
    %6336 = vmatpush1.msra.mxu0 %v6008
    %6337 = vmatprep.subr.mxu0 %v6011
    %6338 = vmatpush1.msra.mxu0 %v6010
    %6339 = vmatprep.subr.mxu0 %v6013
    %6340 = vmatpush1.msra.mxu0 %v6012
    %6341 = vmatprep.subr.mxu0 %v6015
    %6342 = vmatpush1.msra.mxu0 %v6014
    %6343 = vmatprep.subr.mxu0 %v6017
    %6344 = vmatpush1.msra.mxu0 %v6016
    %6345 = vmatprep.subr.mxu0 %v6019
    %6346 = vmatpush1.msra.mxu0 %v6018
    %6347 = vmatprep.subr.mxu0 %v6021
    %6348 = vmatpush1.msra.mxu0 %v6020
    %6349 = vmatprep.mubr.f32.mxu0 %v5887
    %6350 = vmatmul.mubr.f32.gmra.mrb[0].mxu0 %v5886
    %v6351 = vpop.f32.mrb[0].mxu0
    %v6352 = vadd.f32 %v6281, %v6351
    %v6353 = vpop.f32.mrb[0].mxu0
    %v6354 = vadd.f32 %v6283, %v6353
    %6355 = vdwg.mxu0
    %6356 = vmatprep.subr.mxu0 %v6023
    %6357 = vmatpush1.msra.mxu0 %v6022
    %6358 = vmatprep.subr.mxu0 %v6025
    %6359 = vmatpush1.msra.mxu0 %v6024
    %6360 = vmatprep.subr.mxu0 %v6027
    %6361 = vmatpush1.msra.mxu0 %v6026
    %6362 = vmatprep.subr.mxu0 %v6029
    %6363 = vmatpush1.msra.mxu0 %v6028
    %6364 = vmatprep.subr.mxu0 %v6031
    %6365 = vmatpush1.msra.mxu0 %v6030
    %6366 = vmatprep.subr.mxu0 %v6033
    %6367 = vmatpush1.msra.mxu0 %v6032
    %6368 = vmatprep.subr.mxu0 %v6035
    %6369 = vmatpush1.msra.mxu0 %v6034
    %6370 = vmatprep.subr.mxu0 %v6037
    %6371 = vmatpush1.msra.mxu0 %v6036
    %6372 = vmatprep.subr.mxu0 %v6039
    %6373 = vmatpush1.msra.mxu0 %v6038
    %6374 = vmatprep.subr.mxu0 %v6041
    %6375 = vmatpush1.msra.mxu0 %v6040
    %6376 = vmatprep.subr.mxu0 %v6043
    %6377 = vmatpush1.msra.mxu0 %v6042
    %6378 = vmatprep.subr.mxu0 %v6045
    %6379 = vmatpush1.msra.mxu0 %v6044
    %6380 = vmatprep.subr.mxu0 %v6047
    %6381 = vmatpush1.msra.mxu0 %v6046
    %6382 = vmatprep.subr.mxu0 %v6049
    %6383 = vmatpush1.msra.mxu0 %v6048
    %6384 = vmatprep.subr.mxu0 %v6051
    %6385 = vmatpush1.msra.mxu0 %v6050
    %6386 = vmatprep.subr.mxu0 %v6053
    %6387 = vmatpush1.msra.mxu0 %v6052
    %6388 = vmatprep.subr.mxu0 %v6055
    %6389 = vmatpush1.msra.mxu0 %v6054
    %6390 = vmatprep.subr.mxu0 %v6057
    %6391 = vmatpush1.msra.mxu0 %v6056
    %6392 = vmatprep.subr.mxu0 %v6059
    %6393 = vmatpush1.msra.mxu0 %v6058
    %6394 = vmatprep.subr.mxu0 %v6061
    %6395 = vmatpush1.msra.mxu0 %v6060
    %6396 = vmatprep.subr.mxu0 %v6063
    %6397 = vmatpush1.msra.mxu0 %v6062
    %6398 = vmatprep.subr.mxu0 %v6065
    %6399 = vmatpush1.msra.mxu0 %v6064
    %6400 = vmatprep.subr.mxu0 %v6067
    %6401 = vmatpush1.msra.mxu0 %v6066
    %6402 = vmatprep.subr.mxu0 %v6069
    %6403 = vmatpush1.msra.mxu0 %v6068
    %6404 = vmatprep.subr.mxu0 %v6071
    %6405 = vmatpush1.msra.mxu0 %v6070
    %6406 = vmatprep.subr.mxu0 %v6073
    %6407 = vmatpush1.msra.mxu0 %v6072
    %6408 = vmatprep.subr.mxu0 %v6075
    %6409 = vmatpush1.msra.mxu0 %v6074
    %6410 = vmatprep.subr.mxu0 %v6077
    %6411 = vmatpush1.msra.mxu0 %v6076
    %6412 = vmatprep.subr.mxu0 %v6079
    %6413 = vmatpush1.msra.mxu0 %v6078
    %6414 = vmatprep.subr.mxu0 %v6081
    %6415 = vmatpush1.msra.mxu0 %v6080
    %6416 = vmatprep.subr.mxu0 %v6083
    %6417 = vmatpush1.msra.mxu0 %v6082
    %6418 = vmatprep.subr.mxu0 %v6085
    %6419 = vmatpush1.msra.mxu0 %v6084
    %6420 = vmatprep.mubr.f32.mxu0 %v5889
    %6421 = vmatmul.mubr.f32.gmra.mrb[0].mxu0 %v5888
    %v6422 = vpop.f32.mrb[0].mxu0
    %v6423 = vadd.f32 %v6352, %v6422
    %v6424 = vpop.f32.mrb[0].mxu0
    %v6425 = vadd.f32 %v6354, %v6424
    %6426 = vdwg.mxu0
    %6427 = vmatprep.subr.mxu0 %v6087
    %6428 = vmatpush1.msra.mxu0 %v6086
    %6429 = vmatprep.subr.mxu0 %v6089
    %6430 = vmatpush1.msra.mxu0 %v6088
    %6431 = vmatprep.subr.mxu0 %v6091
    %6432 = vmatpush1.msra.mxu0 %v6090
    %6433 = vmatprep.subr.mxu0 %v6093
    %6434 = vmatpush1.msra.mxu0 %v6092
    %6435 = vmatprep.subr.mxu0 %v6095
    %6436 = vmatpush1.msra.mxu0 %v6094
    %6437 = vmatprep.subr.mxu0 %v6097
    %6438 = vmatpush1.msra.mxu0 %v6096
    %6439 = vmatprep.subr.mxu0 %v6099
    %6440 = vmatpush1.msra.mxu0 %v6098
    %6441 = vmatprep.subr.mxu0 %v6101
    %6442 = vmatpush1.msra.mxu0 %v6100
    %6443 = vmatprep.subr.mxu0 %v6103
    %6444 = vmatpush1.msra.mxu0 %v6102
    %6445 = vmatprep.subr.mxu0 %v6105
    %6446 = vmatpush1.msra.mxu0 %v6104
    %6447 = vmatprep.subr.mxu0 %v6107
    %6448 = vmatpush1.msra.mxu0 %v6106
    %6449 = vmatprep.subr.mxu0 %v6109
    %6450 = vmatpush1.msra.mxu0 %v6108
    %6451 = vmatprep.subr.mxu0 %v6111
    %6452 = vmatpush1.msra.mxu0 %v6110
    %6453 = vmatprep.subr.mxu0 %v6113
    %6454 = vmatpush1.msra.mxu0 %v6112
    %6455 = vmatprep.subr.mxu0 %v6115
    %6456 = vmatpush1.msra.mxu0 %v6114
    %6457 = vmatprep.subr.mxu0 %v6117
    %6458 = vmatpush1.msra.mxu0 %v6116
    %6459 = vmatprep.subr.mxu0 %v6119
    %6460 = vmatpush1.msra.mxu0 %v6118
    %6461 = vmatprep.subr.mxu0 %v6121
    %6462 = vmatpush1.msra.mxu0 %v6120
    %6463 = vmatprep.subr.mxu0 %v6123
    %6464 = vmatpush1.msra.mxu0 %v6122
    %6465 = vmatprep.subr.mxu0 %v6125
    %6466 = vmatpush1.msra.mxu0 %v6124
    %6467 = vmatprep.subr.mxu0 %v6127
    %6468 = vmatpush1.msra.mxu0 %v6126
    %6469 = vmatprep.subr.mxu0 %v6129
    %6470 = vmatpush1.msra.mxu0 %v6128
    %6471 = vmatprep.subr.mxu0 %v6131
    %6472 = vmatpush1.msra.mxu0 %v6130
    %6473 = vmatprep.subr.mxu0 %v6133
    %6474 = vmatpush1.msra.mxu0 %v6132
    %6475 = vmatprep.subr.mxu0 %v6135
    %6476 = vmatpush1.msra.mxu0 %v6134
    %6477 = vmatprep.subr.mxu0 %v6137
    %6478 = vmatpush1.msra.mxu0 %v6136
    %6479 = vmatprep.subr.mxu0 %v6139
    %6480 = vmatpush1.msra.mxu0 %v6138
    %6481 = vmatprep.subr.mxu0 %v6141
    %6482 = vmatpush1.msra.mxu0 %v6140
    %6483 = vmatprep.subr.mxu0 %v6143
    %6484 = vmatpush1.msra.mxu0 %v6142
    %6485 = vmatprep.subr.mxu0 %v6145
    %6486 = vmatpush1.msra.mxu0 %v6144
    %6487 = vmatprep.subr.mxu0 %v6147
    %6488 = vmatpush1.msra.mxu0 %v6146
    %6489 = vmatprep.subr.mxu0 %v6149
    %6490 = vmatpush1.msra.mxu0 %v6148
    %6491 = vmatprep.mubr.f32.mxu0 %v5891
    %6492 = vmatmul.mubr.f32.gmra.mrb[0].mxu0 %v5890
    %v6493 = vpop.f32.mrb[0].mxu0
    %v6494 = vadd.f32 %v6423, %v6493
    %v6495 = vpop.f32.mrb[0].mxu0
    %v6496 = vadd.f32 %v6425, %v6495
    %6497 = vdwg.mxu0
    %6498 = vmatprep.subr.mxu0 %v6151
    %6499 = vmatpush1.msra.mxu0 %v6150
    %6500 = vmatprep.subr.mxu0 %v6153
    %6501 = vmatpush1.msra.mxu0 %v6152
    %6502 = vmatprep.subr.mxu0 %v6155
    %6503 = vmatpush1.msra.mxu0 %v6154
    %6504 = vmatprep.subr.mxu0 %v6157
    %6505 = vmatpush1.msra.mxu0 %v6156
    %6506 = vmatprep.subr.mxu0 %v6159
    %6507 = vmatpush1.msra.mxu0 %v6158
    %6508 = vmatprep.subr.mxu0 %v6161
    %6509 = vmatpush1.msra.mxu0 %v6160
    %6510 = vmatprep.subr.mxu0 %v6163
    %6511 = vmatpush1.msra.mxu0 %v6162
    %6512 = vmatprep.subr.mxu0 %v6165
    %6513 = vmatpush1.msra.mxu0 %v6164
    %6514 = vmatprep.subr.mxu0 %v6167
    %6515 = vmatpush1.msra.mxu0 %v6166
    %6516 = vmatprep.subr.mxu0 %v6169
    %6517 = vmatpush1.msra.mxu0 %v6168
    %6518 = vmatprep.subr.mxu0 %v6171
    %6519 = vmatpush1.msra.mxu0 %v6170
    %6520 = vmatprep.subr.mxu0 %v6173
    %6521 = vmatpush1.msra.mxu0 %v6172
    %6522 = vmatprep.subr.mxu0 %v6175
    %6523 = vmatpush1.msra.mxu0 %v6174
    %6524 = vmatprep.subr.mxu0 %v6177
    %6525 = vmatpush1.msra.mxu0 %v6176
    %6526 = vmatprep.subr.mxu0 %v6179
    %6527 = vmatpush1.msra.mxu0 %v6178
    %6528 = vmatprep.subr.mxu0 %v6181
    %6529 = vmatpush1.msra.mxu0 %v6180
    %6530 = vmatprep.subr.mxu0 %v6183
    %6531 = vmatpush1.msra.mxu0 %v6182
    %6532 = vmatprep.subr.mxu0 %v6185
    %6533 = vmatpush1.msra.mxu0 %v6184
    %6534 = vmatprep.subr.mxu0 %v6187
    %6535 = vmatpush1.msra.mxu0 %v6186
    %6536 = vmatprep.subr.mxu0 %v6189
    %6537 = vmatpush1.msra.mxu0 %v6188
    %6538 = vmatprep.subr.mxu0 %v6191
    %6539 = vmatpush1.msra.mxu0 %v6190
    %6540 = vmatprep.subr.mxu0 %v6193
    %6541 = vmatpush1.msra.mxu0 %v6192
    %6542 = vmatprep.subr.mxu0 %v6195
    %6543 = vmatpush1.msra.mxu0 %v6194
    %6544 = vmatprep.subr.mxu0 %v6197
    %6545 = vmatpush1.msra.mxu0 %v6196
    %6546 = vmatprep.subr.mxu0 %v6199
    %6547 = vmatpush1.msra.mxu0 %v6198
    %6548 = vmatprep.subr.mxu0 %v6201
    %6549 = vmatpush1.msra.mxu0 %v6200
    %6550 = vmatprep.subr.mxu0 %v6203
    %6551 = vmatpush1.msra.mxu0 %v6202
    %6552 = vmatprep.subr.mxu0 %v6205
    %6553 = vmatpush1.msra.mxu0 %v6204
    %6554 = vmatprep.subr.mxu0 %v6207
    %6555 = vmatpush1.msra.mxu0 %v6206
    %6556 = vmatprep.subr.mxu0 %v6209
    %6557 = vmatpush1.msra.mxu0 %v6208
    %6558 = vmatprep.subr.mxu0 %v6211
    %6559 = vmatpush1.msra.mxu0 %v6210
    %6560 = vmatprep.subr.mxu0 %v6213
    %6561 = vmatpush1.msra.mxu0 %v6212
    %6562 = vmatprep.mubr.f32.mxu0 %v5893
    %6563 = vmatmul.mubr.f32.gmra.mrb[0].mxu0 %v5892
    %v6564 = vpop.f32.mrb[0].mxu0
    %v6565 = vadd.f32 %v6494, %v6564
    %v6566 = vpop.f32.mrb[0].mxu0
    %v6567 = vadd.f32 %v6496, %v6566
    %6568 = vdwg.mxu0
    %v6569 = vmax.f32 %v6565, 0.0
    %v6570 = vmax.f32 %v6567, 0.0
    %6571 = vst [vmem:[#allocation3 + $0x10] sm:$0xff] %v6569
    %6572 = vst [vmem:[#allocation3 + $0x18] sm:$0xff] %v6570
    %v6573 = vld [vmem:[#allocation2 + $0x40] sm:$0xff]
    %v6574 = vld [vmem:[#allocation2 + $0x48] sm:$0xff]
    %v6575 = vld [vmem:[#allocation2 + $0x50] sm:$0xff]
    %v6576 = vld [vmem:[#allocation2 + $0x58] sm:$0xff]
    %v6577 = vld [vmem:[#allocation2 + $0x60] sm:$0xff]
    %v6578 = vld [vmem:[#allocation2 + $0x68] sm:$0xff]
    %v6579 = vld [vmem:[#allocation2 + $0x70] sm:$0xff]
    %v6580 = vld [vmem:[#allocation2 + $0x78] sm:$0xff]
    %v6581 = vld [vmem:[#allocation2 + $0x80] sm:$0xff]
    %v6582 = vld [vmem:[#allocation2 + $0x88] sm:$0xff]
    %v6583 = vld [vmem:[#allocation12] sm:$0xff]
    %v6584 = vld [vmem:[#allocation12 + $0x8] sm:$0xff]
    %v6585 = vld [vmem:[#allocation12 + $0x10] sm:$0xff]
    %v6586 = vld [vmem:[#allocation12 + $0x18] sm:$0xff]
    %v6587 = vld [vmem:[#allocation12 + $0x20] sm:$0xff]
    %v6588 = vld [vmem:[#allocation12 + $0x28] sm:$0xff]
    %v6589 = vld [vmem:[#allocation12 + $0x30] sm:$0xff]
    %v6590 = vld [vmem:[#allocation12 + $0x38] sm:$0xff]
    %v6591 = vld [vmem:[#allocation12 + $0x40] sm:$0xff]
    %v6592 = vld [vmem:[#allocation12 + $0x48] sm:$0xff]
    %v6593 = vld [vmem:[#allocation12 + $0x50] sm:$0xff]
    %v6594 = vld [vmem:[#allocation12 + $0x58] sm:$0xff]
    %v6595 = vld [vmem:[#allocation12 + $0x60] sm:$0xff]
    %v6596 = vld [vmem:[#allocation12 + $0x68] sm:$0xff]
    %v6597 = vld [vmem:[#allocation12 + $0x70] sm:$0xff]
    %v6598 = vld [vmem:[#allocation12 + $0x78] sm:$0xff]
    %v6599 = vld [vmem:[#allocation12 + $0x80] sm:$0xff]
    %v6600 = vld [vmem:[#allocation12 + $0x88] sm:$0xff]
    %v6601 = vld [vmem:[#allocation12 + $0x90] sm:$0xff]
    %v6602 = vld [vmem:[#allocation12 + $0x98] sm:$0xff]
    %v6603 = vld [vmem:[#allocation12 + $0xa0] sm:$0xff]
    %v6604 = vld [vmem:[#allocation12 + $0xa8] sm:$0xff]
    %v6605 = vld [vmem:[#allocation12 + $0xb0] sm:$0xff]
    %v6606 = vld [vmem:[#allocation12 + $0xb8] sm:$0xff]
    %v6607 = vld [vmem:[#allocation12 + $0xc0] sm:$0xff]
    %v6608 = vld [vmem:[#allocation12 + $0xc8] sm:$0xff]
    %v6609 = vld [vmem:[#allocation12 + $0xd0] sm:$0xff]
    %v6610 = vld [vmem:[#allocation12 + $0xd8] sm:$0xff]
    %v6611 = vld [vmem:[#allocation12 + $0xe0] sm:$0xff]
    %v6612 = vld [vmem:[#allocation12 + $0xe8] sm:$0xff]
    %v6613 = vld [vmem:[#allocation12 + $0xf0] sm:$0xff]
    %v6614 = vld [vmem:[#allocation12 + $0xf8] sm:$0xff]
    %v6615 = vld [vmem:[#allocation12 + $0x100] sm:$0xff]
    %v6616 = vld [vmem:[#allocation12 + $0x108] sm:$0xff]
    %v6617 = vld [vmem:[#allocation12 + $0x110] sm:$0xff]
    %v6618 = vld [vmem:[#allocation12 + $0x118] sm:$0xff]
    %v6619 = vld [vmem:[#allocation12 + $0x120] sm:$0xff]
    %v6620 = vld [vmem:[#allocation12 + $0x128] sm:$0xff]
    %v6621 = vld [vmem:[#allocation12 + $0x130] sm:$0xff]
    %v6622 = vld [vmem:[#allocation12 + $0x138] sm:$0xff]
    %v6623 = vld [vmem:[#allocation12 + $0x140] sm:$0xff]
    %v6624 = vld [vmem:[#allocation12 + $0x148] sm:$0xff]
    %v6625 = vld [vmem:[#allocation12 + $0x150] sm:$0xff]
    %v6626 = vld [vmem:[#allocation12 + $0x158] sm:$0xff]
    %v6627 = vld [vmem:[#allocation12 + $0x160] sm:$0xff]
    %v6628 = vld [vmem:[#allocation12 + $0x168] sm:$0xff]
    %v6629 = vld [vmem:[#allocation12 + $0x170] sm:$0xff]
    %v6630 = vld [vmem:[#allocation12 + $0x178] sm:$0xff]
    %v6631 = vld [vmem:[#allocation12 + $0x180] sm:$0xff]
    %v6632 = vld [vmem:[#allocation12 + $0x188] sm:$0xff]
    %v6633 = vld [vmem:[#allocation12 + $0x190] sm:$0xff]
    %v6634 = vld [vmem:[#allocation12 + $0x198] sm:$0xff]
    %v6635 = vld [vmem:[#allocation12 + $0x1a0] sm:$0xff]
    %v6636 = vld [vmem:[#allocation12 + $0x1a8] sm:$0xff]
    %v6637 = vld [vmem:[#allocation12 + $0x1b0] sm:$0xff]
    %v6638 = vld [vmem:[#allocation12 + $0x1b8] sm:$0xff]
    %v6639 = vld [vmem:[#allocation12 + $0x1c0] sm:$0xff]
    %v6640 = vld [vmem:[#allocation12 + $0x1c8] sm:$0xff]
    %v6641 = vld [vmem:[#allocation12 + $0x1d0] sm:$0xff]
    %v6642 = vld [vmem:[#allocation12 + $0x1d8] sm:$0xff]
    %v6643 = vld [vmem:[#allocation12 + $0x1e0] sm:$0xff]
    %v6644 = vld [vmem:[#allocation12 + $0x1e8] sm:$0xff]
    %v6645 = vld [vmem:[#allocation12 + $0x1f0] sm:$0xff]
    %v6646 = vld [vmem:[#allocation12 + $0x1f8] sm:$0xff]
    %v6647 = vld [vmem:[#allocation12 + $0x200] sm:$0xff]
    %v6648 = vld [vmem:[#allocation12 + $0x208] sm:$0xff]
    %v6649 = vld [vmem:[#allocation12 + $0x210] sm:$0xff]
    %v6650 = vld [vmem:[#allocation12 + $0x218] sm:$0xff]
    %v6651 = vld [vmem:[#allocation12 + $0x220] sm:$0xff]
    %v6652 = vld [vmem:[#allocation12 + $0x228] sm:$0xff]
    %v6653 = vld [vmem:[#allocation12 + $0x230] sm:$0xff]
    %v6654 = vld [vmem:[#allocation12 + $0x238] sm:$0xff]
    %v6655 = vld [vmem:[#allocation12 + $0x240] sm:$0xff]
    %v6656 = vld [vmem:[#allocation12 + $0x248] sm:$0xff]
    %v6657 = vld [vmem:[#allocation12 + $0x250] sm:$0xff]
    %v6658 = vld [vmem:[#allocation12 + $0x258] sm:$0xff]
    %v6659 = vld [vmem:[#allocation12 + $0x260] sm:$0xff]
    %v6660 = vld [vmem:[#allocation12 + $0x268] sm:$0xff]
    %v6661 = vld [vmem:[#allocation12 + $0x270] sm:$0xff]
    %v6662 = vld [vmem:[#allocation12 + $0x278] sm:$0xff]
    %v6663 = vld [vmem:[#allocation12 + $0x280] sm:$0xff]
    %v6664 = vld [vmem:[#allocation12 + $0x288] sm:$0xff]
    %v6665 = vld [vmem:[#allocation12 + $0x290] sm:$0xff]
    %v6666 = vld [vmem:[#allocation12 + $0x298] sm:$0xff]
    %v6667 = vld [vmem:[#allocation12 + $0x2a0] sm:$0xff]
    %v6668 = vld [vmem:[#allocation12 + $0x2a8] sm:$0xff]
    %v6669 = vld [vmem:[#allocation12 + $0x2b0] sm:$0xff]
    %v6670 = vld [vmem:[#allocation12 + $0x2b8] sm:$0xff]
    %v6671 = vld [vmem:[#allocation12 + $0x2c0] sm:$0xff]
    %v6672 = vld [vmem:[#allocation12 + $0x2c8] sm:$0xff]
    %v6673 = vld [vmem:[#allocation12 + $0x2d0] sm:$0xff]
    %v6674 = vld [vmem:[#allocation12 + $0x2d8] sm:$0xff]
    %v6675 = vld [vmem:[#allocation12 + $0x2e0] sm:$0xff]
    %v6676 = vld [vmem:[#allocation12 + $0x2e8] sm:$0xff]
    %v6677 = vld [vmem:[#allocation12 + $0x2f0] sm:$0xff]
    %v6678 = vld [vmem:[#allocation12 + $0x2f8] sm:$0xff]
    %v6679 = vld [vmem:[#allocation12 + $0x300] sm:$0xff]
    %v6680 = vld [vmem:[#allocation12 + $0x308] sm:$0xff]
    %v6681 = vld [vmem:[#allocation12 + $0x310] sm:$0xff]
    %v6682 = vld [vmem:[#allocation12 + $0x318] sm:$0xff]
    %v6683 = vld [vmem:[#allocation12 + $0x320] sm:$0xff]
    %v6684 = vld [vmem:[#allocation12 + $0x328] sm:$0xff]
    %v6685 = vld [vmem:[#allocation12 + $0x330] sm:$0xff]
    %v6686 = vld [vmem:[#allocation12 + $0x338] sm:$0xff]
    %v6687 = vld [vmem:[#allocation12 + $0x340] sm:$0xff]
    %v6688 = vld [vmem:[#allocation12 + $0x348] sm:$0xff]
    %v6689 = vld [vmem:[#allocation12 + $0x350] sm:$0xff]
    %v6690 = vld [vmem:[#allocation12 + $0x358] sm:$0xff]
    %v6691 = vld [vmem:[#allocation12 + $0x360] sm:$0xff]
    %v6692 = vld [vmem:[#allocation12 + $0x368] sm:$0xff]
    %v6693 = vld [vmem:[#allocation12 + $0x370] sm:$0xff]
    %v6694 = vld [vmem:[#allocation12 + $0x378] sm:$0xff]
    %v6695 = vld [vmem:[#allocation12 + $0x380] sm:$0xff]
    %v6696 = vld [vmem:[#allocation12 + $0x388] sm:$0xff]
    %v6697 = vld [vmem:[#allocation12 + $0x390] sm:$0xff]
    %v6698 = vld [vmem:[#allocation12 + $0x398] sm:$0xff]
    %v6699 = vld [vmem:[#allocation12 + $0x3a0] sm:$0xff]
    %v6700 = vld [vmem:[#allocation12 + $0x3a8] sm:$0xff]
    %v6701 = vld [vmem:[#allocation12 + $0x3b0] sm:$0xff]
    %v6702 = vld [vmem:[#allocation12 + $0x3b8] sm:$0xff]
    %v6703 = vld [vmem:[#allocation12 + $0x3c0] sm:$0xff]
    %v6704 = vld [vmem:[#allocation12 + $0x3c8] sm:$0xff]
    %v6705 = vld [vmem:[#allocation12 + $0x3d0] sm:$0xff]
    %v6706 = vld [vmem:[#allocation12 + $0x3d8] sm:$0xff]
    %v6707 = vld [vmem:[#allocation12 + $0x3e0] sm:$0xff]
    %v6708 = vld [vmem:[#allocation12 + $0x3e8] sm:$0xff]
    %v6709 = vld [vmem:[#allocation12 + $0x3f0] sm:$0xff]
    %v6710 = vld [vmem:[#allocation12 + $0x3f8] sm:$0xff]
    %v6711 = vld [vmem:[#allocation12 + $0x400] sm:$0xff]
    %v6712 = vld [vmem:[#allocation12 + $0x408] sm:$0xff]
    %v6713 = vld [vmem:[#allocation12 + $0x410] sm:$0xff]
    %v6714 = vld [vmem:[#allocation12 + $0x418] sm:$0xff]
    %v6715 = vld [vmem:[#allocation12 + $0x420] sm:$0xff]
    %v6716 = vld [vmem:[#allocation12 + $0x428] sm:$0xff]
    %v6717 = vld [vmem:[#allocation12 + $0x430] sm:$0xff]
    %v6718 = vld [vmem:[#allocation12 + $0x438] sm:$0xff]
    %v6719 = vld [vmem:[#allocation12 + $0x440] sm:$0xff]
    %v6720 = vld [vmem:[#allocation12 + $0x448] sm:$0xff]
    %v6721 = vld [vmem:[#allocation12 + $0x450] sm:$0xff]
    %v6722 = vld [vmem:[#allocation12 + $0x458] sm:$0xff]
    %v6723 = vld [vmem:[#allocation12 + $0x460] sm:$0xff]
    %v6724 = vld [vmem:[#allocation12 + $0x468] sm:$0xff]
    %v6725 = vld [vmem:[#allocation12 + $0x470] sm:$0xff]
    %v6726 = vld [vmem:[#allocation12 + $0x478] sm:$0xff]
    %v6727 = vld [vmem:[#allocation12 + $0x480] sm:$0xff]
    %v6728 = vld [vmem:[#allocation12 + $0x488] sm:$0xff]
    %v6729 = vld [vmem:[#allocation12 + $0x490] sm:$0xff]
    %v6730 = vld [vmem:[#allocation12 + $0x498] sm:$0xff]
    %v6731 = vld [vmem:[#allocation12 + $0x4a0] sm:$0xff]
    %v6732 = vld [vmem:[#allocation12 + $0x4a8] sm:$0xff]
    %v6733 = vld [vmem:[#allocation12 + $0x4b0] sm:$0xff]
    %v6734 = vld [vmem:[#allocation12 + $0x4b8] sm:$0xff]
    %v6735 = vld [vmem:[#allocation12 + $0x4c0] sm:$0xff]
    %v6736 = vld [vmem:[#allocation12 + $0x4c8] sm:$0xff]
    %v6737 = vld [vmem:[#allocation12 + $0x4d0] sm:$0xff]
    %v6738 = vld [vmem:[#allocation12 + $0x4d8] sm:$0xff]
    %v6739 = vld [vmem:[#allocation12 + $0x4e0] sm:$0xff]
    %v6740 = vld [vmem:[#allocation12 + $0x4e8] sm:$0xff]
    %v6741 = vld [vmem:[#allocation12 + $0x4f0] sm:$0xff]
    %v6742 = vld [vmem:[#allocation12 + $0x4f8] sm:$0xff]
    %v6743 = vld [vmem:[#allocation12 + $0x500] sm:$0xff]
    %v6744 = vld [vmem:[#allocation12 + $0x508] sm:$0xff]
    %v6745 = vld [vmem:[#allocation12 + $0x510] sm:$0xff]
    %v6746 = vld [vmem:[#allocation12 + $0x518] sm:$0xff]
    %v6747 = vld [vmem:[#allocation12 + $0x520] sm:$0xff]
    %v6748 = vld [vmem:[#allocation12 + $0x528] sm:$0xff]
    %v6749 = vld [vmem:[#allocation12 + $0x530] sm:$0xff]
    %v6750 = vld [vmem:[#allocation12 + $0x538] sm:$0xff]
    %v6751 = vld [vmem:[#allocation12 + $0x540] sm:$0xff]
    %v6752 = vld [vmem:[#allocation12 + $0x548] sm:$0xff]
    %v6753 = vld [vmem:[#allocation12 + $0x550] sm:$0xff]
    %v6754 = vld [vmem:[#allocation12 + $0x558] sm:$0xff]
    %v6755 = vld [vmem:[#allocation12 + $0x560] sm:$0xff]
    %v6756 = vld [vmem:[#allocation12 + $0x568] sm:$0xff]
    %v6757 = vld [vmem:[#allocation12 + $0x570] sm:$0xff]
    %v6758 = vld [vmem:[#allocation12 + $0x578] sm:$0xff]
    %v6759 = vld [vmem:[#allocation12 + $0x580] sm:$0xff]
    %v6760 = vld [vmem:[#allocation12 + $0x588] sm:$0xff]
    %v6761 = vld [vmem:[#allocation12 + $0x590] sm:$0xff]
    %v6762 = vld [vmem:[#allocation12 + $0x598] sm:$0xff]
    %v6763 = vld [vmem:[#allocation12 + $0x5a0] sm:$0xff]
    %v6764 = vld [vmem:[#allocation12 + $0x5a8] sm:$0xff]
    %v6765 = vld [vmem:[#allocation12 + $0x5b0] sm:$0xff]
    %v6766 = vld [vmem:[#allocation12 + $0x5b8] sm:$0xff]
    %v6767 = vld [vmem:[#allocation12 + $0x5c0] sm:$0xff]
    %v6768 = vld [vmem:[#allocation12 + $0x5c8] sm:$0xff]
    %v6769 = vld [vmem:[#allocation12 + $0x5d0] sm:$0xff]
    %v6770 = vld [vmem:[#allocation12 + $0x5d8] sm:$0xff]
    %v6771 = vld [vmem:[#allocation12 + $0x5e0] sm:$0xff]
    %v6772 = vld [vmem:[#allocation12 + $0x5e8] sm:$0xff]
    %v6773 = vld [vmem:[#allocation12 + $0x5f0] sm:$0xff]
    %v6774 = vld [vmem:[#allocation12 + $0x5f8] sm:$0xff]
    %v6775 = vld [vmem:[#allocation12 + $0x600] sm:$0xff]
    %v6776 = vld [vmem:[#allocation12 + $0x608] sm:$0xff]
    %v6777 = vld [vmem:[#allocation12 + $0x610] sm:$0xff]
    %v6778 = vld [vmem:[#allocation12 + $0x618] sm:$0xff]
    %v6779 = vld [vmem:[#allocation12 + $0x620] sm:$0xff]
    %v6780 = vld [vmem:[#allocation12 + $0x628] sm:$0xff]
    %v6781 = vld [vmem:[#allocation12 + $0x630] sm:$0xff]
    %v6782 = vld [vmem:[#allocation12 + $0x638] sm:$0xff]
    %v6783 = vld [vmem:[#allocation12 + $0x640] sm:$0xff]
    %v6784 = vld [vmem:[#allocation12 + $0x648] sm:$0xff]
    %v6785 = vld [vmem:[#allocation12 + $0x650] sm:$0xff]
    %v6786 = vld [vmem:[#allocation12 + $0x658] sm:$0xff]
    %v6787 = vld [vmem:[#allocation12 + $0x660] sm:$0xff]
    %v6788 = vld [vmem:[#allocation12 + $0x668] sm:$0xff]
    %v6789 = vld [vmem:[#allocation12 + $0x670] sm:$0xff]
    %v6790 = vld [vmem:[#allocation12 + $0x678] sm:$0xff]
    %v6791 = vld [vmem:[#allocation12 + $0x680] sm:$0xff]
    %v6792 = vld [vmem:[#allocation12 + $0x688] sm:$0xff]
    %v6793 = vld [vmem:[#allocation12 + $0x690] sm:$0xff]
    %v6794 = vld [vmem:[#allocation12 + $0x698] sm:$0xff]
    %v6795 = vld [vmem:[#allocation12 + $0x6a0] sm:$0xff]
    %v6796 = vld [vmem:[#allocation12 + $0x6a8] sm:$0xff]
    %v6797 = vld [vmem:[#allocation12 + $0x6b0] sm:$0xff]
    %v6798 = vld [vmem:[#allocation12 + $0x6b8] sm:$0xff]
    %v6799 = vld [vmem:[#allocation12 + $0x6c0] sm:$0xff]
    %v6800 = vld [vmem:[#allocation12 + $0x6c8] sm:$0xff]
    %v6801 = vld [vmem:[#allocation12 + $0x6d0] sm:$0xff]
    %v6802 = vld [vmem:[#allocation12 + $0x6d8] sm:$0xff]
    %v6803 = vld [vmem:[#allocation12 + $0x6e0] sm:$0xff]
    %v6804 = vld [vmem:[#allocation12 + $0x6e8] sm:$0xff]
    %v6805 = vld [vmem:[#allocation12 + $0x6f0] sm:$0xff]
    %v6806 = vld [vmem:[#allocation12 + $0x6f8] sm:$0xff]
    %v6807 = vld [vmem:[#allocation12 + $0x700] sm:$0xff]
    %v6808 = vld [vmem:[#allocation12 + $0x708] sm:$0xff]
    %v6809 = vld [vmem:[#allocation12 + $0x710] sm:$0xff]
    %v6810 = vld [vmem:[#allocation12 + $0x718] sm:$0xff]
    %v6811 = vld [vmem:[#allocation12 + $0x720] sm:$0xff]
    %v6812 = vld [vmem:[#allocation12 + $0x728] sm:$0xff]
    %v6813 = vld [vmem:[#allocation12 + $0x730] sm:$0xff]
    %v6814 = vld [vmem:[#allocation12 + $0x738] sm:$0xff]
    %v6815 = vld [vmem:[#allocation12 + $0x740] sm:$0xff]
    %v6816 = vld [vmem:[#allocation12 + $0x748] sm:$0xff]
    %v6817 = vld [vmem:[#allocation12 + $0x750] sm:$0xff]
    %v6818 = vld [vmem:[#allocation12 + $0x758] sm:$0xff]
    %v6819 = vld [vmem:[#allocation12 + $0x760] sm:$0xff]
    %v6820 = vld [vmem:[#allocation12 + $0x768] sm:$0xff]
    %v6821 = vld [vmem:[#allocation12 + $0x770] sm:$0xff]
    %v6822 = vld [vmem:[#allocation12 + $0x778] sm:$0xff]
    %v6823 = vld [vmem:[#allocation12 + $0x780] sm:$0xff]
    %v6824 = vld [vmem:[#allocation12 + $0x788] sm:$0xff]
    %v6825 = vld [vmem:[#allocation12 + $0x790] sm:$0xff]
    %v6826 = vld [vmem:[#allocation12 + $0x798] sm:$0xff]
    %v6827 = vld [vmem:[#allocation12 + $0x7a0] sm:$0xff]
    %v6828 = vld [vmem:[#allocation12 + $0x7a8] sm:$0xff]
    %v6829 = vld [vmem:[#allocation12 + $0x7b0] sm:$0xff]
    %v6830 = vld [vmem:[#allocation12 + $0x7b8] sm:$0xff]
    %v6831 = vld [vmem:[#allocation12 + $0x7c0] sm:$0xff]
    %v6832 = vld [vmem:[#allocation12 + $0x7c8] sm:$0xff]
    %v6833 = vld [vmem:[#allocation12 + $0x7d0] sm:$0xff]
    %v6834 = vld [vmem:[#allocation12 + $0x7d8] sm:$0xff]
    %v6835 = vld [vmem:[#allocation12 + $0x7e0] sm:$0xff]
    %v6836 = vld [vmem:[#allocation12 + $0x7e8] sm:$0xff]
    %v6837 = vld [vmem:[#allocation12 + $0x7f0] sm:$0xff]
    %v6838 = vld [vmem:[#allocation12 + $0x7f8] sm:$0xff]
    %v6839 = vld [vmem:[#allocation12 + $0x800] sm:$0xff]
    %v6840 = vld [vmem:[#allocation12 + $0x808] sm:$0xff]
    %v6841 = vld [vmem:[#allocation12 + $0x810] sm:$0xff]
    %v6842 = vld [vmem:[#allocation12 + $0x818] sm:$0xff]
    %v6843 = vld [vmem:[#allocation12 + $0x820] sm:$0xff]
    %v6844 = vld [vmem:[#allocation12 + $0x828] sm:$0xff]
    %v6845 = vld [vmem:[#allocation12 + $0x830] sm:$0xff]
    %v6846 = vld [vmem:[#allocation12 + $0x838] sm:$0xff]
    %v6847 = vld [vmem:[#allocation12 + $0x840] sm:$0xff]
    %v6848 = vld [vmem:[#allocation12 + $0x848] sm:$0xff]
    %v6849 = vld [vmem:[#allocation12 + $0x850] sm:$0xff]
    %v6850 = vld [vmem:[#allocation12 + $0x858] sm:$0xff]
    %v6851 = vld [vmem:[#allocation12 + $0x860] sm:$0xff]
    %v6852 = vld [vmem:[#allocation12 + $0x868] sm:$0xff]
    %v6853 = vld [vmem:[#allocation12 + $0x870] sm:$0xff]
    %v6854 = vld [vmem:[#allocation12 + $0x878] sm:$0xff]
    %v6855 = vld [vmem:[#allocation12 + $0x880] sm:$0xff]
    %v6856 = vld [vmem:[#allocation12 + $0x888] sm:$0xff]
    %v6857 = vld [vmem:[#allocation12 + $0x890] sm:$0xff]
    %v6858 = vld [vmem:[#allocation12 + $0x898] sm:$0xff]
    %v6859 = vld [vmem:[#allocation12 + $0x8a0] sm:$0xff]
    %v6860 = vld [vmem:[#allocation12 + $0x8a8] sm:$0xff]
    %v6861 = vld [vmem:[#allocation12 + $0x8b0] sm:$0xff]
    %v6862 = vld [vmem:[#allocation12 + $0x8b8] sm:$0xff]
    %v6863 = vld [vmem:[#allocation12 + $0x8c0] sm:$0xff]
    %v6864 = vld [vmem:[#allocation12 + $0x8c8] sm:$0xff]
    %v6865 = vld [vmem:[#allocation12 + $0x8d0] sm:$0xff]
    %v6866 = vld [vmem:[#allocation12 + $0x8d8] sm:$0xff]
    %v6867 = vld [vmem:[#allocation12 + $0x8e0] sm:$0xff]
    %v6868 = vld [vmem:[#allocation12 + $0x8e8] sm:$0xff]
    %v6869 = vld [vmem:[#allocation12 + $0x8f0] sm:$0xff]
    %v6870 = vld [vmem:[#allocation12 + $0x8f8] sm:$0xff]
    %v6871 = vld [vmem:[#allocation12 + $0x900] sm:$0xff]
    %v6872 = vld [vmem:[#allocation12 + $0x908] sm:$0xff]
    %v6873 = vld [vmem:[#allocation12 + $0x910] sm:$0xff]
    %v6874 = vld [vmem:[#allocation12 + $0x918] sm:$0xff]
    %v6875 = vld [vmem:[#allocation12 + $0x920] sm:$0xff]
    %v6876 = vld [vmem:[#allocation12 + $0x928] sm:$0xff]
    %v6877 = vld [vmem:[#allocation12 + $0x930] sm:$0xff]
    %v6878 = vld [vmem:[#allocation12 + $0x938] sm:$0xff]
    %v6879 = vld [vmem:[#allocation12 + $0x940] sm:$0xff]
    %v6880 = vld [vmem:[#allocation12 + $0x948] sm:$0xff]
    %v6881 = vld [vmem:[#allocation12 + $0x950] sm:$0xff]
    %v6882 = vld [vmem:[#allocation12 + $0x958] sm:$0xff]
    %v6883 = vld [vmem:[#allocation12 + $0x960] sm:$0xff]
    %v6884 = vld [vmem:[#allocation12 + $0x968] sm:$0xff]
    %v6885 = vld [vmem:[#allocation12 + $0x970] sm:$0xff]
    %v6886 = vld [vmem:[#allocation12 + $0x978] sm:$0xff]
    %v6887 = vld [vmem:[#allocation12 + $0x980] sm:$0xff]
    %v6888 = vld [vmem:[#allocation12 + $0x988] sm:$0xff]
    %v6889 = vld [vmem:[#allocation12 + $0x990] sm:$0xff]
    %v6890 = vld [vmem:[#allocation12 + $0x998] sm:$0xff]
    %v6891 = vld [vmem:[#allocation12 + $0x9a0] sm:$0xff]
    %v6892 = vld [vmem:[#allocation12 + $0x9a8] sm:$0xff]
    %v6893 = vld [vmem:[#allocation12 + $0x9b0] sm:$0xff]
    %v6894 = vld [vmem:[#allocation12 + $0x9b8] sm:$0xff]
    %v6895 = vld [vmem:[#allocation12 + $0x9c0] sm:$0xff]
    %v6896 = vld [vmem:[#allocation12 + $0x9c8] sm:$0xff]
    %v6897 = vld [vmem:[#allocation12 + $0x9d0] sm:$0xff]
    %v6898 = vld [vmem:[#allocation12 + $0x9d8] sm:$0xff]
    %v6899 = vld [vmem:[#allocation12 + $0x9e0] sm:$0xff]
    %v6900 = vld [vmem:[#allocation12 + $0x9e8] sm:$0xff]
    %v6901 = vld [vmem:[#allocation12 + $0x9f0] sm:$0xff]
    %v6902 = vld [vmem:[#allocation12 + $0x9f8] sm:$0xff]
    %6903 = vmatprep.subr.mxu0 %v6584
    %6904 = vmatpush1.msra.mxu0 %v6583
    %6905 = vmatprep.subr.mxu0 %v6586
    %6906 = vmatpush1.msra.mxu0 %v6585
    %6907 = vmatprep.subr.mxu0 %v6588
    %6908 = vmatpush1.msra.mxu0 %v6587
    %6909 = vmatprep.subr.mxu0 %v6590
    %6910 = vmatpush1.msra.mxu0 %v6589
    %6911 = vmatprep.subr.mxu0 %v6592
    %6912 = vmatpush1.msra.mxu0 %v6591
    %6913 = vmatprep.subr.mxu0 %v6594
    %6914 = vmatpush1.msra.mxu0 %v6593
    %6915 = vmatprep.subr.mxu0 %v6596
    %6916 = vmatpush1.msra.mxu0 %v6595
    %6917 = vmatprep.subr.mxu0 %v6598
    %6918 = vmatpush1.msra.mxu0 %v6597
    %6919 = vmatprep.subr.mxu0 %v6600
    %6920 = vmatpush1.msra.mxu0 %v6599
    %6921 = vmatprep.subr.mxu0 %v6602
    %6922 = vmatpush1.msra.mxu0 %v6601
    %6923 = vmatprep.subr.mxu0 %v6604
    %6924 = vmatpush1.msra.mxu0 %v6603
    %6925 = vmatprep.subr.mxu0 %v6606
    %6926 = vmatpush1.msra.mxu0 %v6605
    %6927 = vmatprep.subr.mxu0 %v6608
    %6928 = vmatpush1.msra.mxu0 %v6607
    %6929 = vmatprep.subr.mxu0 %v6610
    %6930 = vmatpush1.msra.mxu0 %v6609
    %6931 = vmatprep.subr.mxu0 %v6612
    %6932 = vmatpush1.msra.mxu0 %v6611
    %6933 = vmatprep.subr.mxu0 %v6614
    %6934 = vmatpush1.msra.mxu0 %v6613
    %6935 = vmatprep.subr.mxu0 %v6616
    %6936 = vmatpush1.msra.mxu0 %v6615
    %6937 = vmatprep.subr.mxu0 %v6618
    %6938 = vmatpush1.msra.mxu0 %v6617
    %6939 = vmatprep.subr.mxu0 %v6620
    %6940 = vmatpush1.msra.mxu0 %v6619
    %6941 = vmatprep.subr.mxu0 %v6622
    %6942 = vmatpush1.msra.mxu0 %v6621
    %6943 = vmatprep.subr.mxu0 %v6624
    %6944 = vmatpush1.msra.mxu0 %v6623
    %6945 = vmatprep.subr.mxu0 %v6626
    %6946 = vmatpush1.msra.mxu0 %v6625
    %6947 = vmatprep.subr.mxu0 %v6628
    %6948 = vmatpush1.msra.mxu0 %v6627
    %6949 = vmatprep.subr.mxu0 %v6630
    %6950 = vmatpush1.msra.mxu0 %v6629
    %6951 = vmatprep.subr.mxu0 %v6632
    %6952 = vmatpush1.msra.mxu0 %v6631
    %6953 = vmatprep.subr.mxu0 %v6634
    %6954 = vmatpush1.msra.mxu0 %v6633
    %6955 = vmatprep.subr.mxu0 %v6636
    %6956 = vmatpush1.msra.mxu0 %v6635
    %6957 = vmatprep.subr.mxu0 %v6638
    %6958 = vmatpush1.msra.mxu0 %v6637
    %6959 = vmatprep.subr.mxu0 %v6640
    %6960 = vmatpush1.msra.mxu0 %v6639
    %6961 = vmatprep.subr.mxu0 %v6642
    %6962 = vmatpush1.msra.mxu0 %v6641
    %6963 = vmatprep.subr.mxu0 %v6644
    %6964 = vmatpush1.msra.mxu0 %v6643
    %6965 = vmatprep.subr.mxu0 %v6646
    %6966 = vmatpush1.msra.mxu0 %v6645
    %6967 = vmatprep.mubr.f32.mxu0 %v6574
    %6968 = vmatmul.mubr.f32.gmra.mrb[0].mxu0 %v6573
    %v6969 = vpop.f32.mrb[0].mxu0
    %v6970 = vadd.f32 %v5188, %v6969
    %v6971 = vpop.f32.mrb[0].mxu0
    %v6972 = vadd.f32 %v5192, %v6971
    %6973 = vdwg.mxu0
    %6974 = vmatprep.subr.mxu0 %v6648
    %6975 = vmatpush1.msra.mxu0 %v6647
    %6976 = vmatprep.subr.mxu0 %v6650
    %6977 = vmatpush1.msra.mxu0 %v6649
    %6978 = vmatprep.subr.mxu0 %v6652
    %6979 = vmatpush1.msra.mxu0 %v6651
    %6980 = vmatprep.subr.mxu0 %v6654
    %6981 = vmatpush1.msra.mxu0 %v6653
    %6982 = vmatprep.subr.mxu0 %v6656
    %6983 = vmatpush1.msra.mxu0 %v6655
    %6984 = vmatprep.subr.mxu0 %v6658
    %6985 = vmatpush1.msra.mxu0 %v6657
    %6986 = vmatprep.subr.mxu0 %v6660
    %6987 = vmatpush1.msra.mxu0 %v6659
    %6988 = vmatprep.subr.mxu0 %v6662
    %6989 = vmatpush1.msra.mxu0 %v6661
    %6990 = vmatprep.subr.mxu0 %v6664
    %6991 = vmatpush1.msra.mxu0 %v6663
    %6992 = vmatprep.subr.mxu0 %v6666
    %6993 = vmatpush1.msra.mxu0 %v6665
    %6994 = vmatprep.subr.mxu0 %v6668
    %6995 = vmatpush1.msra.mxu0 %v6667
    %6996 = vmatprep.subr.mxu0 %v6670
    %6997 = vmatpush1.msra.mxu0 %v6669
    %6998 = vmatprep.subr.mxu0 %v6672
    %6999 = vmatpush1.msra.mxu0 %v6671
    %7000 = vmatprep.subr.mxu0 %v6674
    %7001 = vmatpush1.msra.mxu0 %v6673
    %7002 = vmatprep.subr.mxu0 %v6676
    %7003 = vmatpush1.msra.mxu0 %v6675
    %7004 = vmatprep.subr.mxu0 %v6678
    %7005 = vmatpush1.msra.mxu0 %v6677
    %7006 = vmatprep.subr.mxu0 %v6680
    %7007 = vmatpush1.msra.mxu0 %v6679
    %7008 = vmatprep.subr.mxu0 %v6682
    %7009 = vmatpush1.msra.mxu0 %v6681
    %7010 = vmatprep.subr.mxu0 %v6684
    %7011 = vmatpush1.msra.mxu0 %v6683
    %7012 = vmatprep.subr.mxu0 %v6686
    %7013 = vmatpush1.msra.mxu0 %v6685
    %7014 = vmatprep.subr.mxu0 %v6688
    %7015 = vmatpush1.msra.mxu0 %v6687
    %7016 = vmatprep.subr.mxu0 %v6690
    %7017 = vmatpush1.msra.mxu0 %v6689
    %7018 = vmatprep.subr.mxu0 %v6692
    %7019 = vmatpush1.msra.mxu0 %v6691
    %7020 = vmatprep.subr.mxu0 %v6694
    %7021 = vmatpush1.msra.mxu0 %v6693
    %7022 = vmatprep.subr.mxu0 %v6696
    %7023 = vmatpush1.msra.mxu0 %v6695
    %7024 = vmatprep.subr.mxu0 %v6698
    %7025 = vmatpush1.msra.mxu0 %v6697
    %7026 = vmatprep.subr.mxu0 %v6700
    %7027 = vmatpush1.msra.mxu0 %v6699
    %7028 = vmatprep.subr.mxu0 %v6702
    %7029 = vmatpush1.msra.mxu0 %v6701
    %7030 = vmatprep.subr.mxu0 %v6704
    %7031 = vmatpush1.msra.mxu0 %v6703
    %7032 = vmatprep.subr.mxu0 %v6706
    %7033 = vmatpush1.msra.mxu0 %v6705
    %7034 = vmatprep.subr.mxu0 %v6708
    %7035 = vmatpush1.msra.mxu0 %v6707
    %7036 = vmatprep.subr.mxu0 %v6710
    %7037 = vmatpush1.msra.mxu0 %v6709
    %7038 = vmatprep.mubr.f32.mxu0 %v6576
    %7039 = vmatmul.mubr.f32.gmra.mrb[0].mxu0 %v6575
    %v7040 = vpop.f32.mrb[0].mxu0
    %v7041 = vadd.f32 %v6970, %v7040
    %v7042 = vpop.f32.mrb[0].mxu0
    %v7043 = vadd.f32 %v6972, %v7042
    %7044 = vdwg.mxu0
    %7045 = vmatprep.subr.mxu0 %v6712
    %7046 = vmatpush1.msra.mxu0 %v6711
    %7047 = vmatprep.subr.mxu0 %v6714
    %7048 = vmatpush1.msra.mxu0 %v6713
    %7049 = vmatprep.subr.mxu0 %v6716
    %7050 = vmatpush1.msra.mxu0 %v6715
    %7051 = vmatprep.subr.mxu0 %v6718
    %7052 = vmatpush1.msra.mxu0 %v6717
    %7053 = vmatprep.subr.mxu0 %v6720
    %7054 = vmatpush1.msra.mxu0 %v6719
    %7055 = vmatprep.subr.mxu0 %v6722
    %7056 = vmatpush1.msra.mxu0 %v6721
    %7057 = vmatprep.subr.mxu0 %v6724
    %7058 = vmatpush1.msra.mxu0 %v6723
    %7059 = vmatprep.subr.mxu0 %v6726
    %7060 = vmatpush1.msra.mxu0 %v6725
    %7061 = vmatprep.subr.mxu0 %v6728
    %7062 = vmatpush1.msra.mxu0 %v6727
    %7063 = vmatprep.subr.mxu0 %v6730
    %7064 = vmatpush1.msra.mxu0 %v6729
    %7065 = vmatprep.subr.mxu0 %v6732
    %7066 = vmatpush1.msra.mxu0 %v6731
    %7067 = vmatprep.subr.mxu0 %v6734
    %7068 = vmatpush1.msra.mxu0 %v6733
    %7069 = vmatprep.subr.mxu0 %v6736
    %7070 = vmatpush1.msra.mxu0 %v6735
    %7071 = vmatprep.subr.mxu0 %v6738
    %7072 = vmatpush1.msra.mxu0 %v6737
    %7073 = vmatprep.subr.mxu0 %v6740
    %7074 = vmatpush1.msra.mxu0 %v6739
    %7075 = vmatprep.subr.mxu0 %v6742
    %7076 = vmatpush1.msra.mxu0 %v6741
    %7077 = vmatprep.subr.mxu0 %v6744
    %7078 = vmatpush1.msra.mxu0 %v6743
    %7079 = vmatprep.subr.mxu0 %v6746
    %7080 = vmatpush1.msra.mxu0 %v6745
    %7081 = vmatprep.subr.mxu0 %v6748
    %7082 = vmatpush1.msra.mxu0 %v6747
    %7083 = vmatprep.subr.mxu0 %v6750
    %7084 = vmatpush1.msra.mxu0 %v6749
    %7085 = vmatprep.subr.mxu0 %v6752
    %7086 = vmatpush1.msra.mxu0 %v6751
    %7087 = vmatprep.subr.mxu0 %v6754
    %7088 = vmatpush1.msra.mxu0 %v6753
    %7089 = vmatprep.subr.mxu0 %v6756
    %7090 = vmatpush1.msra.mxu0 %v6755
    %7091 = vmatprep.subr.mxu0 %v6758
    %7092 = vmatpush1.msra.mxu0 %v6757
    %7093 = vmatprep.subr.mxu0 %v6760
    %7094 = vmatpush1.msra.mxu0 %v6759
    %7095 = vmatprep.subr.mxu0 %v6762
    %7096 = vmatpush1.msra.mxu0 %v6761
    %7097 = vmatprep.subr.mxu0 %v6764
    %7098 = vmatpush1.msra.mxu0 %v6763
    %7099 = vmatprep.subr.mxu0 %v6766
    %7100 = vmatpush1.msra.mxu0 %v6765
    %7101 = vmatprep.subr.mxu0 %v6768
    %7102 = vmatpush1.msra.mxu0 %v6767
    %7103 = vmatprep.subr.mxu0 %v6770
    %7104 = vmatpush1.msra.mxu0 %v6769
    %7105 = vmatprep.subr.mxu0 %v6772
    %7106 = vmatpush1.msra.mxu0 %v6771
    %7107 = vmatprep.subr.mxu0 %v6774
    %7108 = vmatpush1.msra.mxu0 %v6773
    %7109 = vmatprep.mubr.f32.mxu0 %v6578
    %7110 = vmatmul.mubr.f32.gmra.mrb[0].mxu0 %v6577
    %v7111 = vpop.f32.mrb[0].mxu0
    %v7112 = vadd.f32 %v7041, %v7111
    %v7113 = vpop.f32.mrb[0].mxu0
    %v7114 = vadd.f32 %v7043, %v7113
    %7115 = vdwg.mxu0
    %7116 = vmatprep.subr.mxu0 %v6776
    %7117 = vmatpush1.msra.mxu0 %v6775
    %7118 = vmatprep.subr.mxu0 %v6778
    %7119 = vmatpush1.msra.mxu0 %v6777
    %7120 = vmatprep.subr.mxu0 %v6780
    %7121 = vmatpush1.msra.mxu0 %v6779
    %7122 = vmatprep.subr.mxu0 %v6782
    %7123 = vmatpush1.msra.mxu0 %v6781
    %7124 = vmatprep.subr.mxu0 %v6784
    %7125 = vmatpush1.msra.mxu0 %v6783
    %7126 = vmatprep.subr.mxu0 %v6786
    %7127 = vmatpush1.msra.mxu0 %v6785
    %7128 = vmatprep.subr.mxu0 %v6788
    %7129 = vmatpush1.msra.mxu0 %v6787
    %7130 = vmatprep.subr.mxu0 %v6790
    %7131 = vmatpush1.msra.mxu0 %v6789
    %7132 = vmatprep.subr.mxu0 %v6792
    %7133 = vmatpush1.msra.mxu0 %v6791
    %7134 = vmatprep.subr.mxu0 %v6794
    %7135 = vmatpush1.msra.mxu0 %v6793
    %7136 = vmatprep.subr.mxu0 %v6796
    %7137 = vmatpush1.msra.mxu0 %v6795
    %7138 = vmatprep.subr.mxu0 %v6798
    %7139 = vmatpush1.msra.mxu0 %v6797
    %7140 = vmatprep.subr.mxu0 %v6800
    %7141 = vmatpush1.msra.mxu0 %v6799
    %7142 = vmatprep.subr.mxu0 %v6802
    %7143 = vmatpush1.msra.mxu0 %v6801
    %7144 = vmatprep.subr.mxu0 %v6804
    %7145 = vmatpush1.msra.mxu0 %v6803
    %7146 = vmatprep.subr.mxu0 %v6806
    %7147 = vmatpush1.msra.mxu0 %v6805
    %7148 = vmatprep.subr.mxu0 %v6808
    %7149 = vmatpush1.msra.mxu0 %v6807
    %7150 = vmatprep.subr.mxu0 %v6810
    %7151 = vmatpush1.msra.mxu0 %v6809
    %7152 = vmatprep.subr.mxu0 %v6812
    %7153 = vmatpush1.msra.mxu0 %v6811
    %7154 = vmatprep.subr.mxu0 %v6814
    %7155 = vmatpush1.msra.mxu0 %v6813
    %7156 = vmatprep.subr.mxu0 %v6816
    %7157 = vmatpush1.msra.mxu0 %v6815
    %7158 = vmatprep.subr.mxu0 %v6818
    %7159 = vmatpush1.msra.mxu0 %v6817
    %7160 = vmatprep.subr.mxu0 %v6820
    %7161 = vmatpush1.msra.mxu0 %v6819
    %7162 = vmatprep.subr.mxu0 %v6822
    %7163 = vmatpush1.msra.mxu0 %v6821
    %7164 = vmatprep.subr.mxu0 %v6824
    %7165 = vmatpush1.msra.mxu0 %v6823
    %7166 = vmatprep.subr.mxu0 %v6826
    %7167 = vmatpush1.msra.mxu0 %v6825
    %7168 = vmatprep.subr.mxu0 %v6828
    %7169 = vmatpush1.msra.mxu0 %v6827
    %7170 = vmatprep.subr.mxu0 %v6830
    %7171 = vmatpush1.msra.mxu0 %v6829
    %7172 = vmatprep.subr.mxu0 %v6832
    %7173 = vmatpush1.msra.mxu0 %v6831
    %7174 = vmatprep.subr.mxu0 %v6834
    %7175 = vmatpush1.msra.mxu0 %v6833
    %7176 = vmatprep.subr.mxu0 %v6836
    %7177 = vmatpush1.msra.mxu0 %v6835
    %7178 = vmatprep.subr.mxu0 %v6838
    %7179 = vmatpush1.msra.mxu0 %v6837
    %7180 = vmatprep.mubr.f32.mxu0 %v6580
    %7181 = vmatmul.mubr.f32.gmra.mrb[0].mxu0 %v6579
    %v7182 = vpop.f32.mrb[0].mxu0
    %v7183 = vadd.f32 %v7112, %v7182
    %v7184 = vpop.f32.mrb[0].mxu0
    %v7185 = vadd.f32 %v7114, %v7184
    %7186 = vdwg.mxu0
    %7187 = vmatprep.subr.mxu0 %v6840
    %7188 = vmatpush1.msra.mxu0 %v6839
    %7189 = vmatprep.subr.mxu0 %v6842
    %7190 = vmatpush1.msra.mxu0 %v6841
    %7191 = vmatprep.subr.mxu0 %v6844
    %7192 = vmatpush1.msra.mxu0 %v6843
    %7193 = vmatprep.subr.mxu0 %v6846
    %7194 = vmatpush1.msra.mxu0 %v6845
    %7195 = vmatprep.subr.mxu0 %v6848
    %7196 = vmatpush1.msra.mxu0 %v6847
    %7197 = vmatprep.subr.mxu0 %v6850
    %7198 = vmatpush1.msra.mxu0 %v6849
    %7199 = vmatprep.subr.mxu0 %v6852
    %7200 = vmatpush1.msra.mxu0 %v6851
    %7201 = vmatprep.subr.mxu0 %v6854
    %7202 = vmatpush1.msra.mxu0 %v6853
    %7203 = vmatprep.subr.mxu0 %v6856
    %7204 = vmatpush1.msra.mxu0 %v6855
    %7205 = vmatprep.subr.mxu0 %v6858
    %7206 = vmatpush1.msra.mxu0 %v6857
    %7207 = vmatprep.subr.mxu0 %v6860
    %7208 = vmatpush1.msra.mxu0 %v6859
    %7209 = vmatprep.subr.mxu0 %v6862
    %7210 = vmatpush1.msra.mxu0 %v6861
    %7211 = vmatprep.subr.mxu0 %v6864
    %7212 = vmatpush1.msra.mxu0 %v6863
    %7213 = vmatprep.subr.mxu0 %v6866
    %7214 = vmatpush1.msra.mxu0 %v6865
    %7215 = vmatprep.subr.mxu0 %v6868
    %7216 = vmatpush1.msra.mxu0 %v6867
    %7217 = vmatprep.subr.mxu0 %v6870
    %7218 = vmatpush1.msra.mxu0 %v6869
    %7219 = vmatprep.subr.mxu0 %v6872
    %7220 = vmatpush1.msra.mxu0 %v6871
    %7221 = vmatprep.subr.mxu0 %v6874
    %7222 = vmatpush1.msra.mxu0 %v6873
    %7223 = vmatprep.subr.mxu0 %v6876
    %7224 = vmatpush1.msra.mxu0 %v6875
    %7225 = vmatprep.subr.mxu0 %v6878
    %7226 = vmatpush1.msra.mxu0 %v6877
    %7227 = vmatprep.subr.mxu0 %v6880
    %7228 = vmatpush1.msra.mxu0 %v6879
    %7229 = vmatprep.subr.mxu0 %v6882
    %7230 = vmatpush1.msra.mxu0 %v6881
    %7231 = vmatprep.subr.mxu0 %v6884
    %7232 = vmatpush1.msra.mxu0 %v6883
    %7233 = vmatprep.subr.mxu0 %v6886
    %7234 = vmatpush1.msra.mxu0 %v6885
    %7235 = vmatprep.subr.mxu0 %v6888
    %7236 = vmatpush1.msra.mxu0 %v6887
    %7237 = vmatprep.subr.mxu0 %v6890
    %7238 = vmatpush1.msra.mxu0 %v6889
    %7239 = vmatprep.subr.mxu0 %v6892
    %7240 = vmatpush1.msra.mxu0 %v6891
    %7241 = vmatprep.subr.mxu0 %v6894
    %7242 = vmatpush1.msra.mxu0 %v6893
    %7243 = vmatprep.subr.mxu0 %v6896
    %7244 = vmatpush1.msra.mxu0 %v6895
    %7245 = vmatprep.subr.mxu0 %v6898
    %7246 = vmatpush1.msra.mxu0 %v6897
    %7247 = vmatprep.subr.mxu0 %v6900
    %7248 = vmatpush1.msra.mxu0 %v6899
    %7249 = vmatprep.subr.mxu0 %v6902
    %7250 = vmatpush1.msra.mxu0 %v6901
    %7251 = vmatprep.mubr.f32.mxu0 %v6582
    %7252 = vmatmul.mubr.f32.gmra.mrb[0].mxu0 %v6581
    %v7253 = vpop.f32.mrb[0].mxu0
    %v7254 = vadd.f32 %v7183, %v7253
    %v7255 = vpop.f32.mrb[0].mxu0
    %v7256 = vadd.f32 %v7185, %v7255
    %7257 = vdwg.mxu0
    %v7258 = vmax.f32 %v7254, 0.0
    %v7259 = vmax.f32 %v7256, 0.0
    %7260 = vst [vmem:[#allocation3 + $0x20] sm:$0xff] %v7258
    %7261 = vst [vmem:[#allocation3 + $0x28] sm:$0xff] %v7259
    %v7262 = vld [vmem:[#allocation2 + $0x60] sm:$0xff]
    %v7263 = vld [vmem:[#allocation2 + $0x68] sm:$0xff]
    %v7264 = vld [vmem:[#allocation2 + $0x70] sm:$0xff]
    %v7265 = vld [vmem:[#allocation2 + $0x78] sm:$0xff]
    %v7266 = vld [vmem:[#allocation2 + $0x80] sm:$0xff]
    %v7267 = vld [vmem:[#allocation2 + $0x88] sm:$0xff]
    %v7268 = vld [vmem:[#allocation2 + $0x90] sm:$0xff]
    %v7269 = vld [vmem:[#allocation2 + $0x98] sm:$0xff]
    %v7270 = vld [vmem:[#allocation2 + $0xa0] sm:$0xff]
    %v7271 = vld [vmem:[#allocation2 + $0xa8] sm:$0xff]
    %v7272 = vld [vmem:[#allocation12] sm:$0xff]
    %v7273 = vld [vmem:[#allocation12 + $0x8] sm:$0xff]
    %v7274 = vld [vmem:[#allocation12 + $0x10] sm:$0xff]
    %v7275 = vld [vmem:[#allocation12 + $0x18] sm:$0xff]
    %v7276 = vld [vmem:[#allocation12 + $0x20] sm:$0xff]
    %v7277 = vld [vmem:[#allocation12 + $0x28] sm:$0xff]
    %v7278 = vld [vmem:[#allocation12 + $0x30] sm:$0xff]
    %v7279 = vld [vmem:[#allocation12 + $0x38] sm:$0xff]
    %v7280 = vld [vmem:[#allocation12 + $0x40] sm:$0xff]
    %v7281 = vld [vmem:[#allocation12 + $0x48] sm:$0xff]
    %v7282 = vld [vmem:[#allocation12 + $0x50] sm:$0xff]
    %v7283 = vld [vmem:[#allocation12 + $0x58] sm:$0xff]
    %v7284 = vld [vmem:[#allocation12 + $0x60] sm:$0xff]
    %v7285 = vld [vmem:[#allocation12 + $0x68] sm:$0xff]
    %v7286 = vld [vmem:[#allocation12 + $0x70] sm:$0xff]
    %v7287 = vld [vmem:[#allocation12 + $0x78] sm:$0xff]
    %v7288 = vld [vmem:[#allocation12 + $0x80] sm:$0xff]
    %v7289 = vld [vmem:[#allocation12 + $0x88] sm:$0xff]
    %v7290 = vld [vmem:[#allocation12 + $0x90] sm:$0xff]
    %v7291 = vld [vmem:[#allocation12 + $0x98] sm:$0xff]
    %v7292 = vld [vmem:[#allocation12 + $0xa0] sm:$0xff]
    %v7293 = vld [vmem:[#allocation12 + $0xa8] sm:$0xff]
    %v7294 = vld [vmem:[#allocation12 + $0xb0] sm:$0xff]
    %v7295 = vld [vmem:[#allocation12 + $0xb8] sm:$0xff]
    %v7296 = vld [vmem:[#allocation12 + $0xc0] sm:$0xff]
    %v7297 = vld [vmem:[#allocation12 + $0xc8] sm:$0xff]
    %v7298 = vld [vmem:[#allocation12 + $0xd0] sm:$0xff]
    %v7299 = vld [vmem:[#allocation12 + $0xd8] sm:$0xff]
    %v7300 = vld [vmem:[#allocation12 + $0xe0] sm:$0xff]
    %v7301 = vld [vmem:[#allocation12 + $0xe8] sm:$0xff]
    %v7302 = vld [vmem:[#allocation12 + $0xf0] sm:$0xff]
    %v7303 = vld [vmem:[#allocation12 + $0xf8] sm:$0xff]
    %v7304 = vld [vmem:[#allocation12 + $0x100] sm:$0xff]
    %v7305 = vld [vmem:[#allocation12 + $0x108] sm:$0xff]
    %v7306 = vld [vmem:[#allocation12 + $0x110] sm:$0xff]
    %v7307 = vld [vmem:[#allocation12 + $0x118] sm:$0xff]
    %v7308 = vld [vmem:[#allocation12 + $0x120] sm:$0xff]
    %v7309 = vld [vmem:[#allocation12 + $0x128] sm:$0xff]
    %v7310 = vld [vmem:[#allocation12 + $0x130] sm:$0xff]
    %v7311 = vld [vmem:[#allocation12 + $0x138] sm:$0xff]
    %v7312 = vld [vmem:[#allocation12 + $0x140] sm:$0xff]
    %v7313 = vld [vmem:[#allocation12 + $0x148] sm:$0xff]
    %v7314 = vld [vmem:[#allocation12 + $0x150] sm:$0xff]
    %v7315 = vld [vmem:[#allocation12 + $0x158] sm:$0xff]
    %v7316 = vld [vmem:[#allocation12 + $0x160] sm:$0xff]
    %v7317 = vld [vmem:[#allocation12 + $0x168] sm:$0xff]
    %v7318 = vld [vmem:[#allocation12 + $0x170] sm:$0xff]
    %v7319 = vld [vmem:[#allocation12 + $0x178] sm:$0xff]
    %v7320 = vld [vmem:[#allocation12 + $0x180] sm:$0xff]
    %v7321 = vld [vmem:[#allocation12 + $0x188] sm:$0xff]
    %v7322 = vld [vmem:[#allocation12 + $0x190] sm:$0xff]
    %v7323 = vld [vmem:[#allocation12 + $0x198] sm:$0xff]
    %v7324 = vld [vmem:[#allocation12 + $0x1a0] sm:$0xff]
    %v7325 = vld [vmem:[#allocation12 + $0x1a8] sm:$0xff]
    %v7326 = vld [vmem:[#allocation12 + $0x1b0] sm:$0xff]
    %v7327 = vld [vmem:[#allocation12 + $0x1b8] sm:$0xff]
    %v7328 = vld [vmem:[#allocation12 + $0x1c0] sm:$0xff]
    %v7329 = vld [vmem:[#allocation12 + $0x1c8] sm:$0xff]
    %v7330 = vld [vmem:[#allocation12 + $0x1d0] sm:$0xff]
    %v7331 = vld [vmem:[#allocation12 + $0x1d8] sm:$0xff]
    %v7332 = vld [vmem:[#allocation12 + $0x1e0] sm:$0xff]
    %v7333 = vld [vmem:[#allocation12 + $0x1e8] sm:$0xff]
    %v7334 = vld [vmem:[#allocation12 + $0x1f0] sm:$0xff]
    %v7335 = vld [vmem:[#allocation12 + $0x1f8] sm:$0xff]
    %v7336 = vld [vmem:[#allocation12 + $0x200] sm:$0xff]
    %v7337 = vld [vmem:[#allocation12 + $0x208] sm:$0xff]
    %v7338 = vld [vmem:[#allocation12 + $0x210] sm:$0xff]
    %v7339 = vld [vmem:[#allocation12 + $0x218] sm:$0xff]
    %v7340 = vld [vmem:[#allocation12 + $0x220] sm:$0xff]
    %v7341 = vld [vmem:[#allocation12 + $0x228] sm:$0xff]
    %v7342 = vld [vmem:[#allocation12 + $0x230] sm:$0xff]
    %v7343 = vld [vmem:[#allocation12 + $0x238] sm:$0xff]
    %v7344 = vld [vmem:[#allocation12 + $0x240] sm:$0xff]
    %v7345 = vld [vmem:[#allocation12 + $0x248] sm:$0xff]
    %v7346 = vld [vmem:[#allocation12 + $0x250] sm:$0xff]
    %v7347 = vld [vmem:[#allocation12 + $0x258] sm:$0xff]
    %v7348 = vld [vmem:[#allocation12 + $0x260] sm:$0xff]
    %v7349 = vld [vmem:[#allocation12 + $0x268] sm:$0xff]
    %v7350 = vld [vmem:[#allocation12 + $0x270] sm:$0xff]
    %v7351 = vld [vmem:[#allocation12 + $0x278] sm:$0xff]
    %v7352 = vld [vmem:[#allocation12 + $0x280] sm:$0xff]
    %v7353 = vld [vmem:[#allocation12 + $0x288] sm:$0xff]
    %v7354 = vld [vmem:[#allocation12 + $0x290] sm:$0xff]
    %v7355 = vld [vmem:[#allocation12 + $0x298] sm:$0xff]
    %v7356 = vld [vmem:[#allocation12 + $0x2a0] sm:$0xff]
    %v7357 = vld [vmem:[#allocation12 + $0x2a8] sm:$0xff]
    %v7358 = vld [vmem:[#allocation12 + $0x2b0] sm:$0xff]
    %v7359 = vld [vmem:[#allocation12 + $0x2b8] sm:$0xff]
    %v7360 = vld [vmem:[#allocation12 + $0x2c0] sm:$0xff]
    %v7361 = vld [vmem:[#allocation12 + $0x2c8] sm:$0xff]
    %v7362 = vld [vmem:[#allocation12 + $0x2d0] sm:$0xff]
    %v7363 = vld [vmem:[#allocation12 + $0x2d8] sm:$0xff]
    %v7364 = vld [vmem:[#allocation12 + $0x2e0] sm:$0xff]
    %v7365 = vld [vmem:[#allocation12 + $0x2e8] sm:$0xff]
    %v7366 = vld [vmem:[#allocation12 + $0x2f0] sm:$0xff]
    %v7367 = vld [vmem:[#allocation12 + $0x2f8] sm:$0xff]
    %v7368 = vld [vmem:[#allocation12 + $0x300] sm:$0xff]
    %v7369 = vld [vmem:[#allocation12 + $0x308] sm:$0xff]
    %v7370 = vld [vmem:[#allocation12 + $0x310] sm:$0xff]
    %v7371 = vld [vmem:[#allocation12 + $0x318] sm:$0xff]
    %v7372 = vld [vmem:[#allocation12 + $0x320] sm:$0xff]
    %v7373 = vld [vmem:[#allocation12 + $0x328] sm:$0xff]
    %v7374 = vld [vmem:[#allocation12 + $0x330] sm:$0xff]
    %v7375 = vld [vmem:[#allocation12 + $0x338] sm:$0xff]
    %v7376 = vld [vmem:[#allocation12 + $0x340] sm:$0xff]
    %v7377 = vld [vmem:[#allocation12 + $0x348] sm:$0xff]
    %v7378 = vld [vmem:[#allocation12 + $0x350] sm:$0xff]
    %v7379 = vld [vmem:[#allocation12 + $0x358] sm:$0xff]
    %v7380 = vld [vmem:[#allocation12 + $0x360] sm:$0xff]
    %v7381 = vld [vmem:[#allocation12 + $0x368] sm:$0xff]
    %v7382 = vld [vmem:[#allocation12 + $0x370] sm:$0xff]
    %v7383 = vld [vmem:[#allocation12 + $0x378] sm:$0xff]
    %v7384 = vld [vmem:[#allocation12 + $0x380] sm:$0xff]
    %v7385 = vld [vmem:[#allocation12 + $0x388] sm:$0xff]
    %v7386 = vld [vmem:[#allocation12 + $0x390] sm:$0xff]
    %v7387 = vld [vmem:[#allocation12 + $0x398] sm:$0xff]
    %v7388 = vld [vmem:[#allocation12 + $0x3a0] sm:$0xff]
    %v7389 = vld [vmem:[#allocation12 + $0x3a8] sm:$0xff]
    %v7390 = vld [vmem:[#allocation12 + $0x3b0] sm:$0xff]
    %v7391 = vld [vmem:[#allocation12 + $0x3b8] sm:$0xff]
    %v7392 = vld [vmem:[#allocation12 + $0x3c0] sm:$0xff]
    %v7393 = vld [vmem:[#allocation12 + $0x3c8] sm:$0xff]
    %v7394 = vld [vmem:[#allocation12 + $0x3d0] sm:$0xff]
    %v7395 = vld [vmem:[#allocation12 + $0x3d8] sm:$0xff]
    %v7396 = vld [vmem:[#allocation12 + $0x3e0] sm:$0xff]
    %v7397 = vld [vmem:[#allocation12 + $0x3e8] sm:$0xff]
    %v7398 = vld [vmem:[#allocation12 + $0x3f0] sm:$0xff]
    %v7399 = vld [vmem:[#allocation12 + $0x3f8] sm:$0xff]
    %v7400 = vld [vmem:[#allocation12 + $0x400] sm:$0xff]
    %v7401 = vld [vmem:[#allocation12 + $0x408] sm:$0xff]
    %v7402 = vld [vmem:[#allocation12 + $0x410] sm:$0xff]
    %v7403 = vld [vmem:[#allocation12 + $0x418] sm:$0xff]
    %v7404 = vld [vmem:[#allocation12 + $0x420] sm:$0xff]
    %v7405 = vld [vmem:[#allocation12 + $0x428] sm:$0xff]
    %v7406 = vld [vmem:[#allocation12 + $0x430] sm:$0xff]
    %v7407 = vld [vmem:[#allocation12 + $0x438] sm:$0xff]
    %v7408 = vld [vmem:[#allocation12 + $0x440] sm:$0xff]
    %v7409 = vld [vmem:[#allocation12 + $0x448] sm:$0xff]
    %v7410 = vld [vmem:[#allocation12 + $0x450] sm:$0xff]
    %v7411 = vld [vmem:[#allocation12 + $0x458] sm:$0xff]
    %v7412 = vld [vmem:[#allocation12 + $0x460] sm:$0xff]
    %v7413 = vld [vmem:[#allocation12 + $0x468] sm:$0xff]
    %v7414 = vld [vmem:[#allocation12 + $0x470] sm:$0xff]
    %v7415 = vld [vmem:[#allocation12 + $0x478] sm:$0xff]
    %v7416 = vld [vmem:[#allocation12 + $0x480] sm:$0xff]
    %v7417 = vld [vmem:[#allocation12 + $0x488] sm:$0xff]
    %v7418 = vld [vmem:[#allocation12 + $0x490] sm:$0xff]
    %v7419 = vld [vmem:[#allocation12 + $0x498] sm:$0xff]
    %v7420 = vld [vmem:[#allocation12 + $0x4a0] sm:$0xff]
    %v7421 = vld [vmem:[#allocation12 + $0x4a8] sm:$0xff]
    %v7422 = vld [vmem:[#allocation12 + $0x4b0] sm:$0xff]
    %v7423 = vld [vmem:[#allocation12 + $0x4b8] sm:$0xff]
    %v7424 = vld [vmem:[#allocation12 + $0x4c0] sm:$0xff]
    %v7425 = vld [vmem:[#allocation12 + $0x4c8] sm:$0xff]
    %v7426 = vld [vmem:[#allocation12 + $0x4d0] sm:$0xff]
    %v7427 = vld [vmem:[#allocation12 + $0x4d8] sm:$0xff]
    %v7428 = vld [vmem:[#allocation12 + $0x4e0] sm:$0xff]
    %v7429 = vld [vmem:[#allocation12 + $0x4e8] sm:$0xff]
    %v7430 = vld [vmem:[#allocation12 + $0x4f0] sm:$0xff]
    %v7431 = vld [vmem:[#allocation12 + $0x4f8] sm:$0xff]
    %v7432 = vld [vmem:[#allocation12 + $0x500] sm:$0xff]
    %v7433 = vld [vmem:[#allocation12 + $0x508] sm:$0xff]
    %v7434 = vld [vmem:[#allocation12 + $0x510] sm:$0xff]
    %v7435 = vld [vmem:[#allocation12 + $0x518] sm:$0xff]
    %v7436 = vld [vmem:[#allocation12 + $0x520] sm:$0xff]
    %v7437 = vld [vmem:[#allocation12 + $0x528] sm:$0xff]
    %v7438 = vld [vmem:[#allocation12 + $0x530] sm:$0xff]
    %v7439 = vld [vmem:[#allocation12 + $0x538] sm:$0xff]
    %v7440 = vld [vmem:[#allocation12 + $0x540] sm:$0xff]
    %v7441 = vld [vmem:[#allocation12 + $0x548] sm:$0xff]
    %v7442 = vld [vmem:[#allocation12 + $0x550] sm:$0xff]
    %v7443 = vld [vmem:[#allocation12 + $0x558] sm:$0xff]
    %v7444 = vld [vmem:[#allocation12 + $0x560] sm:$0xff]
    %v7445 = vld [vmem:[#allocation12 + $0x568] sm:$0xff]
    %v7446 = vld [vmem:[#allocation12 + $0x570] sm:$0xff]
    %v7447 = vld [vmem:[#allocation12 + $0x578] sm:$0xff]
    %v7448 = vld [vmem:[#allocation12 + $0x580] sm:$0xff]
    %v7449 = vld [vmem:[#allocation12 + $0x588] sm:$0xff]
    %v7450 = vld [vmem:[#allocation12 + $0x590] sm:$0xff]
    %v7451 = vld [vmem:[#allocation12 + $0x598] sm:$0xff]
    %v7452 = vld [vmem:[#allocation12 + $0x5a0] sm:$0xff]
    %v7453 = vld [vmem:[#allocation12 + $0x5a8] sm:$0xff]
    %v7454 = vld [vmem:[#allocation12 + $0x5b0] sm:$0xff]
    %v7455 = vld [vmem:[#allocation12 + $0x5b8] sm:$0xff]
    %v7456 = vld [vmem:[#allocation12 + $0x5c0] sm:$0xff]
    %v7457 = vld [vmem:[#allocation12 + $0x5c8] sm:$0xff]
    %v7458 = vld [vmem:[#allocation12 + $0x5d0] sm:$0xff]
    %v7459 = vld [vmem:[#allocation12 + $0x5d8] sm:$0xff]
    %v7460 = vld [vmem:[#allocation12 + $0x5e0] sm:$0xff]
    %v7461 = vld [vmem:[#allocation12 + $0x5e8] sm:$0xff]
    %v7462 = vld [vmem:[#allocation12 + $0x5f0] sm:$0xff]
    %v7463 = vld [vmem:[#allocation12 + $0x5f8] sm:$0xff]
    %v7464 = vld [vmem:[#allocation12 + $0x600] sm:$0xff]
    %v7465 = vld [vmem:[#allocation12 + $0x608] sm:$0xff]
    %v7466 = vld [vmem:[#allocation12 + $0x610] sm:$0xff]
    %v7467 = vld [vmem:[#allocation12 + $0x618] sm:$0xff]
    %v7468 = vld [vmem:[#allocation12 + $0x620] sm:$0xff]
    %v7469 = vld [vmem:[#allocation12 + $0x628] sm:$0xff]
    %v7470 = vld [vmem:[#allocation12 + $0x630] sm:$0xff]
    %v7471 = vld [vmem:[#allocation12 + $0x638] sm:$0xff]
    %v7472 = vld [vmem:[#allocation12 + $0x640] sm:$0xff]
    %v7473 = vld [vmem:[#allocation12 + $0x648] sm:$0xff]
    %v7474 = vld [vmem:[#allocation12 + $0x650] sm:$0xff]
    %v7475 = vld [vmem:[#allocation12 + $0x658] sm:$0xff]
    %v7476 = vld [vmem:[#allocation12 + $0x660] sm:$0xff]
    %v7477 = vld [vmem:[#allocation12 + $0x668] sm:$0xff]
    %v7478 = vld [vmem:[#allocation12 + $0x670] sm:$0xff]
    %v7479 = vld [vmem:[#allocation12 + $0x678] sm:$0xff]
    %v7480 = vld [vmem:[#allocation12 + $0x680] sm:$0xff]
    %v7481 = vld [vmem:[#allocation12 + $0x688] sm:$0xff]
    %v7482 = vld [vmem:[#allocation12 + $0x690] sm:$0xff]
    %v7483 = vld [vmem:[#allocation12 + $0x698] sm:$0xff]
    %v7484 = vld [vmem:[#allocation12 + $0x6a0] sm:$0xff]
    %v7485 = vld [vmem:[#allocation12 + $0x6a8] sm:$0xff]
    %v7486 = vld [vmem:[#allocation12 + $0x6b0] sm:$0xff]
    %v7487 = vld [vmem:[#allocation12 + $0x6b8] sm:$0xff]
    %v7488 = vld [vmem:[#allocation12 + $0x6c0] sm:$0xff]
    %v7489 = vld [vmem:[#allocation12 + $0x6c8] sm:$0xff]
    %v7490 = vld [vmem:[#allocation12 + $0x6d0] sm:$0xff]
    %v7491 = vld [vmem:[#allocation12 + $0x6d8] sm:$0xff]
    %v7492 = vld [vmem:[#allocation12 + $0x6e0] sm:$0xff]
    %v7493 = vld [vmem:[#allocation12 + $0x6e8] sm:$0xff]
    %v7494 = vld [vmem:[#allocation12 + $0x6f0] sm:$0xff]
    %v7495 = vld [vmem:[#allocation12 + $0x6f8] sm:$0xff]
    %v7496 = vld [vmem:[#allocation12 + $0x700] sm:$0xff]
    %v7497 = vld [vmem:[#allocation12 + $0x708] sm:$0xff]
    %v7498 = vld [vmem:[#allocation12 + $0x710] sm:$0xff]
    %v7499 = vld [vmem:[#allocation12 + $0x718] sm:$0xff]
    %v7500 = vld [vmem:[#allocation12 + $0x720] sm:$0xff]
    %v7501 = vld [vmem:[#allocation12 + $0x728] sm:$0xff]
    %v7502 = vld [vmem:[#allocation12 + $0x730] sm:$0xff]
    %v7503 = vld [vmem:[#allocation12 + $0x738] sm:$0xff]
    %v7504 = vld [vmem:[#allocation12 + $0x740] sm:$0xff]
    %v7505 = vld [vmem:[#allocation12 + $0x748] sm:$0xff]
    %v7506 = vld [vmem:[#allocation12 + $0x750] sm:$0xff]
    %v7507 = vld [vmem:[#allocation12 + $0x758] sm:$0xff]
    %v7508 = vld [vmem:[#allocation12 + $0x760] sm:$0xff]
    %v7509 = vld [vmem:[#allocation12 + $0x768] sm:$0xff]
    %v7510 = vld [vmem:[#allocation12 + $0x770] sm:$0xff]
    %v7511 = vld [vmem:[#allocation12 + $0x778] sm:$0xff]
    %v7512 = vld [vmem:[#allocation12 + $0x780] sm:$0xff]
    %v7513 = vld [vmem:[#allocation12 + $0x788] sm:$0xff]
    %v7514 = vld [vmem:[#allocation12 + $0x790] sm:$0xff]
    %v7515 = vld [vmem:[#allocation12 + $0x798] sm:$0xff]
    %v7516 = vld [vmem:[#allocation12 + $0x7a0] sm:$0xff]
    %v7517 = vld [vmem:[#allocation12 + $0x7a8] sm:$0xff]
    %v7518 = vld [vmem:[#allocation12 + $0x7b0] sm:$0xff]
    %v7519 = vld [vmem:[#allocation12 + $0x7b8] sm:$0xff]
    %v7520 = vld [vmem:[#allocation12 + $0x7c0] sm:$0xff]
    %v7521 = vld [vmem:[#allocation12 + $0x7c8] sm:$0xff]
    %v7522 = vld [vmem:[#allocation12 + $0x7d0] sm:$0xff]
    %v7523 = vld [vmem:[#allocation12 + $0x7d8] sm:$0xff]
    %v7524 = vld [vmem:[#allocation12 + $0x7e0] sm:$0xff]
    %v7525 = vld [vmem:[#allocation12 + $0x7e8] sm:$0xff]
    %v7526 = vld [vmem:[#allocation12 + $0x7f0] sm:$0xff]
    %v7527 = vld [vmem:[#allocation12 + $0x7f8] sm:$0xff]
    %v7528 = vld [vmem:[#allocation12 + $0x800] sm:$0xff]
    %v7529 = vld [vmem:[#allocation12 + $0x808] sm:$0xff]
    %v7530 = vld [vmem:[#allocation12 + $0x810] sm:$0xff]
    %v7531 = vld [vmem:[#allocation12 + $0x818] sm:$0xff]
    %v7532 = vld [vmem:[#allocation12 + $0x820] sm:$0xff]
    %v7533 = vld [vmem:[#allocation12 + $0x828] sm:$0xff]
    %v7534 = vld [vmem:[#allocation12 + $0x830] sm:$0xff]
    %v7535 = vld [vmem:[#allocation12 + $0x838] sm:$0xff]
    %v7536 = vld [vmem:[#allocation12 + $0x840] sm:$0xff]
    %v7537 = vld [vmem:[#allocation12 + $0x848] sm:$0xff]
    %v7538 = vld [vmem:[#allocation12 + $0x850] sm:$0xff]
    %v7539 = vld [vmem:[#allocation12 + $0x858] sm:$0xff]
    %v7540 = vld [vmem:[#allocation12 + $0x860] sm:$0xff]
    %v7541 = vld [vmem:[#allocation12 + $0x868] sm:$0xff]
    %v7542 = vld [vmem:[#allocation12 + $0x870] sm:$0xff]
    %v7543 = vld [vmem:[#allocation12 + $0x878] sm:$0xff]
    %v7544 = vld [vmem:[#allocation12 + $0x880] sm:$0xff]
    %v7545 = vld [vmem:[#allocation12 + $0x888] sm:$0xff]
    %v7546 = vld [vmem:[#allocation12 + $0x890] sm:$0xff]
    %v7547 = vld [vmem:[#allocation12 + $0x898] sm:$0xff]
    %v7548 = vld [vmem:[#allocation12 + $0x8a0] sm:$0xff]
    %v7549 = vld [vmem:[#allocation12 + $0x8a8] sm:$0xff]
    %v7550 = vld [vmem:[#allocation12 + $0x8b0] sm:$0xff]
    %v7551 = vld [vmem:[#allocation12 + $0x8b8] sm:$0xff]
    %v7552 = vld [vmem:[#allocation12 + $0x8c0] sm:$0xff]
    %v7553 = vld [vmem:[#allocation12 + $0x8c8] sm:$0xff]
    %v7554 = vld [vmem:[#allocation12 + $0x8d0] sm:$0xff]
    %v7555 = vld [vmem:[#allocation12 + $0x8d8] sm:$0xff]
    %v7556 = vld [vmem:[#allocation12 + $0x8e0] sm:$0xff]
    %v7557 = vld [vmem:[#allocation12 + $0x8e8] sm:$0xff]
    %v7558 = vld [vmem:[#allocation12 + $0x8f0] sm:$0xff]
    %v7559 = vld [vmem:[#allocation12 + $0x8f8] sm:$0xff]
    %v7560 = vld [vmem:[#allocation12 + $0x900] sm:$0xff]
    %v7561 = vld [vmem:[#allocation12 + $0x908] sm:$0xff]
    %v7562 = vld [vmem:[#allocation12 + $0x910] sm:$0xff]
    %v7563 = vld [vmem:[#allocation12 + $0x918] sm:$0xff]
    %v7564 = vld [vmem:[#allocation12 + $0x920] sm:$0xff]
    %v7565 = vld [vmem:[#allocation12 + $0x928] sm:$0xff]
    %v7566 = vld [vmem:[#allocation12 + $0x930] sm:$0xff]
    %v7567 = vld [vmem:[#allocation12 + $0x938] sm:$0xff]
    %v7568 = vld [vmem:[#allocation12 + $0x940] sm:$0xff]
    %v7569 = vld [vmem:[#allocation12 + $0x948] sm:$0xff]
    %v7570 = vld [vmem:[#allocation12 + $0x950] sm:$0xff]
    %v7571 = vld [vmem:[#allocation12 + $0x958] sm:$0xff]
    %v7572 = vld [vmem:[#allocation12 + $0x960] sm:$0xff]
    %v7573 = vld [vmem:[#allocation12 + $0x968] sm:$0xff]
    %v7574 = vld [vmem:[#allocation12 + $0x970] sm:$0xff]
    %v7575 = vld [vmem:[#allocation12 + $0x978] sm:$0xff]
    %v7576 = vld [vmem:[#allocation12 + $0x980] sm:$0xff]
    %v7577 = vld [vmem:[#allocation12 + $0x988] sm:$0xff]
    %v7578 = vld [vmem:[#allocation12 + $0x990] sm:$0xff]
    %v7579 = vld [vmem:[#allocation12 + $0x998] sm:$0xff]
    %v7580 = vld [vmem:[#allocation12 + $0x9a0] sm:$0xff]
    %v7581 = vld [vmem:[#allocation12 + $0x9a8] sm:$0xff]
    %v7582 = vld [vmem:[#allocation12 + $0x9b0] sm:$0xff]
    %v7583 = vld [vmem:[#allocation12 + $0x9b8] sm:$0xff]
    %v7584 = vld [vmem:[#allocation12 + $0x9c0] sm:$0xff]
    %v7585 = vld [vmem:[#allocation12 + $0x9c8] sm:$0xff]
    %v7586 = vld [vmem:[#allocation12 + $0x9d0] sm:$0xff]
    %v7587 = vld [vmem:[#allocation12 + $0x9d8] sm:$0xff]
    %v7588 = vld [vmem:[#allocation12 + $0x9e0] sm:$0xff]
    %v7589 = vld [vmem:[#allocation12 + $0x9e8] sm:$0xff]
    %v7590 = vld [vmem:[#allocation12 + $0x9f0] sm:$0xff]
    %v7591 = vld [vmem:[#allocation12 + $0x9f8] sm:$0xff]
    %7592 = vmatprep.subr.mxu0 %v7273
    %7593 = vmatpush1.msra.mxu0 %v7272
    %7594 = vmatprep.subr.mxu0 %v7275
    %7595 = vmatpush1.msra.mxu0 %v7274
    %7596 = vmatprep.subr.mxu0 %v7277
    %7597 = vmatpush1.msra.mxu0 %v7276
    %7598 = vmatprep.subr.mxu0 %v7279
    %7599 = vmatpush1.msra.mxu0 %v7278
    %7600 = vmatprep.subr.mxu0 %v7281
    %7601 = vmatpush1.msra.mxu0 %v7280
    %7602 = vmatprep.subr.mxu0 %v7283
    %7603 = vmatpush1.msra.mxu0 %v7282
    %7604 = vmatprep.subr.mxu0 %v7285
    %7605 = vmatpush1.msra.mxu0 %v7284
    %7606 = vmatprep.subr.mxu0 %v7287
    %7607 = vmatpush1.msra.mxu0 %v7286
    %7608 = vmatprep.subr.mxu0 %v7289
    %7609 = vmatpush1.msra.mxu0 %v7288
    %7610 = vmatprep.subr.mxu0 %v7291
    %7611 = vmatpush1.msra.mxu0 %v7290
    %7612 = vmatprep.subr.mxu0 %v7293
    %7613 = vmatpush1.msra.mxu0 %v7292
    %7614 = vmatprep.subr.mxu0 %v7295
    %7615 = vmatpush1.msra.mxu0 %v7294
    %7616 = vmatprep.subr.mxu0 %v7297
    %7617 = vmatpush1.msra.mxu0 %v7296
    %7618 = vmatprep.subr.mxu0 %v7299
    %7619 = vmatpush1.msra.mxu0 %v7298
    %7620 = vmatprep.subr.mxu0 %v7301
    %7621 = vmatpush1.msra.mxu0 %v7300
    %7622 = vmatprep.subr.mxu0 %v7303
    %7623 = vmatpush1.msra.mxu0 %v7302
    %7624 = vmatprep.subr.mxu0 %v7305
    %7625 = vmatpush1.msra.mxu0 %v7304
    %7626 = vmatprep.subr.mxu0 %v7307
    %7627 = vmatpush1.msra.mxu0 %v7306
    %7628 = vmatprep.subr.mxu0 %v7309
    %7629 = vmatpush1.msra.mxu0 %v7308
    %7630 = vmatprep.subr.mxu0 %v7311
    %7631 = vmatpush1.msra.mxu0 %v7310
    %7632 = vmatprep.subr.mxu0 %v7313
    %7633 = vmatpush1.msra.mxu0 %v7312
    %7634 = vmatprep.subr.mxu0 %v7315
    %7635 = vmatpush1.msra.mxu0 %v7314
    %7636 = vmatprep.subr.mxu0 %v7317
    %7637 = vmatpush1.msra.mxu0 %v7316
    %7638 = vmatprep.subr.mxu0 %v7319
    %7639 = vmatpush1.msra.mxu0 %v7318
    %7640 = vmatprep.subr.mxu0 %v7321
    %7641 = vmatpush1.msra.mxu0 %v7320
    %7642 = vmatprep.subr.mxu0 %v7323
    %7643 = vmatpush1.msra.mxu0 %v7322
    %7644 = vmatprep.subr.mxu0 %v7325
    %7645 = vmatpush1.msra.mxu0 %v7324
    %7646 = vmatprep.subr.mxu0 %v7327
    %7647 = vmatpush1.msra.mxu0 %v7326
    %7648 = vmatprep.subr.mxu0 %v7329
    %7649 = vmatpush1.msra.mxu0 %v7328
    %7650 = vmatprep.subr.mxu0 %v7331
    %7651 = vmatpush1.msra.mxu0 %v7330
    %7652 = vmatprep.subr.mxu0 %v7333
    %7653 = vmatpush1.msra.mxu0 %v7332
    %7654 = vmatprep.subr.mxu0 %v7335
    %7655 = vmatpush1.msra.mxu0 %v7334
    %7656 = vmatprep.mubr.f32.mxu0 %v7263
    %7657 = vmatmul.mubr.f32.gmra.mrb[0].mxu0 %v7262
    %v7658 = vpop.f32.mrb[0].mxu0
    %v7659 = vadd.f32 %v5188, %v7658
    %v7660 = vpop.f32.mrb[0].mxu0
    %v7661 = vadd.f32 %v5192, %v7660
    %7662 = vdwg.mxu0
    %7663 = vmatprep.subr.mxu0 %v7337
    %7664 = vmatpush1.msra.mxu0 %v7336
    %7665 = vmatprep.subr.mxu0 %v7339
    %7666 = vmatpush1.msra.mxu0 %v7338
    %7667 = vmatprep.subr.mxu0 %v7341
    %7668 = vmatpush1.msra.mxu0 %v7340
    %7669 = vmatprep.subr.mxu0 %v7343
    %7670 = vmatpush1.msra.mxu0 %v7342
    %7671 = vmatprep.subr.mxu0 %v7345
    %7672 = vmatpush1.msra.mxu0 %v7344
    %7673 = vmatprep.subr.mxu0 %v7347
    %7674 = vmatpush1.msra.mxu0 %v7346
    %7675 = vmatprep.subr.mxu0 %v7349
    %7676 = vmatpush1.msra.mxu0 %v7348
    %7677 = vmatprep.subr.mxu0 %v7351
    %7678 = vmatpush1.msra.mxu0 %v7350
    %7679 = vmatprep.subr.mxu0 %v7353
    %7680 = vmatpush1.msra.mxu0 %v7352
    %7681 = vmatprep.subr.mxu0 %v7355
    %7682 = vmatpush1.msra.mxu0 %v7354
    %7683 = vmatprep.subr.mxu0 %v7357
    %7684 = vmatpush1.msra.mxu0 %v7356
    %7685 = vmatprep.subr.mxu0 %v7359
    %7686 = vmatpush1.msra.mxu0 %v7358
    %7687 = vmatprep.subr.mxu0 %v7361
    %7688 = vmatpush1.msra.mxu0 %v7360
    %7689 = vmatprep.subr.mxu0 %v7363
    %7690 = vmatpush1.msra.mxu0 %v7362
    %7691 = vmatprep.subr.mxu0 %v7365
    %7692 = vmatpush1.msra.mxu0 %v7364
    %7693 = vmatprep.subr.mxu0 %v7367
    %7694 = vmatpush1.msra.mxu0 %v7366
    %7695 = vmatprep.subr.mxu0 %v7369
    %7696 = vmatpush1.msra.mxu0 %v7368
    %7697 = vmatprep.subr.mxu0 %v7371
    %7698 = vmatpush1.msra.mxu0 %v7370
    %7699 = vmatprep.subr.mxu0 %v7373
    %7700 = vmatpush1.msra.mxu0 %v7372
    %7701 = vmatprep.subr.mxu0 %v7375
    %7702 = vmatpush1.msra.mxu0 %v7374
    %7703 = vmatprep.subr.mxu0 %v7377
    %7704 = vmatpush1.msra.mxu0 %v7376
    %7705 = vmatprep.subr.mxu0 %v7379
    %7706 = vmatpush1.msra.mxu0 %v7378
    %7707 = vmatprep.subr.mxu0 %v7381
    %7708 = vmatpush1.msra.mxu0 %v7380
    %7709 = vmatprep.subr.mxu0 %v7383
    %7710 = vmatpush1.msra.mxu0 %v7382
    %7711 = vmatprep.subr.mxu0 %v7385
    %7712 = vmatpush1.msra.mxu0 %v7384
    %7713 = vmatprep.subr.mxu0 %v7387
    %7714 = vmatpush1.msra.mxu0 %v7386
    %7715 = vmatprep.subr.mxu0 %v7389
    %7716 = vmatpush1.msra.mxu0 %v7388
    %7717 = vmatprep.subr.mxu0 %v7391
    %7718 = vmatpush1.msra.mxu0 %v7390
    %7719 = vmatprep.subr.mxu0 %v7393
    %7720 = vmatpush1.msra.mxu0 %v7392
    %7721 = vmatprep.subr.mxu0 %v7395
    %7722 = vmatpush1.msra.mxu0 %v7394
    %7723 = vmatprep.subr.mxu0 %v7397
    %7724 = vmatpush1.msra.mxu0 %v7396
    %7725 = vmatprep.subr.mxu0 %v7399
    %7726 = vmatpush1.msra.mxu0 %v7398
    %7727 = vmatprep.mubr.f32.mxu0 %v7265
    %7728 = vmatmul.mubr.f32.gmra.mrb[0].mxu0 %v7264
    %v7729 = vpop.f32.mrb[0].mxu0
    %v7730 = vadd.f32 %v7659, %v7729
    %v7731 = vpop.f32.mrb[0].mxu0
    %v7732 = vadd.f32 %v7661, %v7731
    %7733 = vdwg.mxu0
    %7734 = vmatprep.subr.mxu0 %v7401
    %7735 = vmatpush1.msra.mxu0 %v7400
    %7736 = vmatprep.subr.mxu0 %v7403
    %7737 = vmatpush1.msra.mxu0 %v7402
    %7738 = vmatprep.subr.mxu0 %v7405
    %7739 = vmatpush1.msra.mxu0 %v7404
    %7740 = vmatprep.subr.mxu0 %v7407
    %7741 = vmatpush1.msra.mxu0 %v7406
    %7742 = vmatprep.subr.mxu0 %v7409
    %7743 = vmatpush1.msra.mxu0 %v7408
    %7744 = vmatprep.subr.mxu0 %v7411
    %7745 = vmatpush1.msra.mxu0 %v7410
    %7746 = vmatprep.subr.mxu0 %v7413
    %7747 = vmatpush1.msra.mxu0 %v7412
    %7748 = vmatprep.subr.mxu0 %v7415
    %7749 = vmatpush1.msra.mxu0 %v7414
    %7750 = vmatprep.subr.mxu0 %v7417
    %7751 = vmatpush1.msra.mxu0 %v7416
    %7752 = vmatprep.subr.mxu0 %v7419
    %7753 = vmatpush1.msra.mxu0 %v7418
    %7754 = vmatprep.subr.mxu0 %v7421
    %7755 = vmatpush1.msra.mxu0 %v7420
    %7756 = vmatprep.subr.mxu0 %v7423
    %7757 = vmatpush1.msra.mxu0 %v7422
    %7758 = vmatprep.subr.mxu0 %v7425
    %7759 = vmatpush1.msra.mxu0 %v7424
    %7760 = vmatprep.subr.mxu0 %v7427
    %7761 = vmatpush1.msra.mxu0 %v7426
    %7762 = vmatprep.subr.mxu0 %v7429
    %7763 = vmatpush1.msra.mxu0 %v7428
    %7764 = vmatprep.subr.mxu0 %v7431
    %7765 = vmatpush1.msra.mxu0 %v7430
    %7766 = vmatprep.subr.mxu0 %v7433
    %7767 = vmatpush1.msra.mxu0 %v7432
    %7768 = vmatprep.subr.mxu0 %v7435
    %7769 = vmatpush1.msra.mxu0 %v7434
    %7770 = vmatprep.subr.mxu0 %v7437
    %7771 = vmatpush1.msra.mxu0 %v7436
    %7772 = vmatprep.subr.mxu0 %v7439
    %7773 = vmatpush1.msra.mxu0 %v7438
    %7774 = vmatprep.subr.mxu0 %v7441
    %7775 = vmatpush1.msra.mxu0 %v7440
    %7776 = vmatprep.subr.mxu0 %v7443
    %7777 = vmatpush1.msra.mxu0 %v7442
    %7778 = vmatprep.subr.mxu0 %v7445
    %7779 = vmatpush1.msra.mxu0 %v7444
    %7780 = vmatprep.subr.mxu0 %v7447
    %7781 = vmatpush1.msra.mxu0 %v7446
    %7782 = vmatprep.subr.mxu0 %v7449
    %7783 = vmatpush1.msra.mxu0 %v7448
    %7784 = vmatprep.subr.mxu0 %v7451
    %7785 = vmatpush1.msra.mxu0 %v7450
    %7786 = vmatprep.subr.mxu0 %v7453
    %7787 = vmatpush1.msra.mxu0 %v7452
    %7788 = vmatprep.subr.mxu0 %v7455
    %7789 = vmatpush1.msra.mxu0 %v7454
    %7790 = vmatprep.subr.mxu0 %v7457
    %7791 = vmatpush1.msra.mxu0 %v7456
    %7792 = vmatprep.subr.mxu0 %v7459
    %7793 = vmatpush1.msra.mxu0 %v7458
    %7794 = vmatprep.subr.mxu0 %v7461
    %7795 = vmatpush1.msra.mxu0 %v7460
    %7796 = vmatprep.subr.mxu0 %v7463
    %7797 = vmatpush1.msra.mxu0 %v7462
    %7798 = vmatprep.mubr.f32.mxu0 %v7267
    %7799 = vmatmul.mubr.f32.gmra.mrb[0].mxu0 %v7266
    %v7800 = vpop.f32.mrb[0].mxu0
    %v7801 = vadd.f32 %v7730, %v7800
    %v7802 = vpop.f32.mrb[0].mxu0
    %v7803 = vadd.f32 %v7732, %v7802
    %7804 = vdwg.mxu0
    %7805 = vmatprep.subr.mxu0 %v7465
    %7806 = vmatpush1.msra.mxu0 %v7464
    %7807 = vmatprep.subr.mxu0 %v7467
    %7808 = vmatpush1.msra.mxu0 %v7466
    %7809 = vmatprep.subr.mxu0 %v7469
    %7810 = vmatpush1.msra.mxu0 %v7468
    %7811 = vmatprep.subr.mxu0 %v7471
    %7812 = vmatpush1.msra.mxu0 %v7470
    %7813 = vmatprep.subr.mxu0 %v7473
    %7814 = vmatpush1.msra.mxu0 %v7472
    %7815 = vmatprep.subr.mxu0 %v7475
    %7816 = vmatpush1.msra.mxu0 %v7474
    %7817 = vmatprep.subr.mxu0 %v7477
    %7818 = vmatpush1.msra.mxu0 %v7476
    %7819 = vmatprep.subr.mxu0 %v7479
    %7820 = vmatpush1.msra.mxu0 %v7478
    %7821 = vmatprep.subr.mxu0 %v7481
    %7822 = vmatpush1.msra.mxu0 %v7480
    %7823 = vmatprep.subr.mxu0 %v7483
    %7824 = vmatpush1.msra.mxu0 %v7482
    %7825 = vmatprep.subr.mxu0 %v7485
    %7826 = vmatpush1.msra.mxu0 %v7484
    %7827 = vmatprep.subr.mxu0 %v7487
    %7828 = vmatpush1.msra.mxu0 %v7486
    %7829 = vmatprep.subr.mxu0 %v7489
    %7830 = vmatpush1.msra.mxu0 %v7488
    %7831 = vmatprep.subr.mxu0 %v7491
    %7832 = vmatpush1.msra.mxu0 %v7490
    %7833 = vmatprep.subr.mxu0 %v7493
    %7834 = vmatpush1.msra.mxu0 %v7492
    %7835 = vmatprep.subr.mxu0 %v7495
    %7836 = vmatpush1.msra.mxu0 %v7494
    %7837 = vmatprep.subr.mxu0 %v7497
    %7838 = vmatpush1.msra.mxu0 %v7496
    %7839 = vmatprep.subr.mxu0 %v7499
    %7840 = vmatpush1.msra.mxu0 %v7498
    %7841 = vmatprep.subr.mxu0 %v7501
    %7842 = vmatpush1.msra.mxu0 %v7500
    %7843 = vmatprep.subr.mxu0 %v7503
    %7844 = vmatpush1.msra.mxu0 %v7502
    %7845 = vmatprep.subr.mxu0 %v7505
    %7846 = vmatpush1.msra.mxu0 %v7504
    %7847 = vmatprep.subr.mxu0 %v7507
    %7848 = vmatpush1.msra.mxu0 %v7506
    %7849 = vmatprep.subr.mxu0 %v7509
    %7850 = vmatpush1.msra.mxu0 %v7508
    %7851 = vmatprep.subr.mxu0 %v7511
    %7852 = vmatpush1.msra.mxu0 %v7510
    %7853 = vmatprep.subr.mxu0 %v7513
    %7854 = vmatpush1.msra.mxu0 %v7512
    %7855 = vmatprep.subr.mxu0 %v7515
    %7856 = vmatpush1.msra.mxu0 %v7514
    %7857 = vmatprep.subr.mxu0 %v7517
    %7858 = vmatpush1.msra.mxu0 %v7516
    %7859 = vmatprep.subr.mxu0 %v7519
    %7860 = vmatpush1.msra.mxu0 %v7518
    %7861 = vmatprep.subr.mxu0 %v7521
    %7862 = vmatpush1.msra.mxu0 %v7520
    %7863 = vmatprep.subr.mxu0 %v7523
    %7864 = vmatpush1.msra.mxu0 %v7522
    %7865 = vmatprep.subr.mxu0 %v7525
    %7866 = vmatpush1.msra.mxu0 %v7524
    %7867 = vmatprep.subr.mxu0 %v7527
    %7868 = vmatpush1.msra.mxu0 %v7526
    %7869 = vmatprep.mubr.f32.mxu0 %v7269
    %7870 = vmatmul.mubr.f32.gmra.mrb[0].mxu0 %v7268
    %v7871 = vpop.f32.mrb[0].mxu0
    %v7872 = vadd.f32 %v7801, %v7871
    %v7873 = vpop.f32.mrb[0].mxu0
    %v7874 = vadd.f32 %v7803, %v7873
    %7875 = vdwg.mxu0
    %7876 = vmatprep.subr.mxu0 %v7529
    %7877 = vmatpush1.msra.mxu0 %v7528
    %7878 = vmatprep.subr.mxu0 %v7531
    %7879 = vmatpush1.msra.mxu0 %v7530
    %7880 = vmatprep.subr.mxu0 %v7533
    %7881 = vmatpush1.msra.mxu0 %v7532
    %7882 = vmatprep.subr.mxu0 %v7535
    %7883 = vmatpush1.msra.mxu0 %v7534
    %7884 = vmatprep.subr.mxu0 %v7537
    %7885 = vmatpush1.msra.mxu0 %v7536
    %7886 = vmatprep.subr.mxu0 %v7539
    %7887 = vmatpush1.msra.mxu0 %v7538
    %7888 = vmatprep.subr.mxu0 %v7541
    %7889 = vmatpush1.msra.mxu0 %v7540
    %7890 = vmatprep.subr.mxu0 %v7543
    %7891 = vmatpush1.msra.mxu0 %v7542
    %7892 = vmatprep.subr.mxu0 %v7545
    %7893 = vmatpush1.msra.mxu0 %v7544
    %7894 = vmatprep.subr.mxu0 %v7547
    %7895 = vmatpush1.msra.mxu0 %v7546
    %7896 = vmatprep.subr.mxu0 %v7549
    %7897 = vmatpush1.msra.mxu0 %v7548
    %7898 = vmatprep.subr.mxu0 %v7551
    %7899 = vmatpush1.msra.mxu0 %v7550
    %7900 = vmatprep.subr.mxu0 %v7553
    %7901 = vmatpush1.msra.mxu0 %v7552
    %7902 = vmatprep.subr.mxu0 %v7555
    %7903 = vmatpush1.msra.mxu0 %v7554
    %7904 = vmatprep.subr.mxu0 %v7557
    %7905 = vmatpush1.msra.mxu0 %v7556
    %7906 = vmatprep.subr.mxu0 %v7559
    %7907 = vmatpush1.msra.mxu0 %v7558
    %7908 = vmatprep.subr.mxu0 %v7561
    %7909 = vmatpush1.msra.mxu0 %v7560
    %7910 = vmatprep.subr.mxu0 %v7563
    %7911 = vmatpush1.msra.mxu0 %v7562
    %7912 = vmatprep.subr.mxu0 %v7565
    %7913 = vmatpush1.msra.mxu0 %v7564
    %7914 = vmatprep.subr.mxu0 %v7567
    %7915 = vmatpush1.msra.mxu0 %v7566
    %7916 = vmatprep.subr.mxu0 %v7569
    %7917 = vmatpush1.msra.mxu0 %v7568
    %7918 = vmatprep.subr.mxu0 %v7571
    %7919 = vmatpush1.msra.mxu0 %v7570
    %7920 = vmatprep.subr.mxu0 %v7573
    %7921 = vmatpush1.msra.mxu0 %v7572
    %7922 = vmatprep.subr.mxu0 %v7575
    %7923 = vmatpush1.msra.mxu0 %v7574
    %7924 = vmatprep.subr.mxu0 %v7577
    %7925 = vmatpush1.msra.mxu0 %v7576
    %7926 = vmatprep.subr.mxu0 %v7579
    %7927 = vmatpush1.msra.mxu0 %v7578
    %7928 = vmatprep.subr.mxu0 %v7581
    %7929 = vmatpush1.msra.mxu0 %v7580
    %7930 = vmatprep.subr.mxu0 %v7583
    %7931 = vmatpush1.msra.mxu0 %v7582
    %7932 = vmatprep.subr.mxu0 %v7585
    %7933 = vmatpush1.msra.mxu0 %v7584
    %7934 = vmatprep.subr.mxu0 %v7587
    %7935 = vmatpush1.msra.mxu0 %v7586
    %7936 = vmatprep.subr.mxu0 %v7589
    %7937 = vmatpush1.msra.mxu0 %v7588
    %7938 = vmatprep.subr.mxu0 %v7591
    %7939 = vmatpush1.msra.mxu0 %v7590
    %7940 = vmatprep.mubr.f32.mxu0 %v7271
    %7941 = vmatmul.mubr.f32.gmra.mrb[0].mxu0 %v7270
    %v7942 = vpop.f32.mrb[0].mxu0
    %v7943 = vadd.f32 %v7872, %v7942
    %v7944 = vpop.f32.mrb[0].mxu0
    %v7945 = vadd.f32 %v7874, %v7944
    %7946 = vdwg.mxu0
    %v7947 = vmax.f32 %v7943, 0.0
    %v7948 = vmax.f32 %v7945, 0.0
    %7949 = vst [vmem:[#allocation3 + $0x30] sm:$0xff] %v7947
    %7950 = vst [vmem:[#allocation3 + $0x38] sm:$0xff] %v7948
    %v7951 = vld [vmem:[#allocation2 + $0x80] sm:$0xff]
    %v7952 = vld [vmem:[#allocation2 + $0x88] sm:$0xff]
    %v7953 = vld [vmem:[#allocation2 + $0x90] sm:$0xff]
    %v7954 = vld [vmem:[#allocation2 + $0x98] sm:$0xff]
    %v7955 = vld [vmem:[#allocation2 + $0xa0] sm:$0xff]
    %v7956 = vld [vmem:[#allocation2 + $0xa8] sm:$0xff]
    %v7957 = vld [vmem:[#allocation2 + $0xb0] sm:$0xff]
    %v7958 = vld [vmem:[#allocation2 + $0xb8] sm:$0xff]
    %v7959 = vld [vmem:[#allocation2 + $0xc0] sm:$0xff]
    %v7960 = vld [vmem:[#allocation2 + $0xc8] sm:$0xff]
    %v7961 = vld [vmem:[#allocation12] sm:$0xff]
    %v7962 = vld [vmem:[#allocation12 + $0x8] sm:$0xff]
    %v7963 = vld [vmem:[#allocation12 + $0x10] sm:$0xff]
    %v7964 = vld [vmem:[#allocation12 + $0x18] sm:$0xff]
    %v7965 = vld [vmem:[#allocation12 + $0x20] sm:$0xff]
    %v7966 = vld [vmem:[#allocation12 + $0x28] sm:$0xff]
    %v7967 = vld [vmem:[#allocation12 + $0x30] sm:$0xff]
    %v7968 = vld [vmem:[#allocation12 + $0x38] sm:$0xff]
    %v7969 = vld [vmem:[#allocation12 + $0x40] sm:$0xff]
    %v7970 = vld [vmem:[#allocation12 + $0x48] sm:$0xff]
    %v7971 = vld [vmem:[#allocation12 + $0x50] sm:$0xff]
    %v7972 = vld [vmem:[#allocation12 + $0x58] sm:$0xff]
    %v7973 = vld [vmem:[#allocation12 + $0x60] sm:$0xff]
    %v7974 = vld [vmem:[#allocation12 + $0x68] sm:$0xff]
    %v7975 = vld [vmem:[#allocation12 + $0x70] sm:$0xff]
    %v7976 = vld [vmem:[#allocation12 + $0x78] sm:$0xff]
    %v7977 = vld [vmem:[#allocation12 + $0x80] sm:$0xff]
    %v7978 = vld [vmem:[#allocation12 + $0x88] sm:$0xff]
    %v7979 = vld [vmem:[#allocation12 + $0x90] sm:$0xff]
    %v7980 = vld [vmem:[#allocation12 + $0x98] sm:$0xff]
    %v7981 = vld [vmem:[#allocation12 + $0xa0] sm:$0xff]
    %v7982 = vld [vmem:[#allocation12 + $0xa8] sm:$0xff]
    %v7983 = vld [vmem:[#allocation12 + $0xb0] sm:$0xff]
    %v7984 = vld [vmem:[#allocation12 + $0xb8] sm:$0xff]
    %v7985 = vld [vmem:[#allocation12 + $0xc0] sm:$0xff]
    %v7986 = vld [vmem:[#allocation12 + $0xc8] sm:$0xff]
    %v7987 = vld [vmem:[#allocation12 + $0xd0] sm:$0xff]
    %v7988 = vld [vmem:[#allocation12 + $0xd8] sm:$0xff]
    %v7989 = vld [vmem:[#allocation12 + $0xe0] sm:$0xff]
    %v7990 = vld [vmem:[#allocation12 + $0xe8] sm:$0xff]
    %v7991 = vld [vmem:[#allocation12 + $0xf0] sm:$0xff]
    %v7992 = vld [vmem:[#allocation12 + $0xf8] sm:$0xff]
    %v7993 = vld [vmem:[#allocation12 + $0x100] sm:$0xff]
    %v7994 = vld [vmem:[#allocation12 + $0x108] sm:$0xff]
    %v7995 = vld [vmem:[#allocation12 + $0x110] sm:$0xff]
    %v7996 = vld [vmem:[#allocation12 + $0x118] sm:$0xff]
    %v7997 = vld [vmem:[#allocation12 + $0x120] sm:$0xff]
    %v7998 = vld [vmem:[#allocation12 + $0x128] sm:$0xff]
    %v7999 = vld [vmem:[#allocation12 + $0x130] sm:$0xff]
    %v8000 = vld [vmem:[#allocation12 + $0x138] sm:$0xff]
    %v8001 = vld [vmem:[#allocation12 + $0x140] sm:$0xff]
    %v8002 = vld [vmem:[#allocation12 + $0x148] sm:$0xff]
    %v8003 = vld [vmem:[#allocation12 + $0x150] sm:$0xff]
    %v8004 = vld [vmem:[#allocation12 + $0x158] sm:$0xff]
    %v8005 = vld [vmem:[#allocation12 + $0x160] sm:$0xff]
    %v8006 = vld [vmem:[#allocation12 + $0x168] sm:$0xff]
    %v8007 = vld [vmem:[#allocation12 + $0x170] sm:$0xff]
    %v8008 = vld [vmem:[#allocation12 + $0x178] sm:$0xff]
    %v8009 = vld [vmem:[#allocation12 + $0x180] sm:$0xff]
    %v8010 = vld [vmem:[#allocation12 + $0x188] sm:$0xff]
    %v8011 = vld [vmem:[#allocation12 + $0x190] sm:$0xff]
    %v8012 = vld [vmem:[#allocation12 + $0x198] sm:$0xff]
    %v8013 = vld [vmem:[#allocation12 + $0x1a0] sm:$0xff]
    %v8014 = vld [vmem:[#allocation12 + $0x1a8] sm:$0xff]
    %v8015 = vld [vmem:[#allocation12 + $0x1b0] sm:$0xff]
    %v8016 = vld [vmem:[#allocation12 + $0x1b8] sm:$0xff]
    %v8017 = vld [vmem:[#allocation12 + $0x1c0] sm:$0xff]
    %v8018 = vld [vmem:[#allocation12 + $0x1c8] sm:$0xff]
    %v8019 = vld [vmem:[#allocation12 + $0x1d0] sm:$0xff]
    %v8020 = vld [vmem:[#allocation12 + $0x1d8] sm:$0xff]
    %v8021 = vld [vmem:[#allocation12 + $0x1e0] sm:$0xff]
    %v8022 = vld [vmem:[#allocation12 + $0x1e8] sm:$0xff]
    %v8023 = vld [vmem:[#allocation12 + $0x1f0] sm:$0xff]
    %v8024 = vld [vmem:[#allocation12 + $0x1f8] sm:$0xff]
    %v8025 = vld [vmem:[#allocation12 + $0x200] sm:$0xff]
    %v8026 = vld [vmem:[#allocation12 + $0x208] sm:$0xff]
    %v8027 = vld [vmem:[#allocation12 + $0x210] sm:$0xff]
    %v8028 = vld [vmem:[#allocation12 + $0x218] sm:$0xff]
    %v8029 = vld [vmem:[#allocation12 + $0x220] sm:$0xff]
    %v8030 = vld [vmem:[#allocation12 + $0x228] sm:$0xff]
    %v8031 = vld [vmem:[#allocation12 + $0x230] sm:$0xff]
    %v8032 = vld [vmem:[#allocation12 + $0x238] sm:$0xff]
    %v8033 = vld [vmem:[#allocation12 + $0x240] sm:$0xff]
    %v8034 = vld [vmem:[#allocation12 + $0x248] sm:$0xff]
    %v8035 = vld [vmem:[#allocation12 + $0x250] sm:$0xff]
    %v8036 = vld [vmem:[#allocation12 + $0x258] sm:$0xff]
    %v8037 = vld [vmem:[#allocation12 + $0x260] sm:$0xff]
    %v8038 = vld [vmem:[#allocation12 + $0x268] sm:$0xff]
    %v8039 = vld [vmem:[#allocation12 + $0x270] sm:$0xff]
    %v8040 = vld [vmem:[#allocation12 + $0x278] sm:$0xff]
    %v8041 = vld [vmem:[#allocation12 + $0x280] sm:$0xff]
    %v8042 = vld [vmem:[#allocation12 + $0x288] sm:$0xff]
    %v8043 = vld [vmem:[#allocation12 + $0x290] sm:$0xff]
    %v8044 = vld [vmem:[#allocation12 + $0x298] sm:$0xff]
    %v8045 = vld [vmem:[#allocation12 + $0x2a0] sm:$0xff]
    %v8046 = vld [vmem:[#allocation12 + $0x2a8] sm:$0xff]
    %v8047 = vld [vmem:[#allocation12 + $0x2b0] sm:$0xff]
    %v8048 = vld [vmem:[#allocation12 + $0x2b8] sm:$0xff]
    %v8049 = vld [vmem:[#allocation12 + $0x2c0] sm:$0xff]
    %v8050 = vld [vmem:[#allocation12 + $0x2c8] sm:$0xff]
    %v8051 = vld [vmem:[#allocation12 + $0x2d0] sm:$0xff]
    %v8052 = vld [vmem:[#allocation12 + $0x2d8] sm:$0xff]
    %v8053 = vld [vmem:[#allocation12 + $0x2e0] sm:$0xff]
    %v8054 = vld [vmem:[#allocation12 + $0x2e8] sm:$0xff]
    %v8055 = vld [vmem:[#allocation12 + $0x2f0] sm:$0xff]
    %v8056 = vld [vmem:[#allocation12 + $0x2f8] sm:$0xff]
    %v8057 = vld [vmem:[#allocation12 + $0x300] sm:$0xff]
    %v8058 = vld [vmem:[#allocation12 + $0x308] sm:$0xff]
    %v8059 = vld [vmem:[#allocation12 + $0x310] sm:$0xff]
    %v8060 = vld [vmem:[#allocation12 + $0x318] sm:$0xff]
    %v8061 = vld [vmem:[#allocation12 + $0x320] sm:$0xff]
    %v8062 = vld [vmem:[#allocation12 + $0x328] sm:$0xff]
    %v8063 = vld [vmem:[#allocation12 + $0x330] sm:$0xff]
    %v8064 = vld [vmem:[#allocation12 + $0x338] sm:$0xff]
    %v8065 = vld [vmem:[#allocation12 + $0x340] sm:$0xff]
    %v8066 = vld [vmem:[#allocation12 + $0x348] sm:$0xff]
    %v8067 = vld [vmem:[#allocation12 + $0x350] sm:$0xff]
    %v8068 = vld [vmem:[#allocation12 + $0x358] sm:$0xff]
    %v8069 = vld [vmem:[#allocation12 + $0x360] sm:$0xff]
    %v8070 = vld [vmem:[#allocation12 + $0x368] sm:$0xff]
    %v8071 = vld [vmem:[#allocation12 + $0x370] sm:$0xff]
    %v8072 = vld [vmem:[#allocation12 + $0x378] sm:$0xff]
    %v8073 = vld [vmem:[#allocation12 + $0x380] sm:$0xff]
    %v8074 = vld [vmem:[#allocation12 + $0x388] sm:$0xff]
    %v8075 = vld [vmem:[#allocation12 + $0x390] sm:$0xff]
    %v8076 = vld [vmem:[#allocation12 + $0x398] sm:$0xff]
    %v8077 = vld [vmem:[#allocation12 + $0x3a0] sm:$0xff]
    %v8078 = vld [vmem:[#allocation12 + $0x3a8] sm:$0xff]
    %v8079 = vld [vmem:[#allocation12 + $0x3b0] sm:$0xff]
    %v8080 = vld [vmem:[#allocation12 + $0x3b8] sm:$0xff]
    %v8081 = vld [vmem:[#allocation12 + $0x3c0] sm:$0xff]
    %v8082 = vld [vmem:[#allocation12 + $0x3c8] sm:$0xff]
    %v8083 = vld [vmem:[#allocation12 + $0x3d0] sm:$0xff]
    %v8084 = vld [vmem:[#allocation12 + $0x3d8] sm:$0xff]
    %v8085 = vld [vmem:[#allocation12 + $0x3e0] sm:$0xff]
    %v8086 = vld [vmem:[#allocation12 + $0x3e8] sm:$0xff]
    %v8087 = vld [vmem:[#allocation12 + $0x3f0] sm:$0xff]
    %v8088 = vld [vmem:[#allocation12 + $0x3f8] sm:$0xff]
    %v8089 = vld [vmem:[#allocation12 + $0x400] sm:$0xff]
    %v8090 = vld [vmem:[#allocation12 + $0x408] sm:$0xff]
    %v8091 = vld [vmem:[#allocation12 + $0x410] sm:$0xff]
    %v8092 = vld [vmem:[#allocation12 + $0x418] sm:$0xff]
    %v8093 = vld [vmem:[#allocation12 + $0x420] sm:$0xff]
    %v8094 = vld [vmem:[#allocation12 + $0x428] sm:$0xff]
    %v8095 = vld [vmem:[#allocation12 + $0x430] sm:$0xff]
    %v8096 = vld [vmem:[#allocation12 + $0x438] sm:$0xff]
    %v8097 = vld [vmem:[#allocation12 + $0x440] sm:$0xff]
    %v8098 = vld [vmem:[#allocation12 + $0x448] sm:$0xff]
    %v8099 = vld [vmem:[#allocation12 + $0x450] sm:$0xff]
    %v8100 = vld [vmem:[#allocation12 + $0x458] sm:$0xff]
    %v8101 = vld [vmem:[#allocation12 + $0x460] sm:$0xff]
    %v8102 = vld [vmem:[#allocation12 + $0x468] sm:$0xff]
    %v8103 = vld [vmem:[#allocation12 + $0x470] sm:$0xff]
    %v8104 = vld [vmem:[#allocation12 + $0x478] sm:$0xff]
    %v8105 = vld [vmem:[#allocation12 + $0x480] sm:$0xff]
    %v8106 = vld [vmem:[#allocation12 + $0x488] sm:$0xff]
    %v8107 = vld [vmem:[#allocation12 + $0x490] sm:$0xff]
    %v8108 = vld [vmem:[#allocation12 + $0x498] sm:$0xff]
    %v8109 = vld [vmem:[#allocation12 + $0x4a0] sm:$0xff]
    %v8110 = vld [vmem:[#allocation12 + $0x4a8] sm:$0xff]
    %v8111 = vld [vmem:[#allocation12 + $0x4b0] sm:$0xff]
    %v8112 = vld [vmem:[#allocation12 + $0x4b8] sm:$0xff]
    %v8113 = vld [vmem:[#allocation12 + $0x4c0] sm:$0xff]
    %v8114 = vld [vmem:[#allocation12 + $0x4c8] sm:$0xff]
    %v8115 = vld [vmem:[#allocation12 + $0x4d0] sm:$0xff]
    %v8116 = vld [vmem:[#allocation12 + $0x4d8] sm:$0xff]
    %v8117 = vld [vmem:[#allocation12 + $0x4e0] sm:$0xff]
    %v8118 = vld [vmem:[#allocation12 + $0x4e8] sm:$0xff]
    %v8119 = vld [vmem:[#allocation12 + $0x4f0] sm:$0xff]
    %v8120 = vld [vmem:[#allocation12 + $0x4f8] sm:$0xff]
    %v8121 = vld [vmem:[#allocation12 + $0x500] sm:$0xff]
    %v8122 = vld [vmem:[#allocation12 + $0x508] sm:$0xff]
    %v8123 = vld [vmem:[#allocation12 + $0x510] sm:$0xff]
    %v8124 = vld [vmem:[#allocation12 + $0x518] sm:$0xff]
    %v8125 = vld [vmem:[#allocation12 + $0x520] sm:$0xff]
    %v8126 = vld [vmem:[#allocation12 + $0x528] sm:$0xff]
    %v8127 = vld [vmem:[#allocation12 + $0x530] sm:$0xff]
    %v8128 = vld [vmem:[#allocation12 + $0x538] sm:$0xff]
    %v8129 = vld [vmem:[#allocation12 + $0x540] sm:$0xff]
    %v8130 = vld [vmem:[#allocation12 + $0x548] sm:$0xff]
    %v8131 = vld [vmem:[#allocation12 + $0x550] sm:$0xff]
    %v8132 = vld [vmem:[#allocation12 + $0x558] sm:$0xff]
    %v8133 = vld [vmem:[#allocation12 + $0x560] sm:$0xff]
    %v8134 = vld [vmem:[#allocation12 + $0x568] sm:$0xff]
    %v8135 = vld [vmem:[#allocation12 + $0x570] sm:$0xff]
    %v8136 = vld [vmem:[#allocation12 + $0x578] sm:$0xff]
    %v8137 = vld [vmem:[#allocation12 + $0x580] sm:$0xff]
    %v8138 = vld [vmem:[#allocation12 + $0x588] sm:$0xff]
    %v8139 = vld [vmem:[#allocation12 + $0x590] sm:$0xff]
    %v8140 = vld [vmem:[#allocation12 + $0x598] sm:$0xff]
    %v8141 = vld [vmem:[#allocation12 + $0x5a0] sm:$0xff]
    %v8142 = vld [vmem:[#allocation12 + $0x5a8] sm:$0xff]
    %v8143 = vld [vmem:[#allocation12 + $0x5b0] sm:$0xff]
    %v8144 = vld [vmem:[#allocation12 + $0x5b8] sm:$0xff]
    %v8145 = vld [vmem:[#allocation12 + $0x5c0] sm:$0xff]
    %v8146 = vld [vmem:[#allocation12 + $0x5c8] sm:$0xff]
    %v8147 = vld [vmem:[#allocation12 + $0x5d0] sm:$0xff]
    %v8148 = vld [vmem:[#allocation12 + $0x5d8] sm:$0xff]
    %v8149 = vld [vmem:[#allocation12 + $0x5e0] sm:$0xff]
    %v8150 = vld [vmem:[#allocation12 + $0x5e8] sm:$0xff]
    %v8151 = vld [vmem:[#allocation12 + $0x5f0] sm:$0xff]
    %v8152 = vld [vmem:[#allocation12 + $0x5f8] sm:$0xff]
    %v8153 = vld [vmem:[#allocation12 + $0x600] sm:$0xff]
    %v8154 = vld [vmem:[#allocation12 + $0x608] sm:$0xff]
    %v8155 = vld [vmem:[#allocation12 + $0x610] sm:$0xff]
    %v8156 = vld [vmem:[#allocation12 + $0x618] sm:$0xff]
    %v8157 = vld [vmem:[#allocation12 + $0x620] sm:$0xff]
    %v8158 = vld [vmem:[#allocation12 + $0x628] sm:$0xff]
    %v8159 = vld [vmem:[#allocation12 + $0x630] sm:$0xff]
    %v8160 = vld [vmem:[#allocation12 + $0x638] sm:$0xff]
    %v8161 = vld [vmem:[#allocation12 + $0x640] sm:$0xff]
    %v8162 = vld [vmem:[#allocation12 + $0x648] sm:$0xff]
    %v8163 = vld [vmem:[#allocation12 + $0x650] sm:$0xff]
    %v8164 = vld [vmem:[#allocation12 + $0x658] sm:$0xff]
    %v8165 = vld [vmem:[#allocation12 + $0x660] sm:$0xff]
    %v8166 = vld [vmem:[#allocation12 + $0x668] sm:$0xff]
    %v8167 = vld [vmem:[#allocation12 + $0x670] sm:$0xff]
    %v8168 = vld [vmem:[#allocation12 + $0x678] sm:$0xff]
    %v8169 = vld [vmem:[#allocation12 + $0x680] sm:$0xff]
    %v8170 = vld [vmem:[#allocation12 + $0x688] sm:$0xff]
    %v8171 = vld [vmem:[#allocation12 + $0x690] sm:$0xff]
    %v8172 = vld [vmem:[#allocation12 + $0x698] sm:$0xff]
    %v8173 = vld [vmem:[#allocation12 + $0x6a0] sm:$0xff]
    %v8174 = vld [vmem:[#allocation12 + $0x6a8] sm:$0xff]
    %v8175 = vld [vmem:[#allocation12 + $0x6b0] sm:$0xff]
    %v8176 = vld [vmem:[#allocation12 + $0x6b8] sm:$0xff]
    %v8177 = vld [vmem:[#allocation12 + $0x6c0] sm:$0xff]
    %v8178 = vld [vmem:[#allocation12 + $0x6c8] sm:$0xff]
    %v8179 = vld [vmem:[#allocation12 + $0x6d0] sm:$0xff]
    %v8180 = vld [vmem:[#allocation12 + $0x6d8] sm:$0xff]
    %v8181 = vld [vmem:[#allocation12 + $0x6e0] sm:$0xff]
    %v8182 = vld [vmem:[#allocation12 + $0x6e8] sm:$0xff]
    %v8183 = vld [vmem:[#allocation12 + $0x6f0] sm:$0xff]
    %v8184 = vld [vmem:[#allocation12 + $0x6f8] sm:$0xff]
    %v8185 = vld [vmem:[#allocation12 + $0x700] sm:$0xff]
    %v8186 = vld [vmem:[#allocation12 + $0x708] sm:$0xff]
    %v8187 = vld [vmem:[#allocation12 + $0x710] sm:$0xff]
    %v8188 = vld [vmem:[#allocation12 + $0x718] sm:$0xff]
    %v8189 = vld [vmem:[#allocation12 + $0x720] sm:$0xff]
    %v8190 = vld [vmem:[#allocation12 + $0x728] sm:$0xff]
    %v8191 = vld [vmem:[#allocation12 + $0x730] sm:$0xff]
    %v8192 = vld [vmem:[#allocation12 + $0x738] sm:$0xff]
    %v8193 = vld [vmem:[#allocation12 + $0x740] sm:$0xff]
    %v8194 = vld [vmem:[#allocation12 + $0x748] sm:$0xff]
    %v8195 = vld [vmem:[#allocation12 + $0x750] sm:$0xff]
    %v8196 = vld [vmem:[#allocation12 + $0x758] sm:$0xff]
    %v8197 = vld [vmem:[#allocation12 + $0x760] sm:$0xff]
    %v8198 = vld [vmem:[#allocation12 + $0x768] sm:$0xff]
    %v8199 = vld [vmem:[#allocation12 + $0x770] sm:$0xff]
    %v8200 = vld [vmem:[#allocation12 + $0x778] sm:$0xff]
    %v8201 = vld [vmem:[#allocation12 + $0x780] sm:$0xff]
    %v8202 = vld [vmem:[#allocation12 + $0x788] sm:$0xff]
    %v8203 = vld [vmem:[#allocation12 + $0x790] sm:$0xff]
    %v8204 = vld [vmem:[#allocation12 + $0x798] sm:$0xff]
    %v8205 = vld [vmem:[#allocation12 + $0x7a0] sm:$0xff]
    %v8206 = vld [vmem:[#allocation12 + $0x7a8] sm:$0xff]
    %v8207 = vld [vmem:[#allocation12 + $0x7b0] sm:$0xff]
    %v8208 = vld [vmem:[#allocation12 + $0x7b8] sm:$0xff]
    %v8209 = vld [vmem:[#allocation12 + $0x7c0] sm:$0xff]
    %v8210 = vld [vmem:[#allocation12 + $0x7c8] sm:$0xff]
    %v8211 = vld [vmem:[#allocation12 + $0x7d0] sm:$0xff]
    %v8212 = vld [vmem:[#allocation12 + $0x7d8] sm:$0xff]
    %v8213 = vld [vmem:[#allocation12 + $0x7e0] sm:$0xff]
    %v8214 = vld [vmem:[#allocation12 + $0x7e8] sm:$0xff]
    %v8215 = vld [vmem:[#allocation12 + $0x7f0] sm:$0xff]
    %v8216 = vld [vmem:[#allocation12 + $0x7f8] sm:$0xff]
    %v8217 = vld [vmem:[#allocation12 + $0x800] sm:$0xff]
    %v8218 = vld [vmem:[#allocation12 + $0x808] sm:$0xff]
    %v8219 = vld [vmem:[#allocation12 + $0x810] sm:$0xff]
    %v8220 = vld [vmem:[#allocation12 + $0x818] sm:$0xff]
    %v8221 = vld [vmem:[#allocation12 + $0x820] sm:$0xff]
    %v8222 = vld [vmem:[#allocation12 + $0x828] sm:$0xff]
    %v8223 = vld [vmem:[#allocation12 + $0x830] sm:$0xff]
    %v8224 = vld [vmem:[#allocation12 + $0x838] sm:$0xff]
    %v8225 = vld [vmem:[#allocation12 + $0x840] sm:$0xff]
    %v8226 = vld [vmem:[#allocation12 + $0x848] sm:$0xff]
    %v8227 = vld [vmem:[#allocation12 + $0x850] sm:$0xff]
    %v8228 = vld [vmem:[#allocation12 + $0x858] sm:$0xff]
    %v8229 = vld [vmem:[#allocation12 + $0x860] sm:$0xff]
    %v8230 = vld [vmem:[#allocation12 + $0x868] sm:$0xff]
    %v8231 = vld [vmem:[#allocation12 + $0x870] sm:$0xff]
    %v8232 = vld [vmem:[#allocation12 + $0x878] sm:$0xff]
    %v8233 = vld [vmem:[#allocation12 + $0x880] sm:$0xff]
    %v8234 = vld [vmem:[#allocation12 + $0x888] sm:$0xff]
    %v8235 = vld [vmem:[#allocation12 + $0x890] sm:$0xff]
    %v8236 = vld [vmem:[#allocation12 + $0x898] sm:$0xff]
    %v8237 = vld [vmem:[#allocation12 + $0x8a0] sm:$0xff]
    %v8238 = vld [vmem:[#allocation12 + $0x8a8] sm:$0xff]
    %v8239 = vld [vmem:[#allocation12 + $0x8b0] sm:$0xff]
    %v8240 = vld [vmem:[#allocation12 + $0x8b8] sm:$0xff]
    %v8241 = vld [vmem:[#allocation12 + $0x8c0] sm:$0xff]
    %v8242 = vld [vmem:[#allocation12 + $0x8c8] sm:$0xff]
    %v8243 = vld [vmem:[#allocation12 + $0x8d0] sm:$0xff]
    %v8244 = vld [vmem:[#allocation12 + $0x8d8] sm:$0xff]
    %v8245 = vld [vmem:[#allocation12 + $0x8e0] sm:$0xff]
    %v8246 = vld [vmem:[#allocation12 + $0x8e8] sm:$0xff]
    %v8247 = vld [vmem:[#allocation12 + $0x8f0] sm:$0xff]
    %v8248 = vld [vmem:[#allocation12 + $0x8f8] sm:$0xff]
    %v8249 = vld [vmem:[#allocation12 + $0x900] sm:$0xff]
    %v8250 = vld [vmem:[#allocation12 + $0x908] sm:$0xff]
    %v8251 = vld [vmem:[#allocation12 + $0x910] sm:$0xff]
    %v8252 = vld [vmem:[#allocation12 + $0x918] sm:$0xff]
    %v8253 = vld [vmem:[#allocation12 + $0x920] sm:$0xff]
    %v8254 = vld [vmem:[#allocation12 + $0x928] sm:$0xff]
    %v8255 = vld [vmem:[#allocation12 + $0x930] sm:$0xff]
    %v8256 = vld [vmem:[#allocation12 + $0x938] sm:$0xff]
    %v8257 = vld [vmem:[#allocation12 + $0x940] sm:$0xff]
    %v8258 = vld [vmem:[#allocation12 + $0x948] sm:$0xff]
    %v8259 = vld [vmem:[#allocation12 + $0x950] sm:$0xff]
    %v8260 = vld [vmem:[#allocation12 + $0x958] sm:$0xff]
    %v8261 = vld [vmem:[#allocation12 + $0x960] sm:$0xff]
    %v8262 = vld [vmem:[#allocation12 + $0x968] sm:$0xff]
    %v8263 = vld [vmem:[#allocation12 + $0x970] sm:$0xff]
    %v8264 = vld [vmem:[#allocation12 + $0x978] sm:$0xff]
    %v8265 = vld [vmem:[#allocation12 + $0x980] sm:$0xff]
    %v8266 = vld [vmem:[#allocation12 + $0x988] sm:$0xff]
    %v8267 = vld [vmem:[#allocation12 + $0x990] sm:$0xff]
    %v8268 = vld [vmem:[#allocation12 + $0x998] sm:$0xff]
    %v8269 = vld [vmem:[#allocation12 + $0x9a0] sm:$0xff]
    %v8270 = vld [vmem:[#allocation12 + $0x9a8] sm:$0xff]
    %v8271 = vld [vmem:[#allocation12 + $0x9b0] sm:$0xff]
    %v8272 = vld [vmem:[#allocation12 + $0x9b8] sm:$0xff]
    %v8273 = vld [vmem:[#allocation12 + $0x9c0] sm:$0xff]
    %v8274 = vld [vmem:[#allocation12 + $0x9c8] sm:$0xff]
    %v8275 = vld [vmem:[#allocation12 + $0x9d0] sm:$0xff]
    %v8276 = vld [vmem:[#allocation12 + $0x9d8] sm:$0xff]
    %v8277 = vld [vmem:[#allocation12 + $0x9e0] sm:$0xff]
    %v8278 = vld [vmem:[#allocation12 + $0x9e8] sm:$0xff]
    %v8279 = vld [vmem:[#allocation12 + $0x9f0] sm:$0xff]
    %v8280 = vld [vmem:[#allocation12 + $0x9f8] sm:$0xff]
    %8281 = vmatprep.subr.mxu0 %v7962
    %8282 = vmatpush1.msra.mxu0 %v7961
    %8283 = vmatprep.subr.mxu0 %v7964
    %8284 = vmatpush1.msra.mxu0 %v7963
    %8285 = vmatprep.subr.mxu0 %v7966
    %8286 = vmatpush1.msra.mxu0 %v7965
    %8287 = vmatprep.subr.mxu0 %v7968
    %8288 = vmatpush1.msra.mxu0 %v7967
    %8289 = vmatprep.subr.mxu0 %v7970
    %8290 = vmatpush1.msra.mxu0 %v7969
    %8291 = vmatprep.subr.mxu0 %v7972
    %8292 = vmatpush1.msra.mxu0 %v7971
    %8293 = vmatprep.subr.mxu0 %v7974
    %8294 = vmatpush1.msra.mxu0 %v7973
    %8295 = vmatprep.subr.mxu0 %v7976
    %8296 = vmatpush1.msra.mxu0 %v7975
    %8297 = vmatprep.subr.mxu0 %v7978
    %8298 = vmatpush1.msra.mxu0 %v7977
    %8299 = vmatprep.subr.mxu0 %v7980
    %8300 = vmatpush1.msra.mxu0 %v7979
    %8301 = vmatprep.subr.mxu0 %v7982
    %8302 = vmatpush1.msra.mxu0 %v7981
    %8303 = vmatprep.subr.mxu0 %v7984
    %8304 = vmatpush1.msra.mxu0 %v7983
    %8305 = vmatprep.subr.mxu0 %v7986
    %8306 = vmatpush1.msra.mxu0 %v7985
    %8307 = vmatprep.subr.mxu0 %v7988
    %8308 = vmatpush1.msra.mxu0 %v7987
    %8309 = vmatprep.subr.mxu0 %v7990
    %8310 = vmatpush1.msra.mxu0 %v7989
    %8311 = vmatprep.subr.mxu0 %v7992
    %8312 = vmatpush1.msra.mxu0 %v7991
    %8313 = vmatprep.subr.mxu0 %v7994
    %8314 = vmatpush1.msra.mxu0 %v7993
    %8315 = vmatprep.subr.mxu0 %v7996
    %8316 = vmatpush1.msra.mxu0 %v7995
    %8317 = vmatprep.subr.mxu0 %v7998
    %8318 = vmatpush1.msra.mxu0 %v7997
    %8319 = vmatprep.subr.mxu0 %v8000
    %8320 = vmatpush1.msra.mxu0 %v7999
    %8321 = vmatprep.subr.mxu0 %v8002
    %8322 = vmatpush1.msra.mxu0 %v8001
    %8323 = vmatprep.subr.mxu0 %v8004
    %8324 = vmatpush1.msra.mxu0 %v8003
    %8325 = vmatprep.subr.mxu0 %v8006
    %8326 = vmatpush1.msra.mxu0 %v8005
    %8327 = vmatprep.subr.mxu0 %v8008
    %8328 = vmatpush1.msra.mxu0 %v8007
    %8329 = vmatprep.subr.mxu0 %v8010
    %8330 = vmatpush1.msra.mxu0 %v8009
    %8331 = vmatprep.subr.mxu0 %v8012
    %8332 = vmatpush1.msra.mxu0 %v8011
    %8333 = vmatprep.subr.mxu0 %v8014
    %8334 = vmatpush1.msra.mxu0 %v8013
    %8335 = vmatprep.subr.mxu0 %v8016
    %8336 = vmatpush1.msra.mxu0 %v8015
    %8337 = vmatprep.subr.mxu0 %v8018
    %8338 = vmatpush1.msra.mxu0 %v8017
    %8339 = vmatprep.subr.mxu0 %v8020
    %8340 = vmatpush1.msra.mxu0 %v8019
    %8341 = vmatprep.subr.mxu0 %v8022
    %8342 = vmatpush1.msra.mxu0 %v8021
    %8343 = vmatprep.subr.mxu0 %v8024
    %8344 = vmatpush1.msra.mxu0 %v8023
    %8345 = vmatprep.mubr.f32.mxu0 %v7952
    %8346 = vmatmul.mubr.f32.gmra.mrb[0].mxu0 %v7951
    %v8347 = vpop.f32.mrb[0].mxu0
    %v8348 = vadd.f32 %v5188, %v8347
    %v8349 = vpop.f32.mrb[0].mxu0
    %v8350 = vadd.f32 %v5192, %v8349
    %8351 = vdwg.mxu0
    %8352 = vmatprep.subr.mxu0 %v8026
    %8353 = vmatpush1.msra.mxu0 %v8025
    %8354 = vmatprep.subr.mxu0 %v8028
    %8355 = vmatpush1.msra.mxu0 %v8027
    %8356 = vmatprep.subr.mxu0 %v8030
    %8357 = vmatpush1.msra.mxu0 %v8029
    %8358 = vmatprep.subr.mxu0 %v8032
    %8359 = vmatpush1.msra.mxu0 %v8031
    %8360 = vmatprep.subr.mxu0 %v8034
    %8361 = vmatpush1.msra.mxu0 %v8033
    %8362 = vmatprep.subr.mxu0 %v8036
    %8363 = vmatpush1.msra.mxu0 %v8035
    %8364 = vmatprep.subr.mxu0 %v8038
    %8365 = vmatpush1.msra.mxu0 %v8037
    %8366 = vmatprep.subr.mxu0 %v8040
    %8367 = vmatpush1.msra.mxu0 %v8039
    %8368 = vmatprep.subr.mxu0 %v8042
    %8369 = vmatpush1.msra.mxu0 %v8041
    %8370 = vmatprep.subr.mxu0 %v8044
    %8371 = vmatpush1.msra.mxu0 %v8043
    %8372 = vmatprep.subr.mxu0 %v8046
    %8373 = vmatpush1.msra.mxu0 %v8045
    %8374 = vmatprep.subr.mxu0 %v8048
    %8375 = vmatpush1.msra.mxu0 %v8047
    %8376 = vmatprep.subr.mxu0 %v8050
    %8377 = vmatpush1.msra.mxu0 %v8049
    %8378 = vmatprep.subr.mxu0 %v8052
    %8379 = vmatpush1.msra.mxu0 %v8051
    %8380 = vmatprep.subr.mxu0 %v8054
    %8381 = vmatpush1.msra.mxu0 %v8053
    %8382 = vmatprep.subr.mxu0 %v8056
    %8383 = vmatpush1.msra.mxu0 %v8055
    %8384 = vmatprep.subr.mxu0 %v8058
    %8385 = vmatpush1.msra.mxu0 %v8057
    %8386 = vmatprep.subr.mxu0 %v8060
    %8387 = vmatpush1.msra.mxu0 %v8059
    %8388 = vmatprep.subr.mxu0 %v8062
    %8389 = vmatpush1.msra.mxu0 %v8061
    %8390 = vmatprep.subr.mxu0 %v8064
    %8391 = vmatpush1.msra.mxu0 %v8063
    %8392 = vmatprep.subr.mxu0 %v8066
    %8393 = vmatpush1.msra.mxu0 %v8065
    %8394 = vmatprep.subr.mxu0 %v8068
    %8395 = vmatpush1.msra.mxu0 %v8067
    %8396 = vmatprep.subr.mxu0 %v8070
    %8397 = vmatpush1.msra.mxu0 %v8069
    %8398 = vmatprep.subr.mxu0 %v8072
    %8399 = vmatpush1.msra.mxu0 %v8071
    %8400 = vmatprep.subr.mxu0 %v8074
    %8401 = vmatpush1.msra.mxu0 %v8073
    %8402 = vmatprep.subr.mxu0 %v8076
    %8403 = vmatpush1.msra.mxu0 %v8075
    %8404 = vmatprep.subr.mxu0 %v8078
    %8405 = vmatpush1.msra.mxu0 %v8077
    %8406 = vmatprep.subr.mxu0 %v8080
    %8407 = vmatpush1.msra.mxu0 %v8079
    %8408 = vmatprep.subr.mxu0 %v8082
    %8409 = vmatpush1.msra.mxu0 %v8081
    %8410 = vmatprep.subr.mxu0 %v8084
    %8411 = vmatpush1.msra.mxu0 %v8083
    %8412 = vmatprep.subr.mxu0 %v8086
    %8413 = vmatpush1.msra.mxu0 %v8085
    %8414 = vmatprep.subr.mxu0 %v8088
    %8415 = vmatpush1.msra.mxu0 %v8087
    %8416 = vmatprep.mubr.f32.mxu0 %v7954
    %8417 = vmatmul.mubr.f32.gmra.mrb[0].mxu0 %v7953
    %v8418 = vpop.f32.mrb[0].mxu0
    %v8419 = vadd.f32 %v8348, %v8418
    %v8420 = vpop.f32.mrb[0].mxu0
    %v8421 = vadd.f32 %v8350, %v8420
    %8422 = vdwg.mxu0
    %8423 = vmatprep.subr.mxu0 %v8090
    %8424 = vmatpush1.msra.mxu0 %v8089
    %8425 = vmatprep.subr.mxu0 %v8092
    %8426 = vmatpush1.msra.mxu0 %v8091
    %8427 = vmatprep.subr.mxu0 %v8094
    %8428 = vmatpush1.msra.mxu0 %v8093
    %8429 = vmatprep.subr.mxu0 %v8096
    %8430 = vmatpush1.msra.mxu0 %v8095
    %8431 = vmatprep.subr.mxu0 %v8098
    %8432 = vmatpush1.msra.mxu0 %v8097
    %8433 = vmatprep.subr.mxu0 %v8100
    %8434 = vmatpush1.msra.mxu0 %v8099
    %8435 = vmatprep.subr.mxu0 %v8102
    %8436 = vmatpush1.msra.mxu0 %v8101
    %8437 = vmatprep.subr.mxu0 %v8104
    %8438 = vmatpush1.msra.mxu0 %v8103
    %8439 = vmatprep.subr.mxu0 %v8106
    %8440 = vmatpush1.msra.mxu0 %v8105
    %8441 = vmatprep.subr.mxu0 %v8108
    %8442 = vmatpush1.msra.mxu0 %v8107
    %8443 = vmatprep.subr.mxu0 %v8110
    %8444 = vmatpush1.msra.mxu0 %v8109
    %8445 = vmatprep.subr.mxu0 %v8112
    %8446 = vmatpush1.msra.mxu0 %v8111
    %8447 = vmatprep.subr.mxu0 %v8114
    %8448 = vmatpush1.msra.mxu0 %v8113
    %8449 = vmatprep.subr.mxu0 %v8116
    %8450 = vmatpush1.msra.mxu0 %v8115
    %8451 = vmatprep.subr.mxu0 %v8118
    %8452 = vmatpush1.msra.mxu0 %v8117
    %8453 = vmatprep.subr.mxu0 %v8120
    %8454 = vmatpush1.msra.mxu0 %v8119
    %8455 = vmatprep.subr.mxu0 %v8122
    %8456 = vmatpush1.msra.mxu0 %v8121
    %8457 = vmatprep.subr.mxu0 %v8124
    %8458 = vmatpush1.msra.mxu0 %v8123
    %8459 = vmatprep.subr.mxu0 %v8126
    %8460 = vmatpush1.msra.mxu0 %v8125
    %8461 = vmatprep.subr.mxu0 %v8128
    %8462 = vmatpush1.msra.mxu0 %v8127
    %8463 = vmatprep.subr.mxu0 %v8130
    %8464 = vmatpush1.msra.mxu0 %v8129
    %8465 = vmatprep.subr.mxu0 %v8132
    %8466 = vmatpush1.msra.mxu0 %v8131
    %8467 = vmatprep.subr.mxu0 %v8134
    %8468 = vmatpush1.msra.mxu0 %v8133
    %8469 = vmatprep.subr.mxu0 %v8136
    %8470 = vmatpush1.msra.mxu0 %v8135
    %8471 = vmatprep.subr.mxu0 %v8138
    %8472 = vmatpush1.msra.mxu0 %v8137
    %8473 = vmatprep.subr.mxu0 %v8140
    %8474 = vmatpush1.msra.mxu0 %v8139
    %8475 = vmatprep.subr.mxu0 %v8142
    %8476 = vmatpush1.msra.mxu0 %v8141
    %8477 = vmatprep.subr.mxu0 %v8144
    %8478 = vmatpush1.msra.mxu0 %v8143
    %8479 = vmatprep.subr.mxu0 %v8146
    %8480 = vmatpush1.msra.mxu0 %v8145
    %8481 = vmatprep.subr.mxu0 %v8148
    %8482 = vmatpush1.msra.mxu0 %v8147
    %8483 = vmatprep.subr.mxu0 %v8150
    %8484 = vmatpush1.msra.mxu0 %v8149
    %8485 = vmatprep.subr.mxu0 %v8152
    %8486 = vmatpush1.msra.mxu0 %v8151
    %8487 = vmatprep.mubr.f32.mxu0 %v7956
    %8488 = vmatmul.mubr.f32.gmra.mrb[0].mxu0 %v7955
    %v8489 = vpop.f32.mrb[0].mxu0
    %v8490 = vadd.f32 %v8419, %v8489
    %v8491 = vpop.f32.mrb[0].mxu0
    %v8492 = vadd.f32 %v8421, %v8491
    %8493 = vdwg.mxu0
    %8494 = vmatprep.subr.mxu0 %v8154
    %8495 = vmatpush1.msra.mxu0 %v8153
    %8496 = vmatprep.subr.mxu0 %v8156
    %8497 = vmatpush1.msra.mxu0 %v8155
    %8498 = vmatprep.subr.mxu0 %v8158
    %8499 = vmatpush1.msra.mxu0 %v8157
    %8500 = vmatprep.subr.mxu0 %v8160
    %8501 = vmatpush1.msra.mxu0 %v8159
    %8502 = vmatprep.subr.mxu0 %v8162
    %8503 = vmatpush1.msra.mxu0 %v8161
    %8504 = vmatprep.subr.mxu0 %v8164
    %8505 = vmatpush1.msra.mxu0 %v8163
    %8506 = vmatprep.subr.mxu0 %v8166
    %8507 = vmatpush1.msra.mxu0 %v8165
    %8508 = vmatprep.subr.mxu0 %v8168
    %8509 = vmatpush1.msra.mxu0 %v8167
    %8510 = vmatprep.subr.mxu0 %v8170
    %8511 = vmatpush1.msra.mxu0 %v8169
    %8512 = vmatprep.subr.mxu0 %v8172
    %8513 = vmatpush1.msra.mxu0 %v8171
    %8514 = vmatprep.subr.mxu0 %v8174
    %8515 = vmatpush1.msra.mxu0 %v8173
    %8516 = vmatprep.subr.mxu0 %v8176
    %8517 = vmatpush1.msra.mxu0 %v8175
    %8518 = vmatprep.subr.mxu0 %v8178
    %8519 = vmatpush1.msra.mxu0 %v8177
    %8520 = vmatprep.subr.mxu0 %v8180
    %8521 = vmatpush1.msra.mxu0 %v8179
    %8522 = vmatprep.subr.mxu0 %v8182
    %8523 = vmatpush1.msra.mxu0 %v8181
    %8524 = vmatprep.subr.mxu0 %v8184
    %8525 = vmatpush1.msra.mxu0 %v8183
    %8526 = vmatprep.subr.mxu0 %v8186
    %8527 = vmatpush1.msra.mxu0 %v8185
    %8528 = vmatprep.subr.mxu0 %v8188
    %8529 = vmatpush1.msra.mxu0 %v8187
    %8530 = vmatprep.subr.mxu0 %v8190
    %8531 = vmatpush1.msra.mxu0 %v8189
    %8532 = vmatprep.subr.mxu0 %v8192
    %8533 = vmatpush1.msra.mxu0 %v8191
    %8534 = vmatprep.subr.mxu0 %v8194
    %8535 = vmatpush1.msra.mxu0 %v8193
    %8536 = vmatprep.subr.mxu0 %v8196
    %8537 = vmatpush1.msra.mxu0 %v8195
    %8538 = vmatprep.subr.mxu0 %v8198
    %8539 = vmatpush1.msra.mxu0 %v8197
    %8540 = vmatprep.subr.mxu0 %v8200
    %8541 = vmatpush1.msra.mxu0 %v8199
    %8542 = vmatprep.subr.mxu0 %v8202
    %8543 = vmatpush1.msra.mxu0 %v8201
    %8544 = vmatprep.subr.mxu0 %v8204
    %8545 = vmatpush1.msra.mxu0 %v8203
    %8546 = vmatprep.subr.mxu0 %v8206
    %8547 = vmatpush1.msra.mxu0 %v8205
    %8548 = vmatprep.subr.mxu0 %v8208
    %8549 = vmatpush1.msra.mxu0 %v8207
    %8550 = vmatprep.subr.mxu0 %v8210
    %8551 = vmatpush1.msra.mxu0 %v8209
    %8552 = vmatprep.subr.mxu0 %v8212
    %8553 = vmatpush1.msra.mxu0 %v8211
    %8554 = vmatprep.subr.mxu0 %v8214
    %8555 = vmatpush1.msra.mxu0 %v8213
    %8556 = vmatprep.subr.mxu0 %v8216
    %8557 = vmatpush1.msra.mxu0 %v8215
    %8558 = vmatprep.mubr.f32.mxu0 %v7958
    %8559 = vmatmul.mubr.f32.gmra.mrb[0].mxu0 %v7957
    %v8560 = vpop.f32.mrb[0].mxu0
    %v8561 = vadd.f32 %v8490, %v8560
    %v8562 = vpop.f32.mrb[0].mxu0
    %v8563 = vadd.f32 %v8492, %v8562
    %8564 = vdwg.mxu0
    %8565 = vmatprep.subr.mxu0 %v8218
    %8566 = vmatpush1.msra.mxu0 %v8217
    %8567 = vmatprep.subr.mxu0 %v8220
    %8568 = vmatpush1.msra.mxu0 %v8219
    %8569 = vmatprep.subr.mxu0 %v8222
    %8570 = vmatpush1.msra.mxu0 %v8221
    %8571 = vmatprep.subr.mxu0 %v8224
    %8572 = vmatpush1.msra.mxu0 %v8223
    %8573 = vmatprep.subr.mxu0 %v8226
    %8574 = vmatpush1.msra.mxu0 %v8225
    %8575 = vmatprep.subr.mxu0 %v8228
    %8576 = vmatpush1.msra.mxu0 %v8227
    %8577 = vmatprep.subr.mxu0 %v8230
    %8578 = vmatpush1.msra.mxu0 %v8229
    %8579 = vmatprep.subr.mxu0 %v8232
    %8580 = vmatpush1.msra.mxu0 %v8231
    %8581 = vmatprep.subr.mxu0 %v8234
    %8582 = vmatpush1.msra.mxu0 %v8233
    %8583 = vmatprep.subr.mxu0 %v8236
    %8584 = vmatpush1.msra.mxu0 %v8235
    %8585 = vmatprep.subr.mxu0 %v8238
    %8586 = vmatpush1.msra.mxu0 %v8237
    %8587 = vmatprep.subr.mxu0 %v8240
    %8588 = vmatpush1.msra.mxu0 %v8239
    %8589 = vmatprep.subr.mxu0 %v8242
    %8590 = vmatpush1.msra.mxu0 %v8241
    %8591 = vmatprep.subr.mxu0 %v8244
    %8592 = vmatpush1.msra.mxu0 %v8243
    %8593 = vmatprep.subr.mxu0 %v8246
    %8594 = vmatpush1.msra.mxu0 %v8245
    %8595 = vmatprep.subr.mxu0 %v8248
    %8596 = vmatpush1.msra.mxu0 %v8247
    %8597 = vmatprep.subr.mxu0 %v8250
    %8598 = vmatpush1.msra.mxu0 %v8249
    %8599 = vmatprep.subr.mxu0 %v8252
    %8600 = vmatpush1.msra.mxu0 %v8251
    %8601 = vmatprep.subr.mxu0 %v8254
    %8602 = vmatpush1.msra.mxu0 %v8253
    %8603 = vmatprep.subr.mxu0 %v8256
    %8604 = vmatpush1.msra.mxu0 %v8255
    %8605 = vmatprep.subr.mxu0 %v8258
    %8606 = vmatpush1.msra.mxu0 %v8257
    %8607 = vmatprep.subr.mxu0 %v8260
    %8608 = vmatpush1.msra.mxu0 %v8259
    %8609 = vmatprep.subr.mxu0 %v8262
    %8610 = vmatpush1.msra.mxu0 %v8261
    %8611 = vmatprep.subr.mxu0 %v8264
    %8612 = vmatpush1.msra.mxu0 %v8263
    %8613 = vmatprep.subr.mxu0 %v8266
    %8614 = vmatpush1.msra.mxu0 %v8265
    %8615 = vmatprep.subr.mxu0 %v8268
    %8616 = vmatpush1.msra.mxu0 %v8267
    %8617 = vmatprep.subr.mxu0 %v8270
    %8618 = vmatpush1.msra.mxu0 %v8269
    %8619 = vmatprep.subr.mxu0 %v8272
    %8620 = vmatpush1.msra.mxu0 %v8271
    %8621 = vmatprep.subr.mxu0 %v8274
    %8622 = vmatpush1.msra.mxu0 %v8273
    %8623 = vmatprep.subr.mxu0 %v8276
    %8624 = vmatpush1.msra.mxu0 %v8275
    %8625 = vmatprep.subr.mxu0 %v8278
    %8626 = vmatpush1.msra.mxu0 %v8277
    %8627 = vmatprep.subr.mxu0 %v8280
    %8628 = vmatpush1.msra.mxu0 %v8279
    %8629 = vmatprep.mubr.f32.mxu0 %v7960
    %8630 = vmatmul.mubr.f32.gmra.mrb[0].mxu0 %v7959
    %v8631 = vpop.f32.mrb[0].mxu0
    %v8632 = vadd.f32 %v8561, %v8631
    %v8633 = vpop.f32.mrb[0].mxu0
    %v8634 = vadd.f32 %v8563, %v8633
    %8635 = vdwg.mxu0
    %v8636 = vmax.f32 %v8632, 0.0
    %v8637 = vmax.f32 %v8634, 0.0
    %8638 = vst [vmem:[#allocation3 + $0x40] sm:$0xff] %v8636
    %8639 = vst [vmem:[#allocation3 + $0x48] sm:$0xff] %v8637
    %v8640 = vld [vmem:[#allocation16] sm:$0x1]
    %v8642 = vlaneseq
    %v8643 = vshrl.u32 %v8642, 7
    %v8644 = vsub.s32 0, %v8643
    %v8645 = vrot.slane %v8640, %v8644
    %v8647 = vld [vmem:[#allocation7] sm:$0xff]
    %v8648 = vld [vmem:[#allocation19] sm:$0x1]
    %8650 = vset.pattern.permute.xlu0 0
    %8651 = vperm.xlu0 %8650, %v8647
    %v8652 = vpop.permute.xlu0 %8651
    %v8655 = vlaneseq
    %v8656 = vshrl.u32 %v8655, 7
    %v8657 = vsub.s32 0, %v8656
    %v8658 = vrot.slane %v8648, %v8657
    %v8660 = vmul.f32 %v8652, %v8658
    %v8661 = vld [vmem:[#allocation21] sm:$0x1]
    %v8663 = vlaneseq
    %v8664 = vshrl.u32 %v8663, 7
    %v8665 = vsub.s32 0, %v8664
    %v8666 = vrot.slane %v8661, %v8665
    %v8668 = vadd.f32 %v8660, %v8666
    %v8669 = vld [vmem:[#allocation3] sm:$0xff]
    %v8670 = vld [vmem:[#allocation3 + $0x8] sm:$0xff]
    %v8671 = vld [vmem:[#allocation3 + $0x10] sm:$0xff]
    %v8672 = vld [vmem:[#allocation3 + $0x18] sm:$0xff]
    %v8673 = vld [vmem:[#allocation3 + $0x20] sm:$0xff]
    %v8674 = vld [vmem:[#allocation3 + $0x28] sm:$0xff]
    %v8675 = vld [vmem:[#allocation3 + $0x30] sm:$0xff]
    %v8676 = vld [vmem:[#allocation3 + $0x38] sm:$0xff]
    %v8677 = vld [vmem:[#allocation3 + $0x40] sm:$0xff]
    %v8678 = vld [vmem:[#allocation3 + $0x48] sm:$0xff]
    %v8679 = vld [vmem:[#allocation15] sm:$0xff]
    %v8680 = vld [vmem:[#allocation15 + $0x8] sm:$0xff]
    %v8681 = vld [vmem:[#allocation15 + $0x10] sm:$0xff]
    %v8682 = vld [vmem:[#allocation15 + $0x18] sm:$0xff]
    %v8683 = vld [vmem:[#allocation15 + $0x20] sm:$0xff]
    %v8684 = vld [vmem:[#allocation15 + $0x28] sm:$0xff]
    %v8685 = vld [vmem:[#allocation15 + $0x30] sm:$0xff]
    %v8686 = vld [vmem:[#allocation15 + $0x38] sm:$0xff]
    %v8687 = vld [vmem:[#allocation15 + $0x40] sm:$0xff]
    %v8688 = vld [vmem:[#allocation15 + $0x48] sm:$0xff]
    %v8689 = vld [vmem:[#allocation15 + $0x50] sm:$0xff]
    %v8690 = vld [vmem:[#allocation15 + $0x58] sm:$0xff]
    %v8691 = vld [vmem:[#allocation15 + $0x60] sm:$0xff]
    %v8692 = vld [vmem:[#allocation15 + $0x68] sm:$0xff]
    %v8693 = vld [vmem:[#allocation15 + $0x70] sm:$0xff]
    %v8694 = vld [vmem:[#allocation15 + $0x78] sm:$0xff]
    %v8695 = vld [vmem:[#allocation15 + $0x80] sm:$0xff]
    %v8696 = vld [vmem:[#allocation15 + $0x88] sm:$0xff]
    %v8697 = vld [vmem:[#allocation15 + $0x90] sm:$0xff]
    %v8698 = vld [vmem:[#allocation15 + $0x98] sm:$0xff]
    %v8699 = vld [vmem:[#allocation15 + $0xa0] sm:$0xff]
    %v8700 = vld [vmem:[#allocation15 + $0xa8] sm:$0xff]
    %v8701 = vld [vmem:[#allocation15 + $0xb0] sm:$0xff]
    %v8702 = vld [vmem:[#allocation15 + $0xb8] sm:$0xff]
    %v8703 = vld [vmem:[#allocation15 + $0xc0] sm:$0xff]
    %v8704 = vld [vmem:[#allocation15 + $0xc8] sm:$0xff]
    %v8705 = vld [vmem:[#allocation15 + $0xd0] sm:$0xff]
    %v8706 = vld [vmem:[#allocation15 + $0xd8] sm:$0xff]
    %v8707 = vld [vmem:[#allocation15 + $0xe0] sm:$0xff]
    %v8708 = vld [vmem:[#allocation15 + $0xe8] sm:$0xff]
    %v8709 = vld [vmem:[#allocation15 + $0xf0] sm:$0xff]
    %v8710 = vld [vmem:[#allocation15 + $0xf8] sm:$0xff]
    %v8711 = vld [vmem:[#allocation15 + $0x100] sm:$0xff]
    %v8712 = vld [vmem:[#allocation15 + $0x108] sm:$0xff]
    %v8713 = vld [vmem:[#allocation15 + $0x110] sm:$0xff]
    %v8714 = vld [vmem:[#allocation15 + $0x118] sm:$0xff]
    %v8715 = vld [vmem:[#allocation15 + $0x120] sm:$0xff]
    %v8716 = vld [vmem:[#allocation15 + $0x128] sm:$0xff]
    %v8717 = vld [vmem:[#allocation15 + $0x130] sm:$0xff]
    %v8718 = vld [vmem:[#allocation15 + $0x138] sm:$0xff]
    %v8719 = vld [vmem:[#allocation15 + $0x140] sm:$0xff]
    %v8720 = vld [vmem:[#allocation15 + $0x148] sm:$0xff]
    %v8721 = vld [vmem:[#allocation15 + $0x150] sm:$0xff]
    %v8722 = vld [vmem:[#allocation15 + $0x158] sm:$0xff]
    %v8723 = vld [vmem:[#allocation15 + $0x160] sm:$0xff]
    %v8724 = vld [vmem:[#allocation15 + $0x168] sm:$0xff]
    %v8725 = vld [vmem:[#allocation15 + $0x170] sm:$0xff]
    %v8726 = vld [vmem:[#allocation15 + $0x178] sm:$0xff]
    %v8727 = vld [vmem:[#allocation15 + $0x180] sm:$0xff]
    %v8728 = vld [vmem:[#allocation15 + $0x188] sm:$0xff]
    %v8729 = vld [vmem:[#allocation15 + $0x190] sm:$0xff]
    %v8730 = vld [vmem:[#allocation15 + $0x198] sm:$0xff]
    %v8731 = vld [vmem:[#allocation15 + $0x1a0] sm:$0xff]
    %v8732 = vld [vmem:[#allocation15 + $0x1a8] sm:$0xff]
    %v8733 = vld [vmem:[#allocation15 + $0x1b0] sm:$0xff]
    %v8734 = vld [vmem:[#allocation15 + $0x1b8] sm:$0xff]
    %v8735 = vld [vmem:[#allocation15 + $0x1c0] sm:$0xff]
    %v8736 = vld [vmem:[#allocation15 + $0x1c8] sm:$0xff]
    %v8737 = vld [vmem:[#allocation15 + $0x1d0] sm:$0xff]
    %v8738 = vld [vmem:[#allocation15 + $0x1d8] sm:$0xff]
    %v8739 = vld [vmem:[#allocation15 + $0x1e0] sm:$0xff]
    %v8740 = vld [vmem:[#allocation15 + $0x1e8] sm:$0xff]
    %v8741 = vld [vmem:[#allocation15 + $0x1f0] sm:$0xff]
    %v8742 = vld [vmem:[#allocation15 + $0x1f8] sm:$0xff]
    %v8743 = vld [vmem:[#allocation15 + $0x200] sm:$0xff]
    %v8744 = vld [vmem:[#allocation15 + $0x208] sm:$0xff]
    %v8745 = vld [vmem:[#allocation15 + $0x210] sm:$0xff]
    %v8746 = vld [vmem:[#allocation15 + $0x218] sm:$0xff]
    %v8747 = vld [vmem:[#allocation15 + $0x220] sm:$0xff]
    %v8748 = vld [vmem:[#allocation15 + $0x228] sm:$0xff]
    %v8749 = vld [vmem:[#allocation15 + $0x230] sm:$0xff]
    %v8750 = vld [vmem:[#allocation15 + $0x238] sm:$0xff]
    %v8751 = vld [vmem:[#allocation15 + $0x240] sm:$0xff]
    %v8752 = vld [vmem:[#allocation15 + $0x248] sm:$0xff]
    %v8753 = vld [vmem:[#allocation15 + $0x250] sm:$0xff]
    %v8754 = vld [vmem:[#allocation15 + $0x258] sm:$0xff]
    %v8755 = vld [vmem:[#allocation15 + $0x260] sm:$0xff]
    %v8756 = vld [vmem:[#allocation15 + $0x268] sm:$0xff]
    %v8757 = vld [vmem:[#allocation15 + $0x270] sm:$0xff]
    %v8758 = vld [vmem:[#allocation15 + $0x278] sm:$0xff]
    %v8759 = vld [vmem:[#allocation15 + $0x280] sm:$0xff]
    %v8760 = vld [vmem:[#allocation15 + $0x288] sm:$0xff]
    %v8761 = vld [vmem:[#allocation15 + $0x290] sm:$0xff]
    %v8762 = vld [vmem:[#allocation15 + $0x298] sm:$0xff]
    %v8763 = vld [vmem:[#allocation15 + $0x2a0] sm:$0xff]
    %v8764 = vld [vmem:[#allocation15 + $0x2a8] sm:$0xff]
    %v8765 = vld [vmem:[#allocation15 + $0x2b0] sm:$0xff]
    %v8766 = vld [vmem:[#allocation15 + $0x2b8] sm:$0xff]
    %v8767 = vld [vmem:[#allocation15 + $0x2c0] sm:$0xff]
    %v8768 = vld [vmem:[#allocation15 + $0x2c8] sm:$0xff]
    %v8769 = vld [vmem:[#allocation15 + $0x2d0] sm:$0xff]
    %v8770 = vld [vmem:[#allocation15 + $0x2d8] sm:$0xff]
    %v8771 = vld [vmem:[#allocation15 + $0x2e0] sm:$0xff]
    %v8772 = vld [vmem:[#allocation15 + $0x2e8] sm:$0xff]
    %v8773 = vld [vmem:[#allocation15 + $0x2f0] sm:$0xff]
    %v8774 = vld [vmem:[#allocation15 + $0x2f8] sm:$0xff]
    %v8775 = vld [vmem:[#allocation15 + $0x300] sm:$0xff]
    %v8776 = vld [vmem:[#allocation15 + $0x308] sm:$0xff]
    %v8777 = vld [vmem:[#allocation15 + $0x310] sm:$0xff]
    %v8778 = vld [vmem:[#allocation15 + $0x318] sm:$0xff]
    %v8779 = vld [vmem:[#allocation15 + $0x320] sm:$0xff]
    %v8780 = vld [vmem:[#allocation15 + $0x328] sm:$0xff]
    %v8781 = vld [vmem:[#allocation15 + $0x330] sm:$0xff]
    %v8782 = vld [vmem:[#allocation15 + $0x338] sm:$0xff]
    %v8783 = vld [vmem:[#allocation15 + $0x340] sm:$0xff]
    %v8784 = vld [vmem:[#allocation15 + $0x348] sm:$0xff]
    %v8785 = vld [vmem:[#allocation15 + $0x350] sm:$0xff]
    %v8786 = vld [vmem:[#allocation15 + $0x358] sm:$0xff]
    %v8787 = vld [vmem:[#allocation15 + $0x360] sm:$0xff]
    %v8788 = vld [vmem:[#allocation15 + $0x368] sm:$0xff]
    %v8789 = vld [vmem:[#allocation15 + $0x370] sm:$0xff]
    %v8790 = vld [vmem:[#allocation15 + $0x378] sm:$0xff]
    %v8791 = vld [vmem:[#allocation15 + $0x380] sm:$0xff]
    %v8792 = vld [vmem:[#allocation15 + $0x388] sm:$0xff]
    %v8793 = vld [vmem:[#allocation15 + $0x390] sm:$0xff]
    %v8794 = vld [vmem:[#allocation15 + $0x398] sm:$0xff]
    %v8795 = vld [vmem:[#allocation15 + $0x3a0] sm:$0xff]
    %v8796 = vld [vmem:[#allocation15 + $0x3a8] sm:$0xff]
    %v8797 = vld [vmem:[#allocation15 + $0x3b0] sm:$0xff]
    %v8798 = vld [vmem:[#allocation15 + $0x3b8] sm:$0xff]
    %v8799 = vld [vmem:[#allocation15 + $0x3c0] sm:$0xff]
    %v8800 = vld [vmem:[#allocation15 + $0x3c8] sm:$0xff]
    %v8801 = vld [vmem:[#allocation15 + $0x3d0] sm:$0xff]
    %v8802 = vld [vmem:[#allocation15 + $0x3d8] sm:$0xff]
    %v8803 = vld [vmem:[#allocation15 + $0x3e0] sm:$0xff]
    %v8804 = vld [vmem:[#allocation15 + $0x3e8] sm:$0xff]
    %v8805 = vld [vmem:[#allocation15 + $0x3f0] sm:$0xff]
    %v8806 = vld [vmem:[#allocation15 + $0x3f8] sm:$0xff]
    %v8807 = vld [vmem:[#allocation15 + $0x400] sm:$0xff]
    %v8808 = vld [vmem:[#allocation15 + $0x408] sm:$0xff]
    %v8809 = vld [vmem:[#allocation15 + $0x410] sm:$0xff]
    %v8810 = vld [vmem:[#allocation15 + $0x418] sm:$0xff]
    %v8811 = vld [vmem:[#allocation15 + $0x420] sm:$0xff]
    %v8812 = vld [vmem:[#allocation15 + $0x428] sm:$0xff]
    %v8813 = vld [vmem:[#allocation15 + $0x430] sm:$0xff]
    %v8814 = vld [vmem:[#allocation15 + $0x438] sm:$0xff]
    %v8815 = vld [vmem:[#allocation15 + $0x440] sm:$0xff]
    %v8816 = vld [vmem:[#allocation15 + $0x448] sm:$0xff]
    %v8817 = vld [vmem:[#allocation15 + $0x450] sm:$0xff]
    %v8818 = vld [vmem:[#allocation15 + $0x458] sm:$0xff]
    %v8819 = vld [vmem:[#allocation15 + $0x460] sm:$0xff]
    %v8820 = vld [vmem:[#allocation15 + $0x468] sm:$0xff]
    %v8821 = vld [vmem:[#allocation15 + $0x470] sm:$0xff]
    %v8822 = vld [vmem:[#allocation15 + $0x478] sm:$0xff]
    %v8823 = vld [vmem:[#allocation15 + $0x480] sm:$0xff]
    %v8824 = vld [vmem:[#allocation15 + $0x488] sm:$0xff]
    %v8825 = vld [vmem:[#allocation15 + $0x490] sm:$0xff]
    %v8826 = vld [vmem:[#allocation15 + $0x498] sm:$0xff]
    %v8827 = vld [vmem:[#allocation15 + $0x4a0] sm:$0xff]
    %v8828 = vld [vmem:[#allocation15 + $0x4a8] sm:$0xff]
    %v8829 = vld [vmem:[#allocation15 + $0x4b0] sm:$0xff]
    %v8830 = vld [vmem:[#allocation15 + $0x4b8] sm:$0xff]
    %v8831 = vld [vmem:[#allocation15 + $0x4c0] sm:$0xff]
    %v8832 = vld [vmem:[#allocation15 + $0x4c8] sm:$0xff]
    %v8833 = vld [vmem:[#allocation15 + $0x4d0] sm:$0xff]
    %v8834 = vld [vmem:[#allocation15 + $0x4d8] sm:$0xff]
    %v8835 = vld [vmem:[#allocation15 + $0x4e0] sm:$0xff]
    %v8836 = vld [vmem:[#allocation15 + $0x4e8] sm:$0xff]
    %v8837 = vld [vmem:[#allocation15 + $0x4f0] sm:$0xff]
    %v8838 = vld [vmem:[#allocation15 + $0x4f8] sm:$0xff]
    %8839 = vmatprep.subr.mxu0 0.0
    %8840 = vmatpush1.msra.mxu0 %v8679
    %8841 = vmatprep.subr.mxu0 0.0
    %8842 = vmatpush1.msra.mxu0 %v8680
    %8843 = vmatprep.subr.mxu0 0.0
    %8844 = vmatpush1.msra.mxu0 %v8681
    %8845 = vmatprep.subr.mxu0 0.0
    %8846 = vmatpush1.msra.mxu0 %v8682
    %8847 = vmatprep.subr.mxu0 0.0
    %8848 = vmatpush1.msra.mxu0 %v8683
    %8849 = vmatprep.subr.mxu0 0.0
    %8850 = vmatpush1.msra.mxu0 %v8684
    %8851 = vmatprep.subr.mxu0 0.0
    %8852 = vmatpush1.msra.mxu0 %v8685
    %8853 = vmatprep.subr.mxu0 0.0
    %8854 = vmatpush1.msra.mxu0 %v8686
    %8855 = vmatprep.subr.mxu0 0.0
    %8856 = vmatpush1.msra.mxu0 %v8687
    %8857 = vmatprep.subr.mxu0 0.0
    %8858 = vmatpush1.msra.mxu0 %v8688
    %8859 = vmatprep.subr.mxu0 0.0
    %8860 = vmatpush1.msra.mxu0 %v8689
    %8861 = vmatprep.subr.mxu0 0.0
    %8862 = vmatpush1.msra.mxu0 %v8690
    %8863 = vmatprep.subr.mxu0 0.0
    %8864 = vmatpush1.msra.mxu0 %v8691
    %8865 = vmatprep.subr.mxu0 0.0
    %8866 = vmatpush1.msra.mxu0 %v8692
    %8867 = vmatprep.subr.mxu0 0.0
    %8868 = vmatpush1.msra.mxu0 %v8693
    %8869 = vmatprep.subr.mxu0 0.0
    %8870 = vmatpush1.msra.mxu0 %v8694
    %8871 = vmatprep.subr.mxu0 0.0
    %8872 = vmatpush1.msra.mxu0 %v8695
    %8873 = vmatprep.subr.mxu0 0.0
    %8874 = vmatpush1.msra.mxu0 %v8696
    %8875 = vmatprep.subr.mxu0 0.0
    %8876 = vmatpush1.msra.mxu0 %v8697
    %8877 = vmatprep.subr.mxu0 0.0
    %8878 = vmatpush1.msra.mxu0 %v8698
    %8879 = vmatprep.subr.mxu0 0.0
    %8880 = vmatpush1.msra.mxu0 %v8699
    %8881 = vmatprep.subr.mxu0 0.0
    %8882 = vmatpush1.msra.mxu0 %v8700
    %8883 = vmatprep.subr.mxu0 0.0
    %8884 = vmatpush1.msra.mxu0 %v8701
    %8885 = vmatprep.subr.mxu0 0.0
    %8886 = vmatpush1.msra.mxu0 %v8702
    %8887 = vmatprep.subr.mxu0 0.0
    %8888 = vmatpush1.msra.mxu0 %v8703
    %8889 = vmatprep.subr.mxu0 0.0
    %8890 = vmatpush1.msra.mxu0 %v8704
    %8891 = vmatprep.subr.mxu0 0.0
    %8892 = vmatpush1.msra.mxu0 %v8705
    %8893 = vmatprep.subr.mxu0 0.0
    %8894 = vmatpush1.msra.mxu0 %v8706
    %8895 = vmatprep.subr.mxu0 0.0
    %8896 = vmatpush1.msra.mxu0 %v8707
    %8897 = vmatprep.subr.mxu0 0.0
    %8898 = vmatpush1.msra.mxu0 %v8708
    %8899 = vmatprep.subr.mxu0 0.0
    %8900 = vmatpush1.msra.mxu0 %v8709
    %8901 = vmatprep.subr.mxu0 0.0
    %8902 = vmatpush1.msra.mxu0 %v8710
    %8903 = vmatprep.mubr.f32.mxu0 %v8670
    %8904 = vmatmul.mubr.f32.gmra.mrb[0].mxu0 %v8669
    %v8905 = vpop.f32.mrb[0].mxu0
    %v8906 = vadd.f32 %v8645, %v8905
    %v8907 = vpop.f32.mrb[0].mxu0
    %8908 = vdwg.mxu0
    %8909 = vmatprep.subr.mxu0 0.0
    %8910 = vmatpush1.msra.mxu0 %v8711
    %8911 = vmatprep.subr.mxu0 0.0
    %8912 = vmatpush1.msra.mxu0 %v8712
    %8913 = vmatprep.subr.mxu0 0.0
    %8914 = vmatpush1.msra.mxu0 %v8713
    %8915 = vmatprep.subr.mxu0 0.0
    %8916 = vmatpush1.msra.mxu0 %v8714
    %8917 = vmatprep.subr.mxu0 0.0
    %8918 = vmatpush1.msra.mxu0 %v8715
    %8919 = vmatprep.subr.mxu0 0.0
    %8920 = vmatpush1.msra.mxu0 %v8716
    %8921 = vmatprep.subr.mxu0 0.0
    %8922 = vmatpush1.msra.mxu0 %v8717
    %8923 = vmatprep.subr.mxu0 0.0
    %8924 = vmatpush1.msra.mxu0 %v8718
    %8925 = vmatprep.subr.mxu0 0.0
    %8926 = vmatpush1.msra.mxu0 %v8719
    %8927 = vmatprep.subr.mxu0 0.0
    %8928 = vmatpush1.msra.mxu0 %v8720
    %8929 = vmatprep.subr.mxu0 0.0
    %8930 = vmatpush1.msra.mxu0 %v8721
    %8931 = vmatprep.subr.mxu0 0.0
    %8932 = vmatpush1.msra.mxu0 %v8722
    %8933 = vmatprep.subr.mxu0 0.0
    %8934 = vmatpush1.msra.mxu0 %v8723
    %8935 = vmatprep.subr.mxu0 0.0
    %8936 = vmatpush1.msra.mxu0 %v8724
    %8937 = vmatprep.subr.mxu0 0.0
    %8938 = vmatpush1.msra.mxu0 %v8725
    %8939 = vmatprep.subr.mxu0 0.0
    %8940 = vmatpush1.msra.mxu0 %v8726
    %8941 = vmatprep.subr.mxu0 0.0
    %8942 = vmatpush1.msra.mxu0 %v8727
    %8943 = vmatprep.subr.mxu0 0.0
    %8944 = vmatpush1.msra.mxu0 %v8728
    %8945 = vmatprep.subr.mxu0 0.0
    %8946 = vmatpush1.msra.mxu0 %v8729
    %8947 = vmatprep.subr.mxu0 0.0
    %8948 = vmatpush1.msra.mxu0 %v8730
    %8949 = vmatprep.subr.mxu0 0.0
    %8950 = vmatpush1.msra.mxu0 %v8731
    %8951 = vmatprep.subr.mxu0 0.0
    %8952 = vmatpush1.msra.mxu0 %v8732
    %8953 = vmatprep.subr.mxu0 0.0
    %8954 = vmatpush1.msra.mxu0 %v8733
    %8955 = vmatprep.subr.mxu0 0.0
    %8956 = vmatpush1.msra.mxu0 %v8734
    %8957 = vmatprep.subr.mxu0 0.0
    %8958 = vmatpush1.msra.mxu0 %v8735
    %8959 = vmatprep.subr.mxu0 0.0
    %8960 = vmatpush1.msra.mxu0 %v8736
    %8961 = vmatprep.subr.mxu0 0.0
    %8962 = vmatpush1.msra.mxu0 %v8737
    %8963 = vmatprep.subr.mxu0 0.0
    %8964 = vmatpush1.msra.mxu0 %v8738
    %8965 = vmatprep.subr.mxu0 0.0
    %8966 = vmatpush1.msra.mxu0 %v8739
    %8967 = vmatprep.subr.mxu0 0.0
    %8968 = vmatpush1.msra.mxu0 %v8740
    %8969 = vmatprep.subr.mxu0 0.0
    %8970 = vmatpush1.msra.mxu0 %v8741
    %8971 = vmatprep.subr.mxu0 0.0
    %8972 = vmatpush1.msra.mxu0 %v8742
    %8973 = vmatprep.mubr.f32.mxu0 %v8672
    %8974 = vmatmul.mubr.f32.gmra.mrb[0].mxu0 %v8671
    %v8975 = vpop.f32.mrb[0].mxu0
    %v8976 = vadd.f32 %v8906, %v8975
    %v8977 = vpop.f32.mrb[0].mxu0
    %8978 = vdwg.mxu0
    %8979 = vmatprep.subr.mxu0 0.0
    %8980 = vmatpush1.msra.mxu0 %v8743
    %8981 = vmatprep.subr.mxu0 0.0
    %8982 = vmatpush1.msra.mxu0 %v8744
    %8983 = vmatprep.subr.mxu0 0.0
    %8984 = vmatpush1.msra.mxu0 %v8745
    %8985 = vmatprep.subr.mxu0 0.0
    %8986 = vmatpush1.msra.mxu0 %v8746
    %8987 = vmatprep.subr.mxu0 0.0
    %8988 = vmatpush1.msra.mxu0 %v8747
    %8989 = vmatprep.subr.mxu0 0.0
    %8990 = vmatpush1.msra.mxu0 %v8748
    %8991 = vmatprep.subr.mxu0 0.0
    %8992 = vmatpush1.msra.mxu0 %v8749
    %8993 = vmatprep.subr.mxu0 0.0
    %8994 = vmatpush1.msra.mxu0 %v8750
    %8995 = vmatprep.subr.mxu0 0.0
    %8996 = vmatpush1.msra.mxu0 %v8751
    %8997 = vmatprep.subr.mxu0 0.0
    %8998 = vmatpush1.msra.mxu0 %v8752
    %8999 = vmatprep.subr.mxu0 0.0
    %9000 = vmatpush1.msra.mxu0 %v8753
    %9001 = vmatprep.subr.mxu0 0.0
    %9002 = vmatpush1.msra.mxu0 %v8754
    %9003 = vmatprep.subr.mxu0 0.0
    %9004 = vmatpush1.msra.mxu0 %v8755
    %9005 = vmatprep.subr.mxu0 0.0
    %9006 = vmatpush1.msra.mxu0 %v8756
    %9007 = vmatprep.subr.mxu0 0.0
    %9008 = vmatpush1.msra.mxu0 %v8757
    %9009 = vmatprep.subr.mxu0 0.0
    %9010 = vmatpush1.msra.mxu0 %v8758
    %9011 = vmatprep.subr.mxu0 0.0
    %9012 = vmatpush1.msra.mxu0 %v8759
    %9013 = vmatprep.subr.mxu0 0.0
    %9014 = vmatpush1.msra.mxu0 %v8760
    %9015 = vmatprep.subr.mxu0 0.0
    %9016 = vmatpush1.msra.mxu0 %v8761
    %9017 = vmatprep.subr.mxu0 0.0
    %9018 = vmatpush1.msra.mxu0 %v8762
    %9019 = vmatprep.subr.mxu0 0.0
    %9020 = vmatpush1.msra.mxu0 %v8763
    %9021 = vmatprep.subr.mxu0 0.0
    %9022 = vmatpush1.msra.mxu0 %v8764
    %9023 = vmatprep.subr.mxu0 0.0
    %9024 = vmatpush1.msra.mxu0 %v8765
    %9025 = vmatprep.subr.mxu0 0.0
    %9026 = vmatpush1.msra.mxu0 %v8766
    %9027 = vmatprep.subr.mxu0 0.0
    %9028 = vmatpush1.msra.mxu0 %v8767
    %9029 = vmatprep.subr.mxu0 0.0
    %9030 = vmatpush1.msra.mxu0 %v8768
    %9031 = vmatprep.subr.mxu0 0.0
    %9032 = vmatpush1.msra.mxu0 %v8769
    %9033 = vmatprep.subr.mxu0 0.0
    %9034 = vmatpush1.msra.mxu0 %v8770
    %9035 = vmatprep.subr.mxu0 0.0
    %9036 = vmatpush1.msra.mxu0 %v8771
    %9037 = vmatprep.subr.mxu0 0.0
    %9038 = vmatpush1.msra.mxu0 %v8772
    %9039 = vmatprep.subr.mxu0 0.0
    %9040 = vmatpush1.msra.mxu0 %v8773
    %9041 = vmatprep.subr.mxu0 0.0
    %9042 = vmatpush1.msra.mxu0 %v8774
    %9043 = vmatprep.mubr.f32.mxu0 %v8674
    %9044 = vmatmul.mubr.f32.gmra.mrb[0].mxu0 %v8673
    %v9045 = vpop.f32.mrb[0].mxu0
    %v9046 = vadd.f32 %v8976, %v9045
    %v9047 = vpop.f32.mrb[0].mxu0
    %9048 = vdwg.mxu0
    %9049 = vmatprep.subr.mxu0 0.0
    %9050 = vmatpush1.msra.mxu0 %v8775
    %9051 = vmatprep.subr.mxu0 0.0
    %9052 = vmatpush1.msra.mxu0 %v8776
    %9053 = vmatprep.subr.mxu0 0.0
    %9054 = vmatpush1.msra.mxu0 %v8777
    %9055 = vmatprep.subr.mxu0 0.0
    %9056 = vmatpush1.msra.mxu0 %v8778
    %9057 = vmatprep.subr.mxu0 0.0
    %9058 = vmatpush1.msra.mxu0 %v8779
    %9059 = vmatprep.subr.mxu0 0.0
    %9060 = vmatpush1.msra.mxu0 %v8780
    %9061 = vmatprep.subr.mxu0 0.0
    %9062 = vmatpush1.msra.mxu0 %v8781
    %9063 = vmatprep.subr.mxu0 0.0
    %9064 = vmatpush1.msra.mxu0 %v8782
    %9065 = vmatprep.subr.mxu0 0.0
    %9066 = vmatpush1.msra.mxu0 %v8783
    %9067 = vmatprep.subr.mxu0 0.0
    %9068 = vmatpush1.msra.mxu0 %v8784
    %9069 = vmatprep.subr.mxu0 0.0
    %9070 = vmatpush1.msra.mxu0 %v8785
    %9071 = vmatprep.subr.mxu0 0.0
    %9072 = vmatpush1.msra.mxu0 %v8786
    %9073 = vmatprep.subr.mxu0 0.0
    %9074 = vmatpush1.msra.mxu0 %v8787
    %9075 = vmatprep.subr.mxu0 0.0
    %9076 = vmatpush1.msra.mxu0 %v8788
    %9077 = vmatprep.subr.mxu0 0.0
    %9078 = vmatpush1.msra.mxu0 %v8789
    %9079 = vmatprep.subr.mxu0 0.0
    %9080 = vmatpush1.msra.mxu0 %v8790
    %9081 = vmatprep.subr.mxu0 0.0
    %9082 = vmatpush1.msra.mxu0 %v8791
    %9083 = vmatprep.subr.mxu0 0.0
    %9084 = vmatpush1.msra.mxu0 %v8792
    %9085 = vmatprep.subr.mxu0 0.0
    %9086 = vmatpush1.msra.mxu0 %v8793
    %9087 = vmatprep.subr.mxu0 0.0
    %9088 = vmatpush1.msra.mxu0 %v8794
    %9089 = vmatprep.subr.mxu0 0.0
    %9090 = vmatpush1.msra.mxu0 %v8795
    %9091 = vmatprep.subr.mxu0 0.0
    %9092 = vmatpush1.msra.mxu0 %v8796
    %9093 = vmatprep.subr.mxu0 0.0
    %9094 = vmatpush1.msra.mxu0 %v8797
    %9095 = vmatprep.subr.mxu0 0.0
    %9096 = vmatpush1.msra.mxu0 %v8798
    %9097 = vmatprep.subr.mxu0 0.0
    %9098 = vmatpush1.msra.mxu0 %v8799
    %9099 = vmatprep.subr.mxu0 0.0
    %9100 = vmatpush1.msra.mxu0 %v8800
    %9101 = vmatprep.subr.mxu0 0.0
    %9102 = vmatpush1.msra.mxu0 %v8801
    %9103 = vmatprep.subr.mxu0 0.0
    %9104 = vmatpush1.msra.mxu0 %v8802
    %9105 = vmatprep.subr.mxu0 0.0
    %9106 = vmatpush1.msra.mxu0 %v8803
    %9107 = vmatprep.subr.mxu0 0.0
    %9108 = vmatpush1.msra.mxu0 %v8804
    %9109 = vmatprep.subr.mxu0 0.0
    %9110 = vmatpush1.msra.mxu0 %v8805
    %9111 = vmatprep.subr.mxu0 0.0
    %9112 = vmatpush1.msra.mxu0 %v8806
    %9113 = vmatprep.mubr.f32.mxu0 %v8676
    %9114 = vmatmul.mubr.f32.gmra.mrb[0].mxu0 %v8675
    %v9115 = vpop.f32.mrb[0].mxu0
    %v9116 = vadd.f32 %v9046, %v9115
    %v9117 = vpop.f32.mrb[0].mxu0
    %9118 = vdwg.mxu0
    %9119 = vmatprep.subr.mxu0 0.0
    %9120 = vmatpush1.msra.mxu0 %v8807
    %9121 = vmatprep.subr.mxu0 0.0
    %9122 = vmatpush1.msra.mxu0 %v8808
    %9123 = vmatprep.subr.mxu0 0.0
    %9124 = vmatpush1.msra.mxu0 %v8809
    %9125 = vmatprep.subr.mxu0 0.0
    %9126 = vmatpush1.msra.mxu0 %v8810
    %9127 = vmatprep.subr.mxu0 0.0
    %9128 = vmatpush1.msra.mxu0 %v8811
    %9129 = vmatprep.subr.mxu0 0.0
    %9130 = vmatpush1.msra.mxu0 %v8812
    %9131 = vmatprep.subr.mxu0 0.0
    %9132 = vmatpush1.msra.mxu0 %v8813
    %9133 = vmatprep.subr.mxu0 0.0
    %9134 = vmatpush1.msra.mxu0 %v8814
    %9135 = vmatprep.subr.mxu0 0.0
    %9136 = vmatpush1.msra.mxu0 %v8815
    %9137 = vmatprep.subr.mxu0 0.0
    %9138 = vmatpush1.msra.mxu0 %v8816
    %9139 = vmatprep.subr.mxu0 0.0
    %9140 = vmatpush1.msra.mxu0 %v8817
    %9141 = vmatprep.subr.mxu0 0.0
    %9142 = vmatpush1.msra.mxu0 %v8818
    %9143 = vmatprep.subr.mxu0 0.0
    %9144 = vmatpush1.msra.mxu0 %v8819
    %9145 = vmatprep.subr.mxu0 0.0
    %9146 = vmatpush1.msra.mxu0 %v8820
    %9147 = vmatprep.subr.mxu0 0.0
    %9148 = vmatpush1.msra.mxu0 %v8821
    %9149 = vmatprep.subr.mxu0 0.0
    %9150 = vmatpush1.msra.mxu0 %v8822
    %9151 = vmatprep.subr.mxu0 0.0
    %9152 = vmatpush1.msra.mxu0 %v8823
    %9153 = vmatprep.subr.mxu0 0.0
    %9154 = vmatpush1.msra.mxu0 %v8824
    %9155 = vmatprep.subr.mxu0 0.0
    %9156 = vmatpush1.msra.mxu0 %v8825
    %9157 = vmatprep.subr.mxu0 0.0
    %9158 = vmatpush1.msra.mxu0 %v8826
    %9159 = vmatprep.subr.mxu0 0.0
    %9160 = vmatpush1.msra.mxu0 %v8827
    %9161 = vmatprep.subr.mxu0 0.0
    %9162 = vmatpush1.msra.mxu0 %v8828
    %9163 = vmatprep.subr.mxu0 0.0
    %9164 = vmatpush1.msra.mxu0 %v8829
    %9165 = vmatprep.subr.mxu0 0.0
    %9166 = vmatpush1.msra.mxu0 %v8830
    %9167 = vmatprep.subr.mxu0 0.0
    %9168 = vmatpush1.msra.mxu0 %v8831
    %9169 = vmatprep.subr.mxu0 0.0
    %9170 = vmatpush1.msra.mxu0 %v8832
    %9171 = vmatprep.subr.mxu0 0.0
    %9172 = vmatpush1.msra.mxu0 %v8833
    %9173 = vmatprep.subr.mxu0 0.0
    %9174 = vmatpush1.msra.mxu0 %v8834
    %9175 = vmatprep.subr.mxu0 0.0
    %9176 = vmatpush1.msra.mxu0 %v8835
    %9177 = vmatprep.subr.mxu0 0.0
    %9178 = vmatpush1.msra.mxu0 %v8836
    %9179 = vmatprep.subr.mxu0 0.0
    %9180 = vmatpush1.msra.mxu0 %v8837
    %9181 = vmatprep.subr.mxu0 0.0
    %9182 = vmatpush1.msra.mxu0 %v8838
    %9183 = vmatprep.mubr.f32.mxu0 %v8678
    %9184 = vmatmul.mubr.f32.gmra.mrb[0].mxu0 %v8677
    %v9185 = vpop.f32.mrb[0].mxu0
    %v9186 = vadd.f32 %v9116, %v9185
    %v9187 = vpop.f32.mrb[0].mxu0
    %9188 = vdwg.mxu0
    %v9189 = vmax.f32 %v9186, 0.0
    %v9190 = vld [vmem:[#allocation18] sm:$0xff]
    %v9191 = vld [vmem:[#allocation18 + $0x8] sm:$0xff]
    %v9192 = vld [vmem:[#allocation18 + $0x10] sm:$0xff]
    %v9193 = vld [vmem:[#allocation18 + $0x18] sm:$0xff]
    %v9194 = vld [vmem:[#allocation18 + $0x20] sm:$0xff]
    %v9195 = vld [vmem:[#allocation18 + $0x28] sm:$0xff]
    %v9196 = vld [vmem:[#allocation18 + $0x30] sm:$0xff]
    %v9197 = vld [vmem:[#allocation18 + $0x38] sm:$0xff]
    %vm9198 = vcmask 523264
    %v9200 = vsel %vm9198, %v9189, 0
    %9202 = vmatprep.subr.mxu0 0.0
    %9203 = vmatpush1.msra.mxu0 %v9190
    %9204 = vmatprep.subr.mxu0 0.0
    %9205 = vmatpush1.msra.mxu0 %v9191
    %9206 = vmatprep.subr.mxu0 0.0
    %9207 = vmatpush1.msra.mxu0 %v9192
    %9208 = vmatprep.subr.mxu0 0.0
    %9209 = vmatpush1.msra.mxu0 %v9193
    %9210 = vmatprep.subr.mxu0 0.0
    %9211 = vmatpush1.msra.mxu0 %v9194
    %9212 = vmatprep.subr.mxu0 0.0
    %9213 = vmatpush1.msra.mxu0 %v9195
    %9214 = vmatprep.subr.mxu0 0.0
    %9215 = vmatpush1.msra.mxu0 %v9196
    %9216 = vmatprep.subr.mxu0 0.0
    %9217 = vmatpush1.msra.mxu0 %v9197
    %9218 = vmatprep.subr.mxu0 0.0
    %9219 = vmatpush1.msra.mxu0 0.0
    %9220 = vmatprep.subr.mxu0 0.0
    %9221 = vmatpush1.msra.mxu0 0.0
    %9222 = vmatprep.subr.mxu0 0.0
    %9223 = vmatpush1.msra.mxu0 0.0
    %9224 = vmatprep.subr.mxu0 0.0
    %9225 = vmatpush1.msra.mxu0 0.0
    %9226 = vmatprep.subr.mxu0 0.0
    %9227 = vmatpush1.msra.mxu0 0.0
    %9228 = vmatprep.subr.mxu0 0.0
    %9229 = vmatpush1.msra.mxu0 0.0
    %9230 = vmatprep.subr.mxu0 0.0
    %9231 = vmatpush1.msra.mxu0 0.0
    %9232 = vmatprep.subr.mxu0 0.0
    %9233 = vmatpush1.msra.mxu0 0.0
    %9234 = vmatprep.subr.mxu0 0.0
    %9235 = vmatpush1.msra.mxu0 0.0
    %9236 = vmatprep.subr.mxu0 0.0
    %9237 = vmatpush1.msra.mxu0 0.0
    %9238 = vmatprep.subr.mxu0 0.0
    %9239 = vmatpush1.msra.mxu0 0.0
    %9240 = vmatprep.subr.mxu0 0.0
    %9241 = vmatpush1.msra.mxu0 0.0
    %9242 = vmatprep.subr.mxu0 0.0
    %9243 = vmatpush1.msra.mxu0 0.0
    %9244 = vmatprep.subr.mxu0 0.0
    %9245 = vmatpush1.msra.mxu0 0.0
    %9246 = vmatprep.subr.mxu0 0.0
    %9247 = vmatpush1.msra.mxu0 0.0
    %9248 = vmatprep.subr.mxu0 0.0
    %9249 = vmatpush1.msra.mxu0 0.0
    %9250 = vmatprep.subr.mxu0 0.0
    %9251 = vmatpush1.msra.mxu0 0.0
    %9252 = vmatprep.subr.mxu0 0.0
    %9253 = vmatpush1.msra.mxu0 0.0
    %9254 = vmatprep.subr.mxu0 0.0
    %9255 = vmatpush1.msra.mxu0 0.0
    %9256 = vmatprep.subr.mxu0 0.0
    %9257 = vmatpush1.msra.mxu0 0.0
    %9258 = vmatprep.subr.mxu0 0.0
    %9259 = vmatpush1.msra.mxu0 0.0
    %9260 = vmatprep.subr.mxu0 0.0
    %9261 = vmatpush1.msra.mxu0 0.0
    %9262 = vmatprep.subr.mxu0 0.0
    %9263 = vmatpush1.msra.mxu0 0.0
    %9264 = vmatprep.subr.mxu0 0.0
    %9265 = vmatpush1.msra.mxu0 0.0
    %9266 = vmatprep.mubr.f32.mxu0 0.0
    %9267 = vmatmul.mubr.f32.gmra.mrb[0].mxu0 %v9200
    %v9268 = vpop.f32.mrb[0].mxu0
    %v9269 = vadd.f32 0.0, %v9268
    %v9270 = vpop.f32.mrb[0].mxu0
    %9271 = vdwg.mxu0
    %v9272 = vadd.f32 %v8668, %v9269
    %v9273 = vmax.f32 %v9272, 0.0
    %v9274 = vld [vmem:[#allocation22] sm:$0xff]
    %v9275 = vld [vmem:[#allocation22 + $0x8] sm:$0xff]
    %v9276 = vld [vmem:[#allocation22 + $0x10] sm:$0xff]
    %v9277 = vld [vmem:[#allocation22 + $0x18] sm:$0xff]
    %v9278 = vld [vmem:[#allocation22 + $0x20] sm:$0xff]
    %v9279 = vld [vmem:[#allocation22 + $0x28] sm:$0xff]
    %v9280 = vld [vmem:[#allocation22 + $0x30] sm:$0xff]
    %v9281 = vld [vmem:[#allocation22 + $0x38] sm:$0xff]
    %v9282 = vld [vmem:[#allocation22 + $0x40] sm:$0xff]
    %v9283 = vld [vmem:[#allocation22 + $0x48] sm:$0xff]
    %v9284 = vld [vmem:[#allocation22 + $0x50] sm:$0xff]
    %v9285 = vld [vmem:[#allocation22 + $0x58] sm:$0xff]
    %v9286 = vld [vmem:[#allocation22 + $0x60] sm:$0xff]
    %v9287 = vld [vmem:[#allocation22 + $0x68] sm:$0xff]
    %v9288 = vld [vmem:[#allocation22 + $0x70] sm:$0xff]
    %v9289 = vld [vmem:[#allocation22 + $0x78] sm:$0xff]
    %v9290 = vld [vmem:[#allocation24] sm:$0x1]
    %v9292 = vlaneseq
    %v9293 = vshrl.u32 %v9292, 7
    %v9294 = vsub.s32 0, %v9293
    %v9295 = vrot.slane %v9290, %v9294
    %9297 = vmatprep.subr.mxu0 0.0
    %9298 = vmatpush1.msra.mxu0 %v9274
    %9299 = vmatprep.subr.mxu0 0.0
    %9300 = vmatpush1.msra.mxu0 %v9275
    %9301 = vmatprep.subr.mxu0 0.0
    %9302 = vmatpush1.msra.mxu0 %v9276
    %9303 = vmatprep.subr.mxu0 0.0
    %9304 = vmatpush1.msra.mxu0 %v9277
    %9305 = vmatprep.subr.mxu0 0.0
    %9306 = vmatpush1.msra.mxu0 %v9278
    %9307 = vmatprep.subr.mxu0 0.0
    %9308 = vmatpush1.msra.mxu0 %v9279
    %9309 = vmatprep.subr.mxu0 0.0
    %9310 = vmatpush1.msra.mxu0 %v9280
    %9311 = vmatprep.subr.mxu0 0.0
    %9312 = vmatpush1.msra.mxu0 %v9281
    %9313 = vmatprep.subr.mxu0 0.0
    %9314 = vmatpush1.msra.mxu0 %v9282
    %9315 = vmatprep.subr.mxu0 0.0
    %9316 = vmatpush1.msra.mxu0 %v9283
    %9317 = vmatprep.subr.mxu0 0.0
    %9318 = vmatpush1.msra.mxu0 %v9284
    %9319 = vmatprep.subr.mxu0 0.0
    %9320 = vmatpush1.msra.mxu0 %v9285
    %9321 = vmatprep.subr.mxu0 0.0
    %9322 = vmatpush1.msra.mxu0 %v9286
    %9323 = vmatprep.subr.mxu0 0.0
    %9324 = vmatpush1.msra.mxu0 %v9287
    %9325 = vmatprep.subr.mxu0 0.0
    %9326 = vmatpush1.msra.mxu0 %v9288
    %9327 = vmatprep.subr.mxu0 0.0
    %9328 = vmatpush1.msra.mxu0 %v9289
    %9329 = vmatprep.subr.mxu0 0.0
    %9330 = vmatpush1.msra.mxu0 0.0
    %9331 = vmatprep.subr.mxu0 0.0
    %9332 = vmatpush1.msra.mxu0 0.0
    %9333 = vmatprep.subr.mxu0 0.0
    %9334 = vmatpush1.msra.mxu0 0.0
    %9335 = vmatprep.subr.mxu0 0.0
    %9336 = vmatpush1.msra.mxu0 0.0
    %9337 = vmatprep.subr.mxu0 0.0
    %9338 = vmatpush1.msra.mxu0 0.0
    %9339 = vmatprep.subr.mxu0 0.0
    %9340 = vmatpush1.msra.mxu0 0.0
    %9341 = vmatprep.subr.mxu0 0.0
    %9342 = vmatpush1.msra.mxu0 0.0
    %9343 = vmatprep.subr.mxu0 0.0
    %9344 = vmatpush1.msra.mxu0 0.0
    %9345 = vmatprep.subr.mxu0 0.0
    %9346 = vmatpush1.msra.mxu0 0.0
    %9347 = vmatprep.subr.mxu0 0.0
    %9348 = vmatpush1.msra.mxu0 0.0
    %9349 = vmatprep.subr.mxu0 0.0
    %9350 = vmatpush1.msra.mxu0 0.0
    %9351 = vmatprep.subr.mxu0 0.0
    %9352 = vmatpush1.msra.mxu0 0.0
    %9353 = vmatprep.subr.mxu0 0.0
    %9354 = vmatpush1.msra.mxu0 0.0
    %9355 = vmatprep.subr.mxu0 0.0
    %9356 = vmatpush1.msra.mxu0 0.0
    %9357 = vmatprep.subr.mxu0 0.0
    %9358 = vmatpush1.msra.mxu0 0.0
    %9359 = vmatprep.subr.mxu0 0.0
    %9360 = vmatpush1.msra.mxu0 0.0
    %9361 = vmatprep.mubr.f32.mxu0 0.0
    %9362 = vmatmul.mubr.f32.gmra.mrb[0].mxu0 %v9273
    %v9363 = vpop.f32.mrb[0].mxu0
    %v9364 = vadd.f32 %v9295, %v9363
    %v9365 = vpop.f32.mrb[0].mxu0
    %9366 = vdwg.mxu0
    %vm9367 = vcmask 23552
    %9368 = vst.msk [vmem:[#allocation25] sm:$0xff] %vm9367, %v9364
    // Predicated region
    $region106: #{tpu_custom_call.1} parent=1 // pred_check
      _
    $region107: #{tpu_custom_call.1} parent=1 // pred_check_branch
      %9370 = sbr.rel (0) target = $region109
    $region108: #{tpu_custom_call.1} parent=1 // pred_region
      %s9372 = ssub.s32 128, 128
      %9373 = vsyncadd [#allocation6], %s9372
      %s9375 = sshll.u32 [#allocation25], 4
      %s9376 = int_to_ptr.vmem [resolvable:$true] %s9375
      %9378 = dma.vmem_to_hbm [thread:$0]  %s9376, 128, %s13, [#allocation6]
    $region109: #{tpu_custom_call.1} parent=1 // pred_fallthru
      _
    // Predicated region
    $region110: #{tpu_custom_call.1} parent=1 // pred_check
      _
    $region111: #{tpu_custom_call.1} parent=1 // pred_check_branch
      %9380 = sbr.rel (0) target = $region113
    $region112: #{tpu_custom_call.1} parent=1 // pred_region
      %9381 = dma.done [#allocation6], 128
    $region113: #{tpu_custom_call.1} parent=1 // pred_fallthru
      _
    %9382 = vsyncpa [#allocation5], 1
    %9383 = vsyncpa [#allocation8], 1
    %9384 = vsyncpa [#allocation11], 1
    %9385 = vsyncpa [#allocation14], 1
    %9386 = vsyncpa [#allocation17], 1
    %9387 = vsyncpa [#allocation20], 1
    %9388 = vsyncpa [#allocation23], 1
    %9389 = vsyncpa [#allocation6], 1

</llo_original>
